<compile_context>
chip_gen: v7x
topology: tpu7x:2x2x1
jax: 0.10.0
libtpu: 0.0.40
codegen_flags: <defaults>
</compile_context>

<pallas_src>
from functools import partial

import jax
import jax.numpy as jnp
from jax.experimental import pallas as pl
from jax.experimental.pallas import tpu as pltpu


# ----------------------------------------------------------------------------
# Generation detection helpers (safe fallbacks everywhere)
# ----------------------------------------------------------------------------
def _device_kind():
    try:
        return jax.devices()[0].device_kind.lower()
    except Exception:
        return ""


def _is_v7x():
    kind = _device_kind()
    if "v7" in kind or "tpu7" in kind:
        return True
    try:
        return int(pltpu.get_tpu_info().vmem_capacity_bytes) <= 64 * 1024 * 1024
    except Exception:
        return False


def _default_compute_dtype():
    kind = _device_kind()
    if "v6" in kind or "v7" in kind or "tpu7" in kind:
        return jnp.bfloat16          # f32 accumulation + f32 epilogue kept
    return jnp.float32               # v5e VPU has no bf16; stay f32 by default


def _auto_conv_mode():
    # v7x: MRB accumulates matmul results in place and VMEM is 64 MiB -> 9
    # accumulated K=C dots.  v5e/v6e (MRF): single K=9C contraction from a
    # scratch-built slab.
    return "taps" if _is_v7x() else "slab"


def _vmem_limit_bytes():
    try:
        phys = int(pltpu.get_tpu_info().vmem_capacity_bytes)
        return min(phys * 3 // 4, 100 * 1024 * 1024)
    except Exception:
        return 48 * 1024 * 1024 if _is_v7x() else 96 * 1024 * 1024


def _pick_strip_rows(H, W, Cout, cdt, budget_bytes=6 * 1024 * 1024):
    """Largest strip height TH (divisor of H, TH <= 32) whose dominant
    per-strip temporary (conv2's im2col slab) fits the VMEM budget."""
    item = jnp.dtype(cdt).itemsize
    divisors = [d for d in range(1, H + 1) if H % d == 0]
    ok = [d for d in divisors
          if (d * W) % 8 == 0 and d <= 32
          and d * W * 9 * Cout * item <= budget_bytes]
    if ok:
        return max(ok)
    ok2 = [d for d in divisors if (d * W) % 8 == 0]
    return min(ok2) if ok2 else H


# ----------------------------------------------------------------------------
# In-kernel 3x3 conv helpers (both read a zero-padded (rows+2, W+2, C) window)
# ----------------------------------------------------------------------------
_TAPS = tuple((dy, dx) for dy in range(3) for dx in range(3))


def _conv3x3_slab(win_ref, w_ref, slab_ref, out_rows, W, C):
    """Single K=9C MXU contraction; slab built via 9 slice-stores into VMEM
    scratch (no functional concatenates).  Preferred on v5e/v6e (MRF)."""
    for t, (dy, dx) in enumerate(_TAPS):
        slab_ref[:, t * C:(t + 1) * C] = (
            win_ref[dy:dy + out_rows, dx:dx + W, :].reshape(out_rows * W, C))
    return jnp.dot(slab_ref[...], w_ref[...],
                   preferred_element_type=jnp.float32)


def _conv3x3_taps(win_ref, w_ref, out_rows, W, C):
    """9 accumulated K=C dots, f32 accumulation.  Preferred on v7x (MRB)."""
    acc = None
    for t, (dy, dx) in enumerate(_TAPS):
        patch = win_ref[dy:dy + out_rows, dx:dx + W, :].reshape(out_rows * W, C)
        part = jnp.dot(patch, w_ref[t * C:(t + 1) * C, :],
                       preferred_element_type=jnp.float32)
        acc = part if acc is None else acc + part
    return acc


# ----------------------------------------------------------------------------
# Fused ResBlock kernel: one (batch element, H-strip) per grid step
# ----------------------------------------------------------------------------
def _resblock_kernel(*refs, H, W, TH, NS, Cin, Cout, expand, slab_mode):
    x_ref, w1_ref, s1_ref, b1_ref, w2_ref, s2_ref, b2_ref = refs[:7]
    i = 7
    if expand:
        wd_ref, sd_ref, bd_ref = refs[i:i + 3]
        i += 3
    out_ref = refs[i]
    xwin_ref, hwin_ref = refs[i + 1], refs[i + 2]
    if slab_mode:
        slab1_ref, slab2_ref = refs[i + 3], refs[i + 4]

    s = pl.program_id(1)
    rows1 = TH + 2                      # conv1 rows needed (strip + 1-row halo)

    # ---- stage zero-padded x window (TH+4, W+2, Cin) for this strip --------
    # (full zero also provides conv1's column/row zero padding and clears any
    #  stale scratch from the previous strip)
    xwin_ref[...] = jnp.zeros_like(xwin_ref)
    if NS == 1:
        xwin_ref[2:TH + 2, 1:W + 1, :] = x_ref[0]
    else:
        @pl.when(s == 0)
        def _():
            xwin_ref[2:TH + 4, 1:W + 1, :] = x_ref[0, pl.ds(0, TH + 2), :, :]

        @pl.when(jnp.logical_and(s > 0, s < NS - 1))
        def _():
            xwin_ref[:, 1:W + 1, :] = x_ref[0, pl.ds(s * TH - 2, TH + 4), :, :]

        @pl.when(s == NS - 1)
        def _():
            xwin_ref[0:TH + 2, 1:W + 1, :] = (
                x_ref[0, pl.ds(s * TH - 2, TH + 2), :, :])

    # ---- conv1 (3x3, pad=1) + BN + ReLU (f32 epilogue) ----------------------
    if slab_mode:
        h = _conv3x3_slab(xwin_ref, w1_ref, slab1_ref, rows1, W, Cin)
    else:
        h = _conv3x3_taps(xwin_ref, w1_ref, rows1, W, Cin)
    h = jnp.maximum(h * s1_ref[...] + b1_ref[...], 0.0)   # (rows1*W, Cout) f32

    # ---- residual branch on the strip's central TH rows ---------------------
    # Computed now, before conv2's large temporaries, to keep peak VMEM low.
    x_strip = x_ref[0, pl.ds(s * TH, TH), :, :].reshape(TH * W, Cin)
    if expand:
        idn = jnp.dot(x_strip, wd_ref[...], preferred_element_type=jnp.float32)
        idn = idn * sd_ref[...] + bd_ref[...]
    else:
        idn = x_strip.astype(jnp.float32)

    # ---- stage h window (TH+2, W+2, Cout) with conv2's zero padding ---------
    hwin_ref[...] = jnp.zeros_like(hwin_ref)
    hwin_ref[:, 1:W + 1, :] = h.reshape(rows1, W, Cout).astype(hwin_ref.dtype)

    # h rows that fall outside the image are conv2's ZERO padding, not
    # conv1-of-zero-input values: zero them explicitly at the image borders.
    @pl.when(s == 0)
    def _():
        hwin_ref[0:1, :, :] = jnp.zeros((1, W + 2, Cout), hwin_ref.dtype)

    @pl.when(s == NS - 1)
    def _():
        hwin_ref[rows1 - 1:rows1, :, :] = (
            jnp.zeros((1, W + 2, Cout), hwin_ref.dtype))

    # ---- conv2 (3x3, pad=1) + BN --------------------------------------------
    if slab_mode:
        o = _conv3x3_slab(hwin_ref, w2_ref, slab2_ref, TH, W, Cout)
    else:
        o = _conv3x3_taps(hwin_ref, w2_ref, TH, W, Cout)
    o = o * s2_ref[...] + b2_ref[...]

    # ---- residual add + final ReLU ------------------------------------------
    out_ref[0] = jnp.maximum(o + idn, 0.0).astype(out_ref.dtype)


# ----------------------------------------------------------------------------
# NHWC core entry point (use this to chain blocks without HBM relayouts)
# ----------------------------------------------------------------------------
def resblock_forward_nhwc(x_nhwc, params, expand=True, compute_dtype=None,
                          conv_mode="auto", strip_rows=None, out_dtype=None,
                          single_buffer_constants=True):
    N, H, W, Cin = x_nhwc.shape
    Cout = params["w1"].shape[-1]
    out_dtype = out_dtype or x_nhwc.dtype
    cdt = compute_dtype or _default_compute_dtype()
    mode = _auto_conv_mode() if conv_mode == "auto" else conv_mode
    slab_mode = (mode == "slab")

    TH = strip_rows or _pick_strip_rows(H, W, Cout, cdt)
    if H % TH != 0 or ((TH * W) % 8 != 0 and TH != H):
        TH = H                              # fall back to one strip per image
    NS = H // TH

    x = x_nhwc.astype(cdt)
    w1 = params["w1"].reshape(9 * Cin, Cout).astype(cdt)    # tap-major, ch-minor
    w2 = params["w2"].reshape(9 * Cout, Cout).astype(cdt)

    def vec(p):                              # folded-BN scale/bias, kept f32
        return p.reshape(1, Cout).astype(jnp.float32)

    args = [x, w1, vec(params["s1"]), vec(params["b1"]),
            w2, vec(params["s2"]), vec(params["b2"])]
    if expand:
        args += [params["wd"].astype(cdt), vec(params["sd"]), vec(params["bd"])]
    else:
        assert Cin == Cout, "expand=False requires Cin == Cout"

    kernel = partial(_resblock_kernel, H=H, W=W, TH=TH, NS=NS,
                     Cin=Cin, Cout=Cout, expand=expand, slab_mode=slab_mode)

    scratch = [pltpu.VMEM((TH + 4, W + 2, Cin), cdt),        # padded x window
               pltpu.VMEM((TH + 2, W + 2, Cout), cdt)]       # padded h window
    if slab_mode:
        scratch += [pltpu.VMEM(((TH + 2) * W, 9 * Cin), cdt),   # conv1 slab
                    pltpu.VMEM((TH * W, 9 * Cout), cdt)]        # conv2 slab

    vmem_limit = _vmem_limit_bytes()

    def run(use_single_buffer):
        if use_single_buffer and hasattr(pl, "Buffered"):
            # Constant blocks (same block every grid step): single-buffer to
            # reclaim VMEM for larger activation strips.
            def const_spec(shape):
                return pl.BlockSpec(shape, lambda n, s: (0, 0),
                                    pipeline_mode=pl.Buffered(buffer_count=1))
        else:
            def const_spec(shape):
                return pl.BlockSpec(shape, lambda n, s: (0, 0))

        cvec = const_spec((1, Cout))
        in_specs = [
            # whole image per batch element, resident across the strip axis
            pl.BlockSpec((1, H, W, Cin), lambda n, s: (n, 0, 0, 0)),
            const_spec((9 * Cin, Cout)), cvec, cvec,
            const_spec((9 * Cout, Cout)), cvec, cvec,
        ]
        if expand:
            in_specs += [const_spec((Cin, Cout)), cvec, cvec]

        return pl.pallas_call(
            kernel,
            out_shape=jax.ShapeDtypeStruct((N, H * W, Cout), out_dtype),
            grid=(N, NS),
            in_specs=in_specs,
            out_specs=pl.BlockSpec((1, TH * W, Cout), lambda n, s: (n, s, 0)),
            scratch_shapes=scratch,
            compiler_params=pltpu.CompilerParams(
                # batch elements and strips are independent -> let v7x's two
                # TensorCores shard them (harmless on single-TC v5e/v6e)
                dimension_semantics=("parallel", "parallel"),
                vmem_limit_bytes=vmem_limit,
            ),
        )(*args)

    if single_buffer_constants:
        try:
            out = run(True)
        except Exception:   # pl.Buffered(1) unsupported on this jax/chip combo
            out = run(False)
    else:
        out = run(False)
    return out.reshape(N, H, W, Cout)


# ----------------------------------------------------------------------------
# NCHW compatibility wrapper (matches the PyTorch module's interface).
# NOTE: in a full network, chain resblock_forward_nhwc directly to avoid the
# two full-tensor HBM relayouts per block that these transposes cost.
# ----------------------------------------------------------------------------
def resblock_forward(x_nchw, params, expand=True, **kw):
    x = jnp.transpose(x_nchw, (0, 2, 3, 1))
    out = resblock_forward_nhwc(x, params, expand=expand, **kw)
    return jnp.transpose(out, (0, 3, 1, 2))


# ----------------------------------------------------------------------------
# Parameter initialization (deterministic; eval-mode BN folded to scale/bias)
# ----------------------------------------------------------------------------
def _fold_bn(gamma, beta, mean, var, eps=1e-5):
    scale = gamma / jnp.sqrt(var + eps)
    bias = beta - mean * scale
    return scale, bias


def init_resblock_params(key, input_ch, expand=True):
    output_ch = input_ch * 2 if expand else input_ch
    ks = jax.random.split(key, 8)

    def conv_w(k, kh, kw, cin, cout):
        bound = 1.0 / jnp.sqrt(cin * kh * kw)
        return jax.random.uniform(k, (kh, kw, cin, cout), jnp.float32,
                                  -bound, bound)

    def bn_params(k, c):
        k1, k2, k3, k4 = jax.random.split(k, 4)
        gamma = jax.random.uniform(k1, (c,), jnp.float32, 0.5, 1.5)
        beta = jax.random.uniform(k2, (c,), jnp.float32, -0.5, 0.5)
        mean = 0.1 * jax.random.normal(k3, (c,), jnp.float32)
        var = jax.random.uniform(k4, (c,), jnp.float32, 0.5, 1.5)
        return _fold_bn(gamma, beta, mean, var)

    params = {}
    params["w1"] = conv_w(ks[0], 3, 3, input_ch, output_ch)            # HWIO
    params["s1"], params["b1"] = bn_params(ks[1], output_ch)
    params["w2"] = conv_w(ks[2], 3, 3, output_ch, output_ch)           # HWIO
    params["s2"], params["b2"] = bn_params(ks[3], output_ch)
    if expand:
        params["wd"] = conv_w(ks[4], 1, 1, input_ch, output_ch)[0, 0]  # (Cin,Cout)
        params["sd"], params["bd"] = bn_params(ks[5], output_ch)
    return params


# ----------------------------------------------------------------------------
# Pure-JAX reference for validation
# ----------------------------------------------------------------------------
def _ref_conv3x3(x, w):
    return jax.lax.conv_general_dilated(
        x, w, window_strides=(1, 1), padding="SAME",
        dimension_numbers=("NHWC", "HWIO", "NHWC"))


def resblock_reference(x_nchw, params, expand=True):
    x = jnp.transpose(x_nchw, (0, 2, 3, 1))
    h = _ref_conv3x3(x, params["w1"]) * params["s1"] + params["b1"]
    h = jnp.maximum(h, 0.0)
    out = _ref_conv3x3(h, params["w2"]) * params["s2"] + params["b2"]
    if expand:
        identity = jnp.einsum("nhwc,co->nhwo", x, params["wd"])
        identity = identity * params["sd"] + params["bd"]
    else:
        identity = x
    out = jnp.maximum(out + identity, 0.0)
    return jnp.transpose(out, (0, 3, 1, 2))


# ----------------------------------------------------------------------------
if __name__ == "__main__":
    key = jax.random.PRNGKey(0)
    k_x, k_p, k_x2, k_p2 = jax.random.split(key, 4)

    # --- expand=True (input_ch=4 -> output_ch=8) -----------------------------
    N, C, H, W = 2, 4, 16, 16
    x = jax.random.normal(k_x, (N, C, H, W), dtype=jnp.float32)
    params = init_resblock_params(k_p, input_ch=C, expand=True)
    ref = jax.block_until_ready(resblock_reference(x, params, expand=True))

    # f32 compute, BOTH conv formulations, multi-strip (TH=8 -> 2 strips,
    # exercises the 2-row-halo strip tiling and border zero-padding)
    for mode in ("slab", "taps"):
        out = jax.block_until_ready(resblock_forward(
            x, params, expand=True, compute_dtype=jnp.float32,
            conv_mode=mode, strip_rows=8))
        assert out.shape == (N, 2 * C, H, W), out.shape
        err = float(jnp.max(jnp.abs(out - ref)))
        assert jnp.allclose(out, ref, rtol=1e-4, atol=1e-4), (mode, err)

    # --- expand=False (identity residual), f32, auto strip/mode --------------
    C2 = 8
    x2 = jax.random.normal(k_x2, (N, C2, H, W), dtype=jnp.float32)
    params2 = init_resblock_params(k_p2, input_ch=C2, expand=False)
    ref2 = jax.block_until_ready(resblock_reference(x2, params2, expand=False))
    out2 = jax.block_until_ready(resblock_forward(
        x2, params2, expand=False, compute_dtype=jnp.float32))
    assert out2.shape == (N, C2, H, W), out2.shape
    assert jnp.allclose(out2, ref2, rtol=1e-4, atol=1e-4), (
        float(jnp.max(jnp.abs(out2 - ref2))))

    # --- fully automatic settings (generation-aware dtype / conv mode /
    #     strip size); bf16 on v6e/v7x -> loose tolerance ---------------------
    out_auto = jax.block_until_ready(resblock_forward(x, params, expand=True))
    assert out_auto.shape == (N, 2 * C, H, W), out_auto.shape
    assert float(jnp.max(jnp.abs(out_auto - ref))) < 0.25

    print("KERNEL_OK")
</pallas_src>

<mosaic_0001>
module attributes {stable_mosaic.version = 11 : i64} {
  func.func @_resblock_kernel(%arg0: i32, %arg1: i32, %arg2: memref<1x16x16x4xf32, #tpu.memory_space<vmem>>, %arg3: memref<36x8xf32, #tpu.memory_space<vmem>>, %arg4: memref<1x8xf32, #tpu.memory_space<vmem>>, %arg5: memref<1x8xf32, #tpu.memory_space<vmem>>, %arg6: memref<72x8xf32, #tpu.memory_space<vmem>>, %arg7: memref<1x8xf32, #tpu.memory_space<vmem>>, %arg8: memref<1x8xf32, #tpu.memory_space<vmem>>, %arg9: memref<4x8xf32, #tpu.memory_space<vmem>>, %arg10: memref<1x8xf32, #tpu.memory_space<vmem>>, %arg11: memref<1x8xf32, #tpu.memory_space<vmem>>, %arg12: memref<1x128x8xf32, #tpu.memory_space<vmem>>, %arg13: memref<12x18x4xf32, #tpu.memory_space<vmem>>, %arg14: memref<10x18x8xf32, #tpu.memory_space<vmem>>, %arg15: memref<160x36xf32, #tpu.memory_space<vmem>>, %arg16: memref<128x72xf32, #tpu.memory_space<vmem>>) attributes {dimension_semantics = [#tpu.dimension_semantics<parallel>, #tpu.dimension_semantics<parallel>], iteration_bounds = array<i64: 2, 2>, scalar_prefetch = 0 : i64, scratch_operands = 4 : i64, tpu.core_type = #tpu.core_type<tc>, window_params = [{transform_indices = @transform_0, window_bounds = array<i64: 1, 16, 16, 4>}, {pipeline_mode = #tpu.pipeline_mode<synchronous>, transform_indices = @transform_1, window_bounds = array<i64: 36, 8>}, {pipeline_mode = #tpu.pipeline_mode<synchronous>, transform_indices = @transform_2, window_bounds = array<i64: 1, 8>}, {pipeline_mode = #tpu.pipeline_mode<synchronous>, transform_indices = @transform_3, window_bounds = array<i64: 1, 8>}, {pipeline_mode = #tpu.pipeline_mode<synchronous>, transform_indices = @transform_4, window_bounds = array<i64: 72, 8>}, {pipeline_mode = #tpu.pipeline_mode<synchronous>, transform_indices = @transform_5, window_bounds = array<i64: 1, 8>}, {pipeline_mode = #tpu.pipeline_mode<synchronous>, transform_indices = @transform_6, window_bounds = array<i64: 1, 8>}, {pipeline_mode = #tpu.pipeline_mode<synchronous>, transform_indices = @transform_7, window_bounds = array<i64: 4, 8>}, {pipeline_mode = #tpu.pipeline_mode<synchronous>, transform_indices = @transform_8, window_bounds = array<i64: 1, 8>}, {pipeline_mode = #tpu.pipeline_mode<synchronous>, transform_indices = @transform_9, window_bounds = array<i64: 1, 8>}, {transform_indices = @transform_10, window_bounds = array<i64: 1, 128, 8>}]} {
    %cst = arith.constant 0.000000e+00 : f32
    %0 = vector.broadcast %cst : f32 to vector<12x18x4xf32>
    %c0 = arith.constant 0 : index
    %c0_0 = arith.constant 0 : index
    %c0_1 = arith.constant 0 : index
    %1 = vector.load %arg13[%c0, %c0_0, %c0_1] : memref<12x18x4xf32, #tpu.memory_space<vmem>>, vector<12x18x4xf32>
    tpu.vector_store %arg13[%c0, %c0_0, %c0_1], %0 {strides = array<i32>} : memref<12x18x4xf32, #tpu.memory_space<vmem>>, vector<12x18x4xf32>,
    %c0_i32 = arith.constant 0 : i32
    %2 = arith.cmpi eq, %arg1, %c0_i32 : i32
    %3 = arith.extui %2 : i1 to i32
    %c0_i32_2 = arith.constant 0 : i32
    %4 = arith.cmpi ne, %3, %c0_i32_2 : i32
    scf.if %4 {
      %c0_127 = arith.constant 0 : index
      %c0_128 = arith.constant 0 : index
      %c0_129 = arith.constant 0 : index
      %c0_130 = arith.constant 0 : index
      %116 = vector.load %arg2[%c0_127, %c0_128, %c0_129, %c0_130] : memref<1x16x16x4xf32, #tpu.memory_space<vmem>>, vector<1x10x16x4xf32>
      %117 = vector.shape_cast %116 : vector<1x10x16x4xf32> to vector<10x16x4xf32>
      %c2_131 = arith.constant 2 : index
      %c1_132 = arith.constant 1 : index
      %c0_133 = arith.constant 0 : index
      %118 = vector.load %arg13[%c2_131, %c1_132, %c0_133] : memref<12x18x4xf32, #tpu.memory_space<vmem>>, vector<10x16x4xf32>
      tpu.vector_store %arg13[%c2_131, %c1_132, %c0_133], %117 {strides = array<i32>} : memref<12x18x4xf32, #tpu.memory_space<vmem>>, vector<10x16x4xf32>,
    } else {
    }
    %c0_i32_3 = arith.constant 0 : i32
    %5 = arith.cmpi sgt, %arg1, %c0_i32_3 : i32
    %c1_i32 = arith.constant 1 : i32
    %6 = arith.cmpi slt, %arg1, %c1_i32 : i32
    %7 = arith.andi %5, %6 : i1
    %8 = arith.extui %7 : i1 to i32
    %c0_i32_4 = arith.constant 0 : i32
    %9 = arith.cmpi ne, %8, %c0_i32_4 : i32
    scf.if %9 {
      %c8_i32_127 = arith.constant 8 : i32
      %116 = arith.muli %arg1, %c8_i32_127 : i32
      %c2_i32 = arith.constant 2 : i32
      %117 = arith.subi %116, %c2_i32 : i32
      %c0_128 = arith.constant 0 : index
      %118 = arith.index_cast %117 : i32 to index
      %c0_129 = arith.constant 0 : index
      %c0_130 = arith.constant 0 : index
      %119 = vector.load %arg2[%c0_128, %118, %c0_129, %c0_130] : memref<1x16x16x4xf32, #tpu.memory_space<vmem>>, vector<1x12x16x4xf32>
      %120 = vector.shape_cast %119 : vector<1x12x16x4xf32> to vector<12x16x4xf32>
      %c0_131 = arith.constant 0 : index
      %c1_132 = arith.constant 1 : index
      %c0_133 = arith.constant 0 : index
      %121 = vector.load %arg13[%c0_131, %c1_132, %c0_133] : memref<12x18x4xf32, #tpu.memory_space<vmem>>, vector<12x16x4xf32>
      tpu.vector_store %arg13[%c0_131, %c1_132, %c0_133], %120 {strides = array<i32>} : memref<12x18x4xf32, #tpu.memory_space<vmem>>, vector<12x16x4xf32>,
    } else {
    }
    %c1_i32_5 = arith.constant 1 : i32
    %10 = arith.cmpi eq, %arg1, %c1_i32_5 : i32
    %11 = arith.extui %10 : i1 to i32
    %c0_i32_6 = arith.constant 0 : i32
    %12 = arith.cmpi ne, %11, %c0_i32_6 : i32
    scf.if %12 {
      %c8_i32_127 = arith.constant 8 : i32
      %116 = arith.muli %arg1, %c8_i32_127 : i32
      %c2_i32 = arith.constant 2 : i32
      %117 = arith.subi %116, %c2_i32 : i32
      %c0_128 = arith.constant 0 : index
      %118 = arith.index_cast %117 : i32 to index
      %c0_129 = arith.constant 0 : index
      %c0_130 = arith.constant 0 : index
      %119 = vector.load %arg2[%c0_128, %118, %c0_129, %c0_130] : memref<1x16x16x4xf32, #tpu.memory_space<vmem>>, vector<1x10x16x4xf32>
      %120 = vector.shape_cast %119 : vector<1x10x16x4xf32> to vector<10x16x4xf32>
      %c0_131 = arith.constant 0 : index
      %c1_132 = arith.constant 1 : index
      %c0_133 = arith.constant 0 : index
      %121 = vector.load %arg13[%c0_131, %c1_132, %c0_133] : memref<12x18x4xf32, #tpu.memory_space<vmem>>, vector<10x16x4xf32>
      tpu.vector_store %arg13[%c0_131, %c1_132, %c0_133], %120 {strides = array<i32>} : memref<12x18x4xf32, #tpu.memory_space<vmem>>, vector<10x16x4xf32>,
    } else {
    }
    %c0_7 = arith.constant 0 : index
    %c0_8 = arith.constant 0 : index
    %c0_9 = arith.constant 0 : index
    %13 = vector.load %arg13[%c0_7, %c0_8, %c0_9] : memref<12x18x4xf32, #tpu.memory_space<vmem>>, vector<10x16x4xf32>
    %14 = vector.shape_cast %13 : vector<10x16x4xf32> to vector<160x4xf32>
    %c0_10 = arith.constant 0 : index
    %c0_11 = arith.constant 0 : index
    %15 = vector.load %arg15[%c0_10, %c0_11] : memref<160x36xf32, #tpu.memory_space<vmem>>, vector<160x4xf32>
    tpu.vector_store %arg15[%c0_10, %c0_11], %14 {strides = array<i32>} : memref<160x36xf32, #tpu.memory_space<vmem>>, vector<160x4xf32>,
    %c0_12 = arith.constant 0 : index
    %c1 = arith.constant 1 : index
    %c0_13 = arith.constant 0 : index
    %16 = vector.load %arg13[%c0_12, %c1, %c0_13] : memref<12x18x4xf32, #tpu.memory_space<vmem>>, vector<10x16x4xf32>
    %17 = vector.shape_cast %16 : vector<10x16x4xf32> to vector<160x4xf32>
    %c0_14 = arith.constant 0 : index
    %c4 = arith.constant 4 : index
    %18 = vector.load %arg15[%c0_14, %c4] : memref<160x36xf32, #tpu.memory_space<vmem>>, vector<160x4xf32>
    tpu.vector_store %arg15[%c0_14, %c4], %17 {strides = array<i32>} : memref<160x36xf32, #tpu.memory_space<vmem>>, vector<160x4xf32>,
    %c0_15 = arith.constant 0 : index
    %c2 = arith.constant 2 : index
    %c0_16 = arith.constant 0 : index
    %19 = vector.load %arg13[%c0_15, %c2, %c0_16] : memref<12x18x4xf32, #tpu.memory_space<vmem>>, vector<10x16x4xf32>
    %20 = vector.shape_cast %19 : vector<10x16x4xf32> to vector<160x4xf32>
    %c0_17 = arith.constant 0 : index
    %c8 = arith.constant 8 : index
    %21 = vector.load %arg15[%c0_17, %c8] : memref<160x36xf32, #tpu.memory_space<vmem>>, vector<160x4xf32>
    tpu.vector_store %arg15[%c0_17, %c8], %20 {strides = array<i32>} : memref<160x36xf32, #tpu.memory_space<vmem>>, vector<160x4xf32>,
    %c1_18 = arith.constant 1 : index
    %c0_19 = arith.constant 0 : index
    %c0_20 = arith.constant 0 : index
    %22 = vector.load %arg13[%c1_18, %c0_19, %c0_20] : memref<12x18x4xf32, #tpu.memory_space<vmem>>, vector<10x16x4xf32>
    %23 = vector.shape_cast %22 : vector<10x16x4xf32> to vector<160x4xf32>
    %c0_21 = arith.constant 0 : index
    %c12 = arith.constant 12 : index
    %24 = vector.load %arg15[%c0_21, %c12] : memref<160x36xf32, #tpu.memory_space<vmem>>, vector<160x4xf32>
    tpu.vector_store %arg15[%c0_21, %c12], %23 {strides = array<i32>} : memref<160x36xf32, #tpu.memory_space<vmem>>, vector<160x4xf32>,
    %c1_22 = arith.constant 1 : index
    %c1_23 = arith.constant 1 : index
    %c0_24 = arith.constant 0 : index
    %25 = vector.load %arg13[%c1_22, %c1_23, %c0_24] : memref<12x18x4xf32, #tpu.memory_space<vmem>>, vector<10x16x4xf32>
    %26 = vector.shape_cast %25 : vector<10x16x4xf32> to vector<160x4xf32>
    %c0_25 = arith.constant 0 : index
    %c16 = arith.constant 16 : index
    %27 = vector.load %arg15[%c0_25, %c16] : memref<160x36xf32, #tpu.memory_space<vmem>>, vector<160x4xf32>
    tpu.vector_store %arg15[%c0_25, %c16], %26 {strides = array<i32>} : memref<160x36xf32, #tpu.memory_space<vmem>>, vector<160x4xf32>,
    %c1_26 = arith.constant 1 : index
    %c2_27 = arith.constant 2 : index
    %c0_28 = arith.constant 0 : index
    %28 = vector.load %arg13[%c1_26, %c2_27, %c0_28] : memref<12x18x4xf32, #tpu.memory_space<vmem>>, vector<10x16x4xf32>
    %29 = vector.shape_cast %28 : vector<10x16x4xf32> to vector<160x4xf32>
    %c0_29 = arith.constant 0 : index
    %c20 = arith.constant 20 : index
    %30 = vector.load %arg15[%c0_29, %c20] : memref<160x36xf32, #tpu.memory_space<vmem>>, vector<160x4xf32>
    tpu.vector_store %arg15[%c0_29, %c20], %29 {strides = array<i32>} : memref<160x36xf32, #tpu.memory_space<vmem>>, vector<160x4xf32>,
    %c2_30 = arith.constant 2 : index
    %c0_31 = arith.constant 0 : index
    %c0_32 = arith.constant 0 : index
    %31 = vector.load %arg13[%c2_30, %c0_31, %c0_32] : memref<12x18x4xf32, #tpu.memory_space<vmem>>, vector<10x16x4xf32>
    %32 = vector.shape_cast %31 : vector<10x16x4xf32> to vector<160x4xf32>
    %c0_33 = arith.constant 0 : index
    %c24 = arith.constant 24 : index
    %33 = vector.load %arg15[%c0_33, %c24] : memref<160x36xf32, #tpu.memory_space<vmem>>, vector<160x4xf32>
    tpu.vector_store %arg15[%c0_33, %c24], %32 {strides = array<i32>} : memref<160x36xf32, #tpu.memory_space<vmem>>, vector<160x4xf32>,
    %c2_34 = arith.constant 2 : index
    %c1_35 = arith.constant 1 : index
    %c0_36 = arith.constant 0 : index
    %34 = vector.load %arg13[%c2_34, %c1_35, %c0_36] : memref<12x18x4xf32, #tpu.memory_space<vmem>>, vector<10x16x4xf32>
    %35 = vector.shape_cast %34 : vector<10x16x4xf32> to vector<160x4xf32>
    %c0_37 = arith.constant 0 : index
    %c28 = arith.constant 28 : index
    %36 = vector.load %arg15[%c0_37, %c28] : memref<160x36xf32, #tpu.memory_space<vmem>>, vector<160x4xf32>
    tpu.vector_store %arg15[%c0_37, %c28], %35 {strides = array<i32>} : memref<160x36xf32, #tpu.memory_space<vmem>>, vector<160x4xf32>,
    %c2_38 = arith.constant 2 : index
    %c2_39 = arith.constant 2 : index
    %c0_40 = arith.constant 0 : index
    %37 = vector.load %arg13[%c2_38, %c2_39, %c0_40] : memref<12x18x4xf32, #tpu.memory_space<vmem>>, vector<10x16x4xf32>
    %38 = vector.shape_cast %37 : vector<10x16x4xf32> to vector<160x4xf32>
    %c0_41 = arith.constant 0 : index
    %c32 = arith.constant 32 : index
    %39 = vector.load %arg15[%c0_41, %c32] : memref<160x36xf32, #tpu.memory_space<vmem>>, vector<160x4xf32>
    tpu.vector_store %arg15[%c0_41, %c32], %38 {strides = array<i32>} : memref<160x36xf32, #tpu.memory_space<vmem>>, vector<160x4xf32>,
    %c0_42 = arith.constant 0 : index
    %c0_43 = arith.constant 0 : index
    %40 = vector.load %arg15[%c0_42, %c0_43] : memref<160x36xf32, #tpu.memory_space<vmem>>, vector<160x36xf32>
    %c0_44 = arith.constant 0 : index
    %c0_45 = arith.constant 0 : index
    %41 = vector.load %arg3[%c0_44, %c0_45] : memref<36x8xf32, #tpu.memory_space<vmem>>, vector<36x8xf32>
    %cst_46 = arith.constant dense<0.000000e+00> : vector<160x8xf32>
    %42 = tpu.matmul %40, %41, %cst_46 {dimension_numbers = #tpu.dot_dimension_numbers<[1], [0], [0], [1], [0, 0, 1, 1], [], []>} : vector<160x36xf32>, vector<36x8xf32>, vector<160x8xf32> -> vector<160x8xf32>
    %c0_47 = arith.constant 0 : index
    %c0_48 = arith.constant 0 : index
    %43 = vector.load %arg4[%c0_47, %c0_48] : memref<1x8xf32, #tpu.memory_space<vmem>>, vector<1x8xf32>
    %44 = vector.broadcast %43 : vector<1x8xf32> to vector<160x8xf32>
    %45 = arith.mulf %42, %44 : vector<160x8xf32>
    %c0_49 = arith.constant 0 : index
    %c0_50 = arith.constant 0 : index
    %46 = vector.load %arg5[%c0_49, %c0_50] : memref<1x8xf32, #tpu.memory_space<vmem>>, vector<1x8xf32>
    %47 = vector.broadcast %46 : vector<1x8xf32> to vector<160x8xf32>
    %48 = arith.addf %45, %47 : vector<160x8xf32>
    %cst_51 = arith.constant 0.000000e+00 : f32
    %49 = vector.broadcast %cst_51 : f32 to vector<160x8xf32>
    %50 = arith.maximumf %48, %49 : vector<160x8xf32>
    %c8_i32 = arith.constant 8 : i32
    %51 = arith.muli %arg1, %c8_i32 : i32
    %c0_52 = arith.constant 0 : index
    %52 = arith.index_cast %51 : i32 to index
    %c0_53 = arith.constant 0 : index
    %c0_54 = arith.constant 0 : index
    %53 = vector.load %arg2[%c0_52, %52, %c0_53, %c0_54] : memref<1x16x16x4xf32, #tpu.memory_space<vmem>>, vector<1x8x16x4xf32>
    %54 = vector.shape_cast %53 : vector<1x8x16x4xf32> to vector<8x16x4xf32>
    %55 = vector.shape_cast %54 : vector<8x16x4xf32> to vector<128x4xf32>
    %c0_55 = arith.constant 0 : index
    %c0_56 = arith.constant 0 : index
    %56 = vector.load %arg9[%c0_55, %c0_56] : memref<4x8xf32, #tpu.memory_space<vmem>>, vector<4x8xf32>
    %cst_57 = arith.constant dense<0.000000e+00> : vector<128x8xf32>
    %57 = tpu.matmul %55, %56, %cst_57 {dimension_numbers = #tpu.dot_dimension_numbers<[1], [0], [0], [1], [0, 0, 1, 1], [], []>} : vector<128x4xf32>, vector<4x8xf32>, vector<128x8xf32> -> vector<128x8xf32>
    %c0_58 = arith.constant 0 : index
    %c0_59 = arith.constant 0 : index
    %58 = vector.load %arg10[%c0_58, %c0_59] : memref<1x8xf32, #tpu.memory_space<vmem>>, vector<1x8xf32>
    %59 = vector.broadcast %58 : vector<1x8xf32> to vector<128x8xf32>
    %60 = arith.mulf %57, %59 : vector<128x8xf32>
    %c0_60 = arith.constant 0 : index
    %c0_61 = arith.constant 0 : index
    %61 = vector.load %arg11[%c0_60, %c0_61] : memref<1x8xf32, #tpu.memory_space<vmem>>, vector<1x8xf32>
    %62 = vector.broadcast %61 : vector<1x8xf32> to vector<128x8xf32>
    %63 = arith.addf %60, %62 : vector<128x8xf32>
    %cst_62 = arith.constant 0.000000e+00 : f32
    %64 = vector.broadcast %cst_62 : f32 to vector<10x18x8xf32>
    %c0_63 = arith.constant 0 : index
    %c0_64 = arith.constant 0 : index
    %c0_65 = arith.constant 0 : index
    %65 = vector.load %arg14[%c0_63, %c0_64, %c0_65] : memref<10x18x8xf32, #tpu.memory_space<vmem>>, vector<10x18x8xf32>
    tpu.vector_store %arg14[%c0_63, %c0_64, %c0_65], %64 {strides = array<i32>} : memref<10x18x8xf32, #tpu.memory_space<vmem>>, vector<10x18x8xf32>,
    %66 = vector.shape_cast %50 : vector<160x8xf32> to vector<10x16x8xf32>
    %c0_66 = arith.constant 0 : index
    %c1_67 = arith.constant 1 : index
    %c0_68 = arith.constant 0 : index
    %67 = vector.load %arg14[%c0_66, %c1_67, %c0_68] : memref<10x18x8xf32, #tpu.memory_space<vmem>>, vector<10x16x8xf32>
    tpu.vector_store %arg14[%c0_66, %c1_67, %c0_68], %66 {strides = array<i32>} : memref<10x18x8xf32, #tpu.memory_space<vmem>>, vector<10x16x8xf32>,
    %c0_i32_69 = arith.constant 0 : i32
    %68 = arith.cmpi eq, %arg1, %c0_i32_69 : i32
    %69 = arith.extui %68 : i1 to i32
    %c0_i32_70 = arith.constant 0 : i32
    %70 = arith.cmpi ne, %69, %c0_i32_70 : i32
    scf.if %70 {
      %cst_127 = arith.constant 0.000000e+00 : f32
      %116 = vector.broadcast %cst_127 : f32 to vector<1x18x8xf32>
      %c0_128 = arith.constant 0 : index
      %c0_129 = arith.constant 0 : index
      %c0_130 = arith.constant 0 : index
      %117 = vector.load %arg14[%c0_128, %c0_129, %c0_130] : memref<10x18x8xf32, #tpu.memory_space<vmem>>, vector<1x18x8xf32>
      tpu.vector_store %arg14[%c0_128, %c0_129, %c0_130], %116 {strides = array<i32>} : memref<10x18x8xf32, #tpu.memory_space<vmem>>, vector<1x18x8xf32>,
    } else {
    }
    %c1_i32_71 = arith.constant 1 : i32
    %71 = arith.cmpi eq, %arg1, %c1_i32_71 : i32
    %72 = arith.extui %71 : i1 to i32
    %c0_i32_72 = arith.constant 0 : i32
    %73 = arith.cmpi ne, %72, %c0_i32_72 : i32
    scf.if %73 {
      %cst_127 = arith.constant 0.000000e+00 : f32
      %116 = vector.broadcast %cst_127 : f32 to vector<1x18x8xf32>
      %c9 = arith.constant 9 : index
      %c0_128 = arith.constant 0 : index
      %c0_129 = arith.constant 0 : index
      %117 = vector.load %arg14[%c9, %c0_128, %c0_129] : memref<10x18x8xf32, #tpu.memory_space<vmem>>, vector<1x18x8xf32>
      tpu.vector_store %arg14[%c9, %c0_128, %c0_129], %116 {strides = array<i32>} : memref<10x18x8xf32, #tpu.memory_space<vmem>>, vector<1x18x8xf32>,
    } else {
    }
    %c0_73 = arith.constant 0 : index
    %c0_74 = arith.constant 0 : index
    %c0_75 = arith.constant 0 : index
    %74 = vector.load %arg14[%c0_73, %c0_74, %c0_75] : memref<10x18x8xf32, #tpu.memory_space<vmem>>, vector<8x16x8xf32>
    %75 = vector.shape_cast %74 : vector<8x16x8xf32> to vector<128x8xf32>
    %c0_76 = arith.constant 0 : index
    %c0_77 = arith.constant 0 : index
    %76 = vector.load %arg16[%c0_76, %c0_77] : memref<128x72xf32, #tpu.memory_space<vmem>>, vector<128x8xf32>
    tpu.vector_store %arg16[%c0_76, %c0_77], %75 {strides = array<i32>} : memref<128x72xf32, #tpu.memory_space<vmem>>, vector<128x8xf32>,
    %c0_78 = arith.constant 0 : index
    %c1_79 = arith.constant 1 : index
    %c0_80 = arith.constant 0 : index
    %77 = vector.load %arg14[%c0_78, %c1_79, %c0_80] : memref<10x18x8xf32, #tpu.memory_space<vmem>>, vector<8x16x8xf32>
    %78 = vector.shape_cast %77 : vector<8x16x8xf32> to vector<128x8xf32>
    %c0_81 = arith.constant 0 : index
    %c8_82 = arith.constant 8 : index
    %79 = vector.load %arg16[%c0_81, %c8_82] : memref<128x72xf32, #tpu.memory_space<vmem>>, vector<128x8xf32>
    tpu.vector_store %arg16[%c0_81, %c8_82], %78 {strides = array<i32>} : memref<128x72xf32, #tpu.memory_space<vmem>>, vector<128x8xf32>,
    %c0_83 = arith.constant 0 : index
    %c2_84 = arith.constant 2 : index
    %c0_85 = arith.constant 0 : index
    %80 = vector.load %arg14[%c0_83, %c2_84, %c0_85] : memref<10x18x8xf32, #tpu.memory_space<vmem>>, vector<8x16x8xf32>
    %81 = vector.shape_cast %80 : vector<8x16x8xf32> to vector<128x8xf32>
    %c0_86 = arith.constant 0 : index
    %c16_87 = arith.constant 16 : index
    %82 = vector.load %arg16[%c0_86, %c16_87] : memref<128x72xf32, #tpu.memory_space<vmem>>, vector<128x8xf32>
    tpu.vector_store %arg16[%c0_86, %c16_87], %81 {strides = array<i32>} : memref<128x72xf32, #tpu.memory_space<vmem>>, vector<128x8xf32>,
    %c1_88 = arith.constant 1 : index
    %c0_89 = arith.constant 0 : index
    %c0_90 = arith.constant 0 : index
    %83 = vector.load %arg14[%c1_88, %c0_89, %c0_90] : memref<10x18x8xf32, #tpu.memory_space<vmem>>, vector<8x16x8xf32>
    %84 = vector.shape_cast %83 : vector<8x16x8xf32> to vector<128x8xf32>
    %c0_91 = arith.constant 0 : index
    %c24_92 = arith.constant 24 : index
    %85 = vector.load %arg16[%c0_91, %c24_92] : memref<128x72xf32, #tpu.memory_space<vmem>>, vector<128x8xf32>
    tpu.vector_store %arg16[%c0_91, %c24_92], %84 {strides = array<i32>} : memref<128x72xf32, #tpu.memory_space<vmem>>, vector<128x8xf32>,
    %c1_93 = arith.constant 1 : index
    %c1_94 = arith.constant 1 : index
    %c0_95 = arith.constant 0 : index
    %86 = vector.load %arg14[%c1_93, %c1_94, %c0_95] : memref<10x18x8xf32, #tpu.memory_space<vmem>>, vector<8x16x8xf32>
    %87 = vector.shape_cast %86 : vector<8x16x8xf32> to vector<128x8xf32>
    %c0_96 = arith.constant 0 : index
    %c32_97 = arith.constant 32 : index
    %88 = vector.load %arg16[%c0_96, %c32_97] : memref<128x72xf32, #tpu.memory_space<vmem>>, vector<128x8xf32>
    tpu.vector_store %arg16[%c0_96, %c32_97], %87 {strides = array<i32>} : memref<128x72xf32, #tpu.memory_space<vmem>>, vector<128x8xf32>,
    %c1_98 = arith.constant 1 : index
    %c2_99 = arith.constant 2 : index
    %c0_100 = arith.constant 0 : index
    %89 = vector.load %arg14[%c1_98, %c2_99, %c0_100] : memref<10x18x8xf32, #tpu.memory_space<vmem>>, vector<8x16x8xf32>
    %90 = vector.shape_cast %89 : vector<8x16x8xf32> to vector<128x8xf32>
    %c0_101 = arith.constant 0 : index
    %c40 = arith.constant 40 : index
    %91 = vector.load %arg16[%c0_101, %c40] : memref<128x72xf32, #tpu.memory_space<vmem>>, vector<128x8xf32>
    tpu.vector_store %arg16[%c0_101, %c40], %90 {strides = array<i32>} : memref<128x72xf32, #tpu.memory_space<vmem>>, vector<128x8xf32>,
    %c2_102 = arith.constant 2 : index
    %c0_103 = arith.constant 0 : index
    %c0_104 = arith.constant 0 : index
    %92 = vector.load %arg14[%c2_102, %c0_103, %c0_104] : memref<10x18x8xf32, #tpu.memory_space<vmem>>, vector<8x16x8xf32>
    %93 = vector.shape_cast %92 : vector<8x16x8xf32> to vector<128x8xf32>
    %c0_105 = arith.constant 0 : index
    %c48 = arith.constant 48 : index
    %94 = vector.load %arg16[%c0_105, %c48] : memref<128x72xf32, #tpu.memory_space<vmem>>, vector<128x8xf32>
    tpu.vector_store %arg16[%c0_105, %c48], %93 {strides = array<i32>} : memref<128x72xf32, #tpu.memory_space<vmem>>, vector<128x8xf32>,
    %c2_106 = arith.constant 2 : index
    %c1_107 = arith.constant 1 : index
    %c0_108 = arith.constant 0 : index
    %95 = vector.load %arg14[%c2_106, %c1_107, %c0_108] : memref<10x18x8xf32, #tpu.memory_space<vmem>>, vector<8x16x8xf32>
    %96 = vector.shape_cast %95 : vector<8x16x8xf32> to vector<128x8xf32>
    %c0_109 = arith.constant 0 : index
    %c56 = arith.constant 56 : index
    %97 = vector.load %arg16[%c0_109, %c56] : memref<128x72xf32, #tpu.memory_space<vmem>>, vector<128x8xf32>
    tpu.vector_store %arg16[%c0_109, %c56], %96 {strides = array<i32>} : memref<128x72xf32, #tpu.memory_space<vmem>>, vector<128x8xf32>,
    %c2_110 = arith.constant 2 : index
    %c2_111 = arith.constant 2 : index
    %c0_112 = arith.constant 0 : index
    %98 = vector.load %arg14[%c2_110, %c2_111, %c0_112] : memref<10x18x8xf32, #tpu.memory_space<vmem>>, vector<8x16x8xf32>
    %99 = vector.shape_cast %98 : vector<8x16x8xf32> to vector<128x8xf32>
    %c0_113 = arith.constant 0 : index
    %c64 = arith.constant 64 : index
    %100 = vector.load %arg16[%c0_113, %c64] : memref<128x72xf32, #tpu.memory_space<vmem>>, vector<128x8xf32>
    tpu.vector_store %arg16[%c0_113, %c64], %99 {strides = array<i32>} : memref<128x72xf32, #tpu.memory_space<vmem>>, vector<128x8xf32>,
    %c0_114 = arith.constant 0 : index
    %c0_115 = arith.constant 0 : index
    %101 = vector.load %arg16[%c0_114, %c0_115] : memref<128x72xf32, #tpu.memory_space<vmem>>, vector<128x72xf32>
    %c0_116 = arith.constant 0 : index
    %c0_117 = arith.constant 0 : index
    %102 = vector.load %arg6[%c0_116, %c0_117] : memref<72x8xf32, #tpu.memory_space<vmem>>, vector<72x8xf32>
    %cst_118 = arith.constant dense<0.000000e+00> : vector<128x8xf32>
    %103 = tpu.matmul %101, %102, %cst_118 {dimension_numbers = #tpu.dot_dimension_numbers<[1], [0], [0], [1], [0, 0, 1, 1], [], []>} : vector<128x72xf32>, vector<72x8xf32>, vector<128x8xf32> -> vector<128x8xf32>
    %c0_119 = arith.constant 0 : index
    %c0_120 = arith.constant 0 : index
    %104 = vector.load %arg7[%c0_119, %c0_120] : memref<1x8xf32, #tpu.memory_space<vmem>>, vector<1x8xf32>
    %105 = vector.broadcast %104 : vector<1x8xf32> to vector<128x8xf32>
    %106 = arith.mulf %103, %105 : vector<128x8xf32>
    %c0_121 = arith.constant 0 : index
    %c0_122 = arith.constant 0 : index
    %107 = vector.load %arg8[%c0_121, %c0_122] : memref<1x8xf32, #tpu.memory_space<vmem>>, vector<1x8xf32>
    %108 = vector.broadcast %107 : vector<1x8xf32> to vector<128x8xf32>
    %109 = arith.addf %106, %108 : vector<128x8xf32>
    %110 = arith.addf %109, %63 : vector<128x8xf32>
    %cst_123 = arith.constant 0.000000e+00 : f32
    %111 = vector.broadcast %cst_123 : f32 to vector<128x8xf32>
    %112 = arith.maximumf %110, %111 : vector<128x8xf32>
    %c0_124 = arith.constant 0 : index
    %c0_125 = arith.constant 0 : index
    %c0_126 = arith.constant 0 : index
    %113 = vector.load %arg12[%c0_124, %c0_125, %c0_126] : memref<1x128x8xf32, #tpu.memory_space<vmem>>, vector<1x128x8xf32>
    %114 = vector.shape_cast %113 : vector<1x128x8xf32> to vector<128x8xf32>
    %115 = vector.shape_cast %112 : vector<128x8xf32> to vector<1x128x8xf32>
    tpu.vector_store %arg12[%c0_124, %c0_125, %c0_126], %115 {strides = array<i32>} : memref<1x128x8xf32, #tpu.memory_space<vmem>>, vector<1x128x8xf32>,
    return
  }
  func.func @transform_0(%arg0: i32, %arg1: i32) -> (i32, i32, i32, i32) {
    %c0_i32 = arith.constant 0 : i32
    %c0_i32_0 = arith.constant 0 : i32
    %c0_i32_1 = arith.constant 0 : i32
    %c0_i32_2 = arith.constant 0 : i32
    return %arg0, %c0_i32, %c0_i32_0, %c0_i32_1 : i32, i32, i32, i32
  }
  func.func @transform_1(%arg0: i32, %arg1: i32) -> (i32, i32) {
    %c0_i32 = arith.constant 0 : i32
    %c0_i32_0 = arith.constant 0 : i32
    %c0_i32_1 = arith.constant 0 : i32
    return %c0_i32, %c0_i32_0 : i32, i32
  }
  func.func @transform_2(%arg0: i32, %arg1: i32) -> (i32, i32) {
    %c0_i32 = arith.constant 0 : i32
    %c0_i32_0 = arith.constant 0 : i32
    %c0_i32_1 = arith.constant 0 : i32
    return %c0_i32, %c0_i32_0 : i32, i32
  }
  func.func @transform_3(%arg0: i32, %arg1: i32) -> (i32, i32) {
    %c0_i32 = arith.constant 0 : i32
    %c0_i32_0 = arith.constant 0 : i32
    %c0_i32_1 = arith.constant 0 : i32
    return %c0_i32, %c0_i32_0 : i32, i32
  }
  func.func @transform_4(%arg0: i32, %arg1: i32) -> (i32, i32) {
    %c0_i32 = arith.constant 0 : i32
    %c0_i32_0 = arith.constant 0 : i32
    %c0_i32_1 = arith.constant 0 : i32
    return %c0_i32, %c0_i32_0 : i32, i32
  }
  func.func @transform_5(%arg0: i32, %arg1: i32) -> (i32, i32) {
    %c0_i32 = arith.constant 0 : i32
    %c0_i32_0 = arith.constant 0 : i32
    %c0_i32_1 = arith.constant 0 : i32
    return %c0_i32, %c0_i32_0 : i32, i32
  }
  func.func @transform_6(%arg0: i32, %arg1: i32) -> (i32, i32) {
    %c0_i32 = arith.constant 0 : i32
    %c0_i32_0 = arith.constant 0 : i32
    %c0_i32_1 = arith.constant 0 : i32
    return %c0_i32, %c0_i32_0 : i32, i32
  }
  func.func @transform_7(%arg0: i32, %arg1: i32) -> (i32, i32) {
    %c0_i32 = arith.constant 0 : i32
    %c0_i32_0 = arith.constant 0 : i32
    %c0_i32_1 = arith.constant 0 : i32
    return %c0_i32, %c0_i32_0 : i32, i32
  }
  func.func @transform_8(%arg0: i32, %arg1: i32) -> (i32, i32) {
    %c0_i32 = arith.constant 0 : i32
    %c0_i32_0 = arith.constant 0 : i32
    %c0_i32_1 = arith.constant 0 : i32
    return %c0_i32, %c0_i32_0 : i32, i32
  }
  func.func @transform_9(%arg0: i32, %arg1: i32) -> (i32, i32) {
    %c0_i32 = arith.constant 0 : i32
    %c0_i32_0 = arith.constant 0 : i32
    %c0_i32_1 = arith.constant 0 : i32
    return %c0_i32, %c0_i32_0 : i32, i32
  }
  func.func @transform_10(%arg0: i32, %arg1: i32) -> (i32, i32, i32) {
    %c0_i32 = arith.constant 0 : i32
    %c0_i32_0 = arith.constant 0 : i32
    return %arg0, %arg1, %c0_i32 : i32, i32, i32
  }
}

module attributes {stable_mosaic.version = 11 : i64} {
  func.func @_resblock_kernel(%arg0: i32, %arg1: i32, %arg2: memref<1x16x16x4xf32, #tpu.memory_space<vmem>>, %arg3: memref<36x8xf32, #tpu.memory_space<vmem>>, %arg4: memref<1x8xf32, #tpu.memory_space<vmem>>, %arg5: memref<1x8xf32, #tpu.memory_space<vmem>>, %arg6: memref<72x8xf32, #tpu.memory_space<vmem>>, %arg7: memref<1x8xf32, #tpu.memory_space<vmem>>, %arg8: memref<1x8xf32, #tpu.memory_space<vmem>>, %arg9: memref<4x8xf32, #tpu.memory_space<vmem>>, %arg10: memref<1x8xf32, #tpu.memory_space<vmem>>, %arg11: memref<1x8xf32, #tpu.memory_space<vmem>>, %arg12: memref<1x128x8xf32, #tpu.memory_space<vmem>>, %arg13: memref<12x18x4xf32, #tpu.memory_space<vmem>>, %arg14: memref<10x18x8xf32, #tpu.memory_space<vmem>>, %arg15: memref<160x36xf32, #tpu.memory_space<vmem>>, %arg16: memref<128x72xf32, #tpu.memory_space<vmem>>) attributes {dimension_semantics = [#tpu.dimension_semantics<parallel>, #tpu.dimension_semantics<parallel>], iteration_bounds = array<i64: 2, 2>, scalar_prefetch = 0 : i64, scratch_operands = 4 : i64, tpu.core_type = #tpu.core_type<tc>, window_params = [{transform_indices = @transform_0, window_bounds = array<i64: 1, 16, 16, 4>}, {pipeline_mode = #tpu.pipeline_mode<synchronous>, transform_indices = @transform_1, window_bounds = array<i64: 36, 8>}, {pipeline_mode = #tpu.pipeline_mode<synchronous>, transform_indices = @transform_2, window_bounds = array<i64: 1, 8>}, {pipeline_mode = #tpu.pipeline_mode<synchronous>, transform_indices = @transform_3, window_bounds = array<i64: 1, 8>}, {pipeline_mode = #tpu.pipeline_mode<synchronous>, transform_indices = @transform_4, window_bounds = array<i64: 72, 8>}, {pipeline_mode = #tpu.pipeline_mode<synchronous>, transform_indices = @transform_5, window_bounds = array<i64: 1, 8>}, {pipeline_mode = #tpu.pipeline_mode<synchronous>, transform_indices = @transform_6, window_bounds = array<i64: 1, 8>}, {pipeline_mode = #tpu.pipeline_mode<synchronous>, transform_indices = @transform_7, window_bounds = array<i64: 4, 8>}, {pipeline_mode = #tpu.pipeline_mode<synchronous>, transform_indices = @transform_8, window_bounds = array<i64: 1, 8>}, {pipeline_mode = #tpu.pipeline_mode<synchronous>, transform_indices = @transform_9, window_bounds = array<i64: 1, 8>}, {transform_indices = @transform_10, window_bounds = array<i64: 1, 128, 8>}]} {
    %cst = arith.constant 0.000000e+00 : f32
    %0 = vector.broadcast %cst : f32 to vector<12x18x4xf32>
    %c0 = arith.constant 0 : index
    %c0_0 = arith.constant 0 : index
    %c0_1 = arith.constant 0 : index
    %1 = vector.load %arg13[%c0, %c0_0, %c0_1] : memref<12x18x4xf32, #tpu.memory_space<vmem>>, vector<12x18x4xf32>
    tpu.vector_store %arg13[%c0, %c0_0, %c0_1], %0 {strides = array<i32>} : memref<12x18x4xf32, #tpu.memory_space<vmem>>, vector<12x18x4xf32>,
    %c0_i32 = arith.constant 0 : i32
    %2 = arith.cmpi eq, %arg1, %c0_i32 : i32
    %3 = arith.extui %2 : i1 to i32
    %c0_i32_2 = arith.constant 0 : i32
    %4 = arith.cmpi ne, %3, %c0_i32_2 : i32
    scf.if %4 {
      %c0_127 = arith.constant 0 : index
      %c0_128 = arith.constant 0 : index
      %c0_129 = arith.constant 0 : index
      %c0_130 = arith.constant 0 : index
      %116 = vector.load %arg2[%c0_127, %c0_128, %c0_129, %c0_130] : memref<1x16x16x4xf32, #tpu.memory_space<vmem>>, vector<1x10x16x4xf32>
      %117 = vector.shape_cast %116 : vector<1x10x16x4xf32> to vector<10x16x4xf32>
      %c2_131 = arith.constant 2 : index
      %c1_132 = arith.constant 1 : index
      %c0_133 = arith.constant 0 : index
      %118 = vector.load %arg13[%c2_131, %c1_132, %c0_133] : memref<12x18x4xf32, #tpu.memory_space<vmem>>, vector<10x16x4xf32>
      tpu.vector_store %arg13[%c2_131, %c1_132, %c0_133], %117 {strides = array<i32>} : memref<12x18x4xf32, #tpu.memory_space<vmem>>, vector<10x16x4xf32>,
    } else {
    }
    %c0_i32_3 = arith.constant 0 : i32
    %5 = arith.cmpi sgt, %arg1, %c0_i32_3 : i32
    %c1_i32 = arith.constant 1 : i32
    %6 = arith.cmpi slt, %arg1, %c1_i32 : i32
    %7 = arith.andi %5, %6 : i1
    %8 = arith.extui %7 : i1 to i32
    %c0_i32_4 = arith.constant 0 : i32
    %9 = arith.cmpi ne, %8, %c0_i32_4 : i32
    scf.if %9 {
      %c8_i32_127 = arith.constant 8 : i32
      %116 = arith.muli %arg1, %c8_i32_127 : i32
      %c2_i32 = arith.constant 2 : i32
      %117 = arith.subi %116, %c2_i32 : i32
      %c0_128 = arith.constant 0 : index
      %118 = arith.index_cast %117 : i32 to index
      %c0_129 = arith.constant 0 : index
      %c0_130 = arith.constant 0 : index
      %119 = vector.load %arg2[%c0_128, %118, %c0_129, %c0_130] : memref<1x16x16x4xf32, #tpu.memory_space<vmem>>, vector<1x12x16x4xf32>
      %120 = vector.shape_cast %119 : vector<1x12x16x4xf32> to vector<12x16x4xf32>
      %c0_131 = arith.constant 0 : index
      %c1_132 = arith.constant 1 : index
      %c0_133 = arith.constant 0 : index
      %121 = vector.load %arg13[%c0_131, %c1_132, %c0_133] : memref<12x18x4xf32, #tpu.memory_space<vmem>>, vector<12x16x4xf32>
      tpu.vector_store %arg13[%c0_131, %c1_132, %c0_133], %120 {strides = array<i32>} : memref<12x18x4xf32, #tpu.memory_space<vmem>>, vector<12x16x4xf32>,
    } else {
    }
    %c1_i32_5 = arith.constant 1 : i32
    %10 = arith.cmpi eq, %arg1, %c1_i32_5 : i32
    %11 = arith.extui %10 : i1 to i32
    %c0_i32_6 = arith.constant 0 : i32
    %12 = arith.cmpi ne, %11, %c0_i32_6 : i32
    scf.if %12 {
      %c8_i32_127 = arith.constant 8 : i32
      %116 = arith.muli %arg1, %c8_i32_127 : i32
      %c2_i32 = arith.constant 2 : i32
      %117 = arith.subi %116, %c2_i32 : i32
      %c0_128 = arith.constant 0 : index
      %118 = arith.index_cast %117 : i32 to index
      %c0_129 = arith.constant 0 : index
      %c0_130 = arith.constant 0 : index
      %119 = vector.load %arg2[%c0_128, %118, %c0_129, %c0_130] : memref<1x16x16x4xf32, #tpu.memory_space<vmem>>, vector<1x10x16x4xf32>
      %120 = vector.shape_cast %119 : vector<1x10x16x4xf32> to vector<10x16x4xf32>
      %c0_131 = arith.constant 0 : index
      %c1_132 = arith.constant 1 : index
      %c0_133 = arith.constant 0 : index
      %121 = vector.load %arg13[%c0_131, %c1_132, %c0_133] : memref<12x18x4xf32, #tpu.memory_space<vmem>>, vector<10x16x4xf32>
      tpu.vector_store %arg13[%c0_131, %c1_132, %c0_133], %120 {strides = array<i32>} : memref<12x18x4xf32, #tpu.memory_space<vmem>>, vector<10x16x4xf32>,
    } else {
    }
    %c0_7 = arith.constant 0 : index
    %c0_8 = arith.constant 0 : index
    %c0_9 = arith.constant 0 : index
    %13 = vector.load %arg13[%c0_7, %c0_8, %c0_9] : memref<12x18x4xf32, #tpu.memory_space<vmem>>, vector<10x16x4xf32>
    %14 = vector.shape_cast %13 : vector<10x16x4xf32> to vector<160x4xf32>
    %c0_10 = arith.constant 0 : index
    %c0_11 = arith.constant 0 : index
    %15 = vector.load %arg15[%c0_10, %c0_11] : memref<160x36xf32, #tpu.memory_space<vmem>>, vector<160x4xf32>
    tpu.vector_store %arg15[%c0_10, %c0_11], %14 {strides = array<i32>} : memref<160x36xf32, #tpu.memory_space<vmem>>, vector<160x4xf32>,
    %c0_12 = arith.constant 0 : index
    %c1 = arith.constant 1 : index
    %c0_13 = arith.constant 0 : index
    %16 = vector.load %arg13[%c0_12, %c1, %c0_13] : memref<12x18x4xf32, #tpu.memory_space<vmem>>, vector<10x16x4xf32>
    %17 = vector.shape_cast %16 : vector<10x16x4xf32> to vector<160x4xf32>
    %c0_14 = arith.constant 0 : index
    %c4 = arith.constant 4 : index
    %18 = vector.load %arg15[%c0_14, %c4] : memref<160x36xf32, #tpu.memory_space<vmem>>, vector<160x4xf32>
    tpu.vector_store %arg15[%c0_14, %c4], %17 {strides = array<i32>} : memref<160x36xf32, #tpu.memory_space<vmem>>, vector<160x4xf32>,
    %c0_15 = arith.constant 0 : index
    %c2 = arith.constant 2 : index
    %c0_16 = arith.constant 0 : index
    %19 = vector.load %arg13[%c0_15, %c2, %c0_16] : memref<12x18x4xf32, #tpu.memory_space<vmem>>, vector<10x16x4xf32>
    %20 = vector.shape_cast %19 : vector<10x16x4xf32> to vector<160x4xf32>
    %c0_17 = arith.constant 0 : index
    %c8 = arith.constant 8 : index
    %21 = vector.load %arg15[%c0_17, %c8] : memref<160x36xf32, #tpu.memory_space<vmem>>, vector<160x4xf32>
    tpu.vector_store %arg15[%c0_17, %c8], %20 {strides = array<i32>} : memref<160x36xf32, #tpu.memory_space<vmem>>, vector<160x4xf32>,
    %c1_18 = arith.constant 1 : index
    %c0_19 = arith.constant 0 : index
    %c0_20 = arith.constant 0 : index
    %22 = vector.load %arg13[%c1_18, %c0_19, %c0_20] : memref<12x18x4xf32, #tpu.memory_space<vmem>>, vector<10x16x4xf32>
    %23 = vector.shape_cast %22 : vector<10x16x4xf32> to vector<160x4xf32>
    %c0_21 = arith.constant 0 : index
    %c12 = arith.constant 12 : index
    %24 = vector.load %arg15[%c0_21, %c12] : memref<160x36xf32, #tpu.memory_space<vmem>>, vector<160x4xf32>
    tpu.vector_store %arg15[%c0_21, %c12], %23 {strides = array<i32>} : memref<160x36xf32, #tpu.memory_space<vmem>>, vector<160x4xf32>,
    %c1_22 = arith.constant 1 : index
    %c1_23 = arith.constant 1 : index
    %c0_24 = arith.constant 0 : index
    %25 = vector.load %arg13[%c1_22, %c1_23, %c0_24] : memref<12x18x4xf32, #tpu.memory_space<vmem>>, vector<10x16x4xf32>
    %26 = vector.shape_cast %25 : vector<10x16x4xf32> to vector<160x4xf32>
    %c0_25 = arith.constant 0 : index
    %c16 = arith.constant 16 : index
    %27 = vector.load %arg15[%c0_25, %c16] : memref<160x36xf32, #tpu.memory_space<vmem>>, vector<160x4xf32>
    tpu.vector_store %arg15[%c0_25, %c16], %26 {strides = array<i32>} : memref<160x36xf32, #tpu.memory_space<vmem>>, vector<160x4xf32>,
    %c1_26 = arith.constant 1 : index
    %c2_27 = arith.constant 2 : index
    %c0_28 = arith.constant 0 : index
    %28 = vector.load %arg13[%c1_26, %c2_27, %c0_28] : memref<12x18x4xf32, #tpu.memory_space<vmem>>, vector<10x16x4xf32>
    %29 = vector.shape_cast %28 : vector<10x16x4xf32> to vector<160x4xf32>
    %c0_29 = arith.constant 0 : index
    %c20 = arith.constant 20 : index
    %30 = vector.load %arg15[%c0_29, %c20] : memref<160x36xf32, #tpu.memory_space<vmem>>, vector<160x4xf32>
    tpu.vector_store %arg15[%c0_29, %c20], %29 {strides = array<i32>} : memref<160x36xf32, #tpu.memory_space<vmem>>, vector<160x4xf32>,
    %c2_30 = arith.constant 2 : index
    %c0_31 = arith.constant 0 : index
    %c0_32 = arith.constant 0 : index
    %31 = vector.load %arg13[%c2_30, %c0_31, %c0_32] : memref<12x18x4xf32, #tpu.memory_space<vmem>>, vector<10x16x4xf32>
    %32 = vector.shape_cast %31 : vector<10x16x4xf32> to vector<160x4xf32>
    %c0_33 = arith.constant 0 : index
    %c24 = arith.constant 24 : index
    %33 = vector.load %arg15[%c0_33, %c24] : memref<160x36xf32, #tpu.memory_space<vmem>>, vector<160x4xf32>
    tpu.vector_store %arg15[%c0_33, %c24], %32 {strides = array<i32>} : memref<160x36xf32, #tpu.memory_space<vmem>>, vector<160x4xf32>,
    %c2_34 = arith.constant 2 : index
    %c1_35 = arith.constant 1 : index
    %c0_36 = arith.constant 0 : index
    %34 = vector.load %arg13[%c2_34, %c1_35, %c0_36] : memref<12x18x4xf32, #tpu.memory_space<vmem>>, vector<10x16x4xf32>
    %35 = vector.shape_cast %34 : vector<10x16x4xf32> to vector<160x4xf32>
    %c0_37 = arith.constant 0 : index
    %c28 = arith.constant 28 : index
    %36 = vector.load %arg15[%c0_37, %c28] : memref<160x36xf32, #tpu.memory_space<vmem>>, vector<160x4xf32>
    tpu.vector_store %arg15[%c0_37, %c28], %35 {strides = array<i32>} : memref<160x36xf32, #tpu.memory_space<vmem>>, vector<160x4xf32>,
    %c2_38 = arith.constant 2 : index
    %c2_39 = arith.constant 2 : index
    %c0_40 = arith.constant 0 : index
    %37 = vector.load %arg13[%c2_38, %c2_39, %c0_40] : memref<12x18x4xf32, #tpu.memory_space<vmem>>, vector<10x16x4xf32>
    %38 = vector.shape_cast %37 : vector<10x16x4xf32> to vector<160x4xf32>
    %c0_41 = arith.constant 0 : index
    %c32 = arith.constant 32 : index
    %39 = vector.load %arg15[%c0_41, %c32] : memref<160x36xf32, #tpu.memory_space<vmem>>, vector<160x4xf32>
    tpu.vector_store %arg15[%c0_41, %c32], %38 {strides = array<i32>} : memref<160x36xf32, #tpu.memory_space<vmem>>, vector<160x4xf32>,
    %c0_42 = arith.constant 0 : index
    %c0_43 = arith.constant 0 : index
    %40 = vector.load %arg15[%c0_42, %c0_43] : memref<160x36xf32, #tpu.memory_space<vmem>>, vector<160x36xf32>
    %c0_44 = arith.constant 0 : index
    %c0_45 = arith.constant 0 : index
    %41 = vector.load %arg3[%c0_44, %c0_45] : memref<36x8xf32, #tpu.memory_space<vmem>>, vector<36x8xf32>
    %cst_46 = arith.constant dense<0.000000e+00> : vector<160x8xf32>
    %42 = tpu.matmul %40, %41, %cst_46 {dimension_numbers = #tpu.dot_dimension_numbers<[1], [0], [0], [1], [0, 0, 1, 1], [], []>} : vector<160x36xf32>, vector<36x8xf32>, vector<160x8xf32> -> vector<160x8xf32>
    %c0_47 = arith.constant 0 : index
    %c0_48 = arith.constant 0 : index
    %43 = vector.load %arg4[%c0_47, %c0_48] : memref<1x8xf32, #tpu.memory_space<vmem>>, vector<1x8xf32>
    %44 = vector.broadcast %43 : vector<1x8xf32> to vector<160x8xf32>
    %45 = arith.mulf %42, %44 : vector<160x8xf32>
    %c0_49 = arith.constant 0 : index
    %c0_50 = arith.constant 0 : index
    %46 = vector.load %arg5[%c0_49, %c0_50] : memref<1x8xf32, #tpu.memory_space<vmem>>, vector<1x8xf32>
    %47 = vector.broadcast %46 : vector<1x8xf32> to vector<160x8xf32>
    %48 = arith.addf %45, %47 : vector<160x8xf32>
    %cst_51 = arith.constant 0.000000e+00 : f32
    %49 = vector.broadcast %cst_51 : f32 to vector<160x8xf32>
    %50 = arith.maximumf %48, %49 : vector<160x8xf32>
    %c8_i32 = arith.constant 8 : i32
    %51 = arith.muli %arg1, %c8_i32 : i32
    %c0_52 = arith.constant 0 : index
    %52 = arith.index_cast %51 : i32 to index
    %c0_53 = arith.constant 0 : index
    %c0_54 = arith.constant 0 : index
    %53 = vector.load %arg2[%c0_52, %52, %c0_53, %c0_54] : memref<1x16x16x4xf32, #tpu.memory_space<vmem>>, vector<1x8x16x4xf32>
    %54 = vector.shape_cast %53 : vector<1x8x16x4xf32> to vector<8x16x4xf32>
    %55 = vector.shape_cast %54 : vector<8x16x4xf32> to vector<128x4xf32>
    %c0_55 = arith.constant 0 : index
    %c0_56 = arith.constant 0 : index
    %56 = vector.load %arg9[%c0_55, %c0_56] : memref<4x8xf32, #tpu.memory_space<vmem>>, vector<4x8xf32>
    %cst_57 = arith.constant dense<0.000000e+00> : vector<128x8xf32>
    %57 = tpu.matmul %55, %56, %cst_57 {dimension_numbers = #tpu.dot_dimension_numbers<[1], [0], [0], [1], [0, 0, 1, 1], [], []>} : vector<128x4xf32>, vector<4x8xf32>, vector<128x8xf32> -> vector<128x8xf32>
    %c0_58 = arith.constant 0 : index
    %c0_59 = arith.constant 0 : index
    %58 = vector.load %arg10[%c0_58, %c0_59] : memref<1x8xf32, #tpu.memory_space<vmem>>, vector<1x8xf32>
    %59 = vector.broadcast %58 : vector<1x8xf32> to vector<128x8xf32>
    %60 = arith.mulf %57, %59 : vector<128x8xf32>
    %c0_60 = arith.constant 0 : index
    %c0_61 = arith.constant 0 : index
    %61 = vector.load %arg11[%c0_60, %c0_61] : memref<1x8xf32, #tpu.memory_space<vmem>>, vector<1x8xf32>
    %62 = vector.broadcast %61 : vector<1x8xf32> to vector<128x8xf32>
    %63 = arith.addf %60, %62 : vector<128x8xf32>
    %cst_62 = arith.constant 0.000000e+00 : f32
    %64 = vector.broadcast %cst_62 : f32 to vector<10x18x8xf32>
    %c0_63 = arith.constant 0 : index
    %c0_64 = arith.constant 0 : index
    %c0_65 = arith.constant 0 : index
    %65 = vector.load %arg14[%c0_63, %c0_64, %c0_65] : memref<10x18x8xf32, #tpu.memory_space<vmem>>, vector<10x18x8xf32>
    tpu.vector_store %arg14[%c0_63, %c0_64, %c0_65], %64 {strides = array<i32>} : memref<10x18x8xf32, #tpu.memory_space<vmem>>, vector<10x18x8xf32>,
    %66 = vector.shape_cast %50 : vector<160x8xf32> to vector<10x16x8xf32>
    %c0_66 = arith.constant 0 : index
    %c1_67 = arith.constant 1 : index
    %c0_68 = arith.constant 0 : index
    %67 = vector.load %arg14[%c0_66, %c1_67, %c0_68] : memref<10x18x8xf32, #tpu.memory_space<vmem>>, vector<10x16x8xf32>
    tpu.vector_store %arg14[%c0_66, %c1_67, %c0_68], %66 {strides = array<i32>} : memref<10x18x8xf32, #tpu.memory_space<vmem>>, vector<10x16x8xf32>,
    %c0_i32_69 = arith.constant 0 : i32
    %68 = arith.cmpi eq, %arg1, %c0_i32_69 : i32
    %69 = arith.extui %68 : i1 to i32
    %c0_i32_70 = arith.constant 0 : i32
    %70 = arith.cmpi ne, %69, %c0_i32_70 : i32
    scf.if %70 {
      %cst_127 = arith.constant 0.000000e+00 : f32
      %116 = vector.broadcast %cst_127 : f32 to vector<1x18x8xf32>
      %c0_128 = arith.constant 0 : index
      %c0_129 = arith.constant 0 : index
      %c0_130 = arith.constant 0 : index
      %117 = vector.load %arg14[%c0_128, %c0_129, %c0_130] : memref<10x18x8xf32, #tpu.memory_space<vmem>>, vector<1x18x8xf32>
      tpu.vector_store %arg14[%c0_128, %c0_129, %c0_130], %116 {strides = array<i32>} : memref<10x18x8xf32, #tpu.memory_space<vmem>>, vector<1x18x8xf32>,
    } else {
    }
    %c1_i32_71 = arith.constant 1 : i32
    %71 = arith.cmpi eq, %arg1, %c1_i32_71 : i32
    %72 = arith.extui %71 : i1 to i32
    %c0_i32_72 = arith.constant 0 : i32
    %73 = arith.cmpi ne, %72, %c0_i32_72 : i32
    scf.if %73 {
      %cst_127 = arith.constant 0.000000e+00 : f32
      %116 = vector.broadcast %cst_127 : f32 to vector<1x18x8xf32>
      %c9 = arith.constant 9 : index
      %c0_128 = arith.constant 0 : index
      %c0_129 = arith.constant 0 : index
      %117 = vector.load %arg14[%c9, %c0_128, %c0_129] : memref<10x18x8xf32, #tpu.memory_space<vmem>>, vector<1x18x8xf32>
      tpu.vector_store %arg14[%c9, %c0_128, %c0_129], %116 {strides = array<i32>} : memref<10x18x8xf32, #tpu.memory_space<vmem>>, vector<1x18x8xf32>,
    } else {
    }
    %c0_73 = arith.constant 0 : index
    %c0_74 = arith.constant 0 : index
    %c0_75 = arith.constant 0 : index
    %74 = vector.load %arg14[%c0_73, %c0_74, %c0_75] : memref<10x18x8xf32, #tpu.memory_space<vmem>>, vector<8x16x8xf32>
    %75 = vector.shape_cast %74 : vector<8x16x8xf32> to vector<128x8xf32>
    %c0_76 = arith.constant 0 : index
    %c0_77 = arith.constant 0 : index
    %76 = vector.load %arg16[%c0_76, %c0_77] : memref<128x72xf32, #tpu.memory_space<vmem>>, vector<128x8xf32>
    tpu.vector_store %arg16[%c0_76, %c0_77], %75 {strides = array<i32>} : memref<128x72xf32, #tpu.memory_space<vmem>>, vector<128x8xf32>,
    %c0_78 = arith.constant 0 : index
    %c1_79 = arith.constant 1 : index
    %c0_80 = arith.constant 0 : index
    %77 = vector.load %arg14[%c0_78, %c1_79, %c0_80] : memref<10x18x8xf32, #tpu.memory_space<vmem>>, vector<8x16x8xf32>
    %78 = vector.shape_cast %77 : vector<8x16x8xf32> to vector<128x8xf32>
    %c0_81 = arith.constant 0 : index
    %c8_82 = arith.constant 8 : index
    %79 = vector.load %arg16[%c0_81, %c8_82] : memref<128x72xf32, #tpu.memory_space<vmem>>, vector<128x8xf32>
    tpu.vector_store %arg16[%c0_81, %c8_82], %78 {strides = array<i32>} : memref<128x72xf32, #tpu.memory_space<vmem>>, vector<128x8xf32>,
    %c0_83 = arith.constant 0 : index
    %c2_84 = arith.constant 2 : index
    %c0_85 = arith.constant 0 : index
    %80 = vector.load %arg14[%c0_83, %c2_84, %c0_85] : memref<10x18x8xf32, #tpu.memory_space<vmem>>, vector<8x16x8xf32>
    %81 = vector.shape_cast %80 : vector<8x16x8xf32> to vector<128x8xf32>
    %c0_86 = arith.constant 0 : index
    %c16_87 = arith.constant 16 : index
    %82 = vector.load %arg16[%c0_86, %c16_87] : memref<128x72xf32, #tpu.memory_space<vmem>>, vector<128x8xf32>
    tpu.vector_store %arg16[%c0_86, %c16_87], %81 {strides = array<i32>} : memref<128x72xf32, #tpu.memory_space<vmem>>, vector<128x8xf32>,
    %c1_88 = arith.constant 1 : index
    %c0_89 = arith.constant 0 : index
    %c0_90 = arith.constant 0 : index
    %83 = vector.load %arg14[%c1_88, %c0_89, %c0_90] : memref<10x18x8xf32, #tpu.memory_space<vmem>>, vector<8x16x8xf32>
    %84 = vector.shape_cast %83 : vector<8x16x8xf32> to vector<128x8xf32>
    %c0_91 = arith.constant 0 : index
    %c24_92 = arith.constant 24 : index
    %85 = vector.load %arg16[%c0_91, %c24_92] : memref<128x72xf32, #tpu.memory_space<vmem>>, vector<128x8xf32>
    tpu.vector_store %arg16[%c0_91, %c24_92], %84 {strides = array<i32>} : memref<128x72xf32, #tpu.memory_space<vmem>>, vector<128x8xf32>,
    %c1_93 = arith.constant 1 : index
    %c1_94 = arith.constant 1 : index
    %c0_95 = arith.constant 0 : index
    %86 = vector.load %arg14[%c1_93, %c1_94, %c0_95] : memref<10x18x8xf32, #tpu.memory_space<vmem>>, vector<8x16x8xf32>
    %87 = vector.shape_cast %86 : vector<8x16x8xf32> to vector<128x8xf32>
    %c0_96 = arith.constant 0 : index
    %c32_97 = arith.constant 32 : index
    %88 = vector.load %arg16[%c0_96, %c32_97] : memref<128x72xf32, #tpu.memory_space<vmem>>, vector<128x8xf32>
    tpu.vector_store %arg16[%c0_96, %c32_97], %87 {strides = array<i32>} : memref<128x72xf32, #tpu.memory_space<vmem>>, vector<128x8xf32>,
    %c1_98 = arith.constant 1 : index
    %c2_99 = arith.constant 2 : index
    %c0_100 = arith.constant 0 : index
    %89 = vector.load %arg14[%c1_98, %c2_99, %c0_100] : memref<10x18x8xf32, #tpu.memory_space<vmem>>, vector<8x16x8xf32>
    %90 = vector.shape_cast %89 : vector<8x16x8xf32> to vector<128x8xf32>
    %c0_101 = arith.constant 0 : index
    %c40 = arith.constant 40 : index
    %91 = vector.load %arg16[%c0_101, %c40] : memref<128x72xf32, #tpu.memory_space<vmem>>, vector<128x8xf32>
    tpu.vector_store %arg16[%c0_101, %c40], %90 {strides = array<i32>} : memref<128x72xf32, #tpu.memory_space<vmem>>, vector<128x8xf32>,
    %c2_102 = arith.constant 2 : index
    %c0_103 = arith.constant 0 : index
    %c0_104 = arith.constant 0 : index
    %92 = vector.load %arg14[%c2_102, %c0_103, %c0_104] : memref<10x18x8xf32, #tpu.memory_space<vmem>>, vector<8x16x8xf32>
    %93 = vector.shape_cast %92 : vector<8x16x8xf32> to vector<128x8xf32>
    %c0_105 = arith.constant 0 : index
    %c48 = arith.constant 48 : index
    %94 = vector.load %arg16[%c0_105, %c48] : memref<128x72xf32, #tpu.memory_space<vmem>>, vector<128x8xf32>
    tpu.vector_store %arg16[%c0_105, %c48], %93 {strides = array<i32>} : memref<128x72xf32, #tpu.memory_space<vmem>>, vector<128x8xf32>,
    %c2_106 = arith.constant 2 : index
    %c1_107 = arith.constant 1 : index
    %c0_108 = arith.constant 0 : index
    %95 = vector.load %arg14[%c2_106, %c1_107, %c0_108] : memref<10x18x8xf32, #tpu.memory_space<vmem>>, vector<8x16x8xf32>
    %96 = vector.shape_cast %95 : vector<8x16x8xf32> to vector<128x8xf32>
    %c0_109 = arith.constant 0 : index
    %c56 = arith.constant 56 : index
    %97 = vector.load %arg16[%c0_109, %c56] : memref<128x72xf32, #tpu.memory_space<vmem>>, vector<128x8xf32>
    tpu.vector_store %arg16[%c0_109, %c56], %96 {strides = array<i32>} : memref<128x72xf32, #tpu.memory_space<vmem>>, vector<128x8xf32>,
    %c2_110 = arith.constant 2 : index
    %c2_111 = arith.constant 2 : index
    %c0_112 = arith.constant 0 : index
    %98 = vector.load %arg14[%c2_110, %c2_111, %c0_112] : memref<10x18x8xf32, #tpu.memory_space<vmem>>, vector<8x16x8xf32>
    %99 = vector.shape_cast %98 : vector<8x16x8xf32> to vector<128x8xf32>
    %c0_113 = arith.constant 0 : index
    %c64 = arith.constant 64 : index
    %100 = vector.load %arg16[%c0_113, %c64] : memref<128x72xf32, #tpu.memory_space<vmem>>, vector<128x8xf32>
    tpu.vector_store %arg16[%c0_113, %c64], %99 {strides = array<i32>} : memref<128x72xf32, #tpu.memory_space<vmem>>, vector<128x8xf32>,
    %c0_114 = arith.constant 0 : index
    %c0_115 = arith.constant 0 : index
    %101 = vector.load %arg16[%c0_114, %c0_115] : memref<128x72xf32, #tpu.memory_space<vmem>>, vector<128x72xf32>
    %c0_116 = arith.constant 0 : index
    %c0_117 = arith.constant 0 : index
    %102 = vector.load %arg6[%c0_116, %c0_117] : memref<72x8xf32, #tpu.memory_space<vmem>>, vector<72x8xf32>
    %cst_118 = arith.constant dense<0.000000e+00> : vector<128x8xf32>
    %103 = tpu.matmul %101, %102, %cst_118 {dimension_numbers = #tpu.dot_dimension_numbers<[1], [0], [0], [1], [0, 0, 1, 1], [], []>} : vector<128x72xf32>, vector<72x8xf32>, vector<128x8xf32> -> vector<128x8xf32>
    %c0_119 = arith.constant 0 : index
    %c0_120 = arith.constant 0 : index
    %104 = vector.load %arg7[%c0_119, %c0_120] : memref<1x8xf32, #tpu.memory_space<vmem>>, vector<1x8xf32>
    %105 = vector.broadcast %104 : vector<1x8xf32> to vector<128x8xf32>
    %106 = arith.mulf %103, %105 : vector<128x8xf32>
    %c0_121 = arith.constant 0 : index
    %c0_122 = arith.constant 0 : index
    %107 = vector.load %arg8[%c0_121, %c0_122] : memref<1x8xf32, #tpu.memory_space<vmem>>, vector<1x8xf32>
    %108 = vector.broadcast %107 : vector<1x8xf32> to vector<128x8xf32>
    %109 = arith.addf %106, %108 : vector<128x8xf32>
    %110 = arith.addf %109, %63 : vector<128x8xf32>
    %cst_123 = arith.constant 0.000000e+00 : f32
    %111 = vector.broadcast %cst_123 : f32 to vector<128x8xf32>
    %112 = arith.maximumf %110, %111 : vector<128x8xf32>
    %c0_124 = arith.constant 0 : index
    %c0_125 = arith.constant 0 : index
    %c0_126 = arith.constant 0 : index
    %113 = vector.load %arg12[%c0_124, %c0_125, %c0_126] : memref<1x128x8xf32, #tpu.memory_space<vmem>>, vector<1x128x8xf32>
    %114 = vector.shape_cast %113 : vector<1x128x8xf32> to vector<128x8xf32>
    %115 = vector.shape_cast %112 : vector<128x8xf32> to vector<1x128x8xf32>
    tpu.vector_store %arg12[%c0_124, %c0_125, %c0_126], %115 {strides = array<i32>} : memref<1x128x8xf32, #tpu.memory_space<vmem>>, vector<1x128x8xf32>,
    return
  }
  func.func @transform_0(%arg0: i32, %arg1: i32) -> (i32, i32, i32, i32) {
    %c0_i32 = arith.constant 0 : i32
    %c0_i32_0 = arith.constant 0 : i32
    %c0_i32_1 = arith.constant 0 : i32
    %c0_i32_2 = arith.constant 0 : i32
    return %arg0, %c0_i32, %c0_i32_0, %c0_i32_1 : i32, i32, i32, i32
  }
  func.func @transform_1(%arg0: i32, %arg1: i32) -> (i32, i32) {
    %c0_i32 = arith.constant 0 : i32
    %c0_i32_0 = arith.constant 0 : i32
    %c0_i32_1 = arith.constant 0 : i32
    return %c0_i32, %c0_i32_0 : i32, i32
  }
  func.func @transform_2(%arg0: i32, %arg1: i32) -> (i32, i32) {
    %c0_i32 = arith.constant 0 : i32
    %c0_i32_0 = arith.constant 0 : i32
    %c0_i32_1 = arith.constant 0 : i32
    return %c0_i32, %c0_i32_0 : i32, i32
  }
  func.func @transform_3(%arg0: i32, %arg1: i32) -> (i32, i32) {
    %c0_i32 = arith.constant 0 : i32
    %c0_i32_0 = arith.constant 0 : i32
    %c0_i32_1 = arith.constant 0 : i32
    return %c0_i32, %c0_i32_0 : i32, i32
  }
  func.func @transform_4(%arg0: i32, %arg1: i32) -> (i32, i32) {
    %c0_i32 = arith.constant 0 : i32
    %c0_i32_0 = arith.constant 0 : i32
    %c0_i32_1 = arith.constant 0 : i32
    return %c0_i32, %c0_i32_0 : i32, i32
  }
  func.func @transform_5(%arg0: i32, %arg1: i32) -> (i32, i32) {
    %c0_i32 = arith.constant 0 : i32
    %c0_i32_0 = arith.constant 0 : i32
    %c0_i32_1 = arith.constant 0 : i32
    return %c0_i32, %c0_i32_0 : i32, i32
  }
  func.func @transform_6(%arg0: i32, %arg1: i32) -> (i32, i32) {
    %c0_i32 = arith.constant 0 : i32
    %c0_i32_0 = arith.constant 0 : i32
    %c0_i32_1 = arith.constant 0 : i32
    return %c0_i32, %c0_i32_0 : i32, i32
  }
  func.func @transform_7(%arg0: i32, %arg1: i32) -> (i32, i32) {
    %c0_i32 = arith.constant 0 : i32
    %c0_i32_0 = arith.constant 0 : i32
    %c0_i32_1 = arith.constant 0 : i32
    return %c0_i32, %c0_i32_0 : i32, i32
  }
  func.func @transform_8(%arg0: i32, %arg1: i32) -> (i32, i32) {
    %c0_i32 = arith.constant 0 : i32
    %c0_i32_0 = arith.constant 0 : i32
    %c0_i32_1 = arith.constant 0 : i32
    return %c0_i32, %c0_i32_0 : i32, i32
  }
  func.func @transform_9(%arg0: i32, %arg1: i32) -> (i32, i32) {
    %c0_i32 = arith.constant 0 : i32
    %c0_i32_0 = arith.constant 0 : i32
    %c0_i32_1 = arith.constant 0 : i32
    return %c0_i32, %c0_i32_0 : i32, i32
  }
  func.func @transform_10(%arg0: i32, %arg1: i32) -> (i32, i32, i32) {
    %c0_i32 = arith.constant 0 : i32
    %c0_i32_0 = arith.constant 0 : i32
    return %arg0, %arg1, %c0_i32 : i32, i32, i32
  }
}

</mosaic_0001>

<llo_original>
// kernel: tpu_custom_call.1
$region0: #{tpu_custom_call.1}
  #allocation0 [shape = 'u32[]', space=smem, size = 0x4, offset = 0x4, fixed_abs, tag = 'smem constant byte address 0x4 - core index']
  #allocation1 [shape = 'u32[144,128]{1,0:T(1,128)}', space=vmem, size = 0x12000, scoped, tag = 'internal scratch']
  #allocation2 [shape = 'f32[12,18,4]{2,1,0:T(8,128)}', space=vmem, size = 0x24000, scoped, tag = 'scratch operand']
  #allocation3 [shape = 'f32[10,18,8]{2,1,0:T(8,128)}', space=vmem, size = 0x1e000, scoped, tag = 'scratch operand']
  #allocation4 [shape = 'f32[160,36]{1,0:T(8,128)}', space=vmem, size = 0x14000, scoped, tag = 'scratch operand']
  #allocation5 [shape = 'f32[128,72]{1,0:T(8,128)}', space=vmem, size = 0x10000, scoped, tag = 'scratch operand']
  %s0 = inlined_call_operand.hbm [shape: f32[2,16,16,4], index: 0, kind: input, shape index: {}]
  %s1 = inlined_call_operand.hbm [shape: f32[36,8], index: 1, kind: input, shape index: {}]
  %s2 = inlined_call_operand.hbm [shape: f32[1,8], index: 2, kind: input, shape index: {}]
  %s3 = inlined_call_operand.hbm [shape: f32[1,8], index: 3, kind: input, shape index: {}]
  %s4 = inlined_call_operand.hbm [shape: f32[72,8], index: 4, kind: input, shape index: {}]
  %s5 = inlined_call_operand.hbm [shape: f32[1,8], index: 5, kind: input, shape index: {}]
  %s6 = inlined_call_operand.hbm [shape: f32[1,8], index: 6, kind: input, shape index: {}]
  %s7 = inlined_call_operand.hbm [shape: f32[4,8], index: 7, kind: input, shape index: {}]
  %s8 = inlined_call_operand.hbm [shape: f32[1,8], index: 8, kind: input, shape index: {}]
  %s9 = inlined_call_operand.hbm [shape: f32[1,8], index: 9, kind: input, shape index: {}]
  %s10 = inlined_call_operand.hbm [shape: f32[2,256,8], index: 10, kind: output, shape index: {}]
  %s11 = sld [smem:[#allocation0]]
  $region133: #{tpu_custom_call.1} parent=0
    _
  %s13 = ssub.s32 1, %s11
  %s14 = scalar_select 0, %s13, %s11
  $region1: #{tpu_custom_call.1} parent=0
    #allocation6 [shape = 'u8[262144]{0}', space=vmem, size = 0x40000, scoped, tag = 'input window, operand 0']
    #allocation7 [shape = 's32[2]{0}', space=sflag, size = 0x8, scoped, tag = 'scoped memory for tpu_custom_call.1']
    #allocation8 [shape = 's32[2]{0}', space=sflag, size = 0x8, scoped, tag = 'scoped memory for tpu_custom_call.1']
    #allocation9 [shape = 'u8[20480]{0}', space=vmem, size = 0x5000, scoped, tag = 'input window, operand 1, single buffered']
    #allocation10 [shape = 's32[1]{0}', space=sflag, size = 0x4, scoped, tag = 'scoped memory for tpu_custom_call.1']
    #allocation11 [shape = 'u8[512]{0}', space=vmem, size = 0x400, scoped, tag = 'input window, operand 2, single buffered']
    #allocation12 [shape = 'u8[512]{0}', space=vmem, size = 0x400, scoped, tag = 'input window, operand 3, single buffered']
    #allocation13 [shape = 's32[1]{0}', space=sflag, size = 0x4, scoped, tag = 'scoped memory for tpu_custom_call.1']
    #allocation14 [shape = 'u8[36864]{0}', space=vmem, size = 0x9000, scoped, tag = 'input window, operand 4, single buffered']
    #allocation15 [shape = 'u8[512]{0}', space=vmem, size = 0x400, scoped, tag = 'input window, operand 5, single buffered']
    #allocation16 [shape = 's32[1]{0}', space=sflag, size = 0x4, scoped, tag = 'scoped memory for tpu_custom_call.1']
    #allocation17 [shape = 'u8[512]{0}', space=vmem, size = 0x400, scoped, tag = 'input window, operand 6, single buffered']
    #allocation18 [shape = 'u8[2048]{0}', space=vmem, size = 0x800, scoped, tag = 'input window, operand 7, single buffered']
    #allocation19 [shape = 's32[1]{0}', space=sflag, size = 0x4, scoped, tag = 'scoped memory for tpu_custom_call.1']
    #allocation20 [shape = 'u8[512]{0}', space=vmem, size = 0x400, scoped, tag = 'input window, operand 8, single buffered']
    #allocation21 [shape = 'u8[512]{0}', space=vmem, size = 0x400, scoped, tag = 'input window, operand 9, single buffered']
    #allocation22 [shape = 's32[1]{0}', space=sflag, size = 0x4, scoped, tag = 'scoped memory for tpu_custom_call.1']
    #allocation23 [shape = 'u8[131072]{0}', space=vmem, size = 0x20000, scoped, tag = 'output window, operand 0']
    %15 = vsyncpa [#allocation7], 0
    %s16 = scalar_lea.sflag [#allocation7], 1
    %17 = vsyncpa %s16, 0
    %18 = vsyncpa [#allocation10], 0
    %19 = vsyncpa [#allocation13], 0
    %20 = vsyncpa [#allocation16], 0
    %21 = vsyncpa [#allocation19], 0
    %22 = vsyncpa [#allocation22], 0
    %23 = vsyncpa [#allocation8], 0
    %s24 = scalar_lea.sflag [#allocation8], 1
    %25 = vsyncpa %s24, 0
    loop: start=0, step=1, limit=6
    $region2: #{tpu_custom_call.1} parent=1 // loop_pre_header
      _
    $region3: #{tpu_custom_call.1} parent=1 // loop_header
      %s27 = sphi 0, %s31
      %p28 = scmp.ge.s32.totalorder %s27, 6
      %s34 = sphi 0, %s46
      %s35 = sphi 0, %s42
      %s36 = sphi 0, %s34
      %s37 = sphi 0, %s35
      %s38 = sphi 0, %s36
      %s39 = sphi 0, %s37
      %s49 = sphi 0, %s51
      %s52 = sphi 0, %s49
      %s53 = sphi 0, %s52
      %s69 = sphi 0, %s53
      %s73 = sphi 0, %s73
      %s75 = sphi 0, %s73
      %s76 = sphi 0, %s75
      %s90 = sphi 0, %s76
      %s94 = sphi 0, %s94
      %s96 = sphi 0, %s94
      %s97 = sphi 0, %s96
      %s111 = sphi 0, %s97
      %s115 = sphi 0, %s115
      %s117 = sphi 0, %s115
      %s118 = sphi 0, %s117
      %s132 = sphi 0, %s118
      %s136 = sphi 0, %s136
      %s138 = sphi 0, %s136
      %s139 = sphi 0, %s138
      %s153 = sphi 0, %s139
      %s157 = sphi 0, %s157
      %s159 = sphi 0, %s157
      %s160 = sphi 0, %s159
      %s174 = sphi 0, %s160
      %s178 = sphi 0, %s178
      %s180 = sphi 0, %s178
      %s181 = sphi 0, %s180
      %s195 = sphi 0, %s181
      %s199 = sphi 0, %s199
      %s201 = sphi 0, %s199
      %s202 = sphi 0, %s201
      %s216 = sphi 0, %s202
      %s220 = sphi 0, %s220
      %s222 = sphi 0, %s220
      %s223 = sphi 0, %s222
      %s237 = sphi 0, %s223
      %s241 = sphi 0, %s241
      %s243 = sphi 0, %s241
      %s244 = sphi 0, %s243
      %s258 = sphi 0, %s244
      %s266 = sphi 0, %s268
      %s269 = sphi 0, %s266
      %s270 = sphi 0, %s269
      %s286 = sphi 0, %s270
    $region4: #{tpu_custom_call.1} parent=1 // loop_header_branch
      %30 = sbr.rel (%p28) target = $region8
    $region5: #{tpu_custom_call.1} parent=1 // loop_body
      %s32 = ssub.s32 %s27, 1
      %s33 = ssub.s32 %s27, 2
      %s40 = sadd.s32 1, %s35
      %p41 = scmp.ge.s32.totalorder %s40, 2
      %s42 = scalar_select %p41, 0, %s40
      %s43 = sadd.s32 1, %s34
      %s44 = scalar_select %p41, %s43, %s34
      %p45 = scmp.ge.s32.totalorder %s44, 2
      %s46 = scalar_select %p45, 0, %s44
      %s47 = ssub.s32 %s34, %s46
      %p48 = scmp.eq.s32.totalorder %s47, 0
      %s50 = sadd.s32 %s49, 1
      %s51 = scalar_select %p48, %s49, %s50
      %p54 = pneg %p48
      %p55 = scmp.eq.s32.totalorder %s27, 3
      %p56 = por %p54, %p55
      %p57 = scmp.ne.s32.totalorder %s49, %s52
      %p58 = scmp.eq.s32.totalorder %s27, 0
      %p59 = por %p57, %p58
      %p60 = scmp.ne.s32.totalorder %s49, %s52
      %p61 = scmp.eq.s32.totalorder %s32, 3
      %p62 = por %p60, %p61
      %p63 = scmp.ne.s32.totalorder %s52, %s53
      %p64 = scmp.eq.s32.totalorder %s32, 0
      %p65 = por %p63, %p64
      %p66 = scmp.ne.s32.totalorder %s52, %s53
      %p67 = scmp.eq.s32.totalorder %s33, 3
      %p68 = por %p66, %p67
      %p70 = scmp.ne.s32.totalorder %s53, %s69
      %p71 = scmp.eq.s32.totalorder %s33, 0
      %p72 = por %p70, %p71
      %s74 = sadd.s32 %s73, 1
      %p77 = scmp.eq.s32.totalorder %s27, 3
      %p78 = scmp.ne.s32.totalorder %s73, %s75
      %p79 = scmp.eq.s32.totalorder %s27, 0
      %p80 = por %p78, %p79
      %p81 = scmp.ne.s32.totalorder %s73, %s75
      %p82 = scmp.eq.s32.totalorder %s32, 3
      %p83 = por %p81, %p82
      %p84 = scmp.ne.s32.totalorder %s75, %s76
      %p85 = scmp.eq.s32.totalorder %s32, 0
      %p86 = por %p84, %p85
      %p87 = scmp.ne.s32.totalorder %s75, %s76
      %p88 = scmp.eq.s32.totalorder %s33, 3
      %p89 = por %p87, %p88
      %p91 = scmp.ne.s32.totalorder %s76, %s90
      %p92 = scmp.eq.s32.totalorder %s33, 0
      %p93 = por %p91, %p92
      %s95 = sadd.s32 %s94, 1
      %p98 = scmp.eq.s32.totalorder %s27, 3
      %p99 = scmp.ne.s32.totalorder %s94, %s96
      %p100 = scmp.eq.s32.totalorder %s27, 0
      %p101 = por %p99, %p100
      %p102 = scmp.ne.s32.totalorder %s94, %s96
      %p103 = scmp.eq.s32.totalorder %s32, 3
      %p104 = por %p102, %p103
      %p105 = scmp.ne.s32.totalorder %s96, %s97
      %p106 = scmp.eq.s32.totalorder %s32, 0
      %p107 = por %p105, %p106
      %p108 = scmp.ne.s32.totalorder %s96, %s97
      %p109 = scmp.eq.s32.totalorder %s33, 3
      %p110 = por %p108, %p109
      %p112 = scmp.ne.s32.totalorder %s97, %s111
      %p113 = scmp.eq.s32.totalorder %s33, 0
      %p114 = por %p112, %p113
      %s116 = sadd.s32 %s115, 1
      %p119 = scmp.eq.s32.totalorder %s27, 3
      %p120 = scmp.ne.s32.totalorder %s115, %s117
      %p121 = scmp.eq.s32.totalorder %s27, 0
      %p122 = por %p120, %p121
      %p123 = scmp.ne.s32.totalorder %s115, %s117
      %p124 = scmp.eq.s32.totalorder %s32, 3
      %p125 = por %p123, %p124
      %p126 = scmp.ne.s32.totalorder %s117, %s118
      %p127 = scmp.eq.s32.totalorder %s32, 0
      %p128 = por %p126, %p127
      %p129 = scmp.ne.s32.totalorder %s117, %s118
      %p130 = scmp.eq.s32.totalorder %s33, 3
      %p131 = por %p129, %p130
      %p133 = scmp.ne.s32.totalorder %s118, %s132
      %p134 = scmp.eq.s32.totalorder %s33, 0
      %p135 = por %p133, %p134
      %s137 = sadd.s32 %s136, 1
      %p140 = scmp.eq.s32.totalorder %s27, 3
      %p141 = scmp.ne.s32.totalorder %s136, %s138
      %p142 = scmp.eq.s32.totalorder %s27, 0
      %p143 = por %p141, %p142
      %p144 = scmp.ne.s32.totalorder %s136, %s138
      %p145 = scmp.eq.s32.totalorder %s32, 3
      %p146 = por %p144, %p145
      %p147 = scmp.ne.s32.totalorder %s138, %s139
      %p148 = scmp.eq.s32.totalorder %s32, 0
      %p149 = por %p147, %p148
      %p150 = scmp.ne.s32.totalorder %s138, %s139
      %p151 = scmp.eq.s32.totalorder %s33, 3
      %p152 = por %p150, %p151
      %p154 = scmp.ne.s32.totalorder %s139, %s153
      %p155 = scmp.eq.s32.totalorder %s33, 0
      %p156 = por %p154, %p155
      %s158 = sadd.s32 %s157, 1
      %p161 = scmp.eq.s32.totalorder %s27, 3
      %p162 = scmp.ne.s32.totalorder %s157, %s159
      %p163 = scmp.eq.s32.totalorder %s27, 0
      %p164 = por %p162, %p163
      %p165 = scmp.ne.s32.totalorder %s157, %s159
      %p166 = scmp.eq.s32.totalorder %s32, 3
      %p167 = por %p165, %p166
      %p168 = scmp.ne.s32.totalorder %s159, %s160
      %p169 = scmp.eq.s32.totalorder %s32, 0
      %p170 = por %p168, %p169
      %p171 = scmp.ne.s32.totalorder %s159, %s160
      %p172 = scmp.eq.s32.totalorder %s33, 3
      %p173 = por %p171, %p172
      %p175 = scmp.ne.s32.totalorder %s160, %s174
      %p176 = scmp.eq.s32.totalorder %s33, 0
      %p177 = por %p175, %p176
      %s179 = sadd.s32 %s178, 1
      %p182 = scmp.eq.s32.totalorder %s27, 3
      %p183 = scmp.ne.s32.totalorder %s178, %s180
      %p184 = scmp.eq.s32.totalorder %s27, 0
      %p185 = por %p183, %p184
      %p186 = scmp.ne.s32.totalorder %s178, %s180
      %p187 = scmp.eq.s32.totalorder %s32, 3
      %p188 = por %p186, %p187
      %p189 = scmp.ne.s32.totalorder %s180, %s181
      %p190 = scmp.eq.s32.totalorder %s32, 0
      %p191 = por %p189, %p190
      %p192 = scmp.ne.s32.totalorder %s180, %s181
      %p193 = scmp.eq.s32.totalorder %s33, 3
      %p194 = por %p192, %p193
      %p196 = scmp.ne.s32.totalorder %s181, %s195
      %p197 = scmp.eq.s32.totalorder %s33, 0
      %p198 = por %p196, %p197
      %s200 = sadd.s32 %s199, 1
      %p203 = scmp.eq.s32.totalorder %s27, 3
      %p204 = scmp.ne.s32.totalorder %s199, %s201
      %p205 = scmp.eq.s32.totalorder %s27, 0
      %p206 = por %p204, %p205
      %p207 = scmp.ne.s32.totalorder %s199, %s201
      %p208 = scmp.eq.s32.totalorder %s32, 3
      %p209 = por %p207, %p208
      %p210 = scmp.ne.s32.totalorder %s201, %s202
      %p211 = scmp.eq.s32.totalorder %s32, 0
      %p212 = por %p210, %p211
      %p213 = scmp.ne.s32.totalorder %s201, %s202
      %p214 = scmp.eq.s32.totalorder %s33, 3
      %p215 = por %p213, %p214
      %p217 = scmp.ne.s32.totalorder %s202, %s216
      %p218 = scmp.eq.s32.totalorder %s33, 0
      %p219 = por %p217, %p218
      %s221 = sadd.s32 %s220, 1
      %p224 = scmp.eq.s32.totalorder %s27, 3
      %p225 = scmp.ne.s32.totalorder %s220, %s222
      %p226 = scmp.eq.s32.totalorder %s27, 0
      %p227 = por %p225, %p226
      %p228 = scmp.ne.s32.totalorder %s220, %s222
      %p229 = scmp.eq.s32.totalorder %s32, 3
      %p230 = por %p228, %p229
      %p231 = scmp.ne.s32.totalorder %s222, %s223
      %p232 = scmp.eq.s32.totalorder %s32, 0
      %p233 = por %p231, %p232
      %p234 = scmp.ne.s32.totalorder %s222, %s223
      %p235 = scmp.eq.s32.totalorder %s33, 3
      %p236 = por %p234, %p235
      %p238 = scmp.ne.s32.totalorder %s223, %s237
      %p239 = scmp.eq.s32.totalorder %s33, 0
      %p240 = por %p238, %p239
      %s242 = sadd.s32 %s241, 1
      %p245 = scmp.eq.s32.totalorder %s27, 3
      %p246 = scmp.ne.s32.totalorder %s241, %s243
      %p247 = scmp.eq.s32.totalorder %s27, 0
      %p248 = por %p246, %p247
      %p249 = scmp.ne.s32.totalorder %s241, %s243
      %p250 = scmp.eq.s32.totalorder %s32, 3
      %p251 = por %p249, %p250
      %p252 = scmp.ne.s32.totalorder %s243, %s244
      %p253 = scmp.eq.s32.totalorder %s32, 0
      %p254 = por %p252, %p253
      %p255 = scmp.ne.s32.totalorder %s243, %s244
      %p256 = scmp.eq.s32.totalorder %s33, 3
      %p257 = por %p255, %p256
      %p259 = scmp.ne.s32.totalorder %s244, %s258
      %p260 = scmp.eq.s32.totalorder %s33, 0
      %p261 = por %p259, %p260
      %s262 = ssub.s32 %s34, %s46
      %s263 = ssub.s32 %s35, %s42
      %s264 = sor.u32 %s262, %s263
      %p265 = scmp.eq.s32.totalorder %s264, 0
      %s267 = sadd.s32 %s266, 1
      %s268 = scalar_select %p265, %s266, %s267
      %p271 = pneg %p265
      %p272 = scmp.eq.s32.totalorder %s27, 3
      %p273 = por %p271, %p272
      %p274 = scmp.ne.s32.totalorder %s266, %s269
      %p275 = scmp.eq.s32.totalorder %s27, 0
      %p276 = por %p274, %p275
      %p277 = scmp.ne.s32.totalorder %s266, %s269
      %p278 = scmp.eq.s32.totalorder %s32, 3
      %p279 = por %p277, %p278
      %p280 = scmp.ne.s32.totalorder %s269, %s270
      %p281 = scmp.eq.s32.totalorder %s32, 0
      %p282 = por %p280, %p281
      %p283 = scmp.ne.s32.totalorder %s269, %s270
      %p284 = scmp.eq.s32.totalorder %s33, 3
      %p285 = por %p283, %p284
      %p287 = scmp.ne.s32.totalorder %s270, %s286
      %p288 = scmp.eq.s32.totalorder %s33, 0
      %p289 = por %p287, %p288
      %p290 = scmp.le.s32.totalorder 1, %s27
      %p291 = scmp.lt.s32.totalorder %s27, 5
      %p292 = pnand %p290, %p291
      %p293 = pneg %p292
      // Predicated region
      $region9: #{tpu_custom_call.1} parent=5 // pred_check
        _
      $region10: #{tpu_custom_call.1} parent=5 // pred_check_branch
        %295 = sbr.rel (%p292) target = $region12
      $region11: #{tpu_custom_call.1} parent=5 // pred_region
        %s296 = ssub.s32 %s27, 1
        // Predicated region
        $region13: #{tpu_custom_call.1} parent=11 // pred_check
          %p297 = pneg %p86
        $region14: #{tpu_custom_call.1} parent=11 // pred_check_branch
          %299 = sbr.rel (%p297) target = $region16
        $region15: #{tpu_custom_call.1} parent=11 // pred_region
          %s301 = ssub.s32 640, 640
          %302 = vsyncadd [#allocation10], %s301
          %s303 = sshll.u32 [#allocation9], 4
          %s304 = int_to_ptr.vmem [resolvable:$true] %s303
          %309 = dma.hbm_to_vmem [thread:$0]  %s1, 640, %s304, [#allocation10], 128, 128, 8
        $region16: #{tpu_custom_call.1} parent=11 // pred_fallthru
          _
        // Predicated region
        $region17: #{tpu_custom_call.1} parent=11 // pred_check
          %p310 = pneg %p107
        $region18: #{tpu_custom_call.1} parent=11 // pred_check_branch
          %312 = sbr.rel (%p310) target = $region20
        $region19: #{tpu_custom_call.1} parent=11 // pred_region
          %s314 = ssub.s32 16, 16
          %315 = vsyncadd [#allocation10], %s314
          %s317 = sshll.u32 [#allocation11], 4
          %s318 = int_to_ptr.vmem [resolvable:$true] %s317
          %320 = dma.hbm_to_vmem [thread:$0]  %s2, 16, %s318, [#allocation10]
        $region20: #{tpu_custom_call.1} parent=11 // pred_fallthru
          _
        // Predicated region
        $region21: #{tpu_custom_call.1} parent=11 // pred_check
          %p321 = pneg %p128
        $region22: #{tpu_custom_call.1} parent=11 // pred_check_branch
          %323 = sbr.rel (%p321) target = $region24
        $region23: #{tpu_custom_call.1} parent=11 // pred_region
          %s325 = ssub.s32 16, 16
          %326 = vsyncadd [#allocation13], %s325
          %s328 = sshll.u32 [#allocation12], 4
          %s329 = int_to_ptr.vmem [resolvable:$true] %s328
          %331 = dma.hbm_to_vmem [thread:$0]  %s3, 16, %s329, [#allocation13]
        $region24: #{tpu_custom_call.1} parent=11 // pred_fallthru
          _
        // Predicated region
        $region25: #{tpu_custom_call.1} parent=11 // pred_check
          %p332 = pneg %p149
        $region26: #{tpu_custom_call.1} parent=11 // pred_check_branch
          %334 = sbr.rel (%p332) target = $region28
        $region27: #{tpu_custom_call.1} parent=11 // pred_region
          %s336 = ssub.s32 1152, 1152
          %337 = vsyncadd [#allocation13], %s336
          %s338 = sshll.u32 [#allocation14], 4
          %s339 = int_to_ptr.vmem [resolvable:$true] %s338
          %344 = dma.hbm_to_vmem [thread:$0]  %s4, 1152, %s339, [#allocation13], 128, 128, 8
        $region28: #{tpu_custom_call.1} parent=11 // pred_fallthru
          _
        // Predicated region
        $region29: #{tpu_custom_call.1} parent=11 // pred_check
          %p345 = pneg %p170
        $region30: #{tpu_custom_call.1} parent=11 // pred_check_branch
          %347 = sbr.rel (%p345) target = $region32
        $region31: #{tpu_custom_call.1} parent=11 // pred_region
          %s349 = ssub.s32 16, 16
          %350 = vsyncadd [#allocation16], %s349
          %s352 = sshll.u32 [#allocation15], 4
          %s353 = int_to_ptr.vmem [resolvable:$true] %s352
          %355 = dma.hbm_to_vmem [thread:$0]  %s5, 16, %s353, [#allocation16]
        $region32: #{tpu_custom_call.1} parent=11 // pred_fallthru
          _
        // Predicated region
        $region33: #{tpu_custom_call.1} parent=11 // pred_check
          %p356 = pneg %p191
        $region34: #{tpu_custom_call.1} parent=11 // pred_check_branch
          %358 = sbr.rel (%p356) target = $region36
        $region35: #{tpu_custom_call.1} parent=11 // pred_region
          %s360 = ssub.s32 16, 16
          %361 = vsyncadd [#allocation16], %s360
          %s363 = sshll.u32 [#allocation17], 4
          %s364 = int_to_ptr.vmem [resolvable:$true] %s363
          %366 = dma.hbm_to_vmem [thread:$0]  %s6, 16, %s364, [#allocation16]
        $region36: #{tpu_custom_call.1} parent=11 // pred_fallthru
          _
        // Predicated region
        $region37: #{tpu_custom_call.1} parent=11 // pred_check
          %p367 = pneg %p212
        $region38: #{tpu_custom_call.1} parent=11 // pred_check_branch
          %369 = sbr.rel (%p367) target = $region40
        $region39: #{tpu_custom_call.1} parent=11 // pred_region
          %s371 = ssub.s32 64, 64
          %372 = vsyncadd [#allocation19], %s371
          %s374 = sshll.u32 [#allocation18], 4
          %s375 = int_to_ptr.vmem [resolvable:$true] %s374
          %377 = dma.hbm_to_vmem [thread:$0]  %s7, 64, %s375, [#allocation19]
        $region40: #{tpu_custom_call.1} parent=11 // pred_fallthru
          _
        // Predicated region
        $region41: #{tpu_custom_call.1} parent=11 // pred_check
          %p378 = pneg %p233
        $region42: #{tpu_custom_call.1} parent=11 // pred_check_branch
          %380 = sbr.rel (%p378) target = $region44
        $region43: #{tpu_custom_call.1} parent=11 // pred_region
          %s382 = ssub.s32 16, 16
          %383 = vsyncadd [#allocation19], %s382
          %s385 = sshll.u32 [#allocation20], 4
          %s386 = int_to_ptr.vmem [resolvable:$true] %s385
          %388 = dma.hbm_to_vmem [thread:$0]  %s8, 16, %s386, [#allocation19]
        $region44: #{tpu_custom_call.1} parent=11 // pred_fallthru
          _
        // Predicated region
        $region45: #{tpu_custom_call.1} parent=11 // pred_check
          %p389 = pneg %p254
        $region46: #{tpu_custom_call.1} parent=11 // pred_check_branch
          %391 = sbr.rel (%p389) target = $region48
        $region47: #{tpu_custom_call.1} parent=11 // pred_region
          %s393 = ssub.s32 16, 16
          %394 = vsyncadd [#allocation22], %s393
          %s396 = sshll.u32 [#allocation21], 4
          %s397 = int_to_ptr.vmem [resolvable:$true] %s396
          %399 = dma.hbm_to_vmem [thread:$0]  %s9, 16, %s397, [#allocation22]
        $region48: #{tpu_custom_call.1} parent=11 // pred_fallthru
          _
      $region12: #{tpu_custom_call.1} parent=5 // pred_fallthru
        _
      %p400 = scmp.lt.s32.totalorder %s27, 4
      // Predicated region
      $region49: #{tpu_custom_call.1} parent=5 // pred_check
        %p401 = pneg %p400
      $region50: #{tpu_custom_call.1} parent=5 // pred_check_branch
        %403 = sbr.rel (%p401) target = $region52
      $region51: #{tpu_custom_call.1} parent=5 // pred_region
        // Predicated region
        $region53: #{tpu_custom_call.1} parent=51 // pred_check
          %p404 = pneg %p59
        $region54: #{tpu_custom_call.1} parent=51 // pred_check_branch
          %406 = sbr.rel (%p404) target = $region56
        $region55: #{tpu_custom_call.1} parent=51 // pred_region
          %s407 = sand.u32 %s49, 1
          %s408 = scalar_lea.sflag [#allocation7], %s407
          %s409 = sand.u32 %s49, 1
          %s410 = smul.addr %s409, 256
          %s411 = scalar_lea.vmem [#allocation6], %s410
          %s413 = ssub.s32 4096, 4096
          %414 = vsyncadd %s408, %s413
          %s415 = smul.addr %s34, 32
          %s416 = smul.addr %s415, 128
          %s417 = scalar_lea.hbm %s0, %s416
          %s418 = sshll.u32 %s411, 4
          %s419 = int_to_ptr.vmem [resolvable:$true] %s418
          %424 = dma.hbm_to_vmem [thread:$0]  %s417, 4096, %s419, %s408, 128, 128, 8
        $region56: #{tpu_custom_call.1} parent=51 // pred_fallthru
          _
      $region52: #{tpu_custom_call.1} parent=5 // pred_fallthru
        _
      %p425 = scmp.le.s32.totalorder 1, %s27
      %p426 = scmp.lt.s32.totalorder %s27, 5
      %p427 = pnand %p425, %p426
      %p428 = pneg %p427
      // Predicated region
      $region57: #{tpu_custom_call.1} parent=5 // pred_check
        _
      $region58: #{tpu_custom_call.1} parent=5 // pred_check_branch
        %430 = sbr.rel (%p427) target = $region60
      $region59: #{tpu_custom_call.1} parent=5 // pred_region
        %s431 = ssub.s32 %s27, 1
        %s432 = sand.u32 %s52, 1
        %s433 = scalar_lea.sflag [#allocation7], %s432
        %s434 = sand.u32 %s52, 1
        %s435 = smul.addr %s434, 256
        %s436 = scalar_lea.vmem [#allocation6], %s435
        // Predicated region
        $region61: #{tpu_custom_call.1} parent=59 // pred_check
          %p437 = pneg %p65
        $region62: #{tpu_custom_call.1} parent=59 // pred_check_branch
          %439 = sbr.rel (%p437) target = $region64
        $region63: #{tpu_custom_call.1} parent=59 // pred_region
          %440 = dma.done %s433, 4096
        $region64: #{tpu_custom_call.1} parent=59 // pred_fallthru
          _
        // Predicated region
        $region65: #{tpu_custom_call.1} parent=59 // pred_check
          %p441 = pneg %p86
        $region66: #{tpu_custom_call.1} parent=59 // pred_check_branch
          %443 = sbr.rel (%p441) target = $region68
        $region67: #{tpu_custom_call.1} parent=59 // pred_region
          %444 = dma.done [#allocation10], 640
        $region68: #{tpu_custom_call.1} parent=59 // pred_fallthru
          _
        // Predicated region
        $region69: #{tpu_custom_call.1} parent=59 // pred_check
          %p445 = pneg %p107
        $region70: #{tpu_custom_call.1} parent=59 // pred_check_branch
          %447 = sbr.rel (%p445) target = $region72
        $region71: #{tpu_custom_call.1} parent=59 // pred_region
          %448 = dma.done [#allocation10], 16
        $region72: #{tpu_custom_call.1} parent=59 // pred_fallthru
          _
        // Predicated region
        $region73: #{tpu_custom_call.1} parent=59 // pred_check
          %p449 = pneg %p128
        $region74: #{tpu_custom_call.1} parent=59 // pred_check_branch
          %451 = sbr.rel (%p449) target = $region76
        $region75: #{tpu_custom_call.1} parent=59 // pred_region
          %452 = dma.done [#allocation13], 16
        $region76: #{tpu_custom_call.1} parent=59 // pred_fallthru
          _
        // Predicated region
        $region77: #{tpu_custom_call.1} parent=59 // pred_check
          %p453 = pneg %p149
        $region78: #{tpu_custom_call.1} parent=59 // pred_check_branch
          %455 = sbr.rel (%p453) target = $region80
        $region79: #{tpu_custom_call.1} parent=59 // pred_region
          %456 = dma.done [#allocation13], 1152
        $region80: #{tpu_custom_call.1} parent=59 // pred_fallthru
          _
        // Predicated region
        $region81: #{tpu_custom_call.1} parent=59 // pred_check
          %p457 = pneg %p170
        $region82: #{tpu_custom_call.1} parent=59 // pred_check_branch
          %459 = sbr.rel (%p457) target = $region84
        $region83: #{tpu_custom_call.1} parent=59 // pred_region
          %460 = dma.done [#allocation16], 16
        $region84: #{tpu_custom_call.1} parent=59 // pred_fallthru
          _
        // Predicated region
        $region85: #{tpu_custom_call.1} parent=59 // pred_check
          %p461 = pneg %p191
        $region86: #{tpu_custom_call.1} parent=59 // pred_check_branch
          %463 = sbr.rel (%p461) target = $region88
        $region87: #{tpu_custom_call.1} parent=59 // pred_region
          %464 = dma.done [#allocation16], 16
        $region88: #{tpu_custom_call.1} parent=59 // pred_fallthru
          _
        // Predicated region
        $region89: #{tpu_custom_call.1} parent=59 // pred_check
          %p465 = pneg %p212
        $region90: #{tpu_custom_call.1} parent=59 // pred_check_branch
          %467 = sbr.rel (%p465) target = $region92
        $region91: #{tpu_custom_call.1} parent=59 // pred_region
          %468 = dma.done [#allocation19], 64
        $region92: #{tpu_custom_call.1} parent=59 // pred_fallthru
          _
        // Predicated region
        $region93: #{tpu_custom_call.1} parent=59 // pred_check
          %p469 = pneg %p233
        $region94: #{tpu_custom_call.1} parent=59 // pred_check_branch
          %471 = sbr.rel (%p469) target = $region96
        $region95: #{tpu_custom_call.1} parent=59 // pred_region
          %472 = dma.done [#allocation19], 16
        $region96: #{tpu_custom_call.1} parent=59 // pred_fallthru
          _
        // Predicated region
        $region97: #{tpu_custom_call.1} parent=59 // pred_check
          %p473 = pneg %p254
        $region98: #{tpu_custom_call.1} parent=59 // pred_check_branch
          %475 = sbr.rel (%p473) target = $region100
        $region99: #{tpu_custom_call.1} parent=59 // pred_region
          %476 = dma.done [#allocation22], 16
        $region100: #{tpu_custom_call.1} parent=59 // pred_fallthru
          _
        %s477 = sand.u32 %s52, 1
        %s478 = scalar_lea.sflag [#allocation7], %s477
        %s479 = sand.u32 %s52, 1
        %s480 = smul.addr %s479, 256
        %s481 = scalar_lea.vmem [#allocation6], %s480
        %p482 = pneg %p65
        %p483 = pneg %p62
        %p484 = pneg %p86
        %p485 = pneg %p83
        %p486 = pneg %p107
        %p487 = pneg %p104
        %p488 = pneg %p128
        %p489 = pneg %p125
        %p490 = pneg %p149
        %p491 = pneg %p146
        %p492 = pneg %p170
        %p493 = pneg %p167
        %p494 = pneg %p191
        %p495 = pneg %p188
        %p496 = pneg %p212
        %p497 = pneg %p209
        %p498 = pneg %p233
        %p499 = pneg %p230
        %p500 = pneg %p254
        %p501 = pneg %p251
        %p502 = pneg %p282
        %p503 = pneg %p279
        %s504 = sand.u32 %s269, 1
        %s505 = scalar_lea.sflag [#allocation8], %s504
        %s506 = sand.u32 %s269, 1
        %s507 = smul.addr %s506, 128
        %s508 = scalar_lea.vmem [#allocation23], %s507
        %s509 = smul.u32 16, %s37
        %vm510 = vcmask 31744
        %511 = vst.msk [vmem:[#allocation2] sm:$0xff] %vm510, 0.0
        %512 = vst.msk [vmem:[#allocation2 + $0x8] sm:$0xff] %vm510, 0.0
        %vm513 = vcmask 25600
        %514 = vst.msk [vmem:[#allocation2 + $0x10] sm:$0x3] %vm513, 0.0
        %515 = vst.msk [vmem:[#allocation2 + $0x18] sm:$0xff] %vm510, 0.0
        %516 = vst.msk [vmem:[#allocation2 + $0x20] sm:$0xff] %vm510, 0.0
        %517 = vst.msk [vmem:[#allocation2 + $0x28] sm:$0x3] %vm513, 0.0
        %518 = vst.msk [vmem:[#allocation2 + $0x30] sm:$0xff] %vm510, 0.0
        %519 = vst.msk [vmem:[#allocation2 + $0x38] sm:$0xff] %vm510, 0.0
        %520 = vst.msk [vmem:[#allocation2 + $0x40] sm:$0x3] %vm513, 0.0
        %521 = vst.msk [vmem:[#allocation2 + $0x48] sm:$0xff] %vm510, 0.0
        %522 = vst.msk [vmem:[#allocation2 + $0x50] sm:$0xff] %vm510, 0.0
        %523 = vst.msk [vmem:[#allocation2 + $0x58] sm:$0x3] %vm513, 0.0
        %524 = vst.msk [vmem:[#allocation2 + $0x60] sm:$0xff] %vm510, 0.0
        %525 = vst.msk [vmem:[#allocation2 + $0x68] sm:$0xff] %vm510, 0.0
        %526 = vst.msk [vmem:[#allocation2 + $0x70] sm:$0x3] %vm513, 0.0
        %527 = vst.msk [vmem:[#allocation2 + $0x78] sm:$0xff] %vm510, 0.0
        %528 = vst.msk [vmem:[#allocation2 + $0x80] sm:$0xff] %vm510, 0.0
        %529 = vst.msk [vmem:[#allocation2 + $0x88] sm:$0x3] %vm513, 0.0
        %530 = vst.msk [vmem:[#allocation2 + $0x90] sm:$0xff] %vm510, 0.0
        %531 = vst.msk [vmem:[#allocation2 + $0x98] sm:$0xff] %vm510, 0.0
        %532 = vst.msk [vmem:[#allocation2 + $0xa0] sm:$0x3] %vm513, 0.0
        %533 = vst.msk [vmem:[#allocation2 + $0xa8] sm:$0xff] %vm510, 0.0
        %534 = vst.msk [vmem:[#allocation2 + $0xb0] sm:$0xff] %vm510, 0.0
        %535 = vst.msk [vmem:[#allocation2 + $0xb8] sm:$0x3] %vm513, 0.0
        %536 = vst.msk [vmem:[#allocation2 + $0xc0] sm:$0xff] %vm510, 0.0
        %537 = vst.msk [vmem:[#allocation2 + $0xc8] sm:$0xff] %vm510, 0.0
        %538 = vst.msk [vmem:[#allocation2 + $0xd0] sm:$0x3] %vm513, 0.0
        %539 = vst.msk [vmem:[#allocation2 + $0xd8] sm:$0xff] %vm510, 0.0
        %540 = vst.msk [vmem:[#allocation2 + $0xe0] sm:$0xff] %vm510, 0.0
        %541 = vst.msk [vmem:[#allocation2 + $0xe8] sm:$0x3] %vm513, 0.0
        %542 = vst.msk [vmem:[#allocation2 + $0xf0] sm:$0xff] %vm510, 0.0
        %543 = vst.msk [vmem:[#allocation2 + $0xf8] sm:$0xff] %vm510, 0.0
        %544 = vst.msk [vmem:[#allocation2 + $0x100] sm:$0x3] %vm513, 0.0
        %545 = vst.msk [vmem:[#allocation2 + $0x108] sm:$0xff] %vm510, 0.0
        %546 = vst.msk [vmem:[#allocation2 + $0x110] sm:$0xff] %vm510, 0.0
        %547 = vst.msk [vmem:[#allocation2 + $0x118] sm:$0x3] %vm513, 0.0
        %p548 = scmp.eq.s32.totalorder %s37, 0
        // Predicated region
        $region101: #{tpu_custom_call.1} parent=59 // pred_check
          %p549 = pneg %p548
        $region102: #{tpu_custom_call.1} parent=59 // pred_check_branch
          %551 = sbr.rel (%p549) target = $region104
        $region103: #{tpu_custom_call.1} parent=59 // pred_region
          %v552 = vld [vmem:[%s436] sm:$0xff]
          %v553 = vld [vmem:[%s436 + $0x8] sm:$0xff]
          %v554 = vld [vmem:[%s436 + $0x10] sm:$0xff]
          %v555 = vld [vmem:[%s436 + $0x18] sm:$0xff]
          %v556 = vld [vmem:[%s436 + $0x20] sm:$0xff]
          %v557 = vld [vmem:[%s436 + $0x28] sm:$0xff]
          %v558 = vld [vmem:[%s436 + $0x30] sm:$0xff]
          %v559 = vld [vmem:[%s436 + $0x38] sm:$0xff]
          %v560 = vld [vmem:[%s436 + $0x40] sm:$0xff]
          %v561 = vld [vmem:[%s436 + $0x48] sm:$0xff]
          %v562 = vld [vmem:[%s436 + $0x50] sm:$0xff]
          %v563 = vld [vmem:[%s436 + $0x58] sm:$0xff]
          %v564 = vld [vmem:[%s436 + $0x60] sm:$0xff]
          %v565 = vld [vmem:[%s436 + $0x68] sm:$0xff]
          %v566 = vld [vmem:[%s436 + $0x70] sm:$0xff]
          %v567 = vld [vmem:[%s436 + $0x78] sm:$0xff]
          %v568 = vld [vmem:[%s436 + $0x80] sm:$0xff]
          %v569 = vld [vmem:[%s436 + $0x88] sm:$0xff]
          %v570 = vld [vmem:[%s436 + $0x90] sm:$0xff]
          %v571 = vld [vmem:[%s436 + $0x98] sm:$0xff]
          %s572 = scalar_lea.vmem [#allocation2], 48
          %573 = vst.msk [vmem:[%s572 + $0x1] sm:$0xff] %vm510, %v552
          %574 = vst.msk [vmem:[%s572 + $0x9] sm:$0xff] %vm510, %v553
          %575 = vst.msk [vmem:[%s572 + $0x19] sm:$0xff] %vm510, %v554
          %576 = vst.msk [vmem:[%s572 + $0x21] sm:$0xff] %vm510, %v555
          %577 = vst.msk [vmem:[%s572 + $0x31] sm:$0xff] %vm510, %v556
          %578 = vst.msk [vmem:[%s572 + $0x39] sm:$0xff] %vm510, %v557
          %579 = vst.msk [vmem:[%s572 + $0x49] sm:$0xff] %vm510, %v558
          %580 = vst.msk [vmem:[%s572 + $0x51] sm:$0xff] %vm510, %v559
          %581 = vst.msk [vmem:[%s572 + $0x61] sm:$0xff] %vm510, %v560
          %582 = vst.msk [vmem:[%s572 + $0x69] sm:$0xff] %vm510, %v561
          %583 = vst.msk [vmem:[%s572 + $0x79] sm:$0xff] %vm510, %v562
          %584 = vst.msk [vmem:[%s572 + $0x81] sm:$0xff] %vm510, %v563
          %585 = vst.msk [vmem:[%s572 + $0x91] sm:$0xff] %vm510, %v564
          %586 = vst.msk [vmem:[%s572 + $0x99] sm:$0xff] %vm510, %v565
          %587 = vst.msk [vmem:[%s572 + $0xa9] sm:$0xff] %vm510, %v566
          %588 = vst.msk [vmem:[%s572 + $0xb1] sm:$0xff] %vm510, %v567
          %589 = vst.msk [vmem:[%s572 + $0xc1] sm:$0xff] %vm510, %v568
          %590 = vst.msk [vmem:[%s572 + $0xc9] sm:$0xff] %vm510, %v569
          %591 = vst.msk [vmem:[%s572 + $0xd9] sm:$0xff] %vm510, %v570
          %592 = vst.msk [vmem:[%s572 + $0xe1] sm:$0xff] %vm510, %v571
        $region104: #{tpu_custom_call.1} parent=59 // pred_fallthru
          _
        %p593 = scmp.gt.s32.totalorder %s37, 0
        %p594 = scmp.lt.s32.totalorder %s37, 1
        %p595 = pnand %p593, %p594
        %p596 = pneg %p595
        // Predicated region
        $region105: #{tpu_custom_call.1} parent=59 // pred_check
          _
        $region106: #{tpu_custom_call.1} parent=59 // pred_check_branch
          %598 = sbr.rel (%p595) target = $region108
        $region107: #{tpu_custom_call.1} parent=59 // pred_region
          %s599 = smul.u32 %s37, 8
          %s600 = ssub.s32 %s599, 2
          %s601 = smul.u32 %s600, 16
          %s602 = scalar_lea.vmem %s436, %s601 [#allocation6]
          %v603 = vld [vmem:[%s602] sm:$0xff]
          %v604 = vld [vmem:[%s602 + $0x8] sm:$0xff]
          %v605 = vld [vmem:[%s602 + $0x10] sm:$0xff]
          %v606 = vld [vmem:[%s602 + $0x18] sm:$0xff]
          %v607 = vld [vmem:[%s602 + $0x20] sm:$0xff]
          %v608 = vld [vmem:[%s602 + $0x28] sm:$0xff]
          %v609 = vld [vmem:[%s602 + $0x30] sm:$0xff]
          %v610 = vld [vmem:[%s602 + $0x38] sm:$0xff]
          %v611 = vld [vmem:[%s602 + $0x40] sm:$0xff]
          %v612 = vld [vmem:[%s602 + $0x48] sm:$0xff]
          %v613 = vld [vmem:[%s602 + $0x50] sm:$0xff]
          %v614 = vld [vmem:[%s602 + $0x58] sm:$0xff]
          %v615 = vld [vmem:[%s602 + $0x60] sm:$0xff]
          %v616 = vld [vmem:[%s602 + $0x68] sm:$0xff]
          %v617 = vld [vmem:[%s602 + $0x70] sm:$0xff]
          %v618 = vld [vmem:[%s602 + $0x78] sm:$0xff]
          %v619 = vld [vmem:[%s602 + $0x80] sm:$0xff]
          %v620 = vld [vmem:[%s602 + $0x88] sm:$0xff]
          %v621 = vld [vmem:[%s602 + $0x90] sm:$0xff]
          %v622 = vld [vmem:[%s602 + $0x98] sm:$0xff]
          %v623 = vld [vmem:[%s602 + $0xa0] sm:$0xff]
          %v624 = vld [vmem:[%s602 + $0xa8] sm:$0xff]
          %v625 = vld [vmem:[%s602 + $0xb0] sm:$0xff]
          %v626 = vld [vmem:[%s602 + $0xb8] sm:$0xff]
          %627 = vst.msk [vmem:[#allocation2 + $0x1] sm:$0xff] %vm510, %v603
          %628 = vst.msk [vmem:[#allocation2 + $0x9] sm:$0xff] %vm510, %v604
          %629 = vst.msk [vmem:[#allocation2 + $0x19] sm:$0xff] %vm510, %v605
          %630 = vst.msk [vmem:[#allocation2 + $0x21] sm:$0xff] %vm510, %v606
          %631 = vst.msk [vmem:[#allocation2 + $0x31] sm:$0xff] %vm510, %v607
          %632 = vst.msk [vmem:[#allocation2 + $0x39] sm:$0xff] %vm510, %v608
          %633 = vst.msk [vmem:[#allocation2 + $0x49] sm:$0xff] %vm510, %v609
          %634 = vst.msk [vmem:[#allocation2 + $0x51] sm:$0xff] %vm510, %v610
          %635 = vst.msk [vmem:[#allocation2 + $0x61] sm:$0xff] %vm510, %v611
          %636 = vst.msk [vmem:[#allocation2 + $0x69] sm:$0xff] %vm510, %v612
          %637 = vst.msk [vmem:[#allocation2 + $0x79] sm:$0xff] %vm510, %v613
          %638 = vst.msk [vmem:[#allocation2 + $0x81] sm:$0xff] %vm510, %v614
          %639 = vst.msk [vmem:[#allocation2 + $0x91] sm:$0xff] %vm510, %v615
          %640 = vst.msk [vmem:[#allocation2 + $0x99] sm:$0xff] %vm510, %v616
          %641 = vst.msk [vmem:[#allocation2 + $0xa9] sm:$0xff] %vm510, %v617
          %642 = vst.msk [vmem:[#allocation2 + $0xb1] sm:$0xff] %vm510, %v618
          %643 = vst.msk [vmem:[#allocation2 + $0xc1] sm:$0xff] %vm510, %v619
          %644 = vst.msk [vmem:[#allocation2 + $0xc9] sm:$0xff] %vm510, %v620
          %645 = vst.msk [vmem:[#allocation2 + $0xd9] sm:$0xff] %vm510, %v621
          %646 = vst.msk [vmem:[#allocation2 + $0xe1] sm:$0xff] %vm510, %v622
          %647 = vst.msk [vmem:[#allocation2 + $0xf1] sm:$0xff] %vm510, %v623
          %648 = vst.msk [vmem:[#allocation2 + $0xf9] sm:$0xff] %vm510, %v624
          %649 = vst.msk [vmem:[#allocation2 + $0x109] sm:$0xff] %vm510, %v625
          %650 = vst.msk [vmem:[#allocation2 + $0x111] sm:$0xff] %vm510, %v626
        $region108: #{tpu_custom_call.1} parent=59 // pred_fallthru
          _
        %p651 = scmp.eq.s32.totalorder %s37, 1
        // Predicated region
        $region109: #{tpu_custom_call.1} parent=59 // pred_check
          %p652 = pneg %p651
        $region110: #{tpu_custom_call.1} parent=59 // pred_check_branch
          %654 = sbr.rel (%p652) target = $region112
        $region111: #{tpu_custom_call.1} parent=59 // pred_region
          %s655 = smul.u32 %s37, 8
          %s656 = ssub.s32 %s655, 2
          %s657 = smul.u32 %s656, 16
          %s658 = scalar_lea.vmem %s436, %s657 [#allocation6]
          %v659 = vld [vmem:[%s658] sm:$0xff]
          %v660 = vld [vmem:[%s658 + $0x8] sm:$0xff]
          %v661 = vld [vmem:[%s658 + $0x10] sm:$0xff]
          %v662 = vld [vmem:[%s658 + $0x18] sm:$0xff]
          %v663 = vld [vmem:[%s658 + $0x20] sm:$0xff]
          %v664 = vld [vmem:[%s658 + $0x28] sm:$0xff]
          %v665 = vld [vmem:[%s658 + $0x30] sm:$0xff]
          %v666 = vld [vmem:[%s658 + $0x38] sm:$0xff]
          %v667 = vld [vmem:[%s658 + $0x40] sm:$0xff]
          %v668 = vld [vmem:[%s658 + $0x48] sm:$0xff]
          %v669 = vld [vmem:[%s658 + $0x50] sm:$0xff]
          %v670 = vld [vmem:[%s658 + $0x58] sm:$0xff]
          %v671 = vld [vmem:[%s658 + $0x60] sm:$0xff]
          %v672 = vld [vmem:[%s658 + $0x68] sm:$0xff]
          %v673 = vld [vmem:[%s658 + $0x70] sm:$0xff]
          %v674 = vld [vmem:[%s658 + $0x78] sm:$0xff]
          %v675 = vld [vmem:[%s658 + $0x80] sm:$0xff]
          %v676 = vld [vmem:[%s658 + $0x88] sm:$0xff]
          %v677 = vld [vmem:[%s658 + $0x90] sm:$0xff]
          %v678 = vld [vmem:[%s658 + $0x98] sm:$0xff]
          %679 = vst.msk [vmem:[#allocation2 + $0x1] sm:$0xff] %vm510, %v659
          %680 = vst.msk [vmem:[#allocation2 + $0x9] sm:$0xff] %vm510, %v660
          %681 = vst.msk [vmem:[#allocation2 + $0x19] sm:$0xff] %vm510, %v661
          %682 = vst.msk [vmem:[#allocation2 + $0x21] sm:$0xff] %vm510, %v662
          %683 = vst.msk [vmem:[#allocation2 + $0x31] sm:$0xff] %vm510, %v663
          %684 = vst.msk [vmem:[#allocation2 + $0x39] sm:$0xff] %vm510, %v664
          %685 = vst.msk [vmem:[#allocation2 + $0x49] sm:$0xff] %vm510, %v665
          %686 = vst.msk [vmem:[#allocation2 + $0x51] sm:$0xff] %vm510, %v666
          %687 = vst.msk [vmem:[#allocation2 + $0x61] sm:$0xff] %vm510, %v667
          %688 = vst.msk [vmem:[#allocation2 + $0x69] sm:$0xff] %vm510, %v668
          %689 = vst.msk [vmem:[#allocation2 + $0x79] sm:$0xff] %vm510, %v669
          %690 = vst.msk [vmem:[#allocation2 + $0x81] sm:$0xff] %vm510, %v670
          %691 = vst.msk [vmem:[#allocation2 + $0x91] sm:$0xff] %vm510, %v671
          %692 = vst.msk [vmem:[#allocation2 + $0x99] sm:$0xff] %vm510, %v672
          %693 = vst.msk [vmem:[#allocation2 + $0xa9] sm:$0xff] %vm510, %v673
          %694 = vst.msk [vmem:[#allocation2 + $0xb1] sm:$0xff] %vm510, %v674
          %695 = vst.msk [vmem:[#allocation2 + $0xc1] sm:$0xff] %vm510, %v675
          %696 = vst.msk [vmem:[#allocation2 + $0xc9] sm:$0xff] %vm510, %v676
          %697 = vst.msk [vmem:[#allocation2 + $0xd9] sm:$0xff] %vm510, %v677
          %698 = vst.msk [vmem:[#allocation2 + $0xe1] sm:$0xff] %vm510, %v678
        $region112: #{tpu_custom_call.1} parent=59 // pred_fallthru
          _
        %v699 = vld [vmem:[#allocation2] sm:$0xff]
        %v700 = vld [vmem:[#allocation2 + $0x8] sm:$0xff]
        %v701 = vld [vmem:[#allocation2 + $0x18] sm:$0xff]
        %v702 = vld [vmem:[#allocation2 + $0x20] sm:$0xff]
        %v703 = vld [vmem:[#allocation2 + $0x30] sm:$0xff]
        %v704 = vld [vmem:[#allocation2 + $0x38] sm:$0xff]
        %v705 = vld [vmem:[#allocation2 + $0x48] sm:$0xff]
        %v706 = vld [vmem:[#allocation2 + $0x50] sm:$0xff]
        %v707 = vld [vmem:[#allocation2 + $0x60] sm:$0xff]
        %v708 = vld [vmem:[#allocation2 + $0x68] sm:$0xff]
        %v709 = vld [vmem:[#allocation2 + $0x78] sm:$0xff]
        %v710 = vld [vmem:[#allocation2 + $0x80] sm:$0xff]
        %v711 = vld [vmem:[#allocation2 + $0x90] sm:$0xff]
        %v712 = vld [vmem:[#allocation2 + $0x98] sm:$0xff]
        %v713 = vld [vmem:[#allocation2 + $0xa8] sm:$0xff]
        %v714 = vld [vmem:[#allocation2 + $0xb0] sm:$0xff]
        %v715 = vld [vmem:[#allocation2 + $0xc0] sm:$0xff]
        %v716 = vld [vmem:[#allocation2 + $0xc8] sm:$0xff]
        %v717 = vld [vmem:[#allocation2 + $0xd8] sm:$0xff]
        %v718 = vld [vmem:[#allocation2 + $0xe0] sm:$0xff]
        %719 = vst.msk [vmem:[#allocation4] sm:$0xff] %vm510, %v699
        %720 = vst.msk [vmem:[#allocation4 + $0x8] sm:$0xff] %vm510, %v700
        %721 = vst.msk [vmem:[#allocation4 + $0x10] sm:$0xff] %vm510, %v701
        %722 = vst.msk [vmem:[#allocation4 + $0x18] sm:$0xff] %vm510, %v702
        %723 = vst.msk [vmem:[#allocation4 + $0x20] sm:$0xff] %vm510, %v703
        %724 = vst.msk [vmem:[#allocation4 + $0x28] sm:$0xff] %vm510, %v704
        %725 = vst.msk [vmem:[#allocation4 + $0x30] sm:$0xff] %vm510, %v705
        %726 = vst.msk [vmem:[#allocation4 + $0x38] sm:$0xff] %vm510, %v706
        %727 = vst.msk [vmem:[#allocation4 + $0x40] sm:$0xff] %vm510, %v707
        %728 = vst.msk [vmem:[#allocation4 + $0x48] sm:$0xff] %vm510, %v708
        %729 = vst.msk [vmem:[#allocation4 + $0x50] sm:$0xff] %vm510, %v709
        %730 = vst.msk [vmem:[#allocation4 + $0x58] sm:$0xff] %vm510, %v710
        %731 = vst.msk [vmem:[#allocation4 + $0x60] sm:$0xff] %vm510, %v711
        %732 = vst.msk [vmem:[#allocation4 + $0x68] sm:$0xff] %vm510, %v712
        %733 = vst.msk [vmem:[#allocation4 + $0x70] sm:$0xff] %vm510, %v713
        %734 = vst.msk [vmem:[#allocation4 + $0x78] sm:$0xff] %vm510, %v714
        %735 = vst.msk [vmem:[#allocation4 + $0x80] sm:$0xff] %vm510, %v715
        %736 = vst.msk [vmem:[#allocation4 + $0x88] sm:$0xff] %vm510, %v716
        %737 = vst.msk [vmem:[#allocation4 + $0x90] sm:$0xff] %vm510, %v717
        %738 = vst.msk [vmem:[#allocation4 + $0x98] sm:$0xff] %vm510, %v718
        %v739 = vld [vmem:[#allocation2 + $0x1] sm:$0xff]
        %v740 = vld [vmem:[#allocation2 + $0x9] sm:$0xff]
        %v741 = vld [vmem:[#allocation2 + $0x19] sm:$0xff]
        %v742 = vld [vmem:[#allocation2 + $0x21] sm:$0xff]
        %v743 = vld [vmem:[#allocation2 + $0x31] sm:$0xff]
        %v744 = vld [vmem:[#allocation2 + $0x39] sm:$0xff]
        %v745 = vld [vmem:[#allocation2 + $0x49] sm:$0xff]
        %v746 = vld [vmem:[#allocation2 + $0x51] sm:$0xff]
        %v747 = vld [vmem:[#allocation2 + $0x61] sm:$0xff]
        %v748 = vld [vmem:[#allocation2 + $0x69] sm:$0xff]
        %v749 = vld [vmem:[#allocation2 + $0x79] sm:$0xff]
        %v750 = vld [vmem:[#allocation2 + $0x81] sm:$0xff]
        %v751 = vld [vmem:[#allocation2 + $0x91] sm:$0xff]
        %v752 = vld [vmem:[#allocation2 + $0x99] sm:$0xff]
        %v753 = vld [vmem:[#allocation2 + $0xa9] sm:$0xff]
        %v754 = vld [vmem:[#allocation2 + $0xb1] sm:$0xff]
        %v755 = vld [vmem:[#allocation2 + $0xc1] sm:$0xff]
        %v756 = vld [vmem:[#allocation2 + $0xc9] sm:$0xff]
        %v757 = vld [vmem:[#allocation2 + $0xd9] sm:$0xff]
        %v758 = vld [vmem:[#allocation2 + $0xe1] sm:$0xff]
        %779 = vrot.lane.b32.xlu0 %v739, 4
        %v780 = vpop.permute.xlu0 %779
        %781 = vrot.lane.b32.xlu0 %v740, 4
        %v782 = vpop.permute.xlu0 %781
        %783 = vrot.lane.b32.xlu0 %v741, 4
        %v784 = vpop.permute.xlu0 %783
        %785 = vrot.lane.b32.xlu0 %v742, 4
        %v786 = vpop.permute.xlu0 %785
        %787 = vrot.lane.b32.xlu0 %v743, 4
        %v788 = vpop.permute.xlu0 %787
        %789 = vrot.lane.b32.xlu0 %v744, 4
        %v790 = vpop.permute.xlu0 %789
        %791 = vrot.lane.b32.xlu0 %v745, 4
        %v792 = vpop.permute.xlu0 %791
        %793 = vrot.lane.b32.xlu0 %v746, 4
        %v794 = vpop.permute.xlu0 %793
        %795 = vrot.lane.b32.xlu0 %v747, 4
        %v796 = vpop.permute.xlu0 %795
        %797 = vrot.lane.b32.xlu0 %v748, 4
        %v798 = vpop.permute.xlu0 %797
        %799 = vrot.lane.b32.xlu0 %v749, 4
        %v800 = vpop.permute.xlu0 %799
        %801 = vrot.lane.b32.xlu0 %v750, 4
        %v802 = vpop.permute.xlu0 %801
        %803 = vrot.lane.b32.xlu0 %v751, 4
        %v804 = vpop.permute.xlu0 %803
        %805 = vrot.lane.b32.xlu0 %v752, 4
        %v806 = vpop.permute.xlu0 %805
        %807 = vrot.lane.b32.xlu0 %v753, 4
        %v808 = vpop.permute.xlu0 %807
        %809 = vrot.lane.b32.xlu0 %v754, 4
        %v810 = vpop.permute.xlu0 %809
        %811 = vrot.lane.b32.xlu0 %v755, 4
        %v812 = vpop.permute.xlu0 %811
        %813 = vrot.lane.b32.xlu0 %v756, 4
        %v814 = vpop.permute.xlu0 %813
        %815 = vrot.lane.b32.xlu0 %v757, 4
        %v816 = vpop.permute.xlu0 %815
        %817 = vrot.lane.b32.xlu0 %v758, 4
        %v818 = vpop.permute.xlu0 %817
        %vm839 = vcmask 64544
        %840 = vst.msk [vmem:[#allocation4] sm:$0xff] %vm839, %v780
        %841 = vst.msk [vmem:[#allocation4 + $0x8] sm:$0xff] %vm839, %v782
        %842 = vst.msk [vmem:[#allocation4 + $0x10] sm:$0xff] %vm839, %v784
        %843 = vst.msk [vmem:[#allocation4 + $0x18] sm:$0xff] %vm839, %v786
        %844 = vst.msk [vmem:[#allocation4 + $0x20] sm:$0xff] %vm839, %v788
        %845 = vst.msk [vmem:[#allocation4 + $0x28] sm:$0xff] %vm839, %v790
        %846 = vst.msk [vmem:[#allocation4 + $0x30] sm:$0xff] %vm839, %v792
        %847 = vst.msk [vmem:[#allocation4 + $0x38] sm:$0xff] %vm839, %v794
        %848 = vst.msk [vmem:[#allocation4 + $0x40] sm:$0xff] %vm839, %v796
        %849 = vst.msk [vmem:[#allocation4 + $0x48] sm:$0xff] %vm839, %v798
        %850 = vst.msk [vmem:[#allocation4 + $0x50] sm:$0xff] %vm839, %v800
        %851 = vst.msk [vmem:[#allocation4 + $0x58] sm:$0xff] %vm839, %v802
        %852 = vst.msk [vmem:[#allocation4 + $0x60] sm:$0xff] %vm839, %v804
        %853 = vst.msk [vmem:[#allocation4 + $0x68] sm:$0xff] %vm839, %v806
        %854 = vst.msk [vmem:[#allocation4 + $0x70] sm:$0xff] %vm839, %v808
        %855 = vst.msk [vmem:[#allocation4 + $0x78] sm:$0xff] %vm839, %v810
        %856 = vst.msk [vmem:[#allocation4 + $0x80] sm:$0xff] %vm839, %v812
        %857 = vst.msk [vmem:[#allocation4 + $0x88] sm:$0xff] %vm839, %v814
        %858 = vst.msk [vmem:[#allocation4 + $0x90] sm:$0xff] %vm839, %v816
        %859 = vst.msk [vmem:[#allocation4 + $0x98] sm:$0xff] %vm839, %v818
        %v860 = vld [vmem:[#allocation2 + $0x2] sm:$0xff]
        %v861 = vld [vmem:[#allocation2 + $0xa] sm:$0xff]
        %v862 = vld [vmem:[#allocation2 + $0x1a] sm:$0xff]
        %v863 = vld [vmem:[#allocation2 + $0x22] sm:$0xff]
        %v864 = vld [vmem:[#allocation2 + $0x32] sm:$0xff]
        %v865 = vld [vmem:[#allocation2 + $0x3a] sm:$0xff]
        %v866 = vld [vmem:[#allocation2 + $0x4a] sm:$0xff]
        %v867 = vld [vmem:[#allocation2 + $0x52] sm:$0xff]
        %v868 = vld [vmem:[#allocation2 + $0x62] sm:$0xff]
        %v869 = vld [vmem:[#allocation2 + $0x6a] sm:$0xff]
        %v870 = vld [vmem:[#allocation2 + $0x7a] sm:$0xff]
        %v871 = vld [vmem:[#allocation2 + $0x82] sm:$0xff]
        %v872 = vld [vmem:[#allocation2 + $0x92] sm:$0xff]
        %v873 = vld [vmem:[#allocation2 + $0x9a] sm:$0xff]
        %v874 = vld [vmem:[#allocation2 + $0xaa] sm:$0xff]
        %v875 = vld [vmem:[#allocation2 + $0xb2] sm:$0xff]
        %v876 = vld [vmem:[#allocation2 + $0xc2] sm:$0xff]
        %v877 = vld [vmem:[#allocation2 + $0xca] sm:$0xff]
        %v878 = vld [vmem:[#allocation2 + $0xda] sm:$0xff]
        %v879 = vld [vmem:[#allocation2 + $0xe2] sm:$0xff]
        %900 = vrot.lane.b32.xlu0 %v860, 8
        %v901 = vpop.permute.xlu0 %900
        %902 = vrot.lane.b32.xlu0 %v861, 8
        %v903 = vpop.permute.xlu0 %902
        %904 = vrot.lane.b32.xlu0 %v862, 8
        %v905 = vpop.permute.xlu0 %904
        %906 = vrot.lane.b32.xlu0 %v863, 8
        %v907 = vpop.permute.xlu0 %906
        %908 = vrot.lane.b32.xlu0 %v864, 8
        %v909 = vpop.permute.xlu0 %908
        %910 = vrot.lane.b32.xlu0 %v865, 8
        %v911 = vpop.permute.xlu0 %910
        %912 = vrot.lane.b32.xlu0 %v866, 8
        %v913 = vpop.permute.xlu0 %912
        %914 = vrot.lane.b32.xlu0 %v867, 8
        %v915 = vpop.permute.xlu0 %914
        %916 = vrot.lane.b32.xlu0 %v868, 8
        %v917 = vpop.permute.xlu0 %916
        %918 = vrot.lane.b32.xlu0 %v869, 8
        %v919 = vpop.permute.xlu0 %918
        %920 = vrot.lane.b32.xlu0 %v870, 8
        %v921 = vpop.permute.xlu0 %920
        %922 = vrot.lane.b32.xlu0 %v871, 8
        %v923 = vpop.permute.xlu0 %922
        %924 = vrot.lane.b32.xlu0 %v872, 8
        %v925 = vpop.permute.xlu0 %924
        %926 = vrot.lane.b32.xlu0 %v873, 8
        %v927 = vpop.permute.xlu0 %926
        %928 = vrot.lane.b32.xlu0 %v874, 8
        %v929 = vpop.permute.xlu0 %928
        %930 = vrot.lane.b32.xlu0 %v875, 8
        %v931 = vpop.permute.xlu0 %930
        %932 = vrot.lane.b32.xlu0 %v876, 8
        %v933 = vpop.permute.xlu0 %932
        %934 = vrot.lane.b32.xlu0 %v877, 8
        %v935 = vpop.permute.xlu0 %934
        %936 = vrot.lane.b32.xlu0 %v878, 8
        %v937 = vpop.permute.xlu0 %936
        %938 = vrot.lane.b32.xlu0 %v879, 8
        %v939 = vpop.permute.xlu0 %938
        %vm960 = vcmask 97344
        %961 = vst.msk [vmem:[#allocation4] sm:$0xff] %vm960, %v901
        %962 = vst.msk [vmem:[#allocation4 + $0x8] sm:$0xff] %vm960, %v903
        %963 = vst.msk [vmem:[#allocation4 + $0x10] sm:$0xff] %vm960, %v905
        %964 = vst.msk [vmem:[#allocation4 + $0x18] sm:$0xff] %vm960, %v907
        %965 = vst.msk [vmem:[#allocation4 + $0x20] sm:$0xff] %vm960, %v909
        %966 = vst.msk [vmem:[#allocation4 + $0x28] sm:$0xff] %vm960, %v911
        %967 = vst.msk [vmem:[#allocation4 + $0x30] sm:$0xff] %vm960, %v913
        %968 = vst.msk [vmem:[#allocation4 + $0x38] sm:$0xff] %vm960, %v915
        %969 = vst.msk [vmem:[#allocation4 + $0x40] sm:$0xff] %vm960, %v917
        %970 = vst.msk [vmem:[#allocation4 + $0x48] sm:$0xff] %vm960, %v919
        %971 = vst.msk [vmem:[#allocation4 + $0x50] sm:$0xff] %vm960, %v921
        %972 = vst.msk [vmem:[#allocation4 + $0x58] sm:$0xff] %vm960, %v923
        %973 = vst.msk [vmem:[#allocation4 + $0x60] sm:$0xff] %vm960, %v925
        %974 = vst.msk [vmem:[#allocation4 + $0x68] sm:$0xff] %vm960, %v927
        %975 = vst.msk [vmem:[#allocation4 + $0x70] sm:$0xff] %vm960, %v929
        %976 = vst.msk [vmem:[#allocation4 + $0x78] sm:$0xff] %vm960, %v931
        %977 = vst.msk [vmem:[#allocation4 + $0x80] sm:$0xff] %vm960, %v933
        %978 = vst.msk [vmem:[#allocation4 + $0x88] sm:$0xff] %vm960, %v935
        %979 = vst.msk [vmem:[#allocation4 + $0x90] sm:$0xff] %vm960, %v937
        %980 = vst.msk [vmem:[#allocation4 + $0x98] sm:$0xff] %vm960, %v939
        %s981 = scalar_lea.vmem [#allocation2], 24
        %v982 = vld [vmem:[%s981] sm:$0xff]
        %v983 = vld [vmem:[%s981 + $0x8] sm:$0xff]
        %v984 = vld [vmem:[%s981 + $0x18] sm:$0xff]
        %v985 = vld [vmem:[%s981 + $0x20] sm:$0xff]
        %v986 = vld [vmem:[%s981 + $0x30] sm:$0xff]
        %v987 = vld [vmem:[%s981 + $0x38] sm:$0xff]
        %v988 = vld [vmem:[%s981 + $0x48] sm:$0xff]
        %v989 = vld [vmem:[%s981 + $0x50] sm:$0xff]
        %v990 = vld [vmem:[%s981 + $0x60] sm:$0xff]
        %v991 = vld [vmem:[%s981 + $0x68] sm:$0xff]
        %v992 = vld [vmem:[%s981 + $0x78] sm:$0xff]
        %v993 = vld [vmem:[%s981 + $0x80] sm:$0xff]
        %v994 = vld [vmem:[%s981 + $0x90] sm:$0xff]
        %v995 = vld [vmem:[%s981 + $0x98] sm:$0xff]
        %v996 = vld [vmem:[%s981 + $0xa8] sm:$0xff]
        %v997 = vld [vmem:[%s981 + $0xb0] sm:$0xff]
        %v998 = vld [vmem:[%s981 + $0xc0] sm:$0xff]
        %v999 = vld [vmem:[%s981 + $0xc8] sm:$0xff]
        %v1000 = vld [vmem:[%s981 + $0xd8] sm:$0xff]
        %v1001 = vld [vmem:[%s981 + $0xe0] sm:$0xff]
        %1022 = vrot.lane.b32.xlu0 %v982, 12
        %v1023 = vpop.permute.xlu0 %1022
        %1024 = vrot.lane.b32.xlu0 %v983, 12
        %v1025 = vpop.permute.xlu0 %1024
        %1026 = vrot.lane.b32.xlu0 %v984, 12
        %v1027 = vpop.permute.xlu0 %1026
        %1028 = vrot.lane.b32.xlu0 %v985, 12
        %v1029 = vpop.permute.xlu0 %1028
        %1030 = vrot.lane.b32.xlu0 %v986, 12
        %v1031 = vpop.permute.xlu0 %1030
        %1032 = vrot.lane.b32.xlu0 %v987, 12
        %v1033 = vpop.permute.xlu0 %1032
        %1034 = vrot.lane.b32.xlu0 %v988, 12
        %v1035 = vpop.permute.xlu0 %1034
        %1036 = vrot.lane.b32.xlu0 %v989, 12
        %v1037 = vpop.permute.xlu0 %1036
        %1038 = vrot.lane.b32.xlu0 %v990, 12
        %v1039 = vpop.permute.xlu0 %1038
        %1040 = vrot.lane.b32.xlu0 %v991, 12
        %v1041 = vpop.permute.xlu0 %1040
        %1042 = vrot.lane.b32.xlu0 %v992, 12
        %v1043 = vpop.permute.xlu0 %1042
        %1044 = vrot.lane.b32.xlu0 %v993, 12
        %v1045 = vpop.permute.xlu0 %1044
        %1046 = vrot.lane.b32.xlu0 %v994, 12
        %v1047 = vpop.permute.xlu0 %1046
        %1048 = vrot.lane.b32.xlu0 %v995, 12
        %v1049 = vpop.permute.xlu0 %1048
        %1050 = vrot.lane.b32.xlu0 %v996, 12
        %v1051 = vpop.permute.xlu0 %1050
        %1052 = vrot.lane.b32.xlu0 %v997, 12
        %v1053 = vpop.permute.xlu0 %1052
        %1054 = vrot.lane.b32.xlu0 %v998, 12
        %v1055 = vpop.permute.xlu0 %1054
        %1056 = vrot.lane.b32.xlu0 %v999, 12
        %v1057 = vpop.permute.xlu0 %1056
        %1058 = vrot.lane.b32.xlu0 %v1000, 12
        %v1059 = vpop.permute.xlu0 %1058
        %1060 = vrot.lane.b32.xlu0 %v1001, 12
        %v1061 = vpop.permute.xlu0 %1060
        %vm1082 = vcmask 130144
        %1083 = vst.msk [vmem:[#allocation4] sm:$0xff] %vm1082, %v1023
        %1084 = vst.msk [vmem:[#allocation4 + $0x8] sm:$0xff] %vm1082, %v1025
        %1085 = vst.msk [vmem:[#allocation4 + $0x10] sm:$0xff] %vm1082, %v1027
        %1086 = vst.msk [vmem:[#allocation4 + $0x18] sm:$0xff] %vm1082, %v1029
        %1087 = vst.msk [vmem:[#allocation4 + $0x20] sm:$0xff] %vm1082, %v1031
        %1088 = vst.msk [vmem:[#allocation4 + $0x28] sm:$0xff] %vm1082, %v1033
        %1089 = vst.msk [vmem:[#allocation4 + $0x30] sm:$0xff] %vm1082, %v1035
        %1090 = vst.msk [vmem:[#allocation4 + $0x38] sm:$0xff] %vm1082, %v1037
        %1091 = vst.msk [vmem:[#allocation4 + $0x40] sm:$0xff] %vm1082, %v1039
        %1092 = vst.msk [vmem:[#allocation4 + $0x48] sm:$0xff] %vm1082, %v1041
        %1093 = vst.msk [vmem:[#allocation4 + $0x50] sm:$0xff] %vm1082, %v1043
        %1094 = vst.msk [vmem:[#allocation4 + $0x58] sm:$0xff] %vm1082, %v1045
        %1095 = vst.msk [vmem:[#allocation4 + $0x60] sm:$0xff] %vm1082, %v1047
        %1096 = vst.msk [vmem:[#allocation4 + $0x68] sm:$0xff] %vm1082, %v1049
        %1097 = vst.msk [vmem:[#allocation4 + $0x70] sm:$0xff] %vm1082, %v1051
        %1098 = vst.msk [vmem:[#allocation4 + $0x78] sm:$0xff] %vm1082, %v1053
        %1099 = vst.msk [vmem:[#allocation4 + $0x80] sm:$0xff] %vm1082, %v1055
        %1100 = vst.msk [vmem:[#allocation4 + $0x88] sm:$0xff] %vm1082, %v1057
        %1101 = vst.msk [vmem:[#allocation4 + $0x90] sm:$0xff] %vm1082, %v1059
        %1102 = vst.msk [vmem:[#allocation4 + $0x98] sm:$0xff] %vm1082, %v1061
        %v1103 = vld [vmem:[%s981 + $0x1] sm:$0xff]
        %v1104 = vld [vmem:[%s981 + $0x9] sm:$0xff]
        %v1105 = vld [vmem:[%s981 + $0x19] sm:$0xff]
        %v1106 = vld [vmem:[%s981 + $0x21] sm:$0xff]
        %v1107 = vld [vmem:[%s981 + $0x31] sm:$0xff]
        %v1108 = vld [vmem:[%s981 + $0x39] sm:$0xff]
        %v1109 = vld [vmem:[%s981 + $0x49] sm:$0xff]
        %v1110 = vld [vmem:[%s981 + $0x51] sm:$0xff]
        %v1111 = vld [vmem:[%s981 + $0x61] sm:$0xff]
        %v1112 = vld [vmem:[%s981 + $0x69] sm:$0xff]
        %v1113 = vld [vmem:[%s981 + $0x79] sm:$0xff]
        %v1114 = vld [vmem:[%s981 + $0x81] sm:$0xff]
        %v1115 = vld [vmem:[%s981 + $0x91] sm:$0xff]
        %v1116 = vld [vmem:[%s981 + $0x99] sm:$0xff]
        %v1117 = vld [vmem:[%s981 + $0xa9] sm:$0xff]
        %v1118 = vld [vmem:[%s981 + $0xb1] sm:$0xff]
        %v1119 = vld [vmem:[%s981 + $0xc1] sm:$0xff]
        %v1120 = vld [vmem:[%s981 + $0xc9] sm:$0xff]
        %v1121 = vld [vmem:[%s981 + $0xd9] sm:$0xff]
        %v1122 = vld [vmem:[%s981 + $0xe1] sm:$0xff]
        %1143 = vrot.lane.b32.xlu0 %v1103, 16
        %v1144 = vpop.permute.xlu0 %1143
        %1145 = vrot.lane.b32.xlu0 %v1104, 16
        %v1146 = vpop.permute.xlu0 %1145
        %1147 = vrot.lane.b32.xlu0 %v1105, 16
        %v1148 = vpop.permute.xlu0 %1147
        %1149 = vrot.lane.b32.xlu0 %v1106, 16
        %v1150 = vpop.permute.xlu0 %1149
        %1151 = vrot.lane.b32.xlu0 %v1107, 16
        %v1152 = vpop.permute.xlu0 %1151
        %1153 = vrot.lane.b32.xlu0 %v1108, 16
        %v1154 = vpop.permute.xlu0 %1153
        %1155 = vrot.lane.b32.xlu0 %v1109, 16
        %v1156 = vpop.permute.xlu0 %1155
        %1157 = vrot.lane.b32.xlu0 %v1110, 16
        %v1158 = vpop.permute.xlu0 %1157
        %1159 = vrot.lane.b32.xlu0 %v1111, 16
        %v1160 = vpop.permute.xlu0 %1159
        %1161 = vrot.lane.b32.xlu0 %v1112, 16
        %v1162 = vpop.permute.xlu0 %1161
        %1163 = vrot.lane.b32.xlu0 %v1113, 16
        %v1164 = vpop.permute.xlu0 %1163
        %1165 = vrot.lane.b32.xlu0 %v1114, 16
        %v1166 = vpop.permute.xlu0 %1165
        %1167 = vrot.lane.b32.xlu0 %v1115, 16
        %v1168 = vpop.permute.xlu0 %1167
        %1169 = vrot.lane.b32.xlu0 %v1116, 16
        %v1170 = vpop.permute.xlu0 %1169
        %1171 = vrot.lane.b32.xlu0 %v1117, 16
        %v1172 = vpop.permute.xlu0 %1171
        %1173 = vrot.lane.b32.xlu0 %v1118, 16
        %v1174 = vpop.permute.xlu0 %1173
        %1175 = vrot.lane.b32.xlu0 %v1119, 16
        %v1176 = vpop.permute.xlu0 %1175
        %1177 = vrot.lane.b32.xlu0 %v1120, 16
        %v1178 = vpop.permute.xlu0 %1177
        %1179 = vrot.lane.b32.xlu0 %v1121, 16
        %v1180 = vpop.permute.xlu0 %1179
        %1181 = vrot.lane.b32.xlu0 %v1122, 16
        %v1182 = vpop.permute.xlu0 %1181
        %vm1203 = vcmask 162944
        %1204 = vst.msk [vmem:[#allocation4] sm:$0xff] %vm1203, %v1144
        %1205 = vst.msk [vmem:[#allocation4 + $0x8] sm:$0xff] %vm1203, %v1146
        %1206 = vst.msk [vmem:[#allocation4 + $0x10] sm:$0xff] %vm1203, %v1148
        %1207 = vst.msk [vmem:[#allocation4 + $0x18] sm:$0xff] %vm1203, %v1150
        %1208 = vst.msk [vmem:[#allocation4 + $0x20] sm:$0xff] %vm1203, %v1152
        %1209 = vst.msk [vmem:[#allocation4 + $0x28] sm:$0xff] %vm1203, %v1154
        %1210 = vst.msk [vmem:[#allocation4 + $0x30] sm:$0xff] %vm1203, %v1156
        %1211 = vst.msk [vmem:[#allocation4 + $0x38] sm:$0xff] %vm1203, %v1158
        %1212 = vst.msk [vmem:[#allocation4 + $0x40] sm:$0xff] %vm1203, %v1160
        %1213 = vst.msk [vmem:[#allocation4 + $0x48] sm:$0xff] %vm1203, %v1162
        %1214 = vst.msk [vmem:[#allocation4 + $0x50] sm:$0xff] %vm1203, %v1164
        %1215 = vst.msk [vmem:[#allocation4 + $0x58] sm:$0xff] %vm1203, %v1166
        %1216 = vst.msk [vmem:[#allocation4 + $0x60] sm:$0xff] %vm1203, %v1168
        %1217 = vst.msk [vmem:[#allocation4 + $0x68] sm:$0xff] %vm1203, %v1170
        %1218 = vst.msk [vmem:[#allocation4 + $0x70] sm:$0xff] %vm1203, %v1172
        %1219 = vst.msk [vmem:[#allocation4 + $0x78] sm:$0xff] %vm1203, %v1174
        %1220 = vst.msk [vmem:[#allocation4 + $0x80] sm:$0xff] %vm1203, %v1176
        %1221 = vst.msk [vmem:[#allocation4 + $0x88] sm:$0xff] %vm1203, %v1178
        %1222 = vst.msk [vmem:[#allocation4 + $0x90] sm:$0xff] %vm1203, %v1180
        %1223 = vst.msk [vmem:[#allocation4 + $0x98] sm:$0xff] %vm1203, %v1182
        %v1224 = vld [vmem:[%s981 + $0x2] sm:$0xff]
        %v1225 = vld [vmem:[%s981 + $0xa] sm:$0xff]
        %v1226 = vld [vmem:[%s981 + $0x1a] sm:$0xff]
        %v1227 = vld [vmem:[%s981 + $0x22] sm:$0xff]
        %v1228 = vld [vmem:[%s981 + $0x32] sm:$0xff]
        %v1229 = vld [vmem:[%s981 + $0x3a] sm:$0xff]
        %v1230 = vld [vmem:[%s981 + $0x4a] sm:$0xff]
        %v1231 = vld [vmem:[%s981 + $0x52] sm:$0xff]
        %v1232 = vld [vmem:[%s981 + $0x62] sm:$0xff]
        %v1233 = vld [vmem:[%s981 + $0x6a] sm:$0xff]
        %v1234 = vld [vmem:[%s981 + $0x7a] sm:$0xff]
        %v1235 = vld [vmem:[%s981 + $0x82] sm:$0xff]
        %v1236 = vld [vmem:[%s981 + $0x92] sm:$0xff]
        %v1237 = vld [vmem:[%s981 + $0x9a] sm:$0xff]
        %v1238 = vld [vmem:[%s981 + $0xaa] sm:$0xff]
        %v1239 = vld [vmem:[%s981 + $0xb2] sm:$0xff]
        %v1240 = vld [vmem:[%s981 + $0xc2] sm:$0xff]
        %v1241 = vld [vmem:[%s981 + $0xca] sm:$0xff]
        %v1242 = vld [vmem:[%s981 + $0xda] sm:$0xff]
        %v1243 = vld [vmem:[%s981 + $0xe2] sm:$0xff]
        %1264 = vrot.lane.b32.xlu0 %v1224, 20
        %v1265 = vpop.permute.xlu0 %1264
        %1266 = vrot.lane.b32.xlu0 %v1225, 20
        %v1267 = vpop.permute.xlu0 %1266
        %1268 = vrot.lane.b32.xlu0 %v1226, 20
        %v1269 = vpop.permute.xlu0 %1268
        %1270 = vrot.lane.b32.xlu0 %v1227, 20
        %v1271 = vpop.permute.xlu0 %1270
        %1272 = vrot.lane.b32.xlu0 %v1228, 20
        %v1273 = vpop.permute.xlu0 %1272
        %1274 = vrot.lane.b32.xlu0 %v1229, 20
        %v1275 = vpop.permute.xlu0 %1274
        %1276 = vrot.lane.b32.xlu0 %v1230, 20
        %v1277 = vpop.permute.xlu0 %1276
        %1278 = vrot.lane.b32.xlu0 %v1231, 20
        %v1279 = vpop.permute.xlu0 %1278
        %1280 = vrot.lane.b32.xlu0 %v1232, 20
        %v1281 = vpop.permute.xlu0 %1280
        %1282 = vrot.lane.b32.xlu0 %v1233, 20
        %v1283 = vpop.permute.xlu0 %1282
        %1284 = vrot.lane.b32.xlu0 %v1234, 20
        %v1285 = vpop.permute.xlu0 %1284
        %1286 = vrot.lane.b32.xlu0 %v1235, 20
        %v1287 = vpop.permute.xlu0 %1286
        %1288 = vrot.lane.b32.xlu0 %v1236, 20
        %v1289 = vpop.permute.xlu0 %1288
        %1290 = vrot.lane.b32.xlu0 %v1237, 20
        %v1291 = vpop.permute.xlu0 %1290
        %1292 = vrot.lane.b32.xlu0 %v1238, 20
        %v1293 = vpop.permute.xlu0 %1292
        %1294 = vrot.lane.b32.xlu0 %v1239, 20
        %v1295 = vpop.permute.xlu0 %1294
        %1296 = vrot.lane.b32.xlu0 %v1240, 20
        %v1297 = vpop.permute.xlu0 %1296
        %1298 = vrot.lane.b32.xlu0 %v1241, 20
        %v1299 = vpop.permute.xlu0 %1298
        %1300 = vrot.lane.b32.xlu0 %v1242, 20
        %v1301 = vpop.permute.xlu0 %1300
        %1302 = vrot.lane.b32.xlu0 %v1243, 20
        %v1303 = vpop.permute.xlu0 %1302
        %vm1324 = vcmask 195744
        %1325 = vst.msk [vmem:[#allocation4] sm:$0xff] %vm1324, %v1265
        %1326 = vst.msk [vmem:[#allocation4 + $0x8] sm:$0xff] %vm1324, %v1267
        %1327 = vst.msk [vmem:[#allocation4 + $0x10] sm:$0xff] %vm1324, %v1269
        %1328 = vst.msk [vmem:[#allocation4 + $0x18] sm:$0xff] %vm1324, %v1271
        %1329 = vst.msk [vmem:[#allocation4 + $0x20] sm:$0xff] %vm1324, %v1273
        %1330 = vst.msk [vmem:[#allocation4 + $0x28] sm:$0xff] %vm1324, %v1275
        %1331 = vst.msk [vmem:[#allocation4 + $0x30] sm:$0xff] %vm1324, %v1277
        %1332 = vst.msk [vmem:[#allocation4 + $0x38] sm:$0xff] %vm1324, %v1279
        %1333 = vst.msk [vmem:[#allocation4 + $0x40] sm:$0xff] %vm1324, %v1281
        %1334 = vst.msk [vmem:[#allocation4 + $0x48] sm:$0xff] %vm1324, %v1283
        %1335 = vst.msk [vmem:[#allocation4 + $0x50] sm:$0xff] %vm1324, %v1285
        %1336 = vst.msk [vmem:[#allocation4 + $0x58] sm:$0xff] %vm1324, %v1287
        %1337 = vst.msk [vmem:[#allocation4 + $0x60] sm:$0xff] %vm1324, %v1289
        %1338 = vst.msk [vmem:[#allocation4 + $0x68] sm:$0xff] %vm1324, %v1291
        %1339 = vst.msk [vmem:[#allocation4 + $0x70] sm:$0xff] %vm1324, %v1293
        %1340 = vst.msk [vmem:[#allocation4 + $0x78] sm:$0xff] %vm1324, %v1295
        %1341 = vst.msk [vmem:[#allocation4 + $0x80] sm:$0xff] %vm1324, %v1297
        %1342 = vst.msk [vmem:[#allocation4 + $0x88] sm:$0xff] %vm1324, %v1299
        %1343 = vst.msk [vmem:[#allocation4 + $0x90] sm:$0xff] %vm1324, %v1301
        %1344 = vst.msk [vmem:[#allocation4 + $0x98] sm:$0xff] %vm1324, %v1303
        %s1345 = scalar_lea.vmem [#allocation2], 48
        %v1346 = vld [vmem:[%s1345] sm:$0xff]
        %v1347 = vld [vmem:[%s1345 + $0x8] sm:$0xff]
        %v1348 = vld [vmem:[%s1345 + $0x18] sm:$0xff]
        %v1349 = vld [vmem:[%s1345 + $0x20] sm:$0xff]
        %v1350 = vld [vmem:[%s1345 + $0x30] sm:$0xff]
        %v1351 = vld [vmem:[%s1345 + $0x38] sm:$0xff]
        %v1352 = vld [vmem:[%s1345 + $0x48] sm:$0xff]
        %v1353 = vld [vmem:[%s1345 + $0x50] sm:$0xff]
        %v1354 = vld [vmem:[%s1345 + $0x60] sm:$0xff]
        %v1355 = vld [vmem:[%s1345 + $0x68] sm:$0xff]
        %v1356 = vld [vmem:[%s1345 + $0x78] sm:$0xff]
        %v1357 = vld [vmem:[%s1345 + $0x80] sm:$0xff]
        %v1358 = vld [vmem:[%s1345 + $0x90] sm:$0xff]
        %v1359 = vld [vmem:[%s1345 + $0x98] sm:$0xff]
        %v1360 = vld [vmem:[%s1345 + $0xa8] sm:$0xff]
        %v1361 = vld [vmem:[%s1345 + $0xb0] sm:$0xff]
        %v1362 = vld [vmem:[%s1345 + $0xc0] sm:$0xff]
        %v1363 = vld [vmem:[%s1345 + $0xc8] sm:$0xff]
        %v1364 = vld [vmem:[%s1345 + $0xd8] sm:$0xff]
        %v1365 = vld [vmem:[%s1345 + $0xe0] sm:$0xff]
        %1386 = vrot.lane.b32.xlu0 %v1346, 24
        %v1387 = vpop.permute.xlu0 %1386
        %1388 = vrot.lane.b32.xlu0 %v1347, 24
        %v1389 = vpop.permute.xlu0 %1388
        %1390 = vrot.lane.b32.xlu0 %v1348, 24
        %v1391 = vpop.permute.xlu0 %1390
        %1392 = vrot.lane.b32.xlu0 %v1349, 24
        %v1393 = vpop.permute.xlu0 %1392
        %1394 = vrot.lane.b32.xlu0 %v1350, 24
        %v1395 = vpop.permute.xlu0 %1394
        %1396 = vrot.lane.b32.xlu0 %v1351, 24
        %v1397 = vpop.permute.xlu0 %1396
        %1398 = vrot.lane.b32.xlu0 %v1352, 24
        %v1399 = vpop.permute.xlu0 %1398
        %1400 = vrot.lane.b32.xlu0 %v1353, 24
        %v1401 = vpop.permute.xlu0 %1400
        %1402 = vrot.lane.b32.xlu0 %v1354, 24
        %v1403 = vpop.permute.xlu0 %1402
        %1404 = vrot.lane.b32.xlu0 %v1355, 24
        %v1405 = vpop.permute.xlu0 %1404
        %1406 = vrot.lane.b32.xlu0 %v1356, 24
        %v1407 = vpop.permute.xlu0 %1406
        %1408 = vrot.lane.b32.xlu0 %v1357, 24
        %v1409 = vpop.permute.xlu0 %1408
        %1410 = vrot.lane.b32.xlu0 %v1358, 24
        %v1411 = vpop.permute.xlu0 %1410
        %1412 = vrot.lane.b32.xlu0 %v1359, 24
        %v1413 = vpop.permute.xlu0 %1412
        %1414 = vrot.lane.b32.xlu0 %v1360, 24
        %v1415 = vpop.permute.xlu0 %1414
        %1416 = vrot.lane.b32.xlu0 %v1361, 24
        %v1417 = vpop.permute.xlu0 %1416
        %1418 = vrot.lane.b32.xlu0 %v1362, 24
        %v1419 = vpop.permute.xlu0 %1418
        %1420 = vrot.lane.b32.xlu0 %v1363, 24
        %v1421 = vpop.permute.xlu0 %1420
        %1422 = vrot.lane.b32.xlu0 %v1364, 24
        %v1423 = vpop.permute.xlu0 %1422
        %1424 = vrot.lane.b32.xlu0 %v1365, 24
        %v1425 = vpop.permute.xlu0 %1424
        %vm1446 = vcmask 228544
        %1447 = vst.msk [vmem:[#allocation4] sm:$0xff] %vm1446, %v1387
        %1448 = vst.msk [vmem:[#allocation4 + $0x8] sm:$0xff] %vm1446, %v1389
        %1449 = vst.msk [vmem:[#allocation4 + $0x10] sm:$0xff] %vm1446, %v1391
        %1450 = vst.msk [vmem:[#allocation4 + $0x18] sm:$0xff] %vm1446, %v1393
        %1451 = vst.msk [vmem:[#allocation4 + $0x20] sm:$0xff] %vm1446, %v1395
        %1452 = vst.msk [vmem:[#allocation4 + $0x28] sm:$0xff] %vm1446, %v1397
        %1453 = vst.msk [vmem:[#allocation4 + $0x30] sm:$0xff] %vm1446, %v1399
        %1454 = vst.msk [vmem:[#allocation4 + $0x38] sm:$0xff] %vm1446, %v1401
        %1455 = vst.msk [vmem:[#allocation4 + $0x40] sm:$0xff] %vm1446, %v1403
        %1456 = vst.msk [vmem:[#allocation4 + $0x48] sm:$0xff] %vm1446, %v1405
        %1457 = vst.msk [vmem:[#allocation4 + $0x50] sm:$0xff] %vm1446, %v1407
        %1458 = vst.msk [vmem:[#allocation4 + $0x58] sm:$0xff] %vm1446, %v1409
        %1459 = vst.msk [vmem:[#allocation4 + $0x60] sm:$0xff] %vm1446, %v1411
        %1460 = vst.msk [vmem:[#allocation4 + $0x68] sm:$0xff] %vm1446, %v1413
        %1461 = vst.msk [vmem:[#allocation4 + $0x70] sm:$0xff] %vm1446, %v1415
        %1462 = vst.msk [vmem:[#allocation4 + $0x78] sm:$0xff] %vm1446, %v1417
        %1463 = vst.msk [vmem:[#allocation4 + $0x80] sm:$0xff] %vm1446, %v1419
        %1464 = vst.msk [vmem:[#allocation4 + $0x88] sm:$0xff] %vm1446, %v1421
        %1465 = vst.msk [vmem:[#allocation4 + $0x90] sm:$0xff] %vm1446, %v1423
        %1466 = vst.msk [vmem:[#allocation4 + $0x98] sm:$0xff] %vm1446, %v1425
        %v1467 = vld [vmem:[%s1345 + $0x1] sm:$0xff]
        %v1468 = vld [vmem:[%s1345 + $0x9] sm:$0xff]
        %v1469 = vld [vmem:[%s1345 + $0x19] sm:$0xff]
        %v1470 = vld [vmem:[%s1345 + $0x21] sm:$0xff]
        %v1471 = vld [vmem:[%s1345 + $0x31] sm:$0xff]
        %v1472 = vld [vmem:[%s1345 + $0x39] sm:$0xff]
        %v1473 = vld [vmem:[%s1345 + $0x49] sm:$0xff]
        %v1474 = vld [vmem:[%s1345 + $0x51] sm:$0xff]
        %v1475 = vld [vmem:[%s1345 + $0x61] sm:$0xff]
        %v1476 = vld [vmem:[%s1345 + $0x69] sm:$0xff]
        %v1477 = vld [vmem:[%s1345 + $0x79] sm:$0xff]
        %v1478 = vld [vmem:[%s1345 + $0x81] sm:$0xff]
        %v1479 = vld [vmem:[%s1345 + $0x91] sm:$0xff]
        %v1480 = vld [vmem:[%s1345 + $0x99] sm:$0xff]
        %v1481 = vld [vmem:[%s1345 + $0xa9] sm:$0xff]
        %v1482 = vld [vmem:[%s1345 + $0xb1] sm:$0xff]
        %v1483 = vld [vmem:[%s1345 + $0xc1] sm:$0xff]
        %v1484 = vld [vmem:[%s1345 + $0xc9] sm:$0xff]
        %v1485 = vld [vmem:[%s1345 + $0xd9] sm:$0xff]
        %v1486 = vld [vmem:[%s1345 + $0xe1] sm:$0xff]
        %1507 = vrot.lane.b32.xlu0 %v1467, 28
        %v1508 = vpop.permute.xlu0 %1507
        %1509 = vrot.lane.b32.xlu0 %v1468, 28
        %v1510 = vpop.permute.xlu0 %1509
        %1511 = vrot.lane.b32.xlu0 %v1469, 28
        %v1512 = vpop.permute.xlu0 %1511
        %1513 = vrot.lane.b32.xlu0 %v1470, 28
        %v1514 = vpop.permute.xlu0 %1513
        %1515 = vrot.lane.b32.xlu0 %v1471, 28
        %v1516 = vpop.permute.xlu0 %1515
        %1517 = vrot.lane.b32.xlu0 %v1472, 28
        %v1518 = vpop.permute.xlu0 %1517
        %1519 = vrot.lane.b32.xlu0 %v1473, 28
        %v1520 = vpop.permute.xlu0 %1519
        %1521 = vrot.lane.b32.xlu0 %v1474, 28
        %v1522 = vpop.permute.xlu0 %1521
        %1523 = vrot.lane.b32.xlu0 %v1475, 28
        %v1524 = vpop.permute.xlu0 %1523
        %1525 = vrot.lane.b32.xlu0 %v1476, 28
        %v1526 = vpop.permute.xlu0 %1525
        %1527 = vrot.lane.b32.xlu0 %v1477, 28
        %v1528 = vpop.permute.xlu0 %1527
        %1529 = vrot.lane.b32.xlu0 %v1478, 28
        %v1530 = vpop.permute.xlu0 %1529
        %1531 = vrot.lane.b32.xlu0 %v1479, 28
        %v1532 = vpop.permute.xlu0 %1531
        %1533 = vrot.lane.b32.xlu0 %v1480, 28
        %v1534 = vpop.permute.xlu0 %1533
        %1535 = vrot.lane.b32.xlu0 %v1481, 28
        %v1536 = vpop.permute.xlu0 %1535
        %1537 = vrot.lane.b32.xlu0 %v1482, 28
        %v1538 = vpop.permute.xlu0 %1537
        %1539 = vrot.lane.b32.xlu0 %v1483, 28
        %v1540 = vpop.permute.xlu0 %1539
        %1541 = vrot.lane.b32.xlu0 %v1484, 28
        %v1542 = vpop.permute.xlu0 %1541
        %1543 = vrot.lane.b32.xlu0 %v1485, 28
        %v1544 = vpop.permute.xlu0 %1543
        %1545 = vrot.lane.b32.xlu0 %v1486, 28
        %v1546 = vpop.permute.xlu0 %1545
        %vm1567 = vcmask 261344
        %1568 = vst.msk [vmem:[#allocation4] sm:$0xff] %vm1567, %v1508
        %1569 = vst.msk [vmem:[#allocation4 + $0x8] sm:$0xff] %vm1567, %v1510
        %1570 = vst.msk [vmem:[#allocation4 + $0x10] sm:$0xff] %vm1567, %v1512
        %1571 = vst.msk [vmem:[#allocation4 + $0x18] sm:$0xff] %vm1567, %v1514
        %1572 = vst.msk [vmem:[#allocation4 + $0x20] sm:$0xff] %vm1567, %v1516
        %1573 = vst.msk [vmem:[#allocation4 + $0x28] sm:$0xff] %vm1567, %v1518
        %1574 = vst.msk [vmem:[#allocation4 + $0x30] sm:$0xff] %vm1567, %v1520
        %1575 = vst.msk [vmem:[#allocation4 + $0x38] sm:$0xff] %vm1567, %v1522
        %1576 = vst.msk [vmem:[#allocation4 + $0x40] sm:$0xff] %vm1567, %v1524
        %1577 = vst.msk [vmem:[#allocation4 + $0x48] sm:$0xff] %vm1567, %v1526
        %1578 = vst.msk [vmem:[#allocation4 + $0x50] sm:$0xff] %vm1567, %v1528
        %1579 = vst.msk [vmem:[#allocation4 + $0x58] sm:$0xff] %vm1567, %v1530
        %1580 = vst.msk [vmem:[#allocation4 + $0x60] sm:$0xff] %vm1567, %v1532
        %1581 = vst.msk [vmem:[#allocation4 + $0x68] sm:$0xff] %vm1567, %v1534
        %1582 = vst.msk [vmem:[#allocation4 + $0x70] sm:$0xff] %vm1567, %v1536
        %1583 = vst.msk [vmem:[#allocation4 + $0x78] sm:$0xff] %vm1567, %v1538
        %1584 = vst.msk [vmem:[#allocation4 + $0x80] sm:$0xff] %vm1567, %v1540
        %1585 = vst.msk [vmem:[#allocation4 + $0x88] sm:$0xff] %vm1567, %v1542
        %1586 = vst.msk [vmem:[#allocation4 + $0x90] sm:$0xff] %vm1567, %v1544
        %1587 = vst.msk [vmem:[#allocation4 + $0x98] sm:$0xff] %vm1567, %v1546
        %v1588 = vld [vmem:[%s1345 + $0x2] sm:$0xff]
        %v1589 = vld [vmem:[%s1345 + $0xa] sm:$0xff]
        %v1590 = vld [vmem:[%s1345 + $0x1a] sm:$0xff]
        %v1591 = vld [vmem:[%s1345 + $0x22] sm:$0xff]
        %v1592 = vld [vmem:[%s1345 + $0x32] sm:$0xff]
        %v1593 = vld [vmem:[%s1345 + $0x3a] sm:$0xff]
        %v1594 = vld [vmem:[%s1345 + $0x4a] sm:$0xff]
        %v1595 = vld [vmem:[%s1345 + $0x52] sm:$0xff]
        %v1596 = vld [vmem:[%s1345 + $0x62] sm:$0xff]
        %v1597 = vld [vmem:[%s1345 + $0x6a] sm:$0xff]
        %v1598 = vld [vmem:[%s1345 + $0x7a] sm:$0xff]
        %v1599 = vld [vmem:[%s1345 + $0x82] sm:$0xff]
        %v1600 = vld [vmem:[%s1345 + $0x92] sm:$0xff]
        %v1601 = vld [vmem:[%s1345 + $0x9a] sm:$0xff]
        %v1602 = vld [vmem:[%s1345 + $0xaa] sm:$0xff]
        %v1603 = vld [vmem:[%s1345 + $0xb2] sm:$0xff]
        %v1604 = vld [vmem:[%s1345 + $0xc2] sm:$0xff]
        %v1605 = vld [vmem:[%s1345 + $0xca] sm:$0xff]
        %v1606 = vld [vmem:[%s1345 + $0xda] sm:$0xff]
        %v1607 = vld [vmem:[%s1345 + $0xe2] sm:$0xff]
        %1628 = vrot.lane.b32.xlu0 %v1588, 32
        %v1629 = vpop.permute.xlu0 %1628
        %1630 = vrot.lane.b32.xlu0 %v1589, 32
        %v1631 = vpop.permute.xlu0 %1630
        %1632 = vrot.lane.b32.xlu0 %v1590, 32
        %v1633 = vpop.permute.xlu0 %1632
        %1634 = vrot.lane.b32.xlu0 %v1591, 32
        %v1635 = vpop.permute.xlu0 %1634
        %1636 = vrot.lane.b32.xlu0 %v1592, 32
        %v1637 = vpop.permute.xlu0 %1636
        %1638 = vrot.lane.b32.xlu0 %v1593, 32
        %v1639 = vpop.permute.xlu0 %1638
        %1640 = vrot.lane.b32.xlu0 %v1594, 32
        %v1641 = vpop.permute.xlu0 %1640
        %1642 = vrot.lane.b32.xlu0 %v1595, 32
        %v1643 = vpop.permute.xlu0 %1642
        %1644 = vrot.lane.b32.xlu0 %v1596, 32
        %v1645 = vpop.permute.xlu0 %1644
        %1646 = vrot.lane.b32.xlu0 %v1597, 32
        %v1647 = vpop.permute.xlu0 %1646
        %1648 = vrot.lane.b32.xlu0 %v1598, 32
        %v1649 = vpop.permute.xlu0 %1648
        %1650 = vrot.lane.b32.xlu0 %v1599, 32
        %v1651 = vpop.permute.xlu0 %1650
        %1652 = vrot.lane.b32.xlu0 %v1600, 32
        %v1653 = vpop.permute.xlu0 %1652
        %1654 = vrot.lane.b32.xlu0 %v1601, 32
        %v1655 = vpop.permute.xlu0 %1654
        %1656 = vrot.lane.b32.xlu0 %v1602, 32
        %v1657 = vpop.permute.xlu0 %1656
        %1658 = vrot.lane.b32.xlu0 %v1603, 32
        %v1659 = vpop.permute.xlu0 %1658
        %1660 = vrot.lane.b32.xlu0 %v1604, 32
        %v1661 = vpop.permute.xlu0 %1660
        %1662 = vrot.lane.b32.xlu0 %v1605, 32
        %v1663 = vpop.permute.xlu0 %1662
        %1664 = vrot.lane.b32.xlu0 %v1606, 32
        %v1665 = vpop.permute.xlu0 %1664
        %1666 = vrot.lane.b32.xlu0 %v1607, 32
        %v1667 = vpop.permute.xlu0 %1666
        %vm1688 = vcmask 294144
        %1689 = vst.msk [vmem:[#allocation4] sm:$0xff] %vm1688, %v1629
        %1690 = vst.msk [vmem:[#allocation4 + $0x8] sm:$0xff] %vm1688, %v1631
        %1691 = vst.msk [vmem:[#allocation4 + $0x10] sm:$0xff] %vm1688, %v1633
        %1692 = vst.msk [vmem:[#allocation4 + $0x18] sm:$0xff] %vm1688, %v1635
        %1693 = vst.msk [vmem:[#allocation4 + $0x20] sm:$0xff] %vm1688, %v1637
        %1694 = vst.msk [vmem:[#allocation4 + $0x28] sm:$0xff] %vm1688, %v1639
        %1695 = vst.msk [vmem:[#allocation4 + $0x30] sm:$0xff] %vm1688, %v1641
        %1696 = vst.msk [vmem:[#allocation4 + $0x38] sm:$0xff] %vm1688, %v1643
        %1697 = vst.msk [vmem:[#allocation4 + $0x40] sm:$0xff] %vm1688, %v1645
        %1698 = vst.msk [vmem:[#allocation4 + $0x48] sm:$0xff] %vm1688, %v1647
        %1699 = vst.msk [vmem:[#allocation4 + $0x50] sm:$0xff] %vm1688, %v1649
        %1700 = vst.msk [vmem:[#allocation4 + $0x58] sm:$0xff] %vm1688, %v1651
        %1701 = vst.msk [vmem:[#allocation4 + $0x60] sm:$0xff] %vm1688, %v1653
        %1702 = vst.msk [vmem:[#allocation4 + $0x68] sm:$0xff] %vm1688, %v1655
        %1703 = vst.msk [vmem:[#allocation4 + $0x70] sm:$0xff] %vm1688, %v1657
        %1704 = vst.msk [vmem:[#allocation4 + $0x78] sm:$0xff] %vm1688, %v1659
        %1705 = vst.msk [vmem:[#allocation4 + $0x80] sm:$0xff] %vm1688, %v1661
        %1706 = vst.msk [vmem:[#allocation4 + $0x88] sm:$0xff] %vm1688, %v1663
        %1707 = vst.msk [vmem:[#allocation4 + $0x90] sm:$0xff] %vm1688, %v1665
        %1708 = vst.msk [vmem:[#allocation4 + $0x98] sm:$0xff] %vm1688, %v1667
        %v1709 = vld [vmem:[#allocation4] sm:$0xff]
        %v1710 = vld [vmem:[#allocation4 + $0x8] sm:$0xff]
        %v1711 = vld [vmem:[#allocation4 + $0x10] sm:$0xff]
        %v1712 = vld [vmem:[#allocation4 + $0x18] sm:$0xff]
        %v1713 = vld [vmem:[#allocation4 + $0x20] sm:$0xff]
        %v1714 = vld [vmem:[#allocation4 + $0x28] sm:$0xff]
        %v1715 = vld [vmem:[#allocation4 + $0x30] sm:$0xff]
        %v1716 = vld [vmem:[#allocation4 + $0x38] sm:$0xff]
        %v1717 = vld [vmem:[#allocation4 + $0x40] sm:$0xff]
        %v1718 = vld [vmem:[#allocation4 + $0x48] sm:$0xff]
        %v1719 = vld [vmem:[#allocation4 + $0x50] sm:$0xff]
        %v1720 = vld [vmem:[#allocation4 + $0x58] sm:$0xff]
        %v1721 = vld [vmem:[#allocation4 + $0x60] sm:$0xff]
        %v1722 = vld [vmem:[#allocation4 + $0x68] sm:$0xff]
        %v1723 = vld [vmem:[#allocation4 + $0x70] sm:$0xff]
        %v1724 = vld [vmem:[#allocation4 + $0x78] sm:$0xff]
        %v1725 = vld [vmem:[#allocation4 + $0x80] sm:$0xff]
        %v1726 = vld [vmem:[#allocation4 + $0x88] sm:$0xff]
        %v1727 = vld [vmem:[#allocation4 + $0x90] sm:$0xff]
        %v1728 = vld [vmem:[#allocation4 + $0x98] sm:$0xff]
        %v1729 = vld [vmem:[#allocation9] sm:$0xff]
        %v1730 = vld [vmem:[#allocation9 + $0x8] sm:$0xff]
        %v1731 = vld [vmem:[#allocation9 + $0x10] sm:$0xff]
        %v1732 = vld [vmem:[#allocation9 + $0x18] sm:$0xff]
        %v1733 = vld [vmem:[#allocation9 + $0x20] sm:$0xf]
        %vm1734 = vcmask 293888
        %v1736 = vsel %vm1734, %v1709, 0
        %v1739 = vsel %vm1734, %v1710, 0
        %v1742 = vsel %vm1734, %v1711, 0
        %v1745 = vsel %vm1734, %v1712, 0
        %v1748 = vsel %vm1734, %v1713, 0
        %v1751 = vsel %vm1734, %v1714, 0
        %v1754 = vsel %vm1734, %v1715, 0
        %v1757 = vsel %vm1734, %v1716, 0
        %v1760 = vsel %vm1734, %v1717, 0
        %v1763 = vsel %vm1734, %v1718, 0
        %v1766 = vsel %vm1734, %v1719, 0
        %v1769 = vsel %vm1734, %v1720, 0
        %v1772 = vsel %vm1734, %v1721, 0
        %v1775 = vsel %vm1734, %v1722, 0
        %v1778 = vsel %vm1734, %v1723, 0
        %v1781 = vsel %vm1734, %v1724, 0
        %v1784 = vsel %vm1734, %v1725, 0
        %v1787 = vsel %vm1734, %v1726, 0
        %v1790 = vsel %vm1734, %v1727, 0
        %v1793 = vsel %vm1734, %v1728, 0
        %vm1795 = vcmask 1043456
        %v1797 = vsel %vm1795, %v1733, 0
        %1799 = vmatprep.subr.mxu0 0.0
        %1800 = vmatpush1.msra.mxu0 %v1729
        %1801 = vmatprep.subr.mxu0 0.0
        %1802 = vmatpush1.msra.mxu0 %v1730
        %1803 = vmatprep.subr.mxu0 0.0
        %1804 = vmatpush1.msra.mxu0 %v1731
        %1805 = vmatprep.subr.mxu0 0.0
        %1806 = vmatpush1.msra.mxu0 %v1732
        %1807 = vmatprep.subr.mxu0 0.0
        %1808 = vmatpush1.msra.mxu0 %v1797
        %1809 = vmatprep.subr.mxu0 0.0
        %1810 = vmatpush1.msra.mxu0 0.0
        %1811 = vmatprep.subr.mxu0 0.0
        %1812 = vmatpush1.msra.mxu0 0.0
        %1813 = vmatprep.subr.mxu0 0.0
        %1814 = vmatpush1.msra.mxu0 0.0
        %1815 = vmatprep.subr.mxu0 0.0
        %1816 = vmatpush1.msra.mxu0 0.0
        %1817 = vmatprep.subr.mxu0 0.0
        %1818 = vmatpush1.msra.mxu0 0.0
        %1819 = vmatprep.subr.mxu0 0.0
        %1820 = vmatpush1.msra.mxu0 0.0
        %1821 = vmatprep.subr.mxu0 0.0
        %1822 = vmatpush1.msra.mxu0 0.0
        %1823 = vmatprep.subr.mxu0 0.0
        %1824 = vmatpush1.msra.mxu0 0.0
        %1825 = vmatprep.subr.mxu0 0.0
        %1826 = vmatpush1.msra.mxu0 0.0
        %1827 = vmatprep.subr.mxu0 0.0
        %1828 = vmatpush1.msra.mxu0 0.0
        %1829 = vmatprep.subr.mxu0 0.0
        %1830 = vmatpush1.msra.mxu0 0.0
        %1831 = vmatprep.subr.mxu0 0.0
        %1832 = vmatpush1.msra.mxu0 0.0
        %1833 = vmatprep.subr.mxu0 0.0
        %1834 = vmatpush1.msra.mxu0 0.0
        %1835 = vmatprep.subr.mxu0 0.0
        %1836 = vmatpush1.msra.mxu0 0.0
        %1837 = vmatprep.subr.mxu0 0.0
        %1838 = vmatpush1.msra.mxu0 0.0
        %1839 = vmatprep.subr.mxu0 0.0
        %1840 = vmatpush1.msra.mxu0 0.0
        %1841 = vmatprep.subr.mxu0 0.0
        %1842 = vmatpush1.msra.mxu0 0.0
        %1843 = vmatprep.subr.mxu0 0.0
        %1844 = vmatpush1.msra.mxu0 0.0
        %1845 = vmatprep.subr.mxu0 0.0
        %1846 = vmatpush1.msra.mxu0 0.0
        %1847 = vmatprep.subr.mxu0 0.0
        %1848 = vmatpush1.msra.mxu0 0.0
        %1849 = vmatprep.subr.mxu0 0.0
        %1850 = vmatpush1.msra.mxu0 0.0
        %1851 = vmatprep.subr.mxu0 0.0
        %1852 = vmatpush1.msra.mxu0 0.0
        %1853 = vmatprep.subr.mxu0 0.0
        %1854 = vmatpush1.msra.mxu0 0.0
        %1855 = vmatprep.subr.mxu0 0.0
        %1856 = vmatpush1.msra.mxu0 0.0
        %1857 = vmatprep.subr.mxu0 0.0
        %1858 = vmatpush1.msra.mxu0 0.0
        %1859 = vmatprep.subr.mxu0 0.0
        %1860 = vmatpush1.msra.mxu0 0.0
        %1861 = vmatprep.subr.mxu0 0.0
        %1862 = vmatpush1.msra.mxu0 0.0
        %1863 = vmatprep.mubr.f32.mxu0 0.0
        %1864 = vmatmul.mubr.f32.gmra.mrb[0].mxu0 %v1736
        %v1865 = vpop.f32.mrb[0].mxu0
        %v1866 = vadd.f32 0.0, %v1865
        %v1867 = vpop.f32.mrb[0].mxu0
        %1868 = vmatprep.mubr.f32.mxu0 0.0
        %1869 = vmatmul.mubr.f32.gmra.mrb[0].mxu0 %v1739
        %v1870 = vpop.f32.mrb[0].mxu0
        %v1871 = vadd.f32 0.0, %v1870
        %v1872 = vpop.f32.mrb[0].mxu0
        %1873 = vmatprep.mubr.f32.mxu0 0.0
        %1874 = vmatmul.mubr.f32.gmra.mrb[0].mxu0 %v1742
        %v1875 = vpop.f32.mrb[0].mxu0
        %v1876 = vadd.f32 0.0, %v1875
        %v1877 = vpop.f32.mrb[0].mxu0
        %1878 = vmatprep.mubr.f32.mxu0 0.0
        %1879 = vmatmul.mubr.f32.gmra.mrb[0].mxu0 %v1745
        %v1880 = vpop.f32.mrb[0].mxu0
        %v1881 = vadd.f32 0.0, %v1880
        %v1882 = vpop.f32.mrb[0].mxu0
        %1883 = vmatprep.mubr.f32.mxu0 0.0
        %1884 = vmatmul.mubr.f32.gmra.mrb[0].mxu0 %v1748
        %v1885 = vpop.f32.mrb[0].mxu0
        %v1886 = vadd.f32 0.0, %v1885
        %v1887 = vpop.f32.mrb[0].mxu0
        %1888 = vmatprep.mubr.f32.mxu0 0.0
        %1889 = vmatmul.mubr.f32.gmra.mrb[0].mxu0 %v1751
        %v1890 = vpop.f32.mrb[0].mxu0
        %v1891 = vadd.f32 0.0, %v1890
        %v1892 = vpop.f32.mrb[0].mxu0
        %1893 = vmatprep.mubr.f32.mxu0 0.0
        %1894 = vmatmul.mubr.f32.gmra.mrb[0].mxu0 %v1754
        %v1895 = vpop.f32.mrb[0].mxu0
        %v1896 = vadd.f32 0.0, %v1895
        %v1897 = vpop.f32.mrb[0].mxu0
        %1898 = vmatprep.mubr.f32.mxu0 0.0
        %1899 = vmatmul.mubr.f32.gmra.mrb[0].mxu0 %v1757
        %v1900 = vpop.f32.mrb[0].mxu0
        %v1901 = vadd.f32 0.0, %v1900
        %v1902 = vpop.f32.mrb[0].mxu0
        %1903 = vmatprep.mubr.f32.mxu0 0.0
        %1904 = vmatmul.mubr.f32.gmra.mrb[0].mxu0 %v1760
        %v1905 = vpop.f32.mrb[0].mxu0
        %v1906 = vadd.f32 0.0, %v1905
        %v1907 = vpop.f32.mrb[0].mxu0
        %1908 = vmatprep.mubr.f32.mxu0 0.0
        %1909 = vmatmul.mubr.f32.gmra.mrb[0].mxu0 %v1763
        %v1910 = vpop.f32.mrb[0].mxu0
        %v1911 = vadd.f32 0.0, %v1910
        %v1912 = vpop.f32.mrb[0].mxu0
        %1913 = vmatprep.mubr.f32.mxu0 0.0
        %1914 = vmatmul.mubr.f32.gmra.mrb[0].mxu0 %v1766
        %v1915 = vpop.f32.mrb[0].mxu0
        %v1916 = vadd.f32 0.0, %v1915
        %v1917 = vpop.f32.mrb[0].mxu0
        %1918 = vmatprep.mubr.f32.mxu0 0.0
        %1919 = vmatmul.mubr.f32.gmra.mrb[0].mxu0 %v1769
        %v1920 = vpop.f32.mrb[0].mxu0
        %v1921 = vadd.f32 0.0, %v1920
        %v1922 = vpop.f32.mrb[0].mxu0
        %1923 = vmatprep.mubr.f32.mxu0 0.0
        %1924 = vmatmul.mubr.f32.gmra.mrb[0].mxu0 %v1772
        %v1925 = vpop.f32.mrb[0].mxu0
        %v1926 = vadd.f32 0.0, %v1925
        %v1927 = vpop.f32.mrb[0].mxu0
        %1928 = vmatprep.mubr.f32.mxu0 0.0
        %1929 = vmatmul.mubr.f32.gmra.mrb[0].mxu0 %v1775
        %v1930 = vpop.f32.mrb[0].mxu0
        %v1931 = vadd.f32 0.0, %v1930
        %v1932 = vpop.f32.mrb[0].mxu0
        %1933 = vmatprep.mubr.f32.mxu0 0.0
        %1934 = vmatmul.mubr.f32.gmra.mrb[0].mxu0 %v1778
        %v1935 = vpop.f32.mrb[0].mxu0
        %v1936 = vadd.f32 0.0, %v1935
        %v1937 = vpop.f32.mrb[0].mxu0
        %1938 = vmatprep.mubr.f32.mxu0 0.0
        %1939 = vmatmul.mubr.f32.gmra.mrb[0].mxu0 %v1781
        %v1940 = vpop.f32.mrb[0].mxu0
        %v1941 = vadd.f32 0.0, %v1940
        %v1942 = vpop.f32.mrb[0].mxu0
        %1943 = vmatprep.mubr.f32.mxu0 0.0
        %1944 = vmatmul.mubr.f32.gmra.mrb[0].mxu0 %v1784
        %v1945 = vpop.f32.mrb[0].mxu0
        %v1946 = vadd.f32 0.0, %v1945
        %v1947 = vpop.f32.mrb[0].mxu0
        %1948 = vmatprep.mubr.f32.mxu0 0.0
        %1949 = vmatmul.mubr.f32.gmra.mrb[0].mxu0 %v1787
        %v1950 = vpop.f32.mrb[0].mxu0
        %v1951 = vadd.f32 0.0, %v1950
        %v1952 = vpop.f32.mrb[0].mxu0
        %1953 = vmatprep.mubr.f32.mxu0 0.0
        %1954 = vmatmul.mubr.f32.gmra.mrb[0].mxu0 %v1790
        %v1955 = vpop.f32.mrb[0].mxu0
        %v1956 = vadd.f32 0.0, %v1955
        %v1957 = vpop.f32.mrb[0].mxu0
        %1958 = vmatprep.mubr.f32.mxu0 0.0
        %1959 = vmatmul.mubr.f32.gmra.mrb[0].mxu0 %v1793
        %v1960 = vpop.f32.mrb[0].mxu0
        %v1961 = vadd.f32 0.0, %v1960
        %v1962 = vpop.f32.mrb[0].mxu0
        %1963 = vdwg.mxu0
        %v1964 = vld [vmem:[#allocation11] sm:$0x1]
        %v1966 = vlaneseq
        %v1967 = vshrl.u32 %v1966, 7
        %v1968 = vsub.s32 0, %v1967
        %v1969 = vrot.slane %v1964, %v1968
        %v1971 = vmul.f32 %v1866, %v1969
        %v1972 = vmul.f32 %v1871, %v1969
        %v1973 = vmul.f32 %v1876, %v1969
        %v1974 = vmul.f32 %v1881, %v1969
        %v1975 = vmul.f32 %v1886, %v1969
        %v1976 = vmul.f32 %v1891, %v1969
        %v1977 = vmul.f32 %v1896, %v1969
        %v1978 = vmul.f32 %v1901, %v1969
        %v1979 = vmul.f32 %v1906, %v1969
        %v1980 = vmul.f32 %v1911, %v1969
        %v1981 = vmul.f32 %v1916, %v1969
        %v1982 = vmul.f32 %v1921, %v1969
        %v1983 = vmul.f32 %v1926, %v1969
        %v1984 = vmul.f32 %v1931, %v1969
        %v1985 = vmul.f32 %v1936, %v1969
        %v1986 = vmul.f32 %v1941, %v1969
        %v1987 = vmul.f32 %v1946, %v1969
        %v1988 = vmul.f32 %v1951, %v1969
        %v1989 = vmul.f32 %v1956, %v1969
        %v1990 = vmul.f32 %v1961, %v1969
        %v1991 = vld [vmem:[#allocation12] sm:$0x1]
        %v1993 = vlaneseq
        %v1994 = vshrl.u32 %v1993, 7
        %v1995 = vsub.s32 0, %v1994
        %v1996 = vrot.slane %v1991, %v1995
        %v1998 = vadd.f32 %v1971, %v1996
        %v1999 = vadd.f32 %v1972, %v1996
        %v2000 = vadd.f32 %v1973, %v1996
        %v2001 = vadd.f32 %v1974, %v1996
        %v2002 = vadd.f32 %v1975, %v1996
        %v2003 = vadd.f32 %v1976, %v1996
        %v2004 = vadd.f32 %v1977, %v1996
        %v2005 = vadd.f32 %v1978, %v1996
        %v2006 = vadd.f32 %v1979, %v1996
        %v2007 = vadd.f32 %v1980, %v1996
        %v2008 = vadd.f32 %v1981, %v1996
        %v2009 = vadd.f32 %v1982, %v1996
        %v2010 = vadd.f32 %v1983, %v1996
        %v2011 = vadd.f32 %v1984, %v1996
        %v2012 = vadd.f32 %v1985, %v1996
        %v2013 = vadd.f32 %v1986, %v1996
        %v2014 = vadd.f32 %v1987, %v1996
        %v2015 = vadd.f32 %v1988, %v1996
        %v2016 = vadd.f32 %v1989, %v1996
        %v2017 = vadd.f32 %v1990, %v1996
        %v2018 = vmax.f32 %v1998, 0.0
        %v2019 = vmax.f32 %v1999, 0.0
        %v2020 = vmax.f32 %v2000, 0.0
        %v2021 = vmax.f32 %v2001, 0.0
        %v2022 = vmax.f32 %v2002, 0.0
        %v2023 = vmax.f32 %v2003, 0.0
        %v2024 = vmax.f32 %v2004, 0.0
        %v2025 = vmax.f32 %v2005, 0.0
        %v2026 = vmax.f32 %v2006, 0.0
        %v2027 = vmax.f32 %v2007, 0.0
        %v2028 = vmax.f32 %v2008, 0.0
        %v2029 = vmax.f32 %v2009, 0.0
        %v2030 = vmax.f32 %v2010, 0.0
        %v2031 = vmax.f32 %v2011, 0.0
        %v2032 = vmax.f32 %v2012, 0.0
        %v2033 = vmax.f32 %v2013, 0.0
        %v2034 = vmax.f32 %v2014, 0.0
        %v2035 = vmax.f32 %v2015, 0.0
        %v2036 = vmax.f32 %v2016, 0.0
        %v2037 = vmax.f32 %v2017, 0.0
        %s2038 = smul.u32 %s37, 8
        %s2039 = smul.u32 %s2038, 16
        %s2040 = scalar_lea.vmem %s436, %s2039 [#allocation6]
        %v2041 = vld [vmem:[%s2040] sm:$0xff]
        %v2042 = vld [vmem:[%s2040 + $0x8] sm:$0xff]
        %v2043 = vld [vmem:[%s2040 + $0x10] sm:$0xff]
        %v2044 = vld [vmem:[%s2040 + $0x18] sm:$0xff]
        %v2045 = vld [vmem:[%s2040 + $0x20] sm:$0xff]
        %v2046 = vld [vmem:[%s2040 + $0x28] sm:$0xff]
        %v2047 = vld [vmem:[%s2040 + $0x30] sm:$0xff]
        %v2048 = vld [vmem:[%s2040 + $0x38] sm:$0xff]
        %v2049 = vld [vmem:[%s2040 + $0x40] sm:$0xff]
        %v2050 = vld [vmem:[%s2040 + $0x48] sm:$0xff]
        %v2051 = vld [vmem:[%s2040 + $0x50] sm:$0xff]
        %v2052 = vld [vmem:[%s2040 + $0x58] sm:$0xff]
        %v2053 = vld [vmem:[%s2040 + $0x60] sm:$0xff]
        %v2054 = vld [vmem:[%s2040 + $0x68] sm:$0xff]
        %v2055 = vld [vmem:[%s2040 + $0x70] sm:$0xff]
        %v2056 = vld [vmem:[%s2040 + $0x78] sm:$0xff]
        %v2057 = vld [vmem:[#allocation18] sm:$0xf]
        %v2059 = vsel %vm510, %v2041, 0
        %v2062 = vsel %vm510, %v2042, 0
        %v2065 = vsel %vm510, %v2043, 0
        %v2068 = vsel %vm510, %v2044, 0
        %v2071 = vsel %vm510, %v2045, 0
        %v2074 = vsel %vm510, %v2046, 0
        %v2077 = vsel %vm510, %v2047, 0
        %v2080 = vsel %vm510, %v2048, 0
        %v2083 = vsel %vm510, %v2049, 0
        %v2086 = vsel %vm510, %v2050, 0
        %v2089 = vsel %vm510, %v2051, 0
        %v2092 = vsel %vm510, %v2052, 0
        %v2095 = vsel %vm510, %v2053, 0
        %v2098 = vsel %vm510, %v2054, 0
        %v2101 = vsel %vm510, %v2055, 0
        %v2104 = vsel %vm510, %v2056, 0
        %v2107 = vsel %vm1795, %v2057, 0
        %2109 = vmatprep.subr.mxu0 0.0
        %2110 = vmatpush1.msra.mxu0 %v2107
        %2111 = vmatprep.subr.mxu0 0.0
        %2112 = vmatpush1.msra.mxu0 0.0
        %2113 = vmatprep.subr.mxu0 0.0
        %2114 = vmatpush1.msra.mxu0 0.0
        %2115 = vmatprep.subr.mxu0 0.0
        %2116 = vmatpush1.msra.mxu0 0.0
        %2117 = vmatprep.subr.mxu0 0.0
        %2118 = vmatpush1.msra.mxu0 0.0
        %2119 = vmatprep.subr.mxu0 0.0
        %2120 = vmatpush1.msra.mxu0 0.0
        %2121 = vmatprep.subr.mxu0 0.0
        %2122 = vmatpush1.msra.mxu0 0.0
        %2123 = vmatprep.subr.mxu0 0.0
        %2124 = vmatpush1.msra.mxu0 0.0
        %2125 = vmatprep.subr.mxu0 0.0
        %2126 = vmatpush1.msra.mxu0 0.0
        %2127 = vmatprep.subr.mxu0 0.0
        %2128 = vmatpush1.msra.mxu0 0.0
        %2129 = vmatprep.subr.mxu0 0.0
        %2130 = vmatpush1.msra.mxu0 0.0
        %2131 = vmatprep.subr.mxu0 0.0
        %2132 = vmatpush1.msra.mxu0 0.0
        %2133 = vmatprep.subr.mxu0 0.0
        %2134 = vmatpush1.msra.mxu0 0.0
        %2135 = vmatprep.subr.mxu0 0.0
        %2136 = vmatpush1.msra.mxu0 0.0
        %2137 = vmatprep.subr.mxu0 0.0
        %2138 = vmatpush1.msra.mxu0 0.0
        %2139 = vmatprep.subr.mxu0 0.0
        %2140 = vmatpush1.msra.mxu0 0.0
        %2141 = vmatprep.subr.mxu0 0.0
        %2142 = vmatpush1.msra.mxu0 0.0
        %2143 = vmatprep.subr.mxu0 0.0
        %2144 = vmatpush1.msra.mxu0 0.0
        %2145 = vmatprep.subr.mxu0 0.0
        %2146 = vmatpush1.msra.mxu0 0.0
        %2147 = vmatprep.subr.mxu0 0.0
        %2148 = vmatpush1.msra.mxu0 0.0
        %2149 = vmatprep.subr.mxu0 0.0
        %2150 = vmatpush1.msra.mxu0 0.0
        %2151 = vmatprep.subr.mxu0 0.0
        %2152 = vmatpush1.msra.mxu0 0.0
        %2153 = vmatprep.subr.mxu0 0.0
        %2154 = vmatpush1.msra.mxu0 0.0
        %2155 = vmatprep.subr.mxu0 0.0
        %2156 = vmatpush1.msra.mxu0 0.0
        %2157 = vmatprep.subr.mxu0 0.0
        %2158 = vmatpush1.msra.mxu0 0.0
        %2159 = vmatprep.subr.mxu0 0.0
        %2160 = vmatpush1.msra.mxu0 0.0
        %2161 = vmatprep.subr.mxu0 0.0
        %2162 = vmatpush1.msra.mxu0 0.0
        %2163 = vmatprep.subr.mxu0 0.0
        %2164 = vmatpush1.msra.mxu0 0.0
        %2165 = vmatprep.subr.mxu0 0.0
        %2166 = vmatpush1.msra.mxu0 0.0
        %2167 = vmatprep.subr.mxu0 0.0
        %2168 = vmatpush1.msra.mxu0 0.0
        %2169 = vmatprep.subr.mxu0 0.0
        %2170 = vmatpush1.msra.mxu0 0.0
        %2171 = vmatprep.subr.mxu0 0.0
        %2172 = vmatpush1.msra.mxu0 0.0
        %2173 = vmatprep.mubr.f32.mxu0 0.0
        %2174 = vmatmul.mubr.f32.gmra.mrb[0].mxu0 %v2059
        %v2175 = vpop.f32.mrb[0].mxu0
        %v2176 = vadd.f32 0.0, %v2175
        %v2177 = vpop.f32.mrb[0].mxu0
        %2178 = vmatprep.mubr.f32.mxu0 0.0
        %2179 = vmatmul.mubr.f32.gmra.mrb[0].mxu0 %v2062
        %v2180 = vpop.f32.mrb[0].mxu0
        %v2181 = vadd.f32 0.0, %v2180
        %v2182 = vpop.f32.mrb[0].mxu0
        %2183 = vmatprep.mubr.f32.mxu0 0.0
        %2184 = vmatmul.mubr.f32.gmra.mrb[0].mxu0 %v2065
        %v2185 = vpop.f32.mrb[0].mxu0
        %v2186 = vadd.f32 0.0, %v2185
        %v2187 = vpop.f32.mrb[0].mxu0
        %2188 = vmatprep.mubr.f32.mxu0 0.0
        %2189 = vmatmul.mubr.f32.gmra.mrb[0].mxu0 %v2068
        %v2190 = vpop.f32.mrb[0].mxu0
        %v2191 = vadd.f32 0.0, %v2190
        %v2192 = vpop.f32.mrb[0].mxu0
        %2193 = vmatprep.mubr.f32.mxu0 0.0
        %2194 = vmatmul.mubr.f32.gmra.mrb[0].mxu0 %v2071
        %v2195 = vpop.f32.mrb[0].mxu0
        %v2196 = vadd.f32 0.0, %v2195
        %v2197 = vpop.f32.mrb[0].mxu0
        %2198 = vmatprep.mubr.f32.mxu0 0.0
        %2199 = vmatmul.mubr.f32.gmra.mrb[0].mxu0 %v2074
        %v2200 = vpop.f32.mrb[0].mxu0
        %v2201 = vadd.f32 0.0, %v2200
        %v2202 = vpop.f32.mrb[0].mxu0
        %2203 = vmatprep.mubr.f32.mxu0 0.0
        %2204 = vmatmul.mubr.f32.gmra.mrb[0].mxu0 %v2077
        %v2205 = vpop.f32.mrb[0].mxu0
        %v2206 = vadd.f32 0.0, %v2205
        %v2207 = vpop.f32.mrb[0].mxu0
        %2208 = vmatprep.mubr.f32.mxu0 0.0
        %2209 = vmatmul.mubr.f32.gmra.mrb[0].mxu0 %v2080
        %v2210 = vpop.f32.mrb[0].mxu0
        %v2211 = vadd.f32 0.0, %v2210
        %v2212 = vpop.f32.mrb[0].mxu0
        %2213 = vmatprep.mubr.f32.mxu0 0.0
        %2214 = vmatmul.mubr.f32.gmra.mrb[0].mxu0 %v2083
        %v2215 = vpop.f32.mrb[0].mxu0
        %v2216 = vadd.f32 0.0, %v2215
        %v2217 = vpop.f32.mrb[0].mxu0
        %2218 = vmatprep.mubr.f32.mxu0 0.0
        %2219 = vmatmul.mubr.f32.gmra.mrb[0].mxu0 %v2086
        %v2220 = vpop.f32.mrb[0].mxu0
        %v2221 = vadd.f32 0.0, %v2220
        %v2222 = vpop.f32.mrb[0].mxu0
        %2223 = vmatprep.mubr.f32.mxu0 0.0
        %2224 = vmatmul.mubr.f32.gmra.mrb[0].mxu0 %v2089
        %v2225 = vpop.f32.mrb[0].mxu0
        %v2226 = vadd.f32 0.0, %v2225
        %v2227 = vpop.f32.mrb[0].mxu0
        %2228 = vmatprep.mubr.f32.mxu0 0.0
        %2229 = vmatmul.mubr.f32.gmra.mrb[0].mxu0 %v2092
        %v2230 = vpop.f32.mrb[0].mxu0
        %v2231 = vadd.f32 0.0, %v2230
        %v2232 = vpop.f32.mrb[0].mxu0
        %2233 = vmatprep.mubr.f32.mxu0 0.0
        %2234 = vmatmul.mubr.f32.gmra.mrb[0].mxu0 %v2095
        %v2235 = vpop.f32.mrb[0].mxu0
        %v2236 = vadd.f32 0.0, %v2235
        %v2237 = vpop.f32.mrb[0].mxu0
        %2238 = vmatprep.mubr.f32.mxu0 0.0
        %2239 = vmatmul.mubr.f32.gmra.mrb[0].mxu0 %v2098
        %v2240 = vpop.f32.mrb[0].mxu0
        %v2241 = vadd.f32 0.0, %v2240
        %v2242 = vpop.f32.mrb[0].mxu0
        %2243 = vmatprep.mubr.f32.mxu0 0.0
        %2244 = vmatmul.mubr.f32.gmra.mrb[0].mxu0 %v2101
        %v2245 = vpop.f32.mrb[0].mxu0
        %v2246 = vadd.f32 0.0, %v2245
        %v2247 = vpop.f32.mrb[0].mxu0
        %2248 = vmatprep.mubr.f32.mxu0 0.0
        %2249 = vmatmul.mubr.f32.gmra.mrb[0].mxu0 %v2104
        %v2250 = vpop.f32.mrb[0].mxu0
        %v2251 = vadd.f32 0.0, %v2250
        %v2252 = vpop.f32.mrb[0].mxu0
        %2253 = vdwg.mxu0
        %v2254 = vld [vmem:[#allocation20] sm:$0x1]
        %v2256 = vlaneseq
        %v2257 = vshrl.u32 %v2256, 7
        %v2258 = vsub.s32 0, %v2257
        %v2259 = vrot.slane %v2254, %v2258
        %v2261 = vmul.f32 %v2176, %v2259
        %v2262 = vmul.f32 %v2181, %v2259
        %v2263 = vmul.f32 %v2186, %v2259
        %v2264 = vmul.f32 %v2191, %v2259
        %v2265 = vmul.f32 %v2196, %v2259
        %v2266 = vmul.f32 %v2201, %v2259
        %v2267 = vmul.f32 %v2206, %v2259
        %v2268 = vmul.f32 %v2211, %v2259
        %v2269 = vmul.f32 %v2216, %v2259
        %v2270 = vmul.f32 %v2221, %v2259
        %v2271 = vmul.f32 %v2226, %v2259
        %v2272 = vmul.f32 %v2231, %v2259
        %v2273 = vmul.f32 %v2236, %v2259
        %v2274 = vmul.f32 %v2241, %v2259
        %v2275 = vmul.f32 %v2246, %v2259
        %v2276 = vmul.f32 %v2251, %v2259
        %v2277 = vld [vmem:[#allocation21] sm:$0x1]
        %v2279 = vlaneseq
        %v2280 = vshrl.u32 %v2279, 7
        %v2281 = vsub.s32 0, %v2280
        %v2282 = vrot.slane %v2277, %v2281
        %v2284 = vadd.f32 %v2261, %v2282
        %v2285 = vadd.f32 %v2262, %v2282
        %v2286 = vadd.f32 %v2263, %v2282
        %v2287 = vadd.f32 %v2264, %v2282
        %v2288 = vadd.f32 %v2265, %v2282
        %v2289 = vadd.f32 %v2266, %v2282
        %v2290 = vadd.f32 %v2267, %v2282
        %v2291 = vadd.f32 %v2268, %v2282
        %v2292 = vadd.f32 %v2269, %v2282
        %v2293 = vadd.f32 %v2270, %v2282
        %v2294 = vadd.f32 %v2271, %v2282
        %v2295 = vadd.f32 %v2272, %v2282
        %v2296 = vadd.f32 %v2273, %v2282
        %v2297 = vadd.f32 %v2274, %v2282
        %v2298 = vadd.f32 %v2275, %v2282
        %v2299 = vadd.f32 %v2276, %v2282
        %vm2300 = vcmask 64512
        %2301 = vst.msk [vmem:[#allocation3] sm:$0xff] %vm2300, 0.0
        %2302 = vst.msk [vmem:[#allocation3 + $0x8] sm:$0xff] %vm2300, 0.0
        %vm2303 = vcmask 58368
        %2304 = vst.msk [vmem:[#allocation3 + $0x10] sm:$0x3] %vm2303, 0.0
        %2305 = vst.msk [vmem:[#allocation3 + $0x18] sm:$0xff] %vm2300, 0.0
        %2306 = vst.msk [vmem:[#allocation3 + $0x20] sm:$0xff] %vm2300, 0.0
        %2307 = vst.msk [vmem:[#allocation3 + $0x28] sm:$0x3] %vm2303, 0.0
        %2308 = vst.msk [vmem:[#allocation3 + $0x30] sm:$0xff] %vm2300, 0.0
        %2309 = vst.msk [vmem:[#allocation3 + $0x38] sm:$0xff] %vm2300, 0.0
        %2310 = vst.msk [vmem:[#allocation3 + $0x40] sm:$0x3] %vm2303, 0.0
        %2311 = vst.msk [vmem:[#allocation3 + $0x48] sm:$0xff] %vm2300, 0.0
        %2312 = vst.msk [vmem:[#allocation3 + $0x50] sm:$0xff] %vm2300, 0.0
        %2313 = vst.msk [vmem:[#allocation3 + $0x58] sm:$0x3] %vm2303, 0.0
        %2314 = vst.msk [vmem:[#allocation3 + $0x60] sm:$0xff] %vm2300, 0.0
        %2315 = vst.msk [vmem:[#allocation3 + $0x68] sm:$0xff] %vm2300, 0.0
        %2316 = vst.msk [vmem:[#allocation3 + $0x70] sm:$0x3] %vm2303, 0.0
        %2317 = vst.msk [vmem:[#allocation3 + $0x78] sm:$0xff] %vm2300, 0.0
        %2318 = vst.msk [vmem:[#allocation3 + $0x80] sm:$0xff] %vm2300, 0.0
        %2319 = vst.msk [vmem:[#allocation3 + $0x88] sm:$0x3] %vm2303, 0.0
        %2320 = vst.msk [vmem:[#allocation3 + $0x90] sm:$0xff] %vm2300, 0.0
        %2321 = vst.msk [vmem:[#allocation3 + $0x98] sm:$0xff] %vm2300, 0.0
        %2322 = vst.msk [vmem:[#allocation3 + $0xa0] sm:$0x3] %vm2303, 0.0
        %2323 = vst.msk [vmem:[#allocation3 + $0xa8] sm:$0xff] %vm2300, 0.0
        %2324 = vst.msk [vmem:[#allocation3 + $0xb0] sm:$0xff] %vm2300, 0.0
        %2325 = vst.msk [vmem:[#allocation3 + $0xb8] sm:$0x3] %vm2303, 0.0
        %2326 = vst.msk [vmem:[#allocation3 + $0xc0] sm:$0xff] %vm2300, 0.0
        %2327 = vst.msk [vmem:[#allocation3 + $0xc8] sm:$0xff] %vm2300, 0.0
        %2328 = vst.msk [vmem:[#allocation3 + $0xd0] sm:$0x3] %vm2303, 0.0
        %2329 = vst.msk [vmem:[#allocation3 + $0xd8] sm:$0xff] %vm2300, 0.0
        %2330 = vst.msk [vmem:[#allocation3 + $0xe0] sm:$0xff] %vm2300, 0.0
        %2331 = vst.msk [vmem:[#allocation3 + $0xe8] sm:$0x3] %vm2303, 0.0
        %2332 = vst.msk [vmem:[#allocation3 + $0x1] sm:$0xff] %vm2300, %v2018
        %2333 = vst.msk [vmem:[#allocation3 + $0x9] sm:$0xff] %vm2300, %v2019
        %2334 = vst.msk [vmem:[#allocation3 + $0x19] sm:$0xff] %vm2300, %v2020
        %2335 = vst.msk [vmem:[#allocation3 + $0x21] sm:$0xff] %vm2300, %v2021
        %2336 = vst.msk [vmem:[#allocation3 + $0x31] sm:$0xff] %vm2300, %v2022
        %2337 = vst.msk [vmem:[#allocation3 + $0x39] sm:$0xff] %vm2300, %v2023
        %2338 = vst.msk [vmem:[#allocation3 + $0x49] sm:$0xff] %vm2300, %v2024
        %2339 = vst.msk [vmem:[#allocation3 + $0x51] sm:$0xff] %vm2300, %v2025
        %2340 = vst.msk [vmem:[#allocation3 + $0x61] sm:$0xff] %vm2300, %v2026
        %2341 = vst.msk [vmem:[#allocation3 + $0x69] sm:$0xff] %vm2300, %v2027
        %2342 = vst.msk [vmem:[#allocation3 + $0x79] sm:$0xff] %vm2300, %v2028
        %2343 = vst.msk [vmem:[#allocation3 + $0x81] sm:$0xff] %vm2300, %v2029
        %2344 = vst.msk [vmem:[#allocation3 + $0x91] sm:$0xff] %vm2300, %v2030
        %2345 = vst.msk [vmem:[#allocation3 + $0x99] sm:$0xff] %vm2300, %v2031
        %2346 = vst.msk [vmem:[#allocation3 + $0xa9] sm:$0xff] %vm2300, %v2032
        %2347 = vst.msk [vmem:[#allocation3 + $0xb1] sm:$0xff] %vm2300, %v2033
        %2348 = vst.msk [vmem:[#allocation3 + $0xc1] sm:$0xff] %vm2300, %v2034
        %2349 = vst.msk [vmem:[#allocation3 + $0xc9] sm:$0xff] %vm2300, %v2035
        %2350 = vst.msk [vmem:[#allocation3 + $0xd9] sm:$0xff] %vm2300, %v2036
        %2351 = vst.msk [vmem:[#allocation3 + $0xe1] sm:$0xff] %vm2300, %v2037
        // Predicated region
        $region113: #{tpu_custom_call.1} parent=59 // pred_check
          %p2352 = pneg %p548
        $region114: #{tpu_custom_call.1} parent=59 // pred_check_branch
          %2354 = sbr.rel (%p2352) target = $region116
        $region115: #{tpu_custom_call.1} parent=59 // pred_region
          %2355 = vst.msk [vmem:[#allocation3] sm:$0xff] %vm2300, 0.0
          %2356 = vst.msk [vmem:[#allocation3 + $0x8] sm:$0xff] %vm2300, 0.0
          %2357 = vst.msk [vmem:[#allocation3 + $0x10] sm:$0x3] %vm2303, 0.0
        $region116: #{tpu_custom_call.1} parent=59 // pred_fallthru
          _
        // Predicated region
        $region117: #{tpu_custom_call.1} parent=59 // pred_check
          %p2358 = pneg %p651
        $region118: #{tpu_custom_call.1} parent=59 // pred_check_branch
          %2360 = sbr.rel (%p2358) target = $region120
        $region119: #{tpu_custom_call.1} parent=59 // pred_region
          %s2361 = scalar_lea.vmem [#allocation3], 216
          %2362 = vst.msk [vmem:[%s2361] sm:$0xff] %vm2300, 0.0
          %2363 = vst.msk [vmem:[%s2361 + $0x8] sm:$0xff] %vm2300, 0.0
          %2364 = vst.msk [vmem:[%s2361 + $0x10] sm:$0x3] %vm2303, 0.0
        $region120: #{tpu_custom_call.1} parent=59 // pred_fallthru
          _
        %v2365 = vld [vmem:[#allocation3] sm:$0xff]
        %v2366 = vld [vmem:[#allocation3 + $0x8] sm:$0xff]
        %v2367 = vld [vmem:[#allocation3 + $0x18] sm:$0xff]
        %v2368 = vld [vmem:[#allocation3 + $0x20] sm:$0xff]
        %v2369 = vld [vmem:[#allocation3 + $0x30] sm:$0xff]
        %v2370 = vld [vmem:[#allocation3 + $0x38] sm:$0xff]
        %v2371 = vld [vmem:[#allocation3 + $0x48] sm:$0xff]
        %v2372 = vld [vmem:[#allocation3 + $0x50] sm:$0xff]
        %v2373 = vld [vmem:[#allocation3 + $0x60] sm:$0xff]
        %v2374 = vld [vmem:[#allocation3 + $0x68] sm:$0xff]
        %v2375 = vld [vmem:[#allocation3 + $0x78] sm:$0xff]
        %v2376 = vld [vmem:[#allocation3 + $0x80] sm:$0xff]
        %v2377 = vld [vmem:[#allocation3 + $0x90] sm:$0xff]
        %v2378 = vld [vmem:[#allocation3 + $0x98] sm:$0xff]
        %v2379 = vld [vmem:[#allocation3 + $0xa8] sm:$0xff]
        %v2380 = vld [vmem:[#allocation3 + $0xb0] sm:$0xff]
        %2381 = vst.msk [vmem:[#allocation5] sm:$0xff] %vm2300, %v2365
        %2382 = vst.msk [vmem:[#allocation5 + $0x8] sm:$0xff] %vm2300, %v2366
        %2383 = vst.msk [vmem:[#allocation5 + $0x10] sm:$0xff] %vm2300, %v2367
        %2384 = vst.msk [vmem:[#allocation5 + $0x18] sm:$0xff] %vm2300, %v2368
        %2385 = vst.msk [vmem:[#allocation5 + $0x20] sm:$0xff] %vm2300, %v2369
        %2386 = vst.msk [vmem:[#allocation5 + $0x28] sm:$0xff] %vm2300, %v2370
        %2387 = vst.msk [vmem:[#allocation5 + $0x30] sm:$0xff] %vm2300, %v2371
        %2388 = vst.msk [vmem:[#allocation5 + $0x38] sm:$0xff] %vm2300, %v2372
        %2389 = vst.msk [vmem:[#allocation5 + $0x40] sm:$0xff] %vm2300, %v2373
        %2390 = vst.msk [vmem:[#allocation5 + $0x48] sm:$0xff] %vm2300, %v2374
        %2391 = vst.msk [vmem:[#allocation5 + $0x50] sm:$0xff] %vm2300, %v2375
        %2392 = vst.msk [vmem:[#allocation5 + $0x58] sm:$0xff] %vm2300, %v2376
        %2393 = vst.msk [vmem:[#allocation5 + $0x60] sm:$0xff] %vm2300, %v2377
        %2394 = vst.msk [vmem:[#allocation5 + $0x68] sm:$0xff] %vm2300, %v2378
        %2395 = vst.msk [vmem:[#allocation5 + $0x70] sm:$0xff] %vm2300, %v2379
        %2396 = vst.msk [vmem:[#allocation5 + $0x78] sm:$0xff] %vm2300, %v2380
        %v2397 = vld [vmem:[#allocation3 + $0x1] sm:$0xff]
        %v2398 = vld [vmem:[#allocation3 + $0x9] sm:$0xff]
        %v2399 = vld [vmem:[#allocation3 + $0x19] sm:$0xff]
        %v2400 = vld [vmem:[#allocation3 + $0x21] sm:$0xff]
        %v2401 = vld [vmem:[#allocation3 + $0x31] sm:$0xff]
        %v2402 = vld [vmem:[#allocation3 + $0x39] sm:$0xff]
        %v2403 = vld [vmem:[#allocation3 + $0x49] sm:$0xff]
        %v2404 = vld [vmem:[#allocation3 + $0x51] sm:$0xff]
        %v2405 = vld [vmem:[#allocation3 + $0x61] sm:$0xff]
        %v2406 = vld [vmem:[#allocation3 + $0x69] sm:$0xff]
        %v2407 = vld [vmem:[#allocation3 + $0x79] sm:$0xff]
        %v2408 = vld [vmem:[#allocation3 + $0x81] sm:$0xff]
        %v2409 = vld [vmem:[#allocation3 + $0x91] sm:$0xff]
        %v2410 = vld [vmem:[#allocation3 + $0x99] sm:$0xff]
        %v2411 = vld [vmem:[#allocation3 + $0xa9] sm:$0xff]
        %v2412 = vld [vmem:[#allocation3 + $0xb1] sm:$0xff]
        %2429 = vrot.lane.b32.xlu0 %v2397, 8
        %v2430 = vpop.permute.xlu0 %2429
        %2431 = vrot.lane.b32.xlu0 %v2398, 8
        %v2432 = vpop.permute.xlu0 %2431
        %2433 = vrot.lane.b32.xlu0 %v2399, 8
        %v2434 = vpop.permute.xlu0 %2433
        %2435 = vrot.lane.b32.xlu0 %v2400, 8
        %v2436 = vpop.permute.xlu0 %2435
        %2437 = vrot.lane.b32.xlu0 %v2401, 8
        %v2438 = vpop.permute.xlu0 %2437
        %2439 = vrot.lane.b32.xlu0 %v2402, 8
        %v2440 = vpop.permute.xlu0 %2439
        %2441 = vrot.lane.b32.xlu0 %v2403, 8
        %v2442 = vpop.permute.xlu0 %2441
        %2443 = vrot.lane.b32.xlu0 %v2404, 8
        %v2444 = vpop.permute.xlu0 %2443
        %2445 = vrot.lane.b32.xlu0 %v2405, 8
        %v2446 = vpop.permute.xlu0 %2445
        %2447 = vrot.lane.b32.xlu0 %v2406, 8
        %v2448 = vpop.permute.xlu0 %2447
        %2449 = vrot.lane.b32.xlu0 %v2407, 8
        %v2450 = vpop.permute.xlu0 %2449
        %2451 = vrot.lane.b32.xlu0 %v2408, 8
        %v2452 = vpop.permute.xlu0 %2451
        %2453 = vrot.lane.b32.xlu0 %v2409, 8
        %v2454 = vpop.permute.xlu0 %2453
        %2455 = vrot.lane.b32.xlu0 %v2410, 8
        %v2456 = vpop.permute.xlu0 %2455
        %2457 = vrot.lane.b32.xlu0 %v2411, 8
        %v2458 = vpop.permute.xlu0 %2457
        %2459 = vrot.lane.b32.xlu0 %v2412, 8
        %v2460 = vpop.permute.xlu0 %2459
        %vm2477 = vcmask 130112
        %2478 = vst.msk [vmem:[#allocation5] sm:$0xff] %vm2477, %v2430
        %2479 = vst.msk [vmem:[#allocation5 + $0x8] sm:$0xff] %vm2477, %v2432
        %2480 = vst.msk [vmem:[#allocation5 + $0x10] sm:$0xff] %vm2477, %v2434
        %2481 = vst.msk [vmem:[#allocation5 + $0x18] sm:$0xff] %vm2477, %v2436
        %2482 = vst.msk [vmem:[#allocation5 + $0x20] sm:$0xff] %vm2477, %v2438
        %2483 = vst.msk [vmem:[#allocation5 + $0x28] sm:$0xff] %vm2477, %v2440
        %2484 = vst.msk [vmem:[#allocation5 + $0x30] sm:$0xff] %vm2477, %v2442
        %2485 = vst.msk [vmem:[#allocation5 + $0x38] sm:$0xff] %vm2477, %v2444
        %2486 = vst.msk [vmem:[#allocation5 + $0x40] sm:$0xff] %vm2477, %v2446
        %2487 = vst.msk [vmem:[#allocation5 + $0x48] sm:$0xff] %vm2477, %v2448
        %2488 = vst.msk [vmem:[#allocation5 + $0x50] sm:$0xff] %vm2477, %v2450
        %2489 = vst.msk [vmem:[#allocation5 + $0x58] sm:$0xff] %vm2477, %v2452
        %2490 = vst.msk [vmem:[#allocation5 + $0x60] sm:$0xff] %vm2477, %v2454
        %2491 = vst.msk [vmem:[#allocation5 + $0x68] sm:$0xff] %vm2477, %v2456
        %2492 = vst.msk [vmem:[#allocation5 + $0x70] sm:$0xff] %vm2477, %v2458
        %2493 = vst.msk [vmem:[#allocation5 + $0x78] sm:$0xff] %vm2477, %v2460
        %v2494 = vld [vmem:[#allocation3 + $0x2] sm:$0xff]
        %v2495 = vld [vmem:[#allocation3 + $0xa] sm:$0xff]
        %v2496 = vld [vmem:[#allocation3 + $0x1a] sm:$0xff]
        %v2497 = vld [vmem:[#allocation3 + $0x22] sm:$0xff]
        %v2498 = vld [vmem:[#allocation3 + $0x32] sm:$0xff]
        %v2499 = vld [vmem:[#allocation3 + $0x3a] sm:$0xff]
        %v2500 = vld [vmem:[#allocation3 + $0x4a] sm:$0xff]
        %v2501 = vld [vmem:[#allocation3 + $0x52] sm:$0xff]
        %v2502 = vld [vmem:[#allocation3 + $0x62] sm:$0xff]
        %v2503 = vld [vmem:[#allocation3 + $0x6a] sm:$0xff]
        %v2504 = vld [vmem:[#allocation3 + $0x7a] sm:$0xff]
        %v2505 = vld [vmem:[#allocation3 + $0x82] sm:$0xff]
        %v2506 = vld [vmem:[#allocation3 + $0x92] sm:$0xff]
        %v2507 = vld [vmem:[#allocation3 + $0x9a] sm:$0xff]
        %v2508 = vld [vmem:[#allocation3 + $0xaa] sm:$0xff]
        %v2509 = vld [vmem:[#allocation3 + $0xb2] sm:$0xff]
        %2526 = vrot.lane.b32.xlu0 %v2494, 16
        %v2527 = vpop.permute.xlu0 %2526
        %2528 = vrot.lane.b32.xlu0 %v2495, 16
        %v2529 = vpop.permute.xlu0 %2528
        %2530 = vrot.lane.b32.xlu0 %v2496, 16
        %v2531 = vpop.permute.xlu0 %2530
        %2532 = vrot.lane.b32.xlu0 %v2497, 16
        %v2533 = vpop.permute.xlu0 %2532
        %2534 = vrot.lane.b32.xlu0 %v2498, 16
        %v2535 = vpop.permute.xlu0 %2534
        %2536 = vrot.lane.b32.xlu0 %v2499, 16
        %v2537 = vpop.permute.xlu0 %2536
        %2538 = vrot.lane.b32.xlu0 %v2500, 16
        %v2539 = vpop.permute.xlu0 %2538
        %2540 = vrot.lane.b32.xlu0 %v2501, 16
        %v2541 = vpop.permute.xlu0 %2540
        %2542 = vrot.lane.b32.xlu0 %v2502, 16
        %v2543 = vpop.permute.xlu0 %2542
        %2544 = vrot.lane.b32.xlu0 %v2503, 16
        %v2545 = vpop.permute.xlu0 %2544
        %2546 = vrot.lane.b32.xlu0 %v2504, 16
        %v2547 = vpop.permute.xlu0 %2546
        %2548 = vrot.lane.b32.xlu0 %v2505, 16
        %v2549 = vpop.permute.xlu0 %2548
        %2550 = vrot.lane.b32.xlu0 %v2506, 16
        %v2551 = vpop.permute.xlu0 %2550
        %2552 = vrot.lane.b32.xlu0 %v2507, 16
        %v2553 = vpop.permute.xlu0 %2552
        %2554 = vrot.lane.b32.xlu0 %v2508, 16
        %v2555 = vpop.permute.xlu0 %2554
        %2556 = vrot.lane.b32.xlu0 %v2509, 16
        %v2557 = vpop.permute.xlu0 %2556
        %vm2574 = vcmask 195712
        %2575 = vst.msk [vmem:[#allocation5] sm:$0xff] %vm2574, %v2527
        %2576 = vst.msk [vmem:[#allocation5 + $0x8] sm:$0xff] %vm2574, %v2529
        %2577 = vst.msk [vmem:[#allocation5 + $0x10] sm:$0xff] %vm2574, %v2531
        %2578 = vst.msk [vmem:[#allocation5 + $0x18] sm:$0xff] %vm2574, %v2533
        %2579 = vst.msk [vmem:[#allocation5 + $0x20] sm:$0xff] %vm2574, %v2535
        %2580 = vst.msk [vmem:[#allocation5 + $0x28] sm:$0xff] %vm2574, %v2537
        %2581 = vst.msk [vmem:[#allocation5 + $0x30] sm:$0xff] %vm2574, %v2539
        %2582 = vst.msk [vmem:[#allocation5 + $0x38] sm:$0xff] %vm2574, %v2541
        %2583 = vst.msk [vmem:[#allocation5 + $0x40] sm:$0xff] %vm2574, %v2543
        %2584 = vst.msk [vmem:[#allocation5 + $0x48] sm:$0xff] %vm2574, %v2545
        %2585 = vst.msk [vmem:[#allocation5 + $0x50] sm:$0xff] %vm2574, %v2547
        %2586 = vst.msk [vmem:[#allocation5 + $0x58] sm:$0xff] %vm2574, %v2549
        %2587 = vst.msk [vmem:[#allocation5 + $0x60] sm:$0xff] %vm2574, %v2551
        %2588 = vst.msk [vmem:[#allocation5 + $0x68] sm:$0xff] %vm2574, %v2553
        %2589 = vst.msk [vmem:[#allocation5 + $0x70] sm:$0xff] %vm2574, %v2555
        %2590 = vst.msk [vmem:[#allocation5 + $0x78] sm:$0xff] %vm2574, %v2557
        %s2591 = scalar_lea.vmem [#allocation3], 24
        %v2592 = vld [vmem:[%s2591] sm:$0xff]
        %v2593 = vld [vmem:[%s2591 + $0x8] sm:$0xff]
        %v2594 = vld [vmem:[%s2591 + $0x18] sm:$0xff]
        %v2595 = vld [vmem:[%s2591 + $0x20] sm:$0xff]
        %v2596 = vld [vmem:[%s2591 + $0x30] sm:$0xff]
        %v2597 = vld [vmem:[%s2591 + $0x38] sm:$0xff]
        %v2598 = vld [vmem:[%s2591 + $0x48] sm:$0xff]
        %v2599 = vld [vmem:[%s2591 + $0x50] sm:$0xff]
        %v2600 = vld [vmem:[%s2591 + $0x60] sm:$0xff]
        %v2601 = vld [vmem:[%s2591 + $0x68] sm:$0xff]
        %v2602 = vld [vmem:[%s2591 + $0x78] sm:$0xff]
        %v2603 = vld [vmem:[%s2591 + $0x80] sm:$0xff]
        %v2604 = vld [vmem:[%s2591 + $0x90] sm:$0xff]
        %v2605 = vld [vmem:[%s2591 + $0x98] sm:$0xff]
        %v2606 = vld [vmem:[%s2591 + $0xa8] sm:$0xff]
        %v2607 = vld [vmem:[%s2591 + $0xb0] sm:$0xff]
        %2624 = vrot.lane.b32.xlu0 %v2592, 24
        %v2625 = vpop.permute.xlu0 %2624
        %2626 = vrot.lane.b32.xlu0 %v2593, 24
        %v2627 = vpop.permute.xlu0 %2626
        %2628 = vrot.lane.b32.xlu0 %v2594, 24
        %v2629 = vpop.permute.xlu0 %2628
        %2630 = vrot.lane.b32.xlu0 %v2595, 24
        %v2631 = vpop.permute.xlu0 %2630
        %2632 = vrot.lane.b32.xlu0 %v2596, 24
        %v2633 = vpop.permute.xlu0 %2632
        %2634 = vrot.lane.b32.xlu0 %v2597, 24
        %v2635 = vpop.permute.xlu0 %2634
        %2636 = vrot.lane.b32.xlu0 %v2598, 24
        %v2637 = vpop.permute.xlu0 %2636
        %2638 = vrot.lane.b32.xlu0 %v2599, 24
        %v2639 = vpop.permute.xlu0 %2638
        %2640 = vrot.lane.b32.xlu0 %v2600, 24
        %v2641 = vpop.permute.xlu0 %2640
        %2642 = vrot.lane.b32.xlu0 %v2601, 24
        %v2643 = vpop.permute.xlu0 %2642
        %2644 = vrot.lane.b32.xlu0 %v2602, 24
        %v2645 = vpop.permute.xlu0 %2644
        %2646 = vrot.lane.b32.xlu0 %v2603, 24
        %v2647 = vpop.permute.xlu0 %2646
        %2648 = vrot.lane.b32.xlu0 %v2604, 24
        %v2649 = vpop.permute.xlu0 %2648
        %2650 = vrot.lane.b32.xlu0 %v2605, 24
        %v2651 = vpop.permute.xlu0 %2650
        %2652 = vrot.lane.b32.xlu0 %v2606, 24
        %v2653 = vpop.permute.xlu0 %2652
        %2654 = vrot.lane.b32.xlu0 %v2607, 24
        %v2655 = vpop.permute.xlu0 %2654
        %vm2672 = vcmask 261312
        %2673 = vst.msk [vmem:[#allocation5] sm:$0xff] %vm2672, %v2625
        %2674 = vst.msk [vmem:[#allocation5 + $0x8] sm:$0xff] %vm2672, %v2627
        %2675 = vst.msk [vmem:[#allocation5 + $0x10] sm:$0xff] %vm2672, %v2629
        %2676 = vst.msk [vmem:[#allocation5 + $0x18] sm:$0xff] %vm2672, %v2631
        %2677 = vst.msk [vmem:[#allocation5 + $0x20] sm:$0xff] %vm2672, %v2633
        %2678 = vst.msk [vmem:[#allocation5 + $0x28] sm:$0xff] %vm2672, %v2635
        %2679 = vst.msk [vmem:[#allocation5 + $0x30] sm:$0xff] %vm2672, %v2637
        %2680 = vst.msk [vmem:[#allocation5 + $0x38] sm:$0xff] %vm2672, %v2639
        %2681 = vst.msk [vmem:[#allocation5 + $0x40] sm:$0xff] %vm2672, %v2641
        %2682 = vst.msk [vmem:[#allocation5 + $0x48] sm:$0xff] %vm2672, %v2643
        %2683 = vst.msk [vmem:[#allocation5 + $0x50] sm:$0xff] %vm2672, %v2645
        %2684 = vst.msk [vmem:[#allocation5 + $0x58] sm:$0xff] %vm2672, %v2647
        %2685 = vst.msk [vmem:[#allocation5 + $0x60] sm:$0xff] %vm2672, %v2649
        %2686 = vst.msk [vmem:[#allocation5 + $0x68] sm:$0xff] %vm2672, %v2651
        %2687 = vst.msk [vmem:[#allocation5 + $0x70] sm:$0xff] %vm2672, %v2653
        %2688 = vst.msk [vmem:[#allocation5 + $0x78] sm:$0xff] %vm2672, %v2655
        %v2689 = vld [vmem:[%s2591 + $0x1] sm:$0xff]
        %v2690 = vld [vmem:[%s2591 + $0x9] sm:$0xff]
        %v2691 = vld [vmem:[%s2591 + $0x19] sm:$0xff]
        %v2692 = vld [vmem:[%s2591 + $0x21] sm:$0xff]
        %v2693 = vld [vmem:[%s2591 + $0x31] sm:$0xff]
        %v2694 = vld [vmem:[%s2591 + $0x39] sm:$0xff]
        %v2695 = vld [vmem:[%s2591 + $0x49] sm:$0xff]
        %v2696 = vld [vmem:[%s2591 + $0x51] sm:$0xff]
        %v2697 = vld [vmem:[%s2591 + $0x61] sm:$0xff]
        %v2698 = vld [vmem:[%s2591 + $0x69] sm:$0xff]
        %v2699 = vld [vmem:[%s2591 + $0x79] sm:$0xff]
        %v2700 = vld [vmem:[%s2591 + $0x81] sm:$0xff]
        %v2701 = vld [vmem:[%s2591 + $0x91] sm:$0xff]
        %v2702 = vld [vmem:[%s2591 + $0x99] sm:$0xff]
        %v2703 = vld [vmem:[%s2591 + $0xa9] sm:$0xff]
        %v2704 = vld [vmem:[%s2591 + $0xb1] sm:$0xff]
        %2721 = vrot.lane.b32.xlu0 %v2689, 32
        %v2722 = vpop.permute.xlu0 %2721
        %2723 = vrot.lane.b32.xlu0 %v2690, 32
        %v2724 = vpop.permute.xlu0 %2723
        %2725 = vrot.lane.b32.xlu0 %v2691, 32
        %v2726 = vpop.permute.xlu0 %2725
        %2727 = vrot.lane.b32.xlu0 %v2692, 32
        %v2728 = vpop.permute.xlu0 %2727
        %2729 = vrot.lane.b32.xlu0 %v2693, 32
        %v2730 = vpop.permute.xlu0 %2729
        %2731 = vrot.lane.b32.xlu0 %v2694, 32
        %v2732 = vpop.permute.xlu0 %2731
        %2733 = vrot.lane.b32.xlu0 %v2695, 32
        %v2734 = vpop.permute.xlu0 %2733
        %2735 = vrot.lane.b32.xlu0 %v2696, 32
        %v2736 = vpop.permute.xlu0 %2735
        %2737 = vrot.lane.b32.xlu0 %v2697, 32
        %v2738 = vpop.permute.xlu0 %2737
        %2739 = vrot.lane.b32.xlu0 %v2698, 32
        %v2740 = vpop.permute.xlu0 %2739
        %2741 = vrot.lane.b32.xlu0 %v2699, 32
        %v2742 = vpop.permute.xlu0 %2741
        %2743 = vrot.lane.b32.xlu0 %v2700, 32
        %v2744 = vpop.permute.xlu0 %2743
        %2745 = vrot.lane.b32.xlu0 %v2701, 32
        %v2746 = vpop.permute.xlu0 %2745
        %2747 = vrot.lane.b32.xlu0 %v2702, 32
        %v2748 = vpop.permute.xlu0 %2747
        %2749 = vrot.lane.b32.xlu0 %v2703, 32
        %v2750 = vpop.permute.xlu0 %2749
        %2751 = vrot.lane.b32.xlu0 %v2704, 32
        %v2752 = vpop.permute.xlu0 %2751
        %vm2769 = vcmask 326912
        %2770 = vst.msk [vmem:[#allocation5] sm:$0xff] %vm2769, %v2722
        %2771 = vst.msk [vmem:[#allocation5 + $0x8] sm:$0xff] %vm2769, %v2724
        %2772 = vst.msk [vmem:[#allocation5 + $0x10] sm:$0xff] %vm2769, %v2726
        %2773 = vst.msk [vmem:[#allocation5 + $0x18] sm:$0xff] %vm2769, %v2728
        %2774 = vst.msk [vmem:[#allocation5 + $0x20] sm:$0xff] %vm2769, %v2730
        %2775 = vst.msk [vmem:[#allocation5 + $0x28] sm:$0xff] %vm2769, %v2732
        %2776 = vst.msk [vmem:[#allocation5 + $0x30] sm:$0xff] %vm2769, %v2734
        %2777 = vst.msk [vmem:[#allocation5 + $0x38] sm:$0xff] %vm2769, %v2736
        %2778 = vst.msk [vmem:[#allocation5 + $0x40] sm:$0xff] %vm2769, %v2738
        %2779 = vst.msk [vmem:[#allocation5 + $0x48] sm:$0xff] %vm2769, %v2740
        %2780 = vst.msk [vmem:[#allocation5 + $0x50] sm:$0xff] %vm2769, %v2742
        %2781 = vst.msk [vmem:[#allocation5 + $0x58] sm:$0xff] %vm2769, %v2744
        %2782 = vst.msk [vmem:[#allocation5 + $0x60] sm:$0xff] %vm2769, %v2746
        %2783 = vst.msk [vmem:[#allocation5 + $0x68] sm:$0xff] %vm2769, %v2748
        %2784 = vst.msk [vmem:[#allocation5 + $0x70] sm:$0xff] %vm2769, %v2750
        %2785 = vst.msk [vmem:[#allocation5 + $0x78] sm:$0xff] %vm2769, %v2752
        %v2786 = vld [vmem:[%s2591 + $0x2] sm:$0xff]
        %v2787 = vld [vmem:[%s2591 + $0xa] sm:$0xff]
        %v2788 = vld [vmem:[%s2591 + $0x1a] sm:$0xff]
        %v2789 = vld [vmem:[%s2591 + $0x22] sm:$0xff]
        %v2790 = vld [vmem:[%s2591 + $0x32] sm:$0xff]
        %v2791 = vld [vmem:[%s2591 + $0x3a] sm:$0xff]
        %v2792 = vld [vmem:[%s2591 + $0x4a] sm:$0xff]
        %v2793 = vld [vmem:[%s2591 + $0x52] sm:$0xff]
        %v2794 = vld [vmem:[%s2591 + $0x62] sm:$0xff]
        %v2795 = vld [vmem:[%s2591 + $0x6a] sm:$0xff]
        %v2796 = vld [vmem:[%s2591 + $0x7a] sm:$0xff]
        %v2797 = vld [vmem:[%s2591 + $0x82] sm:$0xff]
        %v2798 = vld [vmem:[%s2591 + $0x92] sm:$0xff]
        %v2799 = vld [vmem:[%s2591 + $0x9a] sm:$0xff]
        %v2800 = vld [vmem:[%s2591 + $0xaa] sm:$0xff]
        %v2801 = vld [vmem:[%s2591 + $0xb2] sm:$0xff]
        %2818 = vrot.lane.b32.xlu0 %v2786, 40
        %v2819 = vpop.permute.xlu0 %2818
        %2820 = vrot.lane.b32.xlu0 %v2787, 40
        %v2821 = vpop.permute.xlu0 %2820
        %2822 = vrot.lane.b32.xlu0 %v2788, 40
        %v2823 = vpop.permute.xlu0 %2822
        %2824 = vrot.lane.b32.xlu0 %v2789, 40
        %v2825 = vpop.permute.xlu0 %2824
        %2826 = vrot.lane.b32.xlu0 %v2790, 40
        %v2827 = vpop.permute.xlu0 %2826
        %2828 = vrot.lane.b32.xlu0 %v2791, 40
        %v2829 = vpop.permute.xlu0 %2828
        %2830 = vrot.lane.b32.xlu0 %v2792, 40
        %v2831 = vpop.permute.xlu0 %2830
        %2832 = vrot.lane.b32.xlu0 %v2793, 40
        %v2833 = vpop.permute.xlu0 %2832
        %2834 = vrot.lane.b32.xlu0 %v2794, 40
        %v2835 = vpop.permute.xlu0 %2834
        %2836 = vrot.lane.b32.xlu0 %v2795, 40
        %v2837 = vpop.permute.xlu0 %2836
        %2838 = vrot.lane.b32.xlu0 %v2796, 40
        %v2839 = vpop.permute.xlu0 %2838
        %2840 = vrot.lane.b32.xlu0 %v2797, 40
        %v2841 = vpop.permute.xlu0 %2840
        %2842 = vrot.lane.b32.xlu0 %v2798, 40
        %v2843 = vpop.permute.xlu0 %2842
        %2844 = vrot.lane.b32.xlu0 %v2799, 40
        %v2845 = vpop.permute.xlu0 %2844
        %2846 = vrot.lane.b32.xlu0 %v2800, 40
        %v2847 = vpop.permute.xlu0 %2846
        %2848 = vrot.lane.b32.xlu0 %v2801, 40
        %v2849 = vpop.permute.xlu0 %2848
        %vm2866 = vcmask 392512
        %2867 = vst.msk [vmem:[#allocation5] sm:$0xff] %vm2866, %v2819
        %2868 = vst.msk [vmem:[#allocation5 + $0x8] sm:$0xff] %vm2866, %v2821
        %2869 = vst.msk [vmem:[#allocation5 + $0x10] sm:$0xff] %vm2866, %v2823
        %2870 = vst.msk [vmem:[#allocation5 + $0x18] sm:$0xff] %vm2866, %v2825
        %2871 = vst.msk [vmem:[#allocation5 + $0x20] sm:$0xff] %vm2866, %v2827
        %2872 = vst.msk [vmem:[#allocation5 + $0x28] sm:$0xff] %vm2866, %v2829
        %2873 = vst.msk [vmem:[#allocation5 + $0x30] sm:$0xff] %vm2866, %v2831
        %2874 = vst.msk [vmem:[#allocation5 + $0x38] sm:$0xff] %vm2866, %v2833
        %2875 = vst.msk [vmem:[#allocation5 + $0x40] sm:$0xff] %vm2866, %v2835
        %2876 = vst.msk [vmem:[#allocation5 + $0x48] sm:$0xff] %vm2866, %v2837
        %2877 = vst.msk [vmem:[#allocation5 + $0x50] sm:$0xff] %vm2866, %v2839
        %2878 = vst.msk [vmem:[#allocation5 + $0x58] sm:$0xff] %vm2866, %v2841
        %2879 = vst.msk [vmem:[#allocation5 + $0x60] sm:$0xff] %vm2866, %v2843
        %2880 = vst.msk [vmem:[#allocation5 + $0x68] sm:$0xff] %vm2866, %v2845
        %2881 = vst.msk [vmem:[#allocation5 + $0x70] sm:$0xff] %vm2866, %v2847
        %2882 = vst.msk [vmem:[#allocation5 + $0x78] sm:$0xff] %vm2866, %v2849
        %s2883 = scalar_lea.vmem [#allocation3], 48
        %v2884 = vld [vmem:[%s2883] sm:$0xff]
        %v2885 = vld [vmem:[%s2883 + $0x8] sm:$0xff]
        %v2886 = vld [vmem:[%s2883 + $0x18] sm:$0xff]
        %v2887 = vld [vmem:[%s2883 + $0x20] sm:$0xff]
        %v2888 = vld [vmem:[%s2883 + $0x30] sm:$0xff]
        %v2889 = vld [vmem:[%s2883 + $0x38] sm:$0xff]
        %v2890 = vld [vmem:[%s2883 + $0x48] sm:$0xff]
        %v2891 = vld [vmem:[%s2883 + $0x50] sm:$0xff]
        %v2892 = vld [vmem:[%s2883 + $0x60] sm:$0xff]
        %v2893 = vld [vmem:[%s2883 + $0x68] sm:$0xff]
        %v2894 = vld [vmem:[%s2883 + $0x78] sm:$0xff]
        %v2895 = vld [vmem:[%s2883 + $0x80] sm:$0xff]
        %v2896 = vld [vmem:[%s2883 + $0x90] sm:$0xff]
        %v2897 = vld [vmem:[%s2883 + $0x98] sm:$0xff]
        %v2898 = vld [vmem:[%s2883 + $0xa8] sm:$0xff]
        %v2899 = vld [vmem:[%s2883 + $0xb0] sm:$0xff]
        %2916 = vrot.lane.b32.xlu0 %v2884, 48
        %v2917 = vpop.permute.xlu0 %2916
        %2918 = vrot.lane.b32.xlu0 %v2885, 48
        %v2919 = vpop.permute.xlu0 %2918
        %2920 = vrot.lane.b32.xlu0 %v2886, 48
        %v2921 = vpop.permute.xlu0 %2920
        %2922 = vrot.lane.b32.xlu0 %v2887, 48
        %v2923 = vpop.permute.xlu0 %2922
        %2924 = vrot.lane.b32.xlu0 %v2888, 48
        %v2925 = vpop.permute.xlu0 %2924
        %2926 = vrot.lane.b32.xlu0 %v2889, 48
        %v2927 = vpop.permute.xlu0 %2926
        %2928 = vrot.lane.b32.xlu0 %v2890, 48
        %v2929 = vpop.permute.xlu0 %2928
        %2930 = vrot.lane.b32.xlu0 %v2891, 48
        %v2931 = vpop.permute.xlu0 %2930
        %2932 = vrot.lane.b32.xlu0 %v2892, 48
        %v2933 = vpop.permute.xlu0 %2932
        %2934 = vrot.lane.b32.xlu0 %v2893, 48
        %v2935 = vpop.permute.xlu0 %2934
        %2936 = vrot.lane.b32.xlu0 %v2894, 48
        %v2937 = vpop.permute.xlu0 %2936
        %2938 = vrot.lane.b32.xlu0 %v2895, 48
        %v2939 = vpop.permute.xlu0 %2938
        %2940 = vrot.lane.b32.xlu0 %v2896, 48
        %v2941 = vpop.permute.xlu0 %2940
        %2942 = vrot.lane.b32.xlu0 %v2897, 48
        %v2943 = vpop.permute.xlu0 %2942
        %2944 = vrot.lane.b32.xlu0 %v2898, 48
        %v2945 = vpop.permute.xlu0 %2944
        %2946 = vrot.lane.b32.xlu0 %v2899, 48
        %v2947 = vpop.permute.xlu0 %2946
        %vm2964 = vcmask 458112
        %2965 = vst.msk [vmem:[#allocation5] sm:$0xff] %vm2964, %v2917
        %2966 = vst.msk [vmem:[#allocation5 + $0x8] sm:$0xff] %vm2964, %v2919
        %2967 = vst.msk [vmem:[#allocation5 + $0x10] sm:$0xff] %vm2964, %v2921
        %2968 = vst.msk [vmem:[#allocation5 + $0x18] sm:$0xff] %vm2964, %v2923
        %2969 = vst.msk [vmem:[#allocation5 + $0x20] sm:$0xff] %vm2964, %v2925
        %2970 = vst.msk [vmem:[#allocation5 + $0x28] sm:$0xff] %vm2964, %v2927
        %2971 = vst.msk [vmem:[#allocation5 + $0x30] sm:$0xff] %vm2964, %v2929
        %2972 = vst.msk [vmem:[#allocation5 + $0x38] sm:$0xff] %vm2964, %v2931
        %2973 = vst.msk [vmem:[#allocation5 + $0x40] sm:$0xff] %vm2964, %v2933
        %2974 = vst.msk [vmem:[#allocation5 + $0x48] sm:$0xff] %vm2964, %v2935
        %2975 = vst.msk [vmem:[#allocation5 + $0x50] sm:$0xff] %vm2964, %v2937
        %2976 = vst.msk [vmem:[#allocation5 + $0x58] sm:$0xff] %vm2964, %v2939
        %2977 = vst.msk [vmem:[#allocation5 + $0x60] sm:$0xff] %vm2964, %v2941
        %2978 = vst.msk [vmem:[#allocation5 + $0x68] sm:$0xff] %vm2964, %v2943
        %2979 = vst.msk [vmem:[#allocation5 + $0x70] sm:$0xff] %vm2964, %v2945
        %2980 = vst.msk [vmem:[#allocation5 + $0x78] sm:$0xff] %vm2964, %v2947
        %v2981 = vld [vmem:[%s2883 + $0x1] sm:$0xff]
        %v2982 = vld [vmem:[%s2883 + $0x9] sm:$0xff]
        %v2983 = vld [vmem:[%s2883 + $0x19] sm:$0xff]
        %v2984 = vld [vmem:[%s2883 + $0x21] sm:$0xff]
        %v2985 = vld [vmem:[%s2883 + $0x31] sm:$0xff]
        %v2986 = vld [vmem:[%s2883 + $0x39] sm:$0xff]
        %v2987 = vld [vmem:[%s2883 + $0x49] sm:$0xff]
        %v2988 = vld [vmem:[%s2883 + $0x51] sm:$0xff]
        %v2989 = vld [vmem:[%s2883 + $0x61] sm:$0xff]
        %v2990 = vld [vmem:[%s2883 + $0x69] sm:$0xff]
        %v2991 = vld [vmem:[%s2883 + $0x79] sm:$0xff]
        %v2992 = vld [vmem:[%s2883 + $0x81] sm:$0xff]
        %v2993 = vld [vmem:[%s2883 + $0x91] sm:$0xff]
        %v2994 = vld [vmem:[%s2883 + $0x99] sm:$0xff]
        %v2995 = vld [vmem:[%s2883 + $0xa9] sm:$0xff]
        %v2996 = vld [vmem:[%s2883 + $0xb1] sm:$0xff]
        %3013 = vrot.lane.b32.xlu0 %v2981, 56
        %v3014 = vpop.permute.xlu0 %3013
        %3015 = vrot.lane.b32.xlu0 %v2982, 56
        %v3016 = vpop.permute.xlu0 %3015
        %3017 = vrot.lane.b32.xlu0 %v2983, 56
        %v3018 = vpop.permute.xlu0 %3017
        %3019 = vrot.lane.b32.xlu0 %v2984, 56
        %v3020 = vpop.permute.xlu0 %3019
        %3021 = vrot.lane.b32.xlu0 %v2985, 56
        %v3022 = vpop.permute.xlu0 %3021
        %3023 = vrot.lane.b32.xlu0 %v2986, 56
        %v3024 = vpop.permute.xlu0 %3023
        %3025 = vrot.lane.b32.xlu0 %v2987, 56
        %v3026 = vpop.permute.xlu0 %3025
        %3027 = vrot.lane.b32.xlu0 %v2988, 56
        %v3028 = vpop.permute.xlu0 %3027
        %3029 = vrot.lane.b32.xlu0 %v2989, 56
        %v3030 = vpop.permute.xlu0 %3029
        %3031 = vrot.lane.b32.xlu0 %v2990, 56
        %v3032 = vpop.permute.xlu0 %3031
        %3033 = vrot.lane.b32.xlu0 %v2991, 56
        %v3034 = vpop.permute.xlu0 %3033
        %3035 = vrot.lane.b32.xlu0 %v2992, 56
        %v3036 = vpop.permute.xlu0 %3035
        %3037 = vrot.lane.b32.xlu0 %v2993, 56
        %v3038 = vpop.permute.xlu0 %3037
        %3039 = vrot.lane.b32.xlu0 %v2994, 56
        %v3040 = vpop.permute.xlu0 %3039
        %3041 = vrot.lane.b32.xlu0 %v2995, 56
        %v3042 = vpop.permute.xlu0 %3041
        %3043 = vrot.lane.b32.xlu0 %v2996, 56
        %v3044 = vpop.permute.xlu0 %3043
        %vm3061 = vcmask 523712
        %3062 = vst.msk [vmem:[#allocation5] sm:$0xff] %vm3061, %v3014
        %3063 = vst.msk [vmem:[#allocation5 + $0x8] sm:$0xff] %vm3061, %v3016
        %3064 = vst.msk [vmem:[#allocation5 + $0x10] sm:$0xff] %vm3061, %v3018
        %3065 = vst.msk [vmem:[#allocation5 + $0x18] sm:$0xff] %vm3061, %v3020
        %3066 = vst.msk [vmem:[#allocation5 + $0x20] sm:$0xff] %vm3061, %v3022
        %3067 = vst.msk [vmem:[#allocation5 + $0x28] sm:$0xff] %vm3061, %v3024
        %3068 = vst.msk [vmem:[#allocation5 + $0x30] sm:$0xff] %vm3061, %v3026
        %3069 = vst.msk [vmem:[#allocation5 + $0x38] sm:$0xff] %vm3061, %v3028
        %3070 = vst.msk [vmem:[#allocation5 + $0x40] sm:$0xff] %vm3061, %v3030
        %3071 = vst.msk [vmem:[#allocation5 + $0x48] sm:$0xff] %vm3061, %v3032
        %3072 = vst.msk [vmem:[#allocation5 + $0x50] sm:$0xff] %vm3061, %v3034
        %3073 = vst.msk [vmem:[#allocation5 + $0x58] sm:$0xff] %vm3061, %v3036
        %3074 = vst.msk [vmem:[#allocation5 + $0x60] sm:$0xff] %vm3061, %v3038
        %3075 = vst.msk [vmem:[#allocation5 + $0x68] sm:$0xff] %vm3061, %v3040
        %3076 = vst.msk [vmem:[#allocation5 + $0x70] sm:$0xff] %vm3061, %v3042
        %3077 = vst.msk [vmem:[#allocation5 + $0x78] sm:$0xff] %vm3061, %v3044
        %v3078 = vld [vmem:[%s2883 + $0x2] sm:$0xff]
        %v3079 = vld [vmem:[%s2883 + $0xa] sm:$0xff]
        %v3080 = vld [vmem:[%s2883 + $0x1a] sm:$0xff]
        %v3081 = vld [vmem:[%s2883 + $0x22] sm:$0xff]
        %v3082 = vld [vmem:[%s2883 + $0x32] sm:$0xff]
        %v3083 = vld [vmem:[%s2883 + $0x3a] sm:$0xff]
        %v3084 = vld [vmem:[%s2883 + $0x4a] sm:$0xff]
        %v3085 = vld [vmem:[%s2883 + $0x52] sm:$0xff]
        %v3086 = vld [vmem:[%s2883 + $0x62] sm:$0xff]
        %v3087 = vld [vmem:[%s2883 + $0x6a] sm:$0xff]
        %v3088 = vld [vmem:[%s2883 + $0x7a] sm:$0xff]
        %v3089 = vld [vmem:[%s2883 + $0x82] sm:$0xff]
        %v3090 = vld [vmem:[%s2883 + $0x92] sm:$0xff]
        %v3091 = vld [vmem:[%s2883 + $0x9a] sm:$0xff]
        %v3092 = vld [vmem:[%s2883 + $0xaa] sm:$0xff]
        %v3093 = vld [vmem:[%s2883 + $0xb2] sm:$0xff]
        %3110 = vrot.lane.b32.xlu0 %v3078, 64
        %v3111 = vpop.permute.xlu0 %3110
        %3112 = vrot.lane.b32.xlu0 %v3079, 64
        %v3113 = vpop.permute.xlu0 %3112
        %3114 = vrot.lane.b32.xlu0 %v3080, 64
        %v3115 = vpop.permute.xlu0 %3114
        %3116 = vrot.lane.b32.xlu0 %v3081, 64
        %v3117 = vpop.permute.xlu0 %3116
        %3118 = vrot.lane.b32.xlu0 %v3082, 64
        %v3119 = vpop.permute.xlu0 %3118
        %3120 = vrot.lane.b32.xlu0 %v3083, 64
        %v3121 = vpop.permute.xlu0 %3120
        %3122 = vrot.lane.b32.xlu0 %v3084, 64
        %v3123 = vpop.permute.xlu0 %3122
        %3124 = vrot.lane.b32.xlu0 %v3085, 64
        %v3125 = vpop.permute.xlu0 %3124
        %3126 = vrot.lane.b32.xlu0 %v3086, 64
        %v3127 = vpop.permute.xlu0 %3126
        %3128 = vrot.lane.b32.xlu0 %v3087, 64
        %v3129 = vpop.permute.xlu0 %3128
        %3130 = vrot.lane.b32.xlu0 %v3088, 64
        %v3131 = vpop.permute.xlu0 %3130
        %3132 = vrot.lane.b32.xlu0 %v3089, 64
        %v3133 = vpop.permute.xlu0 %3132
        %3134 = vrot.lane.b32.xlu0 %v3090, 64
        %v3135 = vpop.permute.xlu0 %3134
        %3136 = vrot.lane.b32.xlu0 %v3091, 64
        %v3137 = vpop.permute.xlu0 %3136
        %3138 = vrot.lane.b32.xlu0 %v3092, 64
        %v3139 = vpop.permute.xlu0 %3138
        %3140 = vrot.lane.b32.xlu0 %v3093, 64
        %v3141 = vpop.permute.xlu0 %3140
        %vm3158 = vcmask 589312
        %3159 = vst.msk [vmem:[#allocation5] sm:$0xff] %vm3158, %v3111
        %3160 = vst.msk [vmem:[#allocation5 + $0x8] sm:$0xff] %vm3158, %v3113
        %3161 = vst.msk [vmem:[#allocation5 + $0x10] sm:$0xff] %vm3158, %v3115
        %3162 = vst.msk [vmem:[#allocation5 + $0x18] sm:$0xff] %vm3158, %v3117
        %3163 = vst.msk [vmem:[#allocation5 + $0x20] sm:$0xff] %vm3158, %v3119
        %3164 = vst.msk [vmem:[#allocation5 + $0x28] sm:$0xff] %vm3158, %v3121
        %3165 = vst.msk [vmem:[#allocation5 + $0x30] sm:$0xff] %vm3158, %v3123
        %3166 = vst.msk [vmem:[#allocation5 + $0x38] sm:$0xff] %vm3158, %v3125
        %3167 = vst.msk [vmem:[#allocation5 + $0x40] sm:$0xff] %vm3158, %v3127
        %3168 = vst.msk [vmem:[#allocation5 + $0x48] sm:$0xff] %vm3158, %v3129
        %3169 = vst.msk [vmem:[#allocation5 + $0x50] sm:$0xff] %vm3158, %v3131
        %3170 = vst.msk [vmem:[#allocation5 + $0x58] sm:$0xff] %vm3158, %v3133
        %3171 = vst.msk [vmem:[#allocation5 + $0x60] sm:$0xff] %vm3158, %v3135
        %3172 = vst.msk [vmem:[#allocation5 + $0x68] sm:$0xff] %vm3158, %v3137
        %3173 = vst.msk [vmem:[#allocation5 + $0x70] sm:$0xff] %vm3158, %v3139
        %3174 = vst.msk [vmem:[#allocation5 + $0x78] sm:$0xff] %vm3158, %v3141
        %v3175 = vld [vmem:[#allocation5] sm:$0xff]
        %v3176 = vld [vmem:[#allocation5 + $0x8] sm:$0xff]
        %v3177 = vld [vmem:[#allocation5 + $0x10] sm:$0xff]
        %v3178 = vld [vmem:[#allocation5 + $0x18] sm:$0xff]
        %v3179 = vld [vmem:[#allocation5 + $0x20] sm:$0xff]
        %v3180 = vld [vmem:[#allocation5 + $0x28] sm:$0xff]
        %v3181 = vld [vmem:[#allocation5 + $0x30] sm:$0xff]
        %v3182 = vld [vmem:[#allocation5 + $0x38] sm:$0xff]
        %v3183 = vld [vmem:[#allocation5 + $0x40] sm:$0xff]
        %v3184 = vld [vmem:[#allocation5 + $0x48] sm:$0xff]
        %v3185 = vld [vmem:[#allocation5 + $0x50] sm:$0xff]
        %v3186 = vld [vmem:[#allocation5 + $0x58] sm:$0xff]
        %v3187 = vld [vmem:[#allocation5 + $0x60] sm:$0xff]
        %v3188 = vld [vmem:[#allocation5 + $0x68] sm:$0xff]
        %v3189 = vld [vmem:[#allocation5 + $0x70] sm:$0xff]
        %v3190 = vld [vmem:[#allocation5 + $0x78] sm:$0xff]
        %v3191 = vld [vmem:[#allocation14] sm:$0xff]
        %v3192 = vld [vmem:[#allocation14 + $0x8] sm:$0xff]
        %v3193 = vld [vmem:[#allocation14 + $0x10] sm:$0xff]
        %v3194 = vld [vmem:[#allocation14 + $0x18] sm:$0xff]
        %v3195 = vld [vmem:[#allocation14 + $0x20] sm:$0xff]
        %v3196 = vld [vmem:[#allocation14 + $0x28] sm:$0xff]
        %v3197 = vld [vmem:[#allocation14 + $0x30] sm:$0xff]
        %v3198 = vld [vmem:[#allocation14 + $0x38] sm:$0xff]
        %v3199 = vld [vmem:[#allocation14 + $0x40] sm:$0xff]
        %vm3200 = vcmask 588800
        %v3202 = vsel %vm3200, %v3175, 0
        %v3205 = vsel %vm3200, %v3176, 0
        %v3208 = vsel %vm3200, %v3177, 0
        %v3211 = vsel %vm3200, %v3178, 0
        %v3214 = vsel %vm3200, %v3179, 0
        %v3217 = vsel %vm3200, %v3180, 0
        %v3220 = vsel %vm3200, %v3181, 0
        %v3223 = vsel %vm3200, %v3182, 0
        %v3226 = vsel %vm3200, %v3183, 0
        %v3229 = vsel %vm3200, %v3184, 0
        %v3232 = vsel %vm3200, %v3185, 0
        %v3235 = vsel %vm3200, %v3186, 0
        %v3238 = vsel %vm3200, %v3187, 0
        %v3241 = vsel %vm3200, %v3188, 0
        %v3244 = vsel %vm3200, %v3189, 0
        %v3247 = vsel %vm3200, %v3190, 0
        %3249 = vmatprep.subr.mxu0 0.0
        %3250 = vmatpush1.msra.mxu0 %v3191
        %3251 = vmatprep.subr.mxu0 0.0
        %3252 = vmatpush1.msra.mxu0 %v3192
        %3253 = vmatprep.subr.mxu0 0.0
        %3254 = vmatpush1.msra.mxu0 %v3193
        %3255 = vmatprep.subr.mxu0 0.0
        %3256 = vmatpush1.msra.mxu0 %v3194
        %3257 = vmatprep.subr.mxu0 0.0
        %3258 = vmatpush1.msra.mxu0 %v3195
        %3259 = vmatprep.subr.mxu0 0.0
        %3260 = vmatpush1.msra.mxu0 %v3196
        %3261 = vmatprep.subr.mxu0 0.0
        %3262 = vmatpush1.msra.mxu0 %v3197
        %3263 = vmatprep.subr.mxu0 0.0
        %3264 = vmatpush1.msra.mxu0 %v3198
        %3265 = vmatprep.subr.mxu0 0.0
        %3266 = vmatpush1.msra.mxu0 %v3199
        %3267 = vmatprep.subr.mxu0 0.0
        %3268 = vmatpush1.msra.mxu0 0.0
        %3269 = vmatprep.subr.mxu0 0.0
        %3270 = vmatpush1.msra.mxu0 0.0
        %3271 = vmatprep.subr.mxu0 0.0
        %3272 = vmatpush1.msra.mxu0 0.0
        %3273 = vmatprep.subr.mxu0 0.0
        %3274 = vmatpush1.msra.mxu0 0.0
        %3275 = vmatprep.subr.mxu0 0.0
        %3276 = vmatpush1.msra.mxu0 0.0
        %3277 = vmatprep.subr.mxu0 0.0
        %3278 = vmatpush1.msra.mxu0 0.0
        %3279 = vmatprep.subr.mxu0 0.0
        %3280 = vmatpush1.msra.mxu0 0.0
        %3281 = vmatprep.subr.mxu0 0.0
        %3282 = vmatpush1.msra.mxu0 0.0
        %3283 = vmatprep.subr.mxu0 0.0
        %3284 = vmatpush1.msra.mxu0 0.0
        %3285 = vmatprep.subr.mxu0 0.0
        %3286 = vmatpush1.msra.mxu0 0.0
        %3287 = vmatprep.subr.mxu0 0.0
        %3288 = vmatpush1.msra.mxu0 0.0
        %3289 = vmatprep.subr.mxu0 0.0
        %3290 = vmatpush1.msra.mxu0 0.0
        %3291 = vmatprep.subr.mxu0 0.0
        %3292 = vmatpush1.msra.mxu0 0.0
        %3293 = vmatprep.subr.mxu0 0.0
        %3294 = vmatpush1.msra.mxu0 0.0
        %3295 = vmatprep.subr.mxu0 0.0
        %3296 = vmatpush1.msra.mxu0 0.0
        %3297 = vmatprep.subr.mxu0 0.0
        %3298 = vmatpush1.msra.mxu0 0.0
        %3299 = vmatprep.subr.mxu0 0.0
        %3300 = vmatpush1.msra.mxu0 0.0
        %3301 = vmatprep.subr.mxu0 0.0
        %3302 = vmatpush1.msra.mxu0 0.0
        %3303 = vmatprep.subr.mxu0 0.0
        %3304 = vmatpush1.msra.mxu0 0.0
        %3305 = vmatprep.subr.mxu0 0.0
        %3306 = vmatpush1.msra.mxu0 0.0
        %3307 = vmatprep.subr.mxu0 0.0
        %3308 = vmatpush1.msra.mxu0 0.0
        %3309 = vmatprep.subr.mxu0 0.0
        %3310 = vmatpush1.msra.mxu0 0.0
        %3311 = vmatprep.subr.mxu0 0.0
        %3312 = vmatpush1.msra.mxu0 0.0
        %3313 = vmatprep.mubr.f32.mxu0 0.0
        %3314 = vmatmul.mubr.f32.gmra.mrb[0].mxu0 %v3202
        %v3315 = vpop.f32.mrb[0].mxu0
        %v3316 = vadd.f32 0.0, %v3315
        %v3317 = vpop.f32.mrb[0].mxu0
        %3318 = vmatprep.mubr.f32.mxu0 0.0
        %3319 = vmatmul.mubr.f32.gmra.mrb[0].mxu0 %v3205
        %v3320 = vpop.f32.mrb[0].mxu0
        %v3321 = vadd.f32 0.0, %v3320
        %v3322 = vpop.f32.mrb[0].mxu0
        %3323 = vmatprep.mubr.f32.mxu0 0.0
        %3324 = vmatmul.mubr.f32.gmra.mrb[0].mxu0 %v3208
        %v3325 = vpop.f32.mrb[0].mxu0
        %v3326 = vadd.f32 0.0, %v3325
        %v3327 = vpop.f32.mrb[0].mxu0
        %3328 = vmatprep.mubr.f32.mxu0 0.0
        %3329 = vmatmul.mubr.f32.gmra.mrb[0].mxu0 %v3211
        %v3330 = vpop.f32.mrb[0].mxu0
        %v3331 = vadd.f32 0.0, %v3330
        %v3332 = vpop.f32.mrb[0].mxu0
        %3333 = vmatprep.mubr.f32.mxu0 0.0
        %3334 = vmatmul.mubr.f32.gmra.mrb[0].mxu0 %v3214
        %v3335 = vpop.f32.mrb[0].mxu0
        %v3336 = vadd.f32 0.0, %v3335
        %v3337 = vpop.f32.mrb[0].mxu0
        %3338 = vmatprep.mubr.f32.mxu0 0.0
        %3339 = vmatmul.mubr.f32.gmra.mrb[0].mxu0 %v3217
        %v3340 = vpop.f32.mrb[0].mxu0
        %v3341 = vadd.f32 0.0, %v3340
        %v3342 = vpop.f32.mrb[0].mxu0
        %3343 = vmatprep.mubr.f32.mxu0 0.0
        %3344 = vmatmul.mubr.f32.gmra.mrb[0].mxu0 %v3220
        %v3345 = vpop.f32.mrb[0].mxu0
        %v3346 = vadd.f32 0.0, %v3345
        %v3347 = vpop.f32.mrb[0].mxu0
        %3348 = vmatprep.mubr.f32.mxu0 0.0
        %3349 = vmatmul.mubr.f32.gmra.mrb[0].mxu0 %v3223
        %v3350 = vpop.f32.mrb[0].mxu0
        %v3351 = vadd.f32 0.0, %v3350
        %v3352 = vpop.f32.mrb[0].mxu0
        %3353 = vmatprep.mubr.f32.mxu0 0.0
        %3354 = vmatmul.mubr.f32.gmra.mrb[0].mxu0 %v3226
        %v3355 = vpop.f32.mrb[0].mxu0
        %v3356 = vadd.f32 0.0, %v3355
        %v3357 = vpop.f32.mrb[0].mxu0
        %3358 = vmatprep.mubr.f32.mxu0 0.0
        %3359 = vmatmul.mubr.f32.gmra.mrb[0].mxu0 %v3229
        %v3360 = vpop.f32.mrb[0].mxu0
        %v3361 = vadd.f32 0.0, %v3360
        %v3362 = vpop.f32.mrb[0].mxu0
        %3363 = vmatprep.mubr.f32.mxu0 0.0
        %3364 = vmatmul.mubr.f32.gmra.mrb[0].mxu0 %v3232
        %v3365 = vpop.f32.mrb[0].mxu0
        %v3366 = vadd.f32 0.0, %v3365
        %v3367 = vpop.f32.mrb[0].mxu0
        %3368 = vmatprep.mubr.f32.mxu0 0.0
        %3369 = vmatmul.mubr.f32.gmra.mrb[0].mxu0 %v3235
        %v3370 = vpop.f32.mrb[0].mxu0
        %v3371 = vadd.f32 0.0, %v3370
        %v3372 = vpop.f32.mrb[0].mxu0
        %3373 = vmatprep.mubr.f32.mxu0 0.0
        %3374 = vmatmul.mubr.f32.gmra.mrb[0].mxu0 %v3238
        %v3375 = vpop.f32.mrb[0].mxu0
        %v3376 = vadd.f32 0.0, %v3375
        %v3377 = vpop.f32.mrb[0].mxu0
        %3378 = vmatprep.mubr.f32.mxu0 0.0
        %3379 = vmatmul.mubr.f32.gmra.mrb[0].mxu0 %v3241
        %v3380 = vpop.f32.mrb[0].mxu0
        %v3381 = vadd.f32 0.0, %v3380
        %v3382 = vpop.f32.mrb[0].mxu0
        %3383 = vmatprep.mubr.f32.mxu0 0.0
        %3384 = vmatmul.mubr.f32.gmra.mrb[0].mxu0 %v3244
        %v3385 = vpop.f32.mrb[0].mxu0
        %v3386 = vadd.f32 0.0, %v3385
        %v3387 = vpop.f32.mrb[0].mxu0
        %3388 = vmatprep.mubr.f32.mxu0 0.0
        %3389 = vmatmul.mubr.f32.gmra.mrb[0].mxu0 %v3247
        %v3390 = vpop.f32.mrb[0].mxu0
        %v3391 = vadd.f32 0.0, %v3390
        %v3392 = vpop.f32.mrb[0].mxu0
        %3393 = vdwg.mxu0
        %v3394 = vld [vmem:[#allocation15] sm:$0x1]
        %v3396 = vlaneseq
        %v3397 = vshrl.u32 %v3396, 7
        %v3398 = vsub.s32 0, %v3397
        %v3399 = vrot.slane %v3394, %v3398
        %v3401 = vmul.f32 %v3316, %v3399
        %v3402 = vmul.f32 %v3321, %v3399
        %v3403 = vmul.f32 %v3326, %v3399
        %v3404 = vmul.f32 %v3331, %v3399
        %v3405 = vmul.f32 %v3336, %v3399
        %v3406 = vmul.f32 %v3341, %v3399
        %v3407 = vmul.f32 %v3346, %v3399
        %v3408 = vmul.f32 %v3351, %v3399
        %v3409 = vmul.f32 %v3356, %v3399
        %v3410 = vmul.f32 %v3361, %v3399
        %v3411 = vmul.f32 %v3366, %v3399
        %v3412 = vmul.f32 %v3371, %v3399
        %v3413 = vmul.f32 %v3376, %v3399
        %v3414 = vmul.f32 %v3381, %v3399
        %v3415 = vmul.f32 %v3386, %v3399
        %v3416 = vmul.f32 %v3391, %v3399
        %v3417 = vld [vmem:[#allocation17] sm:$0x1]
        %v3419 = vlaneseq
        %v3420 = vshrl.u32 %v3419, 7
        %v3421 = vsub.s32 0, %v3420
        %v3422 = vrot.slane %v3417, %v3421
        %v3424 = vadd.f32 %v3401, %v3422
        %v3425 = vadd.f32 %v3402, %v3422
        %v3426 = vadd.f32 %v3403, %v3422
        %v3427 = vadd.f32 %v3404, %v3422
        %v3428 = vadd.f32 %v3405, %v3422
        %v3429 = vadd.f32 %v3406, %v3422
        %v3430 = vadd.f32 %v3407, %v3422
        %v3431 = vadd.f32 %v3408, %v3422
        %v3432 = vadd.f32 %v3409, %v3422
        %v3433 = vadd.f32 %v3410, %v3422
        %v3434 = vadd.f32 %v3411, %v3422
        %v3435 = vadd.f32 %v3412, %v3422
        %v3436 = vadd.f32 %v3413, %v3422
        %v3437 = vadd.f32 %v3414, %v3422
        %v3438 = vadd.f32 %v3415, %v3422
        %v3439 = vadd.f32 %v3416, %v3422
        %v3440 = vadd.f32 %v3424, %v2284
        %v3441 = vadd.f32 %v3425, %v2285
        %v3442 = vadd.f32 %v3426, %v2286
        %v3443 = vadd.f32 %v3427, %v2287
        %v3444 = vadd.f32 %v3428, %v2288
        %v3445 = vadd.f32 %v3429, %v2289
        %v3446 = vadd.f32 %v3430, %v2290
        %v3447 = vadd.f32 %v3431, %v2291
        %v3448 = vadd.f32 %v3432, %v2292
        %v3449 = vadd.f32 %v3433, %v2293
        %v3450 = vadd.f32 %v3434, %v2294
        %v3451 = vadd.f32 %v3435, %v2295
        %v3452 = vadd.f32 %v3436, %v2296
        %v3453 = vadd.f32 %v3437, %v2297
        %v3454 = vadd.f32 %v3438, %v2298
        %v3455 = vadd.f32 %v3439, %v2299
        %v3456 = vmax.f32 %v3440, 0.0
        %v3457 = vmax.f32 %v3441, 0.0
        %v3458 = vmax.f32 %v3442, 0.0
        %v3459 = vmax.f32 %v3443, 0.0
        %v3460 = vmax.f32 %v3444, 0.0
        %v3461 = vmax.f32 %v3445, 0.0
        %v3462 = vmax.f32 %v3446, 0.0
        %v3463 = vmax.f32 %v3447, 0.0
        %v3464 = vmax.f32 %v3448, 0.0
        %v3465 = vmax.f32 %v3449, 0.0
        %v3466 = vmax.f32 %v3450, 0.0
        %v3467 = vmax.f32 %v3451, 0.0
        %v3468 = vmax.f32 %v3452, 0.0
        %v3469 = vmax.f32 %v3453, 0.0
        %v3470 = vmax.f32 %v3454, 0.0
        %v3471 = vmax.f32 %v3455, 0.0
        %3472 = vst.msk [vmem:[%s508] sm:$0xff] %vm2300, %v3456
        %3473 = vst.msk [vmem:[%s508 + $0x8] sm:$0xff] %vm2300, %v3457
        %3474 = vst.msk [vmem:[%s508 + $0x10] sm:$0xff] %vm2300, %v3458
        %3475 = vst.msk [vmem:[%s508 + $0x18] sm:$0xff] %vm2300, %v3459
        %3476 = vst.msk [vmem:[%s508 + $0x20] sm:$0xff] %vm2300, %v3460
        %3477 = vst.msk [vmem:[%s508 + $0x28] sm:$0xff] %vm2300, %v3461
        %3478 = vst.msk [vmem:[%s508 + $0x30] sm:$0xff] %vm2300, %v3462
        %3479 = vst.msk [vmem:[%s508 + $0x38] sm:$0xff] %vm2300, %v3463
        %3480 = vst.msk [vmem:[%s508 + $0x40] sm:$0xff] %vm2300, %v3464
        %3481 = vst.msk [vmem:[%s508 + $0x48] sm:$0xff] %vm2300, %v3465
        %3482 = vst.msk [vmem:[%s508 + $0x50] sm:$0xff] %vm2300, %v3466
        %3483 = vst.msk [vmem:[%s508 + $0x58] sm:$0xff] %vm2300, %v3467
        %3484 = vst.msk [vmem:[%s508 + $0x60] sm:$0xff] %vm2300, %v3468
        %3485 = vst.msk [vmem:[%s508 + $0x68] sm:$0xff] %vm2300, %v3469
        %3486 = vst.msk [vmem:[%s508 + $0x70] sm:$0xff] %vm2300, %v3470
        %3487 = vst.msk [vmem:[%s508 + $0x78] sm:$0xff] %vm2300, %v3471
        %s3488 = sand.u32 %s269, 1
        %s3489 = scalar_lea.sflag [#allocation8], %s3488
        %s3490 = sand.u32 %s269, 1
        %s3491 = smul.addr %s3490, 128
        %s3492 = scalar_lea.vmem [#allocation23], %s3491
        // Predicated region
        $region121: #{tpu_custom_call.1} parent=59 // pred_check
          %p3493 = pneg %p279
        $region122: #{tpu_custom_call.1} parent=59 // pred_check_branch
          %3495 = sbr.rel (%p3493) target = $region124
        $region123: #{tpu_custom_call.1} parent=59 // pred_region
          %s3496 = smul.u32 16, %s37
          %s3498 = ssub.s32 2048, 2048
          %3499 = vsyncadd %s3489, %s3498
          %s3500 = smul.addr %s36, 32
          %s3501 = sadd.s32 %s3496, %s3500
          %s3502 = smul.addr %s3501, 128
          %s3503 = scalar_lea.hbm %s10, %s3502
          %s3504 = sshll.u32 %s3492, 4
          %s3505 = int_to_ptr.vmem [resolvable:$true] %s3504
          %3510 = dma.vmem_to_hbm [thread:$0]  %s3505, 2048, %s3503, %s3489, 128, 128, 8
        $region124: #{tpu_custom_call.1} parent=59 // pred_fallthru
          _
      $region60: #{tpu_custom_call.1} parent=5 // pred_fallthru
        _
      %p3511 = scmp.le.s32.totalorder 2, %s27
      // Predicated region
      $region125: #{tpu_custom_call.1} parent=5 // pred_check
        %p3512 = pneg %p3511
      $region126: #{tpu_custom_call.1} parent=5 // pred_check_branch
        %3514 = sbr.rel (%p3512) target = $region128
      $region127: #{tpu_custom_call.1} parent=5 // pred_region
        %s3515 = ssub.s32 %s27, 2
        // Predicated region
        $region129: #{tpu_custom_call.1} parent=127 // pred_check
          %p3516 = pneg %p285
        $region130: #{tpu_custom_call.1} parent=127 // pred_check_branch
          %3518 = sbr.rel (%p3516) target = $region132
        $region131: #{tpu_custom_call.1} parent=127 // pred_region
          %s3519 = sand.u32 %s270, 1
          %s3520 = scalar_lea.sflag [#allocation8], %s3519
          %s3521 = sand.u32 %s270, 1
          %s3522 = smul.addr %s3521, 128
          %s3523 = scalar_lea.vmem [#allocation23], %s3522
          %3524 = dma.done %s3520, 2048
        $region132: #{tpu_custom_call.1} parent=127 // pred_fallthru
          _
      $region128: #{tpu_custom_call.1} parent=5 // pred_fallthru
        _
    $region6: #{tpu_custom_call.1} parent=1 // loop_footer
      %s31 = sadd.s32 1, %s27
    $region7: #{tpu_custom_call.1} parent=1 // loop_footer_branch
      %26 = sbr.rel target = $region3
    $region8: #{tpu_custom_call.1} parent=1 // loop_exit
      _
    %3525 = vsyncpa [#allocation7], 1
    %s3526 = scalar_lea.sflag [#allocation7], 1
    %3527 = vsyncpa %s3526, 1
    %3528 = vsyncpa [#allocation10], 1
    %3529 = vsyncpa [#allocation13], 1
    %3530 = vsyncpa [#allocation16], 1
    %3531 = vsyncpa [#allocation19], 1
    %3532 = vsyncpa [#allocation22], 1
    %3533 = vsyncpa [#allocation8], 1
    %s3534 = scalar_lea.sflag [#allocation8], 1
    %3535 = vsyncpa %s3534, 1

// kernel: tpu_custom_call.1
$region0: #{tpu_custom_call.1}
  #allocation0 [shape = 'u32[]', space=smem, size = 0x4, offset = 0x4, fixed_abs, tag = 'smem constant byte address 0x4 - core index']
  #allocation1 [shape = 'u32[144,128]{1,0:T(1,128)}', space=vmem, size = 0x12000, scoped, tag = 'internal scratch']
  #allocation2 [shape = 'f32[12,18,4]{2,1,0:T(8,128)}', space=vmem, size = 0x24000, scoped, tag = 'scratch operand']
  #allocation3 [shape = 'f32[10,18,8]{2,1,0:T(8,128)}', space=vmem, size = 0x1e000, scoped, tag = 'scratch operand']
  #allocation4 [shape = 'f32[160,36]{1,0:T(8,128)}', space=vmem, size = 0x14000, scoped, tag = 'scratch operand']
  #allocation5 [shape = 'f32[128,72]{1,0:T(8,128)}', space=vmem, size = 0x10000, scoped, tag = 'scratch operand']
  %s0 = inlined_call_operand.hbm [shape: f32[2,16,16,4], index: 0, kind: input, shape index: {}]
  %s1 = inlined_call_operand.hbm [shape: f32[36,8], index: 1, kind: input, shape index: {}]
  %s2 = inlined_call_operand.hbm [shape: f32[1,8], index: 2, kind: input, shape index: {}]
  %s3 = inlined_call_operand.hbm [shape: f32[1,8], index: 3, kind: input, shape index: {}]
  %s4 = inlined_call_operand.hbm [shape: f32[72,8], index: 4, kind: input, shape index: {}]
  %s5 = inlined_call_operand.hbm [shape: f32[1,8], index: 5, kind: input, shape index: {}]
  %s6 = inlined_call_operand.hbm [shape: f32[1,8], index: 6, kind: input, shape index: {}]
  %s7 = inlined_call_operand.hbm [shape: f32[4,8], index: 7, kind: input, shape index: {}]
  %s8 = inlined_call_operand.hbm [shape: f32[1,8], index: 8, kind: input, shape index: {}]
  %s9 = inlined_call_operand.hbm [shape: f32[1,8], index: 9, kind: input, shape index: {}]
  %s10 = inlined_call_operand.hbm [shape: f32[2,256,8], index: 10, kind: output, shape index: {}]
  %s11 = sld [smem:[#allocation0]]
  $region133: #{tpu_custom_call.1} parent=0
    _
  %s13 = ssub.s32 1, %s11
  %s14 = scalar_select 0, %s13, %s11
  $region1: #{tpu_custom_call.1} parent=0
    #allocation6 [shape = 'u8[262144]{0}', space=vmem, size = 0x40000, scoped, tag = 'input window, operand 0']
    #allocation7 [shape = 's32[2]{0}', space=sflag, size = 0x8, scoped, tag = 'scoped memory for tpu_custom_call.1']
    #allocation8 [shape = 's32[2]{0}', space=sflag, size = 0x8, scoped, tag = 'scoped memory for tpu_custom_call.1']
    #allocation9 [shape = 'u8[20480]{0}', space=vmem, size = 0x5000, scoped, tag = 'input window, operand 1, single buffered']
    #allocation10 [shape = 's32[1]{0}', space=sflag, size = 0x4, scoped, tag = 'scoped memory for tpu_custom_call.1']
    #allocation11 [shape = 'u8[512]{0}', space=vmem, size = 0x400, scoped, tag = 'input window, operand 2, single buffered']
    #allocation12 [shape = 'u8[512]{0}', space=vmem, size = 0x400, scoped, tag = 'input window, operand 3, single buffered']
    #allocation13 [shape = 's32[1]{0}', space=sflag, size = 0x4, scoped, tag = 'scoped memory for tpu_custom_call.1']
    #allocation14 [shape = 'u8[36864]{0}', space=vmem, size = 0x9000, scoped, tag = 'input window, operand 4, single buffered']
    #allocation15 [shape = 'u8[512]{0}', space=vmem, size = 0x400, scoped, tag = 'input window, operand 5, single buffered']
    #allocation16 [shape = 's32[1]{0}', space=sflag, size = 0x4, scoped, tag = 'scoped memory for tpu_custom_call.1']
    #allocation17 [shape = 'u8[512]{0}', space=vmem, size = 0x400, scoped, tag = 'input window, operand 6, single buffered']
    #allocation18 [shape = 'u8[2048]{0}', space=vmem, size = 0x800, scoped, tag = 'input window, operand 7, single buffered']
    #allocation19 [shape = 's32[1]{0}', space=sflag, size = 0x4, scoped, tag = 'scoped memory for tpu_custom_call.1']
    #allocation20 [shape = 'u8[512]{0}', space=vmem, size = 0x400, scoped, tag = 'input window, operand 8, single buffered']
    #allocation21 [shape = 'u8[512]{0}', space=vmem, size = 0x400, scoped, tag = 'input window, operand 9, single buffered']
    #allocation22 [shape = 's32[1]{0}', space=sflag, size = 0x4, scoped, tag = 'scoped memory for tpu_custom_call.1']
    #allocation23 [shape = 'u8[131072]{0}', space=vmem, size = 0x20000, scoped, tag = 'output window, operand 0']
    %15 = vsyncpa [#allocation7], 0
    %s16 = scalar_lea.sflag [#allocation7], 1
    %17 = vsyncpa %s16, 0
    %18 = vsyncpa [#allocation10], 0
    %19 = vsyncpa [#allocation13], 0
    %20 = vsyncpa [#allocation16], 0
    %21 = vsyncpa [#allocation19], 0
    %22 = vsyncpa [#allocation22], 0
    %23 = vsyncpa [#allocation8], 0
    %s24 = scalar_lea.sflag [#allocation8], 1
    %25 = vsyncpa %s24, 0
    loop: start=0, step=1, limit=6
    $region2: #{tpu_custom_call.1} parent=1 // loop_pre_header
      _
    $region3: #{tpu_custom_call.1} parent=1 // loop_header
      %s27 = sphi 0, %s31
      %p28 = scmp.ge.s32.totalorder %s27, 6
      %s34 = sphi 0, %s46
      %s35 = sphi 0, %s42
      %s36 = sphi 0, %s34
      %s37 = sphi 0, %s35
      %s38 = sphi 0, %s36
      %s39 = sphi 0, %s37
      %s49 = sphi 0, %s51
      %s52 = sphi 0, %s49
      %s53 = sphi 0, %s52
      %s69 = sphi 0, %s53
      %s73 = sphi 0, %s73
      %s75 = sphi 0, %s73
      %s76 = sphi 0, %s75
      %s90 = sphi 0, %s76
      %s94 = sphi 0, %s94
      %s96 = sphi 0, %s94
      %s97 = sphi 0, %s96
      %s111 = sphi 0, %s97
      %s115 = sphi 0, %s115
      %s117 = sphi 0, %s115
      %s118 = sphi 0, %s117
      %s132 = sphi 0, %s118
      %s136 = sphi 0, %s136
      %s138 = sphi 0, %s136
      %s139 = sphi 0, %s138
      %s153 = sphi 0, %s139
      %s157 = sphi 0, %s157
      %s159 = sphi 0, %s157
      %s160 = sphi 0, %s159
      %s174 = sphi 0, %s160
      %s178 = sphi 0, %s178
      %s180 = sphi 0, %s178
      %s181 = sphi 0, %s180
      %s195 = sphi 0, %s181
      %s199 = sphi 0, %s199
      %s201 = sphi 0, %s199
      %s202 = sphi 0, %s201
      %s216 = sphi 0, %s202
      %s220 = sphi 0, %s220
      %s222 = sphi 0, %s220
      %s223 = sphi 0, %s222
      %s237 = sphi 0, %s223
      %s241 = sphi 0, %s241
      %s243 = sphi 0, %s241
      %s244 = sphi 0, %s243
      %s258 = sphi 0, %s244
      %s266 = sphi 0, %s268
      %s269 = sphi 0, %s266
      %s270 = sphi 0, %s269
      %s286 = sphi 0, %s270
    $region4: #{tpu_custom_call.1} parent=1 // loop_header_branch
      %30 = sbr.rel (%p28) target = $region8
    $region5: #{tpu_custom_call.1} parent=1 // loop_body
      %s32 = ssub.s32 %s27, 1
      %s33 = ssub.s32 %s27, 2
      %s40 = sadd.s32 1, %s35
      %p41 = scmp.ge.s32.totalorder %s40, 2
      %s42 = scalar_select %p41, 0, %s40
      %s43 = sadd.s32 1, %s34
      %s44 = scalar_select %p41, %s43, %s34
      %p45 = scmp.ge.s32.totalorder %s44, 2
      %s46 = scalar_select %p45, 0, %s44
      %s47 = ssub.s32 %s34, %s46
      %p48 = scmp.eq.s32.totalorder %s47, 0
      %s50 = sadd.s32 %s49, 1
      %s51 = scalar_select %p48, %s49, %s50
      %p54 = pneg %p48
      %p55 = scmp.eq.s32.totalorder %s27, 3
      %p56 = por %p54, %p55
      %p57 = scmp.ne.s32.totalorder %s49, %s52
      %p58 = scmp.eq.s32.totalorder %s27, 0
      %p59 = por %p57, %p58
      %p60 = scmp.ne.s32.totalorder %s49, %s52
      %p61 = scmp.eq.s32.totalorder %s32, 3
      %p62 = por %p60, %p61
      %p63 = scmp.ne.s32.totalorder %s52, %s53
      %p64 = scmp.eq.s32.totalorder %s32, 0
      %p65 = por %p63, %p64
      %p66 = scmp.ne.s32.totalorder %s52, %s53
      %p67 = scmp.eq.s32.totalorder %s33, 3
      %p68 = por %p66, %p67
      %p70 = scmp.ne.s32.totalorder %s53, %s69
      %p71 = scmp.eq.s32.totalorder %s33, 0
      %p72 = por %p70, %p71
      %s74 = sadd.s32 %s73, 1
      %p77 = scmp.eq.s32.totalorder %s27, 3
      %p78 = scmp.ne.s32.totalorder %s73, %s75
      %p79 = scmp.eq.s32.totalorder %s27, 0
      %p80 = por %p78, %p79
      %p81 = scmp.ne.s32.totalorder %s73, %s75
      %p82 = scmp.eq.s32.totalorder %s32, 3
      %p83 = por %p81, %p82
      %p84 = scmp.ne.s32.totalorder %s75, %s76
      %p85 = scmp.eq.s32.totalorder %s32, 0
      %p86 = por %p84, %p85
      %p87 = scmp.ne.s32.totalorder %s75, %s76
      %p88 = scmp.eq.s32.totalorder %s33, 3
      %p89 = por %p87, %p88
      %p91 = scmp.ne.s32.totalorder %s76, %s90
      %p92 = scmp.eq.s32.totalorder %s33, 0
      %p93 = por %p91, %p92
      %s95 = sadd.s32 %s94, 1
      %p98 = scmp.eq.s32.totalorder %s27, 3
      %p99 = scmp.ne.s32.totalorder %s94, %s96
      %p100 = scmp.eq.s32.totalorder %s27, 0
      %p101 = por %p99, %p100
      %p102 = scmp.ne.s32.totalorder %s94, %s96
      %p103 = scmp.eq.s32.totalorder %s32, 3
      %p104 = por %p102, %p103
      %p105 = scmp.ne.s32.totalorder %s96, %s97
      %p106 = scmp.eq.s32.totalorder %s32, 0
      %p107 = por %p105, %p106
      %p108 = scmp.ne.s32.totalorder %s96, %s97
      %p109 = scmp.eq.s32.totalorder %s33, 3
      %p110 = por %p108, %p109
      %p112 = scmp.ne.s32.totalorder %s97, %s111
      %p113 = scmp.eq.s32.totalorder %s33, 0
      %p114 = por %p112, %p113
      %s116 = sadd.s32 %s115, 1
      %p119 = scmp.eq.s32.totalorder %s27, 3
      %p120 = scmp.ne.s32.totalorder %s115, %s117
      %p121 = scmp.eq.s32.totalorder %s27, 0
      %p122 = por %p120, %p121
      %p123 = scmp.ne.s32.totalorder %s115, %s117
      %p124 = scmp.eq.s32.totalorder %s32, 3
      %p125 = por %p123, %p124
      %p126 = scmp.ne.s32.totalorder %s117, %s118
      %p127 = scmp.eq.s32.totalorder %s32, 0
      %p128 = por %p126, %p127
      %p129 = scmp.ne.s32.totalorder %s117, %s118
      %p130 = scmp.eq.s32.totalorder %s33, 3
      %p131 = por %p129, %p130
      %p133 = scmp.ne.s32.totalorder %s118, %s132
      %p134 = scmp.eq.s32.totalorder %s33, 0
      %p135 = por %p133, %p134
      %s137 = sadd.s32 %s136, 1
      %p140 = scmp.eq.s32.totalorder %s27, 3
      %p141 = scmp.ne.s32.totalorder %s136, %s138
      %p142 = scmp.eq.s32.totalorder %s27, 0
      %p143 = por %p141, %p142
      %p144 = scmp.ne.s32.totalorder %s136, %s138
      %p145 = scmp.eq.s32.totalorder %s32, 3
      %p146 = por %p144, %p145
      %p147 = scmp.ne.s32.totalorder %s138, %s139
      %p148 = scmp.eq.s32.totalorder %s32, 0
      %p149 = por %p147, %p148
      %p150 = scmp.ne.s32.totalorder %s138, %s139
      %p151 = scmp.eq.s32.totalorder %s33, 3
      %p152 = por %p150, %p151
      %p154 = scmp.ne.s32.totalorder %s139, %s153
      %p155 = scmp.eq.s32.totalorder %s33, 0
      %p156 = por %p154, %p155
      %s158 = sadd.s32 %s157, 1
      %p161 = scmp.eq.s32.totalorder %s27, 3
      %p162 = scmp.ne.s32.totalorder %s157, %s159
      %p163 = scmp.eq.s32.totalorder %s27, 0
      %p164 = por %p162, %p163
      %p165 = scmp.ne.s32.totalorder %s157, %s159
      %p166 = scmp.eq.s32.totalorder %s32, 3
      %p167 = por %p165, %p166
      %p168 = scmp.ne.s32.totalorder %s159, %s160
      %p169 = scmp.eq.s32.totalorder %s32, 0
      %p170 = por %p168, %p169
      %p171 = scmp.ne.s32.totalorder %s159, %s160
      %p172 = scmp.eq.s32.totalorder %s33, 3
      %p173 = por %p171, %p172
      %p175 = scmp.ne.s32.totalorder %s160, %s174
      %p176 = scmp.eq.s32.totalorder %s33, 0
      %p177 = por %p175, %p176
      %s179 = sadd.s32 %s178, 1
      %p182 = scmp.eq.s32.totalorder %s27, 3
      %p183 = scmp.ne.s32.totalorder %s178, %s180
      %p184 = scmp.eq.s32.totalorder %s27, 0
      %p185 = por %p183, %p184
      %p186 = scmp.ne.s32.totalorder %s178, %s180
      %p187 = scmp.eq.s32.totalorder %s32, 3
      %p188 = por %p186, %p187
      %p189 = scmp.ne.s32.totalorder %s180, %s181
      %p190 = scmp.eq.s32.totalorder %s32, 0
      %p191 = por %p189, %p190
      %p192 = scmp.ne.s32.totalorder %s180, %s181
      %p193 = scmp.eq.s32.totalorder %s33, 3
      %p194 = por %p192, %p193
      %p196 = scmp.ne.s32.totalorder %s181, %s195
      %p197 = scmp.eq.s32.totalorder %s33, 0
      %p198 = por %p196, %p197
      %s200 = sadd.s32 %s199, 1
      %p203 = scmp.eq.s32.totalorder %s27, 3
      %p204 = scmp.ne.s32.totalorder %s199, %s201
      %p205 = scmp.eq.s32.totalorder %s27, 0
      %p206 = por %p204, %p205
      %p207 = scmp.ne.s32.totalorder %s199, %s201
      %p208 = scmp.eq.s32.totalorder %s32, 3
      %p209 = por %p207, %p208
      %p210 = scmp.ne.s32.totalorder %s201, %s202
      %p211 = scmp.eq.s32.totalorder %s32, 0
      %p212 = por %p210, %p211
      %p213 = scmp.ne.s32.totalorder %s201, %s202
      %p214 = scmp.eq.s32.totalorder %s33, 3
      %p215 = por %p213, %p214
      %p217 = scmp.ne.s32.totalorder %s202, %s216
      %p218 = scmp.eq.s32.totalorder %s33, 0
      %p219 = por %p217, %p218
      %s221 = sadd.s32 %s220, 1
      %p224 = scmp.eq.s32.totalorder %s27, 3
      %p225 = scmp.ne.s32.totalorder %s220, %s222
      %p226 = scmp.eq.s32.totalorder %s27, 0
      %p227 = por %p225, %p226
      %p228 = scmp.ne.s32.totalorder %s220, %s222
      %p229 = scmp.eq.s32.totalorder %s32, 3
      %p230 = por %p228, %p229
      %p231 = scmp.ne.s32.totalorder %s222, %s223
      %p232 = scmp.eq.s32.totalorder %s32, 0
      %p233 = por %p231, %p232
      %p234 = scmp.ne.s32.totalorder %s222, %s223
      %p235 = scmp.eq.s32.totalorder %s33, 3
      %p236 = por %p234, %p235
      %p238 = scmp.ne.s32.totalorder %s223, %s237
      %p239 = scmp.eq.s32.totalorder %s33, 0
      %p240 = por %p238, %p239
      %s242 = sadd.s32 %s241, 1
      %p245 = scmp.eq.s32.totalorder %s27, 3
      %p246 = scmp.ne.s32.totalorder %s241, %s243
      %p247 = scmp.eq.s32.totalorder %s27, 0
      %p248 = por %p246, %p247
      %p249 = scmp.ne.s32.totalorder %s241, %s243
      %p250 = scmp.eq.s32.totalorder %s32, 3
      %p251 = por %p249, %p250
      %p252 = scmp.ne.s32.totalorder %s243, %s244
      %p253 = scmp.eq.s32.totalorder %s32, 0
      %p254 = por %p252, %p253
      %p255 = scmp.ne.s32.totalorder %s243, %s244
      %p256 = scmp.eq.s32.totalorder %s33, 3
      %p257 = por %p255, %p256
      %p259 = scmp.ne.s32.totalorder %s244, %s258
      %p260 = scmp.eq.s32.totalorder %s33, 0
      %p261 = por %p259, %p260
      %s262 = ssub.s32 %s34, %s46
      %s263 = ssub.s32 %s35, %s42
      %s264 = sor.u32 %s262, %s263
      %p265 = scmp.eq.s32.totalorder %s264, 0
      %s267 = sadd.s32 %s266, 1
      %s268 = scalar_select %p265, %s266, %s267
      %p271 = pneg %p265
      %p272 = scmp.eq.s32.totalorder %s27, 3
      %p273 = por %p271, %p272
      %p274 = scmp.ne.s32.totalorder %s266, %s269
      %p275 = scmp.eq.s32.totalorder %s27, 0
      %p276 = por %p274, %p275
      %p277 = scmp.ne.s32.totalorder %s266, %s269
      %p278 = scmp.eq.s32.totalorder %s32, 3
      %p279 = por %p277, %p278
      %p280 = scmp.ne.s32.totalorder %s269, %s270
      %p281 = scmp.eq.s32.totalorder %s32, 0
      %p282 = por %p280, %p281
      %p283 = scmp.ne.s32.totalorder %s269, %s270
      %p284 = scmp.eq.s32.totalorder %s33, 3
      %p285 = por %p283, %p284
      %p287 = scmp.ne.s32.totalorder %s270, %s286
      %p288 = scmp.eq.s32.totalorder %s33, 0
      %p289 = por %p287, %p288
      %p290 = scmp.le.s32.totalorder 1, %s27
      %p291 = scmp.lt.s32.totalorder %s27, 5
      %p292 = pnand %p290, %p291
      %p293 = pneg %p292
      // Predicated region
      $region9: #{tpu_custom_call.1} parent=5 // pred_check
        _
      $region10: #{tpu_custom_call.1} parent=5 // pred_check_branch
        %295 = sbr.rel (%p292) target = $region12
      $region11: #{tpu_custom_call.1} parent=5 // pred_region
        %s296 = ssub.s32 %s27, 1
        // Predicated region
        $region13: #{tpu_custom_call.1} parent=11 // pred_check
          %p297 = pneg %p86
        $region14: #{tpu_custom_call.1} parent=11 // pred_check_branch
          %299 = sbr.rel (%p297) target = $region16
        $region15: #{tpu_custom_call.1} parent=11 // pred_region
          %s301 = ssub.s32 640, 640
          %302 = vsyncadd [#allocation10], %s301
          %s303 = sshll.u32 [#allocation9], 4
          %s304 = int_to_ptr.vmem [resolvable:$true] %s303
          %309 = dma.hbm_to_vmem [thread:$0]  %s1, 640, %s304, [#allocation10], 128, 128, 8
        $region16: #{tpu_custom_call.1} parent=11 // pred_fallthru
          _
        // Predicated region
        $region17: #{tpu_custom_call.1} parent=11 // pred_check
          %p310 = pneg %p107
        $region18: #{tpu_custom_call.1} parent=11 // pred_check_branch
          %312 = sbr.rel (%p310) target = $region20
        $region19: #{tpu_custom_call.1} parent=11 // pred_region
          %s314 = ssub.s32 16, 16
          %315 = vsyncadd [#allocation10], %s314
          %s317 = sshll.u32 [#allocation11], 4
          %s318 = int_to_ptr.vmem [resolvable:$true] %s317
          %320 = dma.hbm_to_vmem [thread:$0]  %s2, 16, %s318, [#allocation10]
        $region20: #{tpu_custom_call.1} parent=11 // pred_fallthru
          _
        // Predicated region
        $region21: #{tpu_custom_call.1} parent=11 // pred_check
          %p321 = pneg %p128
        $region22: #{tpu_custom_call.1} parent=11 // pred_check_branch
          %323 = sbr.rel (%p321) target = $region24
        $region23: #{tpu_custom_call.1} parent=11 // pred_region
          %s325 = ssub.s32 16, 16
          %326 = vsyncadd [#allocation13], %s325
          %s328 = sshll.u32 [#allocation12], 4
          %s329 = int_to_ptr.vmem [resolvable:$true] %s328
          %331 = dma.hbm_to_vmem [thread:$0]  %s3, 16, %s329, [#allocation13]
        $region24: #{tpu_custom_call.1} parent=11 // pred_fallthru
          _
        // Predicated region
        $region25: #{tpu_custom_call.1} parent=11 // pred_check
          %p332 = pneg %p149
        $region26: #{tpu_custom_call.1} parent=11 // pred_check_branch
          %334 = sbr.rel (%p332) target = $region28
        $region27: #{tpu_custom_call.1} parent=11 // pred_region
          %s336 = ssub.s32 1152, 1152
          %337 = vsyncadd [#allocation13], %s336
          %s338 = sshll.u32 [#allocation14], 4
          %s339 = int_to_ptr.vmem [resolvable:$true] %s338
          %344 = dma.hbm_to_vmem [thread:$0]  %s4, 1152, %s339, [#allocation13], 128, 128, 8
        $region28: #{tpu_custom_call.1} parent=11 // pred_fallthru
          _
        // Predicated region
        $region29: #{tpu_custom_call.1} parent=11 // pred_check
          %p345 = pneg %p170
        $region30: #{tpu_custom_call.1} parent=11 // pred_check_branch
          %347 = sbr.rel (%p345) target = $region32
        $region31: #{tpu_custom_call.1} parent=11 // pred_region
          %s349 = ssub.s32 16, 16
          %350 = vsyncadd [#allocation16], %s349
          %s352 = sshll.u32 [#allocation15], 4
          %s353 = int_to_ptr.vmem [resolvable:$true] %s352
          %355 = dma.hbm_to_vmem [thread:$0]  %s5, 16, %s353, [#allocation16]
        $region32: #{tpu_custom_call.1} parent=11 // pred_fallthru
          _
        // Predicated region
        $region33: #{tpu_custom_call.1} parent=11 // pred_check
          %p356 = pneg %p191
        $region34: #{tpu_custom_call.1} parent=11 // pred_check_branch
          %358 = sbr.rel (%p356) target = $region36
        $region35: #{tpu_custom_call.1} parent=11 // pred_region
          %s360 = ssub.s32 16, 16
          %361 = vsyncadd [#allocation16], %s360
          %s363 = sshll.u32 [#allocation17], 4
          %s364 = int_to_ptr.vmem [resolvable:$true] %s363
          %366 = dma.hbm_to_vmem [thread:$0]  %s6, 16, %s364, [#allocation16]
        $region36: #{tpu_custom_call.1} parent=11 // pred_fallthru
          _
        // Predicated region
        $region37: #{tpu_custom_call.1} parent=11 // pred_check
          %p367 = pneg %p212
        $region38: #{tpu_custom_call.1} parent=11 // pred_check_branch
          %369 = sbr.rel (%p367) target = $region40
        $region39: #{tpu_custom_call.1} parent=11 // pred_region
          %s371 = ssub.s32 64, 64
          %372 = vsyncadd [#allocation19], %s371
          %s374 = sshll.u32 [#allocation18], 4
          %s375 = int_to_ptr.vmem [resolvable:$true] %s374
          %377 = dma.hbm_to_vmem [thread:$0]  %s7, 64, %s375, [#allocation19]
        $region40: #{tpu_custom_call.1} parent=11 // pred_fallthru
          _
        // Predicated region
        $region41: #{tpu_custom_call.1} parent=11 // pred_check
          %p378 = pneg %p233
        $region42: #{tpu_custom_call.1} parent=11 // pred_check_branch
          %380 = sbr.rel (%p378) target = $region44
        $region43: #{tpu_custom_call.1} parent=11 // pred_region
          %s382 = ssub.s32 16, 16
          %383 = vsyncadd [#allocation19], %s382
          %s385 = sshll.u32 [#allocation20], 4
          %s386 = int_to_ptr.vmem [resolvable:$true] %s385
          %388 = dma.hbm_to_vmem [thread:$0]  %s8, 16, %s386, [#allocation19]
        $region44: #{tpu_custom_call.1} parent=11 // pred_fallthru
          _
        // Predicated region
        $region45: #{tpu_custom_call.1} parent=11 // pred_check
          %p389 = pneg %p254
        $region46: #{tpu_custom_call.1} parent=11 // pred_check_branch
          %391 = sbr.rel (%p389) target = $region48
        $region47: #{tpu_custom_call.1} parent=11 // pred_region
          %s393 = ssub.s32 16, 16
          %394 = vsyncadd [#allocation22], %s393
          %s396 = sshll.u32 [#allocation21], 4
          %s397 = int_to_ptr.vmem [resolvable:$true] %s396
          %399 = dma.hbm_to_vmem [thread:$0]  %s9, 16, %s397, [#allocation22]
        $region48: #{tpu_custom_call.1} parent=11 // pred_fallthru
          _
      $region12: #{tpu_custom_call.1} parent=5 // pred_fallthru
        _
      %p400 = scmp.lt.s32.totalorder %s27, 4
      // Predicated region
      $region49: #{tpu_custom_call.1} parent=5 // pred_check
        %p401 = pneg %p400
      $region50: #{tpu_custom_call.1} parent=5 // pred_check_branch
        %403 = sbr.rel (%p401) target = $region52
      $region51: #{tpu_custom_call.1} parent=5 // pred_region
        // Predicated region
        $region53: #{tpu_custom_call.1} parent=51 // pred_check
          %p404 = pneg %p59
        $region54: #{tpu_custom_call.1} parent=51 // pred_check_branch
          %406 = sbr.rel (%p404) target = $region56
        $region55: #{tpu_custom_call.1} parent=51 // pred_region
          %s407 = sand.u32 %s49, 1
          %s408 = scalar_lea.sflag [#allocation7], %s407
          %s409 = sand.u32 %s49, 1
          %s410 = smul.addr %s409, 256
          %s411 = scalar_lea.vmem [#allocation6], %s410
          %s413 = ssub.s32 4096, 4096
          %414 = vsyncadd %s408, %s413
          %s415 = smul.addr %s34, 32
          %s416 = smul.addr %s415, 128
          %s417 = scalar_lea.hbm %s0, %s416
          %s418 = sshll.u32 %s411, 4
          %s419 = int_to_ptr.vmem [resolvable:$true] %s418
          %424 = dma.hbm_to_vmem [thread:$0]  %s417, 4096, %s419, %s408, 128, 128, 8
        $region56: #{tpu_custom_call.1} parent=51 // pred_fallthru
          _
      $region52: #{tpu_custom_call.1} parent=5 // pred_fallthru
        _
      %p425 = scmp.le.s32.totalorder 1, %s27
      %p426 = scmp.lt.s32.totalorder %s27, 5
      %p427 = pnand %p425, %p426
      %p428 = pneg %p427
      // Predicated region
      $region57: #{tpu_custom_call.1} parent=5 // pred_check
        _
      $region58: #{tpu_custom_call.1} parent=5 // pred_check_branch
        %430 = sbr.rel (%p427) target = $region60
      $region59: #{tpu_custom_call.1} parent=5 // pred_region
        %s431 = ssub.s32 %s27, 1
        %s432 = sand.u32 %s52, 1
        %s433 = scalar_lea.sflag [#allocation7], %s432
        %s434 = sand.u32 %s52, 1
        %s435 = smul.addr %s434, 256
        %s436 = scalar_lea.vmem [#allocation6], %s435
        // Predicated region
        $region61: #{tpu_custom_call.1} parent=59 // pred_check
          %p437 = pneg %p65
        $region62: #{tpu_custom_call.1} parent=59 // pred_check_branch
          %439 = sbr.rel (%p437) target = $region64
        $region63: #{tpu_custom_call.1} parent=59 // pred_region
          %440 = dma.done %s433, 4096
        $region64: #{tpu_custom_call.1} parent=59 // pred_fallthru
          _
        // Predicated region
        $region65: #{tpu_custom_call.1} parent=59 // pred_check
          %p441 = pneg %p86
        $region66: #{tpu_custom_call.1} parent=59 // pred_check_branch
          %443 = sbr.rel (%p441) target = $region68
        $region67: #{tpu_custom_call.1} parent=59 // pred_region
          %444 = dma.done [#allocation10], 640
        $region68: #{tpu_custom_call.1} parent=59 // pred_fallthru
          _
        // Predicated region
        $region69: #{tpu_custom_call.1} parent=59 // pred_check
          %p445 = pneg %p107
        $region70: #{tpu_custom_call.1} parent=59 // pred_check_branch
          %447 = sbr.rel (%p445) target = $region72
        $region71: #{tpu_custom_call.1} parent=59 // pred_region
          %448 = dma.done [#allocation10], 16
        $region72: #{tpu_custom_call.1} parent=59 // pred_fallthru
          _
        // Predicated region
        $region73: #{tpu_custom_call.1} parent=59 // pred_check
          %p449 = pneg %p128
        $region74: #{tpu_custom_call.1} parent=59 // pred_check_branch
          %451 = sbr.rel (%p449) target = $region76
        $region75: #{tpu_custom_call.1} parent=59 // pred_region
          %452 = dma.done [#allocation13], 16
        $region76: #{tpu_custom_call.1} parent=59 // pred_fallthru
          _
        // Predicated region
        $region77: #{tpu_custom_call.1} parent=59 // pred_check
          %p453 = pneg %p149
        $region78: #{tpu_custom_call.1} parent=59 // pred_check_branch
          %455 = sbr.rel (%p453) target = $region80
        $region79: #{tpu_custom_call.1} parent=59 // pred_region
          %456 = dma.done [#allocation13], 1152
        $region80: #{tpu_custom_call.1} parent=59 // pred_fallthru
          _
        // Predicated region
        $region81: #{tpu_custom_call.1} parent=59 // pred_check
          %p457 = pneg %p170
        $region82: #{tpu_custom_call.1} parent=59 // pred_check_branch
          %459 = sbr.rel (%p457) target = $region84
        $region83: #{tpu_custom_call.1} parent=59 // pred_region
          %460 = dma.done [#allocation16], 16
        $region84: #{tpu_custom_call.1} parent=59 // pred_fallthru
          _
        // Predicated region
        $region85: #{tpu_custom_call.1} parent=59 // pred_check
          %p461 = pneg %p191
        $region86: #{tpu_custom_call.1} parent=59 // pred_check_branch
          %463 = sbr.rel (%p461) target = $region88
        $region87: #{tpu_custom_call.1} parent=59 // pred_region
          %464 = dma.done [#allocation16], 16
        $region88: #{tpu_custom_call.1} parent=59 // pred_fallthru
          _
        // Predicated region
        $region89: #{tpu_custom_call.1} parent=59 // pred_check
          %p465 = pneg %p212
        $region90: #{tpu_custom_call.1} parent=59 // pred_check_branch
          %467 = sbr.rel (%p465) target = $region92
        $region91: #{tpu_custom_call.1} parent=59 // pred_region
          %468 = dma.done [#allocation19], 64
        $region92: #{tpu_custom_call.1} parent=59 // pred_fallthru
          _
        // Predicated region
        $region93: #{tpu_custom_call.1} parent=59 // pred_check
          %p469 = pneg %p233
        $region94: #{tpu_custom_call.1} parent=59 // pred_check_branch
          %471 = sbr.rel (%p469) target = $region96
        $region95: #{tpu_custom_call.1} parent=59 // pred_region
          %472 = dma.done [#allocation19], 16
        $region96: #{tpu_custom_call.1} parent=59 // pred_fallthru
          _
        // Predicated region
        $region97: #{tpu_custom_call.1} parent=59 // pred_check
          %p473 = pneg %p254
        $region98: #{tpu_custom_call.1} parent=59 // pred_check_branch
          %475 = sbr.rel (%p473) target = $region100
        $region99: #{tpu_custom_call.1} parent=59 // pred_region
          %476 = dma.done [#allocation22], 16
        $region100: #{tpu_custom_call.1} parent=59 // pred_fallthru
          _
        %s477 = sand.u32 %s52, 1
        %s478 = scalar_lea.sflag [#allocation7], %s477
        %s479 = sand.u32 %s52, 1
        %s480 = smul.addr %s479, 256
        %s481 = scalar_lea.vmem [#allocation6], %s480
        %p482 = pneg %p65
        %p483 = pneg %p62
        %p484 = pneg %p86
        %p485 = pneg %p83
        %p486 = pneg %p107
        %p487 = pneg %p104
        %p488 = pneg %p128
        %p489 = pneg %p125
        %p490 = pneg %p149
        %p491 = pneg %p146
        %p492 = pneg %p170
        %p493 = pneg %p167
        %p494 = pneg %p191
        %p495 = pneg %p188
        %p496 = pneg %p212
        %p497 = pneg %p209
        %p498 = pneg %p233
        %p499 = pneg %p230
        %p500 = pneg %p254
        %p501 = pneg %p251
        %p502 = pneg %p282
        %p503 = pneg %p279
        %s504 = sand.u32 %s269, 1
        %s505 = scalar_lea.sflag [#allocation8], %s504
        %s506 = sand.u32 %s269, 1
        %s507 = smul.addr %s506, 128
        %s508 = scalar_lea.vmem [#allocation23], %s507
        %s509 = smul.u32 16, %s37
        %vm510 = vcmask 31744
        %511 = vst.msk [vmem:[#allocation2] sm:$0xff] %vm510, 0.0
        %512 = vst.msk [vmem:[#allocation2 + $0x8] sm:$0xff] %vm510, 0.0
        %vm513 = vcmask 25600
        %514 = vst.msk [vmem:[#allocation2 + $0x10] sm:$0x3] %vm513, 0.0
        %515 = vst.msk [vmem:[#allocation2 + $0x18] sm:$0xff] %vm510, 0.0
        %516 = vst.msk [vmem:[#allocation2 + $0x20] sm:$0xff] %vm510, 0.0
        %517 = vst.msk [vmem:[#allocation2 + $0x28] sm:$0x3] %vm513, 0.0
        %518 = vst.msk [vmem:[#allocation2 + $0x30] sm:$0xff] %vm510, 0.0
        %519 = vst.msk [vmem:[#allocation2 + $0x38] sm:$0xff] %vm510, 0.0
        %520 = vst.msk [vmem:[#allocation2 + $0x40] sm:$0x3] %vm513, 0.0
        %521 = vst.msk [vmem:[#allocation2 + $0x48] sm:$0xff] %vm510, 0.0
        %522 = vst.msk [vmem:[#allocation2 + $0x50] sm:$0xff] %vm510, 0.0
        %523 = vst.msk [vmem:[#allocation2 + $0x58] sm:$0x3] %vm513, 0.0
        %524 = vst.msk [vmem:[#allocation2 + $0x60] sm:$0xff] %vm510, 0.0
        %525 = vst.msk [vmem:[#allocation2 + $0x68] sm:$0xff] %vm510, 0.0
        %526 = vst.msk [vmem:[#allocation2 + $0x70] sm:$0x3] %vm513, 0.0
        %527 = vst.msk [vmem:[#allocation2 + $0x78] sm:$0xff] %vm510, 0.0
        %528 = vst.msk [vmem:[#allocation2 + $0x80] sm:$0xff] %vm510, 0.0
        %529 = vst.msk [vmem:[#allocation2 + $0x88] sm:$0x3] %vm513, 0.0
        %530 = vst.msk [vmem:[#allocation2 + $0x90] sm:$0xff] %vm510, 0.0
        %531 = vst.msk [vmem:[#allocation2 + $0x98] sm:$0xff] %vm510, 0.0
        %532 = vst.msk [vmem:[#allocation2 + $0xa0] sm:$0x3] %vm513, 0.0
        %533 = vst.msk [vmem:[#allocation2 + $0xa8] sm:$0xff] %vm510, 0.0
        %534 = vst.msk [vmem:[#allocation2 + $0xb0] sm:$0xff] %vm510, 0.0
        %535 = vst.msk [vmem:[#allocation2 + $0xb8] sm:$0x3] %vm513, 0.0
        %536 = vst.msk [vmem:[#allocation2 + $0xc0] sm:$0xff] %vm510, 0.0
        %537 = vst.msk [vmem:[#allocation2 + $0xc8] sm:$0xff] %vm510, 0.0
        %538 = vst.msk [vmem:[#allocation2 + $0xd0] sm:$0x3] %vm513, 0.0
        %539 = vst.msk [vmem:[#allocation2 + $0xd8] sm:$0xff] %vm510, 0.0
        %540 = vst.msk [vmem:[#allocation2 + $0xe0] sm:$0xff] %vm510, 0.0
        %541 = vst.msk [vmem:[#allocation2 + $0xe8] sm:$0x3] %vm513, 0.0
        %542 = vst.msk [vmem:[#allocation2 + $0xf0] sm:$0xff] %vm510, 0.0
        %543 = vst.msk [vmem:[#allocation2 + $0xf8] sm:$0xff] %vm510, 0.0
        %544 = vst.msk [vmem:[#allocation2 + $0x100] sm:$0x3] %vm513, 0.0
        %545 = vst.msk [vmem:[#allocation2 + $0x108] sm:$0xff] %vm510, 0.0
        %546 = vst.msk [vmem:[#allocation2 + $0x110] sm:$0xff] %vm510, 0.0
        %547 = vst.msk [vmem:[#allocation2 + $0x118] sm:$0x3] %vm513, 0.0
        %p548 = scmp.eq.s32.totalorder %s37, 0
        // Predicated region
        $region101: #{tpu_custom_call.1} parent=59 // pred_check
          %p549 = pneg %p548
        $region102: #{tpu_custom_call.1} parent=59 // pred_check_branch
          %551 = sbr.rel (%p549) target = $region104
        $region103: #{tpu_custom_call.1} parent=59 // pred_region
          %v552 = vld [vmem:[%s436] sm:$0xff]
          %v553 = vld [vmem:[%s436 + $0x8] sm:$0xff]
          %v554 = vld [vmem:[%s436 + $0x10] sm:$0xff]
          %v555 = vld [vmem:[%s436 + $0x18] sm:$0xff]
          %v556 = vld [vmem:[%s436 + $0x20] sm:$0xff]
          %v557 = vld [vmem:[%s436 + $0x28] sm:$0xff]
          %v558 = vld [vmem:[%s436 + $0x30] sm:$0xff]
          %v559 = vld [vmem:[%s436 + $0x38] sm:$0xff]
          %v560 = vld [vmem:[%s436 + $0x40] sm:$0xff]
          %v561 = vld [vmem:[%s436 + $0x48] sm:$0xff]
          %v562 = vld [vmem:[%s436 + $0x50] sm:$0xff]
          %v563 = vld [vmem:[%s436 + $0x58] sm:$0xff]
          %v564 = vld [vmem:[%s436 + $0x60] sm:$0xff]
          %v565 = vld [vmem:[%s436 + $0x68] sm:$0xff]
          %v566 = vld [vmem:[%s436 + $0x70] sm:$0xff]
          %v567 = vld [vmem:[%s436 + $0x78] sm:$0xff]
          %v568 = vld [vmem:[%s436 + $0x80] sm:$0xff]
          %v569 = vld [vmem:[%s436 + $0x88] sm:$0xff]
          %v570 = vld [vmem:[%s436 + $0x90] sm:$0xff]
          %v571 = vld [vmem:[%s436 + $0x98] sm:$0xff]
          %s572 = scalar_lea.vmem [#allocation2], 48
          %573 = vst.msk [vmem:[%s572 + $0x1] sm:$0xff] %vm510, %v552
          %574 = vst.msk [vmem:[%s572 + $0x9] sm:$0xff] %vm510, %v553
          %575 = vst.msk [vmem:[%s572 + $0x19] sm:$0xff] %vm510, %v554
          %576 = vst.msk [vmem:[%s572 + $0x21] sm:$0xff] %vm510, %v555
          %577 = vst.msk [vmem:[%s572 + $0x31] sm:$0xff] %vm510, %v556
          %578 = vst.msk [vmem:[%s572 + $0x39] sm:$0xff] %vm510, %v557
          %579 = vst.msk [vmem:[%s572 + $0x49] sm:$0xff] %vm510, %v558
          %580 = vst.msk [vmem:[%s572 + $0x51] sm:$0xff] %vm510, %v559
          %581 = vst.msk [vmem:[%s572 + $0x61] sm:$0xff] %vm510, %v560
          %582 = vst.msk [vmem:[%s572 + $0x69] sm:$0xff] %vm510, %v561
          %583 = vst.msk [vmem:[%s572 + $0x79] sm:$0xff] %vm510, %v562
          %584 = vst.msk [vmem:[%s572 + $0x81] sm:$0xff] %vm510, %v563
          %585 = vst.msk [vmem:[%s572 + $0x91] sm:$0xff] %vm510, %v564
          %586 = vst.msk [vmem:[%s572 + $0x99] sm:$0xff] %vm510, %v565
          %587 = vst.msk [vmem:[%s572 + $0xa9] sm:$0xff] %vm510, %v566
          %588 = vst.msk [vmem:[%s572 + $0xb1] sm:$0xff] %vm510, %v567
          %589 = vst.msk [vmem:[%s572 + $0xc1] sm:$0xff] %vm510, %v568
          %590 = vst.msk [vmem:[%s572 + $0xc9] sm:$0xff] %vm510, %v569
          %591 = vst.msk [vmem:[%s572 + $0xd9] sm:$0xff] %vm510, %v570
          %592 = vst.msk [vmem:[%s572 + $0xe1] sm:$0xff] %vm510, %v571
        $region104: #{tpu_custom_call.1} parent=59 // pred_fallthru
          _
        %p593 = scmp.gt.s32.totalorder %s37, 0
        %p594 = scmp.lt.s32.totalorder %s37, 1
        %p595 = pnand %p593, %p594
        %p596 = pneg %p595
        // Predicated region
        $region105: #{tpu_custom_call.1} parent=59 // pred_check
          _
        $region106: #{tpu_custom_call.1} parent=59 // pred_check_branch
          %598 = sbr.rel (%p595) target = $region108
        $region107: #{tpu_custom_call.1} parent=59 // pred_region
          %s599 = smul.u32 %s37, 8
          %s600 = ssub.s32 %s599, 2
          %s601 = smul.u32 %s600, 16
          %s602 = scalar_lea.vmem %s436, %s601 [#allocation6]
          %v603 = vld [vmem:[%s602] sm:$0xff]
          %v604 = vld [vmem:[%s602 + $0x8] sm:$0xff]
          %v605 = vld [vmem:[%s602 + $0x10] sm:$0xff]
          %v606 = vld [vmem:[%s602 + $0x18] sm:$0xff]
          %v607 = vld [vmem:[%s602 + $0x20] sm:$0xff]
          %v608 = vld [vmem:[%s602 + $0x28] sm:$0xff]
          %v609 = vld [vmem:[%s602 + $0x30] sm:$0xff]
          %v610 = vld [vmem:[%s602 + $0x38] sm:$0xff]
          %v611 = vld [vmem:[%s602 + $0x40] sm:$0xff]
          %v612 = vld [vmem:[%s602 + $0x48] sm:$0xff]
          %v613 = vld [vmem:[%s602 + $0x50] sm:$0xff]
          %v614 = vld [vmem:[%s602 + $0x58] sm:$0xff]
          %v615 = vld [vmem:[%s602 + $0x60] sm:$0xff]
          %v616 = vld [vmem:[%s602 + $0x68] sm:$0xff]
          %v617 = vld [vmem:[%s602 + $0x70] sm:$0xff]
          %v618 = vld [vmem:[%s602 + $0x78] sm:$0xff]
          %v619 = vld [vmem:[%s602 + $0x80] sm:$0xff]
          %v620 = vld [vmem:[%s602 + $0x88] sm:$0xff]
          %v621 = vld [vmem:[%s602 + $0x90] sm:$0xff]
          %v622 = vld [vmem:[%s602 + $0x98] sm:$0xff]
          %v623 = vld [vmem:[%s602 + $0xa0] sm:$0xff]
          %v624 = vld [vmem:[%s602 + $0xa8] sm:$0xff]
          %v625 = vld [vmem:[%s602 + $0xb0] sm:$0xff]
          %v626 = vld [vmem:[%s602 + $0xb8] sm:$0xff]
          %627 = vst.msk [vmem:[#allocation2 + $0x1] sm:$0xff] %vm510, %v603
          %628 = vst.msk [vmem:[#allocation2 + $0x9] sm:$0xff] %vm510, %v604
          %629 = vst.msk [vmem:[#allocation2 + $0x19] sm:$0xff] %vm510, %v605
          %630 = vst.msk [vmem:[#allocation2 + $0x21] sm:$0xff] %vm510, %v606
          %631 = vst.msk [vmem:[#allocation2 + $0x31] sm:$0xff] %vm510, %v607
          %632 = vst.msk [vmem:[#allocation2 + $0x39] sm:$0xff] %vm510, %v608
          %633 = vst.msk [vmem:[#allocation2 + $0x49] sm:$0xff] %vm510, %v609
          %634 = vst.msk [vmem:[#allocation2 + $0x51] sm:$0xff] %vm510, %v610
          %635 = vst.msk [vmem:[#allocation2 + $0x61] sm:$0xff] %vm510, %v611
          %636 = vst.msk [vmem:[#allocation2 + $0x69] sm:$0xff] %vm510, %v612
          %637 = vst.msk [vmem:[#allocation2 + $0x79] sm:$0xff] %vm510, %v613
          %638 = vst.msk [vmem:[#allocation2 + $0x81] sm:$0xff] %vm510, %v614
          %639 = vst.msk [vmem:[#allocation2 + $0x91] sm:$0xff] %vm510, %v615
          %640 = vst.msk [vmem:[#allocation2 + $0x99] sm:$0xff] %vm510, %v616
          %641 = vst.msk [vmem:[#allocation2 + $0xa9] sm:$0xff] %vm510, %v617
          %642 = vst.msk [vmem:[#allocation2 + $0xb1] sm:$0xff] %vm510, %v618
          %643 = vst.msk [vmem:[#allocation2 + $0xc1] sm:$0xff] %vm510, %v619
          %644 = vst.msk [vmem:[#allocation2 + $0xc9] sm:$0xff] %vm510, %v620
          %645 = vst.msk [vmem:[#allocation2 + $0xd9] sm:$0xff] %vm510, %v621
          %646 = vst.msk [vmem:[#allocation2 + $0xe1] sm:$0xff] %vm510, %v622
          %647 = vst.msk [vmem:[#allocation2 + $0xf1] sm:$0xff] %vm510, %v623
          %648 = vst.msk [vmem:[#allocation2 + $0xf9] sm:$0xff] %vm510, %v624
          %649 = vst.msk [vmem:[#allocation2 + $0x109] sm:$0xff] %vm510, %v625
          %650 = vst.msk [vmem:[#allocation2 + $0x111] sm:$0xff] %vm510, %v626
        $region108: #{tpu_custom_call.1} parent=59 // pred_fallthru
          _
        %p651 = scmp.eq.s32.totalorder %s37, 1
        // Predicated region
        $region109: #{tpu_custom_call.1} parent=59 // pred_check
          %p652 = pneg %p651
        $region110: #{tpu_custom_call.1} parent=59 // pred_check_branch
          %654 = sbr.rel (%p652) target = $region112
        $region111: #{tpu_custom_call.1} parent=59 // pred_region
          %s655 = smul.u32 %s37, 8
          %s656 = ssub.s32 %s655, 2
          %s657 = smul.u32 %s656, 16
          %s658 = scalar_lea.vmem %s436, %s657 [#allocation6]
          %v659 = vld [vmem:[%s658] sm:$0xff]
          %v660 = vld [vmem:[%s658 + $0x8] sm:$0xff]
          %v661 = vld [vmem:[%s658 + $0x10] sm:$0xff]
          %v662 = vld [vmem:[%s658 + $0x18] sm:$0xff]
          %v663 = vld [vmem:[%s658 + $0x20] sm:$0xff]
          %v664 = vld [vmem:[%s658 + $0x28] sm:$0xff]
          %v665 = vld [vmem:[%s658 + $0x30] sm:$0xff]
          %v666 = vld [vmem:[%s658 + $0x38] sm:$0xff]
          %v667 = vld [vmem:[%s658 + $0x40] sm:$0xff]
          %v668 = vld [vmem:[%s658 + $0x48] sm:$0xff]
          %v669 = vld [vmem:[%s658 + $0x50] sm:$0xff]
          %v670 = vld [vmem:[%s658 + $0x58] sm:$0xff]
          %v671 = vld [vmem:[%s658 + $0x60] sm:$0xff]
          %v672 = vld [vmem:[%s658 + $0x68] sm:$0xff]
          %v673 = vld [vmem:[%s658 + $0x70] sm:$0xff]
          %v674 = vld [vmem:[%s658 + $0x78] sm:$0xff]
          %v675 = vld [vmem:[%s658 + $0x80] sm:$0xff]
          %v676 = vld [vmem:[%s658 + $0x88] sm:$0xff]
          %v677 = vld [vmem:[%s658 + $0x90] sm:$0xff]
          %v678 = vld [vmem:[%s658 + $0x98] sm:$0xff]
          %679 = vst.msk [vmem:[#allocation2 + $0x1] sm:$0xff] %vm510, %v659
          %680 = vst.msk [vmem:[#allocation2 + $0x9] sm:$0xff] %vm510, %v660
          %681 = vst.msk [vmem:[#allocation2 + $0x19] sm:$0xff] %vm510, %v661
          %682 = vst.msk [vmem:[#allocation2 + $0x21] sm:$0xff] %vm510, %v662
          %683 = vst.msk [vmem:[#allocation2 + $0x31] sm:$0xff] %vm510, %v663
          %684 = vst.msk [vmem:[#allocation2 + $0x39] sm:$0xff] %vm510, %v664
          %685 = vst.msk [vmem:[#allocation2 + $0x49] sm:$0xff] %vm510, %v665
          %686 = vst.msk [vmem:[#allocation2 + $0x51] sm:$0xff] %vm510, %v666
          %687 = vst.msk [vmem:[#allocation2 + $0x61] sm:$0xff] %vm510, %v667
          %688 = vst.msk [vmem:[#allocation2 + $0x69] sm:$0xff] %vm510, %v668
          %689 = vst.msk [vmem:[#allocation2 + $0x79] sm:$0xff] %vm510, %v669
          %690 = vst.msk [vmem:[#allocation2 + $0x81] sm:$0xff] %vm510, %v670
          %691 = vst.msk [vmem:[#allocation2 + $0x91] sm:$0xff] %vm510, %v671
          %692 = vst.msk [vmem:[#allocation2 + $0x99] sm:$0xff] %vm510, %v672
          %693 = vst.msk [vmem:[#allocation2 + $0xa9] sm:$0xff] %vm510, %v673
          %694 = vst.msk [vmem:[#allocation2 + $0xb1] sm:$0xff] %vm510, %v674
          %695 = vst.msk [vmem:[#allocation2 + $0xc1] sm:$0xff] %vm510, %v675
          %696 = vst.msk [vmem:[#allocation2 + $0xc9] sm:$0xff] %vm510, %v676
          %697 = vst.msk [vmem:[#allocation2 + $0xd9] sm:$0xff] %vm510, %v677
          %698 = vst.msk [vmem:[#allocation2 + $0xe1] sm:$0xff] %vm510, %v678
        $region112: #{tpu_custom_call.1} parent=59 // pred_fallthru
          _
        %v699 = vld [vmem:[#allocation2] sm:$0xff]
        %v700 = vld [vmem:[#allocation2 + $0x8] sm:$0xff]
        %v701 = vld [vmem:[#allocation2 + $0x18] sm:$0xff]
        %v702 = vld [vmem:[#allocation2 + $0x20] sm:$0xff]
        %v703 = vld [vmem:[#allocation2 + $0x30] sm:$0xff]
        %v704 = vld [vmem:[#allocation2 + $0x38] sm:$0xff]
        %v705 = vld [vmem:[#allocation2 + $0x48] sm:$0xff]
        %v706 = vld [vmem:[#allocation2 + $0x50] sm:$0xff]
        %v707 = vld [vmem:[#allocation2 + $0x60] sm:$0xff]
        %v708 = vld [vmem:[#allocation2 + $0x68] sm:$0xff]
        %v709 = vld [vmem:[#allocation2 + $0x78] sm:$0xff]
        %v710 = vld [vmem:[#allocation2 + $0x80] sm:$0xff]
        %v711 = vld [vmem:[#allocation2 + $0x90] sm:$0xff]
        %v712 = vld [vmem:[#allocation2 + $0x98] sm:$0xff]
        %v713 = vld [vmem:[#allocation2 + $0xa8] sm:$0xff]
        %v714 = vld [vmem:[#allocation2 + $0xb0] sm:$0xff]
        %v715 = vld [vmem:[#allocation2 + $0xc0] sm:$0xff]
        %v716 = vld [vmem:[#allocation2 + $0xc8] sm:$0xff]
        %v717 = vld [vmem:[#allocation2 + $0xd8] sm:$0xff]
        %v718 = vld [vmem:[#allocation2 + $0xe0] sm:$0xff]
        %719 = vst.msk [vmem:[#allocation4] sm:$0xff] %vm510, %v699
        %720 = vst.msk [vmem:[#allocation4 + $0x8] sm:$0xff] %vm510, %v700
        %721 = vst.msk [vmem:[#allocation4 + $0x10] sm:$0xff] %vm510, %v701
        %722 = vst.msk [vmem:[#allocation4 + $0x18] sm:$0xff] %vm510, %v702
        %723 = vst.msk [vmem:[#allocation4 + $0x20] sm:$0xff] %vm510, %v703
        %724 = vst.msk [vmem:[#allocation4 + $0x28] sm:$0xff] %vm510, %v704
        %725 = vst.msk [vmem:[#allocation4 + $0x30] sm:$0xff] %vm510, %v705
        %726 = vst.msk [vmem:[#allocation4 + $0x38] sm:$0xff] %vm510, %v706
        %727 = vst.msk [vmem:[#allocation4 + $0x40] sm:$0xff] %vm510, %v707
        %728 = vst.msk [vmem:[#allocation4 + $0x48] sm:$0xff] %vm510, %v708
        %729 = vst.msk [vmem:[#allocation4 + $0x50] sm:$0xff] %vm510, %v709
        %730 = vst.msk [vmem:[#allocation4 + $0x58] sm:$0xff] %vm510, %v710
        %731 = vst.msk [vmem:[#allocation4 + $0x60] sm:$0xff] %vm510, %v711
        %732 = vst.msk [vmem:[#allocation4 + $0x68] sm:$0xff] %vm510, %v712
        %733 = vst.msk [vmem:[#allocation4 + $0x70] sm:$0xff] %vm510, %v713
        %734 = vst.msk [vmem:[#allocation4 + $0x78] sm:$0xff] %vm510, %v714
        %735 = vst.msk [vmem:[#allocation4 + $0x80] sm:$0xff] %vm510, %v715
        %736 = vst.msk [vmem:[#allocation4 + $0x88] sm:$0xff] %vm510, %v716
        %737 = vst.msk [vmem:[#allocation4 + $0x90] sm:$0xff] %vm510, %v717
        %738 = vst.msk [vmem:[#allocation4 + $0x98] sm:$0xff] %vm510, %v718
        %v739 = vld [vmem:[#allocation2 + $0x1] sm:$0xff]
        %v740 = vld [vmem:[#allocation2 + $0x9] sm:$0xff]
        %v741 = vld [vmem:[#allocation2 + $0x19] sm:$0xff]
        %v742 = vld [vmem:[#allocation2 + $0x21] sm:$0xff]
        %v743 = vld [vmem:[#allocation2 + $0x31] sm:$0xff]
        %v744 = vld [vmem:[#allocation2 + $0x39] sm:$0xff]
        %v745 = vld [vmem:[#allocation2 + $0x49] sm:$0xff]
        %v746 = vld [vmem:[#allocation2 + $0x51] sm:$0xff]
        %v747 = vld [vmem:[#allocation2 + $0x61] sm:$0xff]
        %v748 = vld [vmem:[#allocation2 + $0x69] sm:$0xff]
        %v749 = vld [vmem:[#allocation2 + $0x79] sm:$0xff]
        %v750 = vld [vmem:[#allocation2 + $0x81] sm:$0xff]
        %v751 = vld [vmem:[#allocation2 + $0x91] sm:$0xff]
        %v752 = vld [vmem:[#allocation2 + $0x99] sm:$0xff]
        %v753 = vld [vmem:[#allocation2 + $0xa9] sm:$0xff]
        %v754 = vld [vmem:[#allocation2 + $0xb1] sm:$0xff]
        %v755 = vld [vmem:[#allocation2 + $0xc1] sm:$0xff]
        %v756 = vld [vmem:[#allocation2 + $0xc9] sm:$0xff]
        %v757 = vld [vmem:[#allocation2 + $0xd9] sm:$0xff]
        %v758 = vld [vmem:[#allocation2 + $0xe1] sm:$0xff]
        %779 = vrot.lane.b32.xlu0 %v739, 4
        %v780 = vpop.permute.xlu0 %779
        %781 = vrot.lane.b32.xlu0 %v740, 4
        %v782 = vpop.permute.xlu0 %781
        %783 = vrot.lane.b32.xlu0 %v741, 4
        %v784 = vpop.permute.xlu0 %783
        %785 = vrot.lane.b32.xlu0 %v742, 4
        %v786 = vpop.permute.xlu0 %785
        %787 = vrot.lane.b32.xlu0 %v743, 4
        %v788 = vpop.permute.xlu0 %787
        %789 = vrot.lane.b32.xlu0 %v744, 4
        %v790 = vpop.permute.xlu0 %789
        %791 = vrot.lane.b32.xlu0 %v745, 4
        %v792 = vpop.permute.xlu0 %791
        %793 = vrot.lane.b32.xlu0 %v746, 4
        %v794 = vpop.permute.xlu0 %793
        %795 = vrot.lane.b32.xlu0 %v747, 4
        %v796 = vpop.permute.xlu0 %795
        %797 = vrot.lane.b32.xlu0 %v748, 4
        %v798 = vpop.permute.xlu0 %797
        %799 = vrot.lane.b32.xlu0 %v749, 4
        %v800 = vpop.permute.xlu0 %799
        %801 = vrot.lane.b32.xlu0 %v750, 4
        %v802 = vpop.permute.xlu0 %801
        %803 = vrot.lane.b32.xlu0 %v751, 4
        %v804 = vpop.permute.xlu0 %803
        %805 = vrot.lane.b32.xlu0 %v752, 4
        %v806 = vpop.permute.xlu0 %805
        %807 = vrot.lane.b32.xlu0 %v753, 4
        %v808 = vpop.permute.xlu0 %807
        %809 = vrot.lane.b32.xlu0 %v754, 4
        %v810 = vpop.permute.xlu0 %809
        %811 = vrot.lane.b32.xlu0 %v755, 4
        %v812 = vpop.permute.xlu0 %811
        %813 = vrot.lane.b32.xlu0 %v756, 4
        %v814 = vpop.permute.xlu0 %813
        %815 = vrot.lane.b32.xlu0 %v757, 4
        %v816 = vpop.permute.xlu0 %815
        %817 = vrot.lane.b32.xlu0 %v758, 4
        %v818 = vpop.permute.xlu0 %817
        %vm839 = vcmask 64544
        %840 = vst.msk [vmem:[#allocation4] sm:$0xff] %vm839, %v780
        %841 = vst.msk [vmem:[#allocation4 + $0x8] sm:$0xff] %vm839, %v782
        %842 = vst.msk [vmem:[#allocation4 + $0x10] sm:$0xff] %vm839, %v784
        %843 = vst.msk [vmem:[#allocation4 + $0x18] sm:$0xff] %vm839, %v786
        %844 = vst.msk [vmem:[#allocation4 + $0x20] sm:$0xff] %vm839, %v788
        %845 = vst.msk [vmem:[#allocation4 + $0x28] sm:$0xff] %vm839, %v790
        %846 = vst.msk [vmem:[#allocation4 + $0x30] sm:$0xff] %vm839, %v792
        %847 = vst.msk [vmem:[#allocation4 + $0x38] sm:$0xff] %vm839, %v794
        %848 = vst.msk [vmem:[#allocation4 + $0x40] sm:$0xff] %vm839, %v796
        %849 = vst.msk [vmem:[#allocation4 + $0x48] sm:$0xff] %vm839, %v798
        %850 = vst.msk [vmem:[#allocation4 + $0x50] sm:$0xff] %vm839, %v800
        %851 = vst.msk [vmem:[#allocation4 + $0x58] sm:$0xff] %vm839, %v802
        %852 = vst.msk [vmem:[#allocation4 + $0x60] sm:$0xff] %vm839, %v804
        %853 = vst.msk [vmem:[#allocation4 + $0x68] sm:$0xff] %vm839, %v806
        %854 = vst.msk [vmem:[#allocation4 + $0x70] sm:$0xff] %vm839, %v808
        %855 = vst.msk [vmem:[#allocation4 + $0x78] sm:$0xff] %vm839, %v810
        %856 = vst.msk [vmem:[#allocation4 + $0x80] sm:$0xff] %vm839, %v812
        %857 = vst.msk [vmem:[#allocation4 + $0x88] sm:$0xff] %vm839, %v814
        %858 = vst.msk [vmem:[#allocation4 + $0x90] sm:$0xff] %vm839, %v816
        %859 = vst.msk [vmem:[#allocation4 + $0x98] sm:$0xff] %vm839, %v818
        %v860 = vld [vmem:[#allocation2 + $0x2] sm:$0xff]
        %v861 = vld [vmem:[#allocation2 + $0xa] sm:$0xff]
        %v862 = vld [vmem:[#allocation2 + $0x1a] sm:$0xff]
        %v863 = vld [vmem:[#allocation2 + $0x22] sm:$0xff]
        %v864 = vld [vmem:[#allocation2 + $0x32] sm:$0xff]
        %v865 = vld [vmem:[#allocation2 + $0x3a] sm:$0xff]
        %v866 = vld [vmem:[#allocation2 + $0x4a] sm:$0xff]
        %v867 = vld [vmem:[#allocation2 + $0x52] sm:$0xff]
        %v868 = vld [vmem:[#allocation2 + $0x62] sm:$0xff]
        %v869 = vld [vmem:[#allocation2 + $0x6a] sm:$0xff]
        %v870 = vld [vmem:[#allocation2 + $0x7a] sm:$0xff]
        %v871 = vld [vmem:[#allocation2 + $0x82] sm:$0xff]
        %v872 = vld [vmem:[#allocation2 + $0x92] sm:$0xff]
        %v873 = vld [vmem:[#allocation2 + $0x9a] sm:$0xff]
        %v874 = vld [vmem:[#allocation2 + $0xaa] sm:$0xff]
        %v875 = vld [vmem:[#allocation2 + $0xb2] sm:$0xff]
        %v876 = vld [vmem:[#allocation2 + $0xc2] sm:$0xff]
        %v877 = vld [vmem:[#allocation2 + $0xca] sm:$0xff]
        %v878 = vld [vmem:[#allocation2 + $0xda] sm:$0xff]
        %v879 = vld [vmem:[#allocation2 + $0xe2] sm:$0xff]
        %900 = vrot.lane.b32.xlu0 %v860, 8
        %v901 = vpop.permute.xlu0 %900
        %902 = vrot.lane.b32.xlu0 %v861, 8
        %v903 = vpop.permute.xlu0 %902
        %904 = vrot.lane.b32.xlu0 %v862, 8
        %v905 = vpop.permute.xlu0 %904
        %906 = vrot.lane.b32.xlu0 %v863, 8
        %v907 = vpop.permute.xlu0 %906
        %908 = vrot.lane.b32.xlu0 %v864, 8
        %v909 = vpop.permute.xlu0 %908
        %910 = vrot.lane.b32.xlu0 %v865, 8
        %v911 = vpop.permute.xlu0 %910
        %912 = vrot.lane.b32.xlu0 %v866, 8
        %v913 = vpop.permute.xlu0 %912
        %914 = vrot.lane.b32.xlu0 %v867, 8
        %v915 = vpop.permute.xlu0 %914
        %916 = vrot.lane.b32.xlu0 %v868, 8
        %v917 = vpop.permute.xlu0 %916
        %918 = vrot.lane.b32.xlu0 %v869, 8
        %v919 = vpop.permute.xlu0 %918
        %920 = vrot.lane.b32.xlu0 %v870, 8
        %v921 = vpop.permute.xlu0 %920
        %922 = vrot.lane.b32.xlu0 %v871, 8
        %v923 = vpop.permute.xlu0 %922
        %924 = vrot.lane.b32.xlu0 %v872, 8
        %v925 = vpop.permute.xlu0 %924
        %926 = vrot.lane.b32.xlu0 %v873, 8
        %v927 = vpop.permute.xlu0 %926
        %928 = vrot.lane.b32.xlu0 %v874, 8
        %v929 = vpop.permute.xlu0 %928
        %930 = vrot.lane.b32.xlu0 %v875, 8
        %v931 = vpop.permute.xlu0 %930
        %932 = vrot.lane.b32.xlu0 %v876, 8
        %v933 = vpop.permute.xlu0 %932
        %934 = vrot.lane.b32.xlu0 %v877, 8
        %v935 = vpop.permute.xlu0 %934
        %936 = vrot.lane.b32.xlu0 %v878, 8
        %v937 = vpop.permute.xlu0 %936
        %938 = vrot.lane.b32.xlu0 %v879, 8
        %v939 = vpop.permute.xlu0 %938
        %vm960 = vcmask 97344
        %961 = vst.msk [vmem:[#allocation4] sm:$0xff] %vm960, %v901
        %962 = vst.msk [vmem:[#allocation4 + $0x8] sm:$0xff] %vm960, %v903
        %963 = vst.msk [vmem:[#allocation4 + $0x10] sm:$0xff] %vm960, %v905
        %964 = vst.msk [vmem:[#allocation4 + $0x18] sm:$0xff] %vm960, %v907
        %965 = vst.msk [vmem:[#allocation4 + $0x20] sm:$0xff] %vm960, %v909
        %966 = vst.msk [vmem:[#allocation4 + $0x28] sm:$0xff] %vm960, %v911
        %967 = vst.msk [vmem:[#allocation4 + $0x30] sm:$0xff] %vm960, %v913
        %968 = vst.msk [vmem:[#allocation4 + $0x38] sm:$0xff] %vm960, %v915
        %969 = vst.msk [vmem:[#allocation4 + $0x40] sm:$0xff] %vm960, %v917
        %970 = vst.msk [vmem:[#allocation4 + $0x48] sm:$0xff] %vm960, %v919
        %971 = vst.msk [vmem:[#allocation4 + $0x50] sm:$0xff] %vm960, %v921
        %972 = vst.msk [vmem:[#allocation4 + $0x58] sm:$0xff] %vm960, %v923
        %973 = vst.msk [vmem:[#allocation4 + $0x60] sm:$0xff] %vm960, %v925
        %974 = vst.msk [vmem:[#allocation4 + $0x68] sm:$0xff] %vm960, %v927
        %975 = vst.msk [vmem:[#allocation4 + $0x70] sm:$0xff] %vm960, %v929
        %976 = vst.msk [vmem:[#allocation4 + $0x78] sm:$0xff] %vm960, %v931
        %977 = vst.msk [vmem:[#allocation4 + $0x80] sm:$0xff] %vm960, %v933
        %978 = vst.msk [vmem:[#allocation4 + $0x88] sm:$0xff] %vm960, %v935
        %979 = vst.msk [vmem:[#allocation4 + $0x90] sm:$0xff] %vm960, %v937
        %980 = vst.msk [vmem:[#allocation4 + $0x98] sm:$0xff] %vm960, %v939
        %s981 = scalar_lea.vmem [#allocation2], 24
        %v982 = vld [vmem:[%s981] sm:$0xff]
        %v983 = vld [vmem:[%s981 + $0x8] sm:$0xff]
        %v984 = vld [vmem:[%s981 + $0x18] sm:$0xff]
        %v985 = vld [vmem:[%s981 + $0x20] sm:$0xff]
        %v986 = vld [vmem:[%s981 + $0x30] sm:$0xff]
        %v987 = vld [vmem:[%s981 + $0x38] sm:$0xff]
        %v988 = vld [vmem:[%s981 + $0x48] sm:$0xff]
        %v989 = vld [vmem:[%s981 + $0x50] sm:$0xff]
        %v990 = vld [vmem:[%s981 + $0x60] sm:$0xff]
        %v991 = vld [vmem:[%s981 + $0x68] sm:$0xff]
        %v992 = vld [vmem:[%s981 + $0x78] sm:$0xff]
        %v993 = vld [vmem:[%s981 + $0x80] sm:$0xff]
        %v994 = vld [vmem:[%s981 + $0x90] sm:$0xff]
        %v995 = vld [vmem:[%s981 + $0x98] sm:$0xff]
        %v996 = vld [vmem:[%s981 + $0xa8] sm:$0xff]
        %v997 = vld [vmem:[%s981 + $0xb0] sm:$0xff]
        %v998 = vld [vmem:[%s981 + $0xc0] sm:$0xff]
        %v999 = vld [vmem:[%s981 + $0xc8] sm:$0xff]
        %v1000 = vld [vmem:[%s981 + $0xd8] sm:$0xff]
        %v1001 = vld [vmem:[%s981 + $0xe0] sm:$0xff]
        %1022 = vrot.lane.b32.xlu0 %v982, 12
        %v1023 = vpop.permute.xlu0 %1022
        %1024 = vrot.lane.b32.xlu0 %v983, 12
        %v1025 = vpop.permute.xlu0 %1024
        %1026 = vrot.lane.b32.xlu0 %v984, 12
        %v1027 = vpop.permute.xlu0 %1026
        %1028 = vrot.lane.b32.xlu0 %v985, 12
        %v1029 = vpop.permute.xlu0 %1028
        %1030 = vrot.lane.b32.xlu0 %v986, 12
        %v1031 = vpop.permute.xlu0 %1030
        %1032 = vrot.lane.b32.xlu0 %v987, 12
        %v1033 = vpop.permute.xlu0 %1032
        %1034 = vrot.lane.b32.xlu0 %v988, 12
        %v1035 = vpop.permute.xlu0 %1034
        %1036 = vrot.lane.b32.xlu0 %v989, 12
        %v1037 = vpop.permute.xlu0 %1036
        %1038 = vrot.lane.b32.xlu0 %v990, 12
        %v1039 = vpop.permute.xlu0 %1038
        %1040 = vrot.lane.b32.xlu0 %v991, 12
        %v1041 = vpop.permute.xlu0 %1040
        %1042 = vrot.lane.b32.xlu0 %v992, 12
        %v1043 = vpop.permute.xlu0 %1042
        %1044 = vrot.lane.b32.xlu0 %v993, 12
        %v1045 = vpop.permute.xlu0 %1044
        %1046 = vrot.lane.b32.xlu0 %v994, 12
        %v1047 = vpop.permute.xlu0 %1046
        %1048 = vrot.lane.b32.xlu0 %v995, 12
        %v1049 = vpop.permute.xlu0 %1048
        %1050 = vrot.lane.b32.xlu0 %v996, 12
        %v1051 = vpop.permute.xlu0 %1050
        %1052 = vrot.lane.b32.xlu0 %v997, 12
        %v1053 = vpop.permute.xlu0 %1052
        %1054 = vrot.lane.b32.xlu0 %v998, 12
        %v1055 = vpop.permute.xlu0 %1054
        %1056 = vrot.lane.b32.xlu0 %v999, 12
        %v1057 = vpop.permute.xlu0 %1056
        %1058 = vrot.lane.b32.xlu0 %v1000, 12
        %v1059 = vpop.permute.xlu0 %1058
        %1060 = vrot.lane.b32.xlu0 %v1001, 12
        %v1061 = vpop.permute.xlu0 %1060
        %vm1082 = vcmask 130144
        %1083 = vst.msk [vmem:[#allocation4] sm:$0xff] %vm1082, %v1023
        %1084 = vst.msk [vmem:[#allocation4 + $0x8] sm:$0xff] %vm1082, %v1025
        %1085 = vst.msk [vmem:[#allocation4 + $0x10] sm:$0xff] %vm1082, %v1027
        %1086 = vst.msk [vmem:[#allocation4 + $0x18] sm:$0xff] %vm1082, %v1029
        %1087 = vst.msk [vmem:[#allocation4 + $0x20] sm:$0xff] %vm1082, %v1031
        %1088 = vst.msk [vmem:[#allocation4 + $0x28] sm:$0xff] %vm1082, %v1033
        %1089 = vst.msk [vmem:[#allocation4 + $0x30] sm:$0xff] %vm1082, %v1035
        %1090 = vst.msk [vmem:[#allocation4 + $0x38] sm:$0xff] %vm1082, %v1037
        %1091 = vst.msk [vmem:[#allocation4 + $0x40] sm:$0xff] %vm1082, %v1039
        %1092 = vst.msk [vmem:[#allocation4 + $0x48] sm:$0xff] %vm1082, %v1041
        %1093 = vst.msk [vmem:[#allocation4 + $0x50] sm:$0xff] %vm1082, %v1043
        %1094 = vst.msk [vmem:[#allocation4 + $0x58] sm:$0xff] %vm1082, %v1045
        %1095 = vst.msk [vmem:[#allocation4 + $0x60] sm:$0xff] %vm1082, %v1047
        %1096 = vst.msk [vmem:[#allocation4 + $0x68] sm:$0xff] %vm1082, %v1049
        %1097 = vst.msk [vmem:[#allocation4 + $0x70] sm:$0xff] %vm1082, %v1051
        %1098 = vst.msk [vmem:[#allocation4 + $0x78] sm:$0xff] %vm1082, %v1053
        %1099 = vst.msk [vmem:[#allocation4 + $0x80] sm:$0xff] %vm1082, %v1055
        %1100 = vst.msk [vmem:[#allocation4 + $0x88] sm:$0xff] %vm1082, %v1057
        %1101 = vst.msk [vmem:[#allocation4 + $0x90] sm:$0xff] %vm1082, %v1059
        %1102 = vst.msk [vmem:[#allocation4 + $0x98] sm:$0xff] %vm1082, %v1061
        %v1103 = vld [vmem:[%s981 + $0x1] sm:$0xff]
        %v1104 = vld [vmem:[%s981 + $0x9] sm:$0xff]
        %v1105 = vld [vmem:[%s981 + $0x19] sm:$0xff]
        %v1106 = vld [vmem:[%s981 + $0x21] sm:$0xff]
        %v1107 = vld [vmem:[%s981 + $0x31] sm:$0xff]
        %v1108 = vld [vmem:[%s981 + $0x39] sm:$0xff]
        %v1109 = vld [vmem:[%s981 + $0x49] sm:$0xff]
        %v1110 = vld [vmem:[%s981 + $0x51] sm:$0xff]
        %v1111 = vld [vmem:[%s981 + $0x61] sm:$0xff]
        %v1112 = vld [vmem:[%s981 + $0x69] sm:$0xff]
        %v1113 = vld [vmem:[%s981 + $0x79] sm:$0xff]
        %v1114 = vld [vmem:[%s981 + $0x81] sm:$0xff]
        %v1115 = vld [vmem:[%s981 + $0x91] sm:$0xff]
        %v1116 = vld [vmem:[%s981 + $0x99] sm:$0xff]
        %v1117 = vld [vmem:[%s981 + $0xa9] sm:$0xff]
        %v1118 = vld [vmem:[%s981 + $0xb1] sm:$0xff]
        %v1119 = vld [vmem:[%s981 + $0xc1] sm:$0xff]
        %v1120 = vld [vmem:[%s981 + $0xc9] sm:$0xff]
        %v1121 = vld [vmem:[%s981 + $0xd9] sm:$0xff]
        %v1122 = vld [vmem:[%s981 + $0xe1] sm:$0xff]
        %1143 = vrot.lane.b32.xlu0 %v1103, 16
        %v1144 = vpop.permute.xlu0 %1143
        %1145 = vrot.lane.b32.xlu0 %v1104, 16
        %v1146 = vpop.permute.xlu0 %1145
        %1147 = vrot.lane.b32.xlu0 %v1105, 16
        %v1148 = vpop.permute.xlu0 %1147
        %1149 = vrot.lane.b32.xlu0 %v1106, 16
        %v1150 = vpop.permute.xlu0 %1149
        %1151 = vrot.lane.b32.xlu0 %v1107, 16
        %v1152 = vpop.permute.xlu0 %1151
        %1153 = vrot.lane.b32.xlu0 %v1108, 16
        %v1154 = vpop.permute.xlu0 %1153
        %1155 = vrot.lane.b32.xlu0 %v1109, 16
        %v1156 = vpop.permute.xlu0 %1155
        %1157 = vrot.lane.b32.xlu0 %v1110, 16
        %v1158 = vpop.permute.xlu0 %1157
        %1159 = vrot.lane.b32.xlu0 %v1111, 16
        %v1160 = vpop.permute.xlu0 %1159
        %1161 = vrot.lane.b32.xlu0 %v1112, 16
        %v1162 = vpop.permute.xlu0 %1161
        %1163 = vrot.lane.b32.xlu0 %v1113, 16
        %v1164 = vpop.permute.xlu0 %1163
        %1165 = vrot.lane.b32.xlu0 %v1114, 16
        %v1166 = vpop.permute.xlu0 %1165
        %1167 = vrot.lane.b32.xlu0 %v1115, 16
        %v1168 = vpop.permute.xlu0 %1167
        %1169 = vrot.lane.b32.xlu0 %v1116, 16
        %v1170 = vpop.permute.xlu0 %1169
        %1171 = vrot.lane.b32.xlu0 %v1117, 16
        %v1172 = vpop.permute.xlu0 %1171
        %1173 = vrot.lane.b32.xlu0 %v1118, 16
        %v1174 = vpop.permute.xlu0 %1173
        %1175 = vrot.lane.b32.xlu0 %v1119, 16
        %v1176 = vpop.permute.xlu0 %1175
        %1177 = vrot.lane.b32.xlu0 %v1120, 16
        %v1178 = vpop.permute.xlu0 %1177
        %1179 = vrot.lane.b32.xlu0 %v1121, 16
        %v1180 = vpop.permute.xlu0 %1179
        %1181 = vrot.lane.b32.xlu0 %v1122, 16
        %v1182 = vpop.permute.xlu0 %1181
        %vm1203 = vcmask 162944
        %1204 = vst.msk [vmem:[#allocation4] sm:$0xff] %vm1203, %v1144
        %1205 = vst.msk [vmem:[#allocation4 + $0x8] sm:$0xff] %vm1203, %v1146
        %1206 = vst.msk [vmem:[#allocation4 + $0x10] sm:$0xff] %vm1203, %v1148
        %1207 = vst.msk [vmem:[#allocation4 + $0x18] sm:$0xff] %vm1203, %v1150
        %1208 = vst.msk [vmem:[#allocation4 + $0x20] sm:$0xff] %vm1203, %v1152
        %1209 = vst.msk [vmem:[#allocation4 + $0x28] sm:$0xff] %vm1203, %v1154
        %1210 = vst.msk [vmem:[#allocation4 + $0x30] sm:$0xff] %vm1203, %v1156
        %1211 = vst.msk [vmem:[#allocation4 + $0x38] sm:$0xff] %vm1203, %v1158
        %1212 = vst.msk [vmem:[#allocation4 + $0x40] sm:$0xff] %vm1203, %v1160
        %1213 = vst.msk [vmem:[#allocation4 + $0x48] sm:$0xff] %vm1203, %v1162
        %1214 = vst.msk [vmem:[#allocation4 + $0x50] sm:$0xff] %vm1203, %v1164
        %1215 = vst.msk [vmem:[#allocation4 + $0x58] sm:$0xff] %vm1203, %v1166
        %1216 = vst.msk [vmem:[#allocation4 + $0x60] sm:$0xff] %vm1203, %v1168
        %1217 = vst.msk [vmem:[#allocation4 + $0x68] sm:$0xff] %vm1203, %v1170
        %1218 = vst.msk [vmem:[#allocation4 + $0x70] sm:$0xff] %vm1203, %v1172
        %1219 = vst.msk [vmem:[#allocation4 + $0x78] sm:$0xff] %vm1203, %v1174
        %1220 = vst.msk [vmem:[#allocation4 + $0x80] sm:$0xff] %vm1203, %v1176
        %1221 = vst.msk [vmem:[#allocation4 + $0x88] sm:$0xff] %vm1203, %v1178
        %1222 = vst.msk [vmem:[#allocation4 + $0x90] sm:$0xff] %vm1203, %v1180
        %1223 = vst.msk [vmem:[#allocation4 + $0x98] sm:$0xff] %vm1203, %v1182
        %v1224 = vld [vmem:[%s981 + $0x2] sm:$0xff]
        %v1225 = vld [vmem:[%s981 + $0xa] sm:$0xff]
        %v1226 = vld [vmem:[%s981 + $0x1a] sm:$0xff]
        %v1227 = vld [vmem:[%s981 + $0x22] sm:$0xff]
        %v1228 = vld [vmem:[%s981 + $0x32] sm:$0xff]
        %v1229 = vld [vmem:[%s981 + $0x3a] sm:$0xff]
        %v1230 = vld [vmem:[%s981 + $0x4a] sm:$0xff]
        %v1231 = vld [vmem:[%s981 + $0x52] sm:$0xff]
        %v1232 = vld [vmem:[%s981 + $0x62] sm:$0xff]
        %v1233 = vld [vmem:[%s981 + $0x6a] sm:$0xff]
        %v1234 = vld [vmem:[%s981 + $0x7a] sm:$0xff]
        %v1235 = vld [vmem:[%s981 + $0x82] sm:$0xff]
        %v1236 = vld [vmem:[%s981 + $0x92] sm:$0xff]
        %v1237 = vld [vmem:[%s981 + $0x9a] sm:$0xff]
        %v1238 = vld [vmem:[%s981 + $0xaa] sm:$0xff]
        %v1239 = vld [vmem:[%s981 + $0xb2] sm:$0xff]
        %v1240 = vld [vmem:[%s981 + $0xc2] sm:$0xff]
        %v1241 = vld [vmem:[%s981 + $0xca] sm:$0xff]
        %v1242 = vld [vmem:[%s981 + $0xda] sm:$0xff]
        %v1243 = vld [vmem:[%s981 + $0xe2] sm:$0xff]
        %1264 = vrot.lane.b32.xlu0 %v1224, 20
        %v1265 = vpop.permute.xlu0 %1264
        %1266 = vrot.lane.b32.xlu0 %v1225, 20
        %v1267 = vpop.permute.xlu0 %1266
        %1268 = vrot.lane.b32.xlu0 %v1226, 20
        %v1269 = vpop.permute.xlu0 %1268
        %1270 = vrot.lane.b32.xlu0 %v1227, 20
        %v1271 = vpop.permute.xlu0 %1270
        %1272 = vrot.lane.b32.xlu0 %v1228, 20
        %v1273 = vpop.permute.xlu0 %1272
        %1274 = vrot.lane.b32.xlu0 %v1229, 20
        %v1275 = vpop.permute.xlu0 %1274
        %1276 = vrot.lane.b32.xlu0 %v1230, 20
        %v1277 = vpop.permute.xlu0 %1276
        %1278 = vrot.lane.b32.xlu0 %v1231, 20
        %v1279 = vpop.permute.xlu0 %1278
        %1280 = vrot.lane.b32.xlu0 %v1232, 20
        %v1281 = vpop.permute.xlu0 %1280
        %1282 = vrot.lane.b32.xlu0 %v1233, 20
        %v1283 = vpop.permute.xlu0 %1282
        %1284 = vrot.lane.b32.xlu0 %v1234, 20
        %v1285 = vpop.permute.xlu0 %1284
        %1286 = vrot.lane.b32.xlu0 %v1235, 20
        %v1287 = vpop.permute.xlu0 %1286
        %1288 = vrot.lane.b32.xlu0 %v1236, 20
        %v1289 = vpop.permute.xlu0 %1288
        %1290 = vrot.lane.b32.xlu0 %v1237, 20
        %v1291 = vpop.permute.xlu0 %1290
        %1292 = vrot.lane.b32.xlu0 %v1238, 20
        %v1293 = vpop.permute.xlu0 %1292
        %1294 = vrot.lane.b32.xlu0 %v1239, 20
        %v1295 = vpop.permute.xlu0 %1294
        %1296 = vrot.lane.b32.xlu0 %v1240, 20
        %v1297 = vpop.permute.xlu0 %1296
        %1298 = vrot.lane.b32.xlu0 %v1241, 20
        %v1299 = vpop.permute.xlu0 %1298
        %1300 = vrot.lane.b32.xlu0 %v1242, 20
        %v1301 = vpop.permute.xlu0 %1300
        %1302 = vrot.lane.b32.xlu0 %v1243, 20
        %v1303 = vpop.permute.xlu0 %1302
        %vm1324 = vcmask 195744
        %1325 = vst.msk [vmem:[#allocation4] sm:$0xff] %vm1324, %v1265
        %1326 = vst.msk [vmem:[#allocation4 + $0x8] sm:$0xff] %vm1324, %v1267
        %1327 = vst.msk [vmem:[#allocation4 + $0x10] sm:$0xff] %vm1324, %v1269
        %1328 = vst.msk [vmem:[#allocation4 + $0x18] sm:$0xff] %vm1324, %v1271
        %1329 = vst.msk [vmem:[#allocation4 + $0x20] sm:$0xff] %vm1324, %v1273
        %1330 = vst.msk [vmem:[#allocation4 + $0x28] sm:$0xff] %vm1324, %v1275
        %1331 = vst.msk [vmem:[#allocation4 + $0x30] sm:$0xff] %vm1324, %v1277
        %1332 = vst.msk [vmem:[#allocation4 + $0x38] sm:$0xff] %vm1324, %v1279
        %1333 = vst.msk [vmem:[#allocation4 + $0x40] sm:$0xff] %vm1324, %v1281
        %1334 = vst.msk [vmem:[#allocation4 + $0x48] sm:$0xff] %vm1324, %v1283
        %1335 = vst.msk [vmem:[#allocation4 + $0x50] sm:$0xff] %vm1324, %v1285
        %1336 = vst.msk [vmem:[#allocation4 + $0x58] sm:$0xff] %vm1324, %v1287
        %1337 = vst.msk [vmem:[#allocation4 + $0x60] sm:$0xff] %vm1324, %v1289
        %1338 = vst.msk [vmem:[#allocation4 + $0x68] sm:$0xff] %vm1324, %v1291
        %1339 = vst.msk [vmem:[#allocation4 + $0x70] sm:$0xff] %vm1324, %v1293
        %1340 = vst.msk [vmem:[#allocation4 + $0x78] sm:$0xff] %vm1324, %v1295
        %1341 = vst.msk [vmem:[#allocation4 + $0x80] sm:$0xff] %vm1324, %v1297
        %1342 = vst.msk [vmem:[#allocation4 + $0x88] sm:$0xff] %vm1324, %v1299
        %1343 = vst.msk [vmem:[#allocation4 + $0x90] sm:$0xff] %vm1324, %v1301
        %1344 = vst.msk [vmem:[#allocation4 + $0x98] sm:$0xff] %vm1324, %v1303
        %s1345 = scalar_lea.vmem [#allocation2], 48
        %v1346 = vld [vmem:[%s1345] sm:$0xff]
        %v1347 = vld [vmem:[%s1345 + $0x8] sm:$0xff]
        %v1348 = vld [vmem:[%s1345 + $0x18] sm:$0xff]
        %v1349 = vld [vmem:[%s1345 + $0x20] sm:$0xff]
        %v1350 = vld [vmem:[%s1345 + $0x30] sm:$0xff]
        %v1351 = vld [vmem:[%s1345 + $0x38] sm:$0xff]
        %v1352 = vld [vmem:[%s1345 + $0x48] sm:$0xff]
        %v1353 = vld [vmem:[%s1345 + $0x50] sm:$0xff]
        %v1354 = vld [vmem:[%s1345 + $0x60] sm:$0xff]
        %v1355 = vld [vmem:[%s1345 + $0x68] sm:$0xff]
        %v1356 = vld [vmem:[%s1345 + $0x78] sm:$0xff]
        %v1357 = vld [vmem:[%s1345 + $0x80] sm:$0xff]
        %v1358 = vld [vmem:[%s1345 + $0x90] sm:$0xff]
        %v1359 = vld [vmem:[%s1345 + $0x98] sm:$0xff]
        %v1360 = vld [vmem:[%s1345 + $0xa8] sm:$0xff]
        %v1361 = vld [vmem:[%s1345 + $0xb0] sm:$0xff]
        %v1362 = vld [vmem:[%s1345 + $0xc0] sm:$0xff]
        %v1363 = vld [vmem:[%s1345 + $0xc8] sm:$0xff]
        %v1364 = vld [vmem:[%s1345 + $0xd8] sm:$0xff]
        %v1365 = vld [vmem:[%s1345 + $0xe0] sm:$0xff]
        %1386 = vrot.lane.b32.xlu0 %v1346, 24
        %v1387 = vpop.permute.xlu0 %1386
        %1388 = vrot.lane.b32.xlu0 %v1347, 24
        %v1389 = vpop.permute.xlu0 %1388
        %1390 = vrot.lane.b32.xlu0 %v1348, 24
        %v1391 = vpop.permute.xlu0 %1390
        %1392 = vrot.lane.b32.xlu0 %v1349, 24
        %v1393 = vpop.permute.xlu0 %1392
        %1394 = vrot.lane.b32.xlu0 %v1350, 24
        %v1395 = vpop.permute.xlu0 %1394
        %1396 = vrot.lane.b32.xlu0 %v1351, 24
        %v1397 = vpop.permute.xlu0 %1396
        %1398 = vrot.lane.b32.xlu0 %v1352, 24
        %v1399 = vpop.permute.xlu0 %1398
        %1400 = vrot.lane.b32.xlu0 %v1353, 24
        %v1401 = vpop.permute.xlu0 %1400
        %1402 = vrot.lane.b32.xlu0 %v1354, 24
        %v1403 = vpop.permute.xlu0 %1402
        %1404 = vrot.lane.b32.xlu0 %v1355, 24
        %v1405 = vpop.permute.xlu0 %1404
        %1406 = vrot.lane.b32.xlu0 %v1356, 24
        %v1407 = vpop.permute.xlu0 %1406
        %1408 = vrot.lane.b32.xlu0 %v1357, 24
        %v1409 = vpop.permute.xlu0 %1408
        %1410 = vrot.lane.b32.xlu0 %v1358, 24
        %v1411 = vpop.permute.xlu0 %1410
        %1412 = vrot.lane.b32.xlu0 %v1359, 24
        %v1413 = vpop.permute.xlu0 %1412
        %1414 = vrot.lane.b32.xlu0 %v1360, 24
        %v1415 = vpop.permute.xlu0 %1414
        %1416 = vrot.lane.b32.xlu0 %v1361, 24
        %v1417 = vpop.permute.xlu0 %1416
        %1418 = vrot.lane.b32.xlu0 %v1362, 24
        %v1419 = vpop.permute.xlu0 %1418
        %1420 = vrot.lane.b32.xlu0 %v1363, 24
        %v1421 = vpop.permute.xlu0 %1420
        %1422 = vrot.lane.b32.xlu0 %v1364, 24
        %v1423 = vpop.permute.xlu0 %1422
        %1424 = vrot.lane.b32.xlu0 %v1365, 24
        %v1425 = vpop.permute.xlu0 %1424
        %vm1446 = vcmask 228544
        %1447 = vst.msk [vmem:[#allocation4] sm:$0xff] %vm1446, %v1387
        %1448 = vst.msk [vmem:[#allocation4 + $0x8] sm:$0xff] %vm1446, %v1389
        %1449 = vst.msk [vmem:[#allocation4 + $0x10] sm:$0xff] %vm1446, %v1391
        %1450 = vst.msk [vmem:[#allocation4 + $0x18] sm:$0xff] %vm1446, %v1393
        %1451 = vst.msk [vmem:[#allocation4 + $0x20] sm:$0xff] %vm1446, %v1395
        %1452 = vst.msk [vmem:[#allocation4 + $0x28] sm:$0xff] %vm1446, %v1397
        %1453 = vst.msk [vmem:[#allocation4 + $0x30] sm:$0xff] %vm1446, %v1399
        %1454 = vst.msk [vmem:[#allocation4 + $0x38] sm:$0xff] %vm1446, %v1401
        %1455 = vst.msk [vmem:[#allocation4 + $0x40] sm:$0xff] %vm1446, %v1403
        %1456 = vst.msk [vmem:[#allocation4 + $0x48] sm:$0xff] %vm1446, %v1405
        %1457 = vst.msk [vmem:[#allocation4 + $0x50] sm:$0xff] %vm1446, %v1407
        %1458 = vst.msk [vmem:[#allocation4 + $0x58] sm:$0xff] %vm1446, %v1409
        %1459 = vst.msk [vmem:[#allocation4 + $0x60] sm:$0xff] %vm1446, %v1411
        %1460 = vst.msk [vmem:[#allocation4 + $0x68] sm:$0xff] %vm1446, %v1413
        %1461 = vst.msk [vmem:[#allocation4 + $0x70] sm:$0xff] %vm1446, %v1415
        %1462 = vst.msk [vmem:[#allocation4 + $0x78] sm:$0xff] %vm1446, %v1417
        %1463 = vst.msk [vmem:[#allocation4 + $0x80] sm:$0xff] %vm1446, %v1419
        %1464 = vst.msk [vmem:[#allocation4 + $0x88] sm:$0xff] %vm1446, %v1421
        %1465 = vst.msk [vmem:[#allocation4 + $0x90] sm:$0xff] %vm1446, %v1423
        %1466 = vst.msk [vmem:[#allocation4 + $0x98] sm:$0xff] %vm1446, %v1425
        %v1467 = vld [vmem:[%s1345 + $0x1] sm:$0xff]
        %v1468 = vld [vmem:[%s1345 + $0x9] sm:$0xff]
        %v1469 = vld [vmem:[%s1345 + $0x19] sm:$0xff]
        %v1470 = vld [vmem:[%s1345 + $0x21] sm:$0xff]
        %v1471 = vld [vmem:[%s1345 + $0x31] sm:$0xff]
        %v1472 = vld [vmem:[%s1345 + $0x39] sm:$0xff]
        %v1473 = vld [vmem:[%s1345 + $0x49] sm:$0xff]
        %v1474 = vld [vmem:[%s1345 + $0x51] sm:$0xff]
        %v1475 = vld [vmem:[%s1345 + $0x61] sm:$0xff]
        %v1476 = vld [vmem:[%s1345 + $0x69] sm:$0xff]
        %v1477 = vld [vmem:[%s1345 + $0x79] sm:$0xff]
        %v1478 = vld [vmem:[%s1345 + $0x81] sm:$0xff]
        %v1479 = vld [vmem:[%s1345 + $0x91] sm:$0xff]
        %v1480 = vld [vmem:[%s1345 + $0x99] sm:$0xff]
        %v1481 = vld [vmem:[%s1345 + $0xa9] sm:$0xff]
        %v1482 = vld [vmem:[%s1345 + $0xb1] sm:$0xff]
        %v1483 = vld [vmem:[%s1345 + $0xc1] sm:$0xff]
        %v1484 = vld [vmem:[%s1345 + $0xc9] sm:$0xff]
        %v1485 = vld [vmem:[%s1345 + $0xd9] sm:$0xff]
        %v1486 = vld [vmem:[%s1345 + $0xe1] sm:$0xff]
        %1507 = vrot.lane.b32.xlu0 %v1467, 28
        %v1508 = vpop.permute.xlu0 %1507
        %1509 = vrot.lane.b32.xlu0 %v1468, 28
        %v1510 = vpop.permute.xlu0 %1509
        %1511 = vrot.lane.b32.xlu0 %v1469, 28
        %v1512 = vpop.permute.xlu0 %1511
        %1513 = vrot.lane.b32.xlu0 %v1470, 28
        %v1514 = vpop.permute.xlu0 %1513
        %1515 = vrot.lane.b32.xlu0 %v1471, 28
        %v1516 = vpop.permute.xlu0 %1515
        %1517 = vrot.lane.b32.xlu0 %v1472, 28
        %v1518 = vpop.permute.xlu0 %1517
        %1519 = vrot.lane.b32.xlu0 %v1473, 28
        %v1520 = vpop.permute.xlu0 %1519
        %1521 = vrot.lane.b32.xlu0 %v1474, 28
        %v1522 = vpop.permute.xlu0 %1521
        %1523 = vrot.lane.b32.xlu0 %v1475, 28
        %v1524 = vpop.permute.xlu0 %1523
        %1525 = vrot.lane.b32.xlu0 %v1476, 28
        %v1526 = vpop.permute.xlu0 %1525
        %1527 = vrot.lane.b32.xlu0 %v1477, 28
        %v1528 = vpop.permute.xlu0 %1527
        %1529 = vrot.lane.b32.xlu0 %v1478, 28
        %v1530 = vpop.permute.xlu0 %1529
        %1531 = vrot.lane.b32.xlu0 %v1479, 28
        %v1532 = vpop.permute.xlu0 %1531
        %1533 = vrot.lane.b32.xlu0 %v1480, 28
        %v1534 = vpop.permute.xlu0 %1533
        %1535 = vrot.lane.b32.xlu0 %v1481, 28
        %v1536 = vpop.permute.xlu0 %1535
        %1537 = vrot.lane.b32.xlu0 %v1482, 28
        %v1538 = vpop.permute.xlu0 %1537
        %1539 = vrot.lane.b32.xlu0 %v1483, 28
        %v1540 = vpop.permute.xlu0 %1539
        %1541 = vrot.lane.b32.xlu0 %v1484, 28
        %v1542 = vpop.permute.xlu0 %1541
        %1543 = vrot.lane.b32.xlu0 %v1485, 28
        %v1544 = vpop.permute.xlu0 %1543
        %1545 = vrot.lane.b32.xlu0 %v1486, 28
        %v1546 = vpop.permute.xlu0 %1545
        %vm1567 = vcmask 261344
        %1568 = vst.msk [vmem:[#allocation4] sm:$0xff] %vm1567, %v1508
        %1569 = vst.msk [vmem:[#allocation4 + $0x8] sm:$0xff] %vm1567, %v1510
        %1570 = vst.msk [vmem:[#allocation4 + $0x10] sm:$0xff] %vm1567, %v1512
        %1571 = vst.msk [vmem:[#allocation4 + $0x18] sm:$0xff] %vm1567, %v1514
        %1572 = vst.msk [vmem:[#allocation4 + $0x20] sm:$0xff] %vm1567, %v1516
        %1573 = vst.msk [vmem:[#allocation4 + $0x28] sm:$0xff] %vm1567, %v1518
        %1574 = vst.msk [vmem:[#allocation4 + $0x30] sm:$0xff] %vm1567, %v1520
        %1575 = vst.msk [vmem:[#allocation4 + $0x38] sm:$0xff] %vm1567, %v1522
        %1576 = vst.msk [vmem:[#allocation4 + $0x40] sm:$0xff] %vm1567, %v1524
        %1577 = vst.msk [vmem:[#allocation4 + $0x48] sm:$0xff] %vm1567, %v1526
        %1578 = vst.msk [vmem:[#allocation4 + $0x50] sm:$0xff] %vm1567, %v1528
        %1579 = vst.msk [vmem:[#allocation4 + $0x58] sm:$0xff] %vm1567, %v1530
        %1580 = vst.msk [vmem:[#allocation4 + $0x60] sm:$0xff] %vm1567, %v1532
        %1581 = vst.msk [vmem:[#allocation4 + $0x68] sm:$0xff] %vm1567, %v1534
        %1582 = vst.msk [vmem:[#allocation4 + $0x70] sm:$0xff] %vm1567, %v1536
        %1583 = vst.msk [vmem:[#allocation4 + $0x78] sm:$0xff] %vm1567, %v1538
        %1584 = vst.msk [vmem:[#allocation4 + $0x80] sm:$0xff] %vm1567, %v1540
        %1585 = vst.msk [vmem:[#allocation4 + $0x88] sm:$0xff] %vm1567, %v1542
        %1586 = vst.msk [vmem:[#allocation4 + $0x90] sm:$0xff] %vm1567, %v1544
        %1587 = vst.msk [vmem:[#allocation4 + $0x98] sm:$0xff] %vm1567, %v1546
        %v1588 = vld [vmem:[%s1345 + $0x2] sm:$0xff]
        %v1589 = vld [vmem:[%s1345 + $0xa] sm:$0xff]
        %v1590 = vld [vmem:[%s1345 + $0x1a] sm:$0xff]
        %v1591 = vld [vmem:[%s1345 + $0x22] sm:$0xff]
        %v1592 = vld [vmem:[%s1345 + $0x32] sm:$0xff]
        %v1593 = vld [vmem:[%s1345 + $0x3a] sm:$0xff]
        %v1594 = vld [vmem:[%s1345 + $0x4a] sm:$0xff]
        %v1595 = vld [vmem:[%s1345 + $0x52] sm:$0xff]
        %v1596 = vld [vmem:[%s1345 + $0x62] sm:$0xff]
        %v1597 = vld [vmem:[%s1345 + $0x6a] sm:$0xff]
        %v1598 = vld [vmem:[%s1345 + $0x7a] sm:$0xff]
        %v1599 = vld [vmem:[%s1345 + $0x82] sm:$0xff]
        %v1600 = vld [vmem:[%s1345 + $0x92] sm:$0xff]
        %v1601 = vld [vmem:[%s1345 + $0x9a] sm:$0xff]
        %v1602 = vld [vmem:[%s1345 + $0xaa] sm:$0xff]
        %v1603 = vld [vmem:[%s1345 + $0xb2] sm:$0xff]
        %v1604 = vld [vmem:[%s1345 + $0xc2] sm:$0xff]
        %v1605 = vld [vmem:[%s1345 + $0xca] sm:$0xff]
        %v1606 = vld [vmem:[%s1345 + $0xda] sm:$0xff]
        %v1607 = vld [vmem:[%s1345 + $0xe2] sm:$0xff]
        %1628 = vrot.lane.b32.xlu0 %v1588, 32
        %v1629 = vpop.permute.xlu0 %1628
        %1630 = vrot.lane.b32.xlu0 %v1589, 32
        %v1631 = vpop.permute.xlu0 %1630
        %1632 = vrot.lane.b32.xlu0 %v1590, 32
        %v1633 = vpop.permute.xlu0 %1632
        %1634 = vrot.lane.b32.xlu0 %v1591, 32
        %v1635 = vpop.permute.xlu0 %1634
        %1636 = vrot.lane.b32.xlu0 %v1592, 32
        %v1637 = vpop.permute.xlu0 %1636
        %1638 = vrot.lane.b32.xlu0 %v1593, 32
        %v1639 = vpop.permute.xlu0 %1638
        %1640 = vrot.lane.b32.xlu0 %v1594, 32
        %v1641 = vpop.permute.xlu0 %1640
        %1642 = vrot.lane.b32.xlu0 %v1595, 32
        %v1643 = vpop.permute.xlu0 %1642
        %1644 = vrot.lane.b32.xlu0 %v1596, 32
        %v1645 = vpop.permute.xlu0 %1644
        %1646 = vrot.lane.b32.xlu0 %v1597, 32
        %v1647 = vpop.permute.xlu0 %1646
        %1648 = vrot.lane.b32.xlu0 %v1598, 32
        %v1649 = vpop.permute.xlu0 %1648
        %1650 = vrot.lane.b32.xlu0 %v1599, 32
        %v1651 = vpop.permute.xlu0 %1650
        %1652 = vrot.lane.b32.xlu0 %v1600, 32
        %v1653 = vpop.permute.xlu0 %1652
        %1654 = vrot.lane.b32.xlu0 %v1601, 32
        %v1655 = vpop.permute.xlu0 %1654
        %1656 = vrot.lane.b32.xlu0 %v1602, 32
        %v1657 = vpop.permute.xlu0 %1656
        %1658 = vrot.lane.b32.xlu0 %v1603, 32
        %v1659 = vpop.permute.xlu0 %1658
        %1660 = vrot.lane.b32.xlu0 %v1604, 32
        %v1661 = vpop.permute.xlu0 %1660
        %1662 = vrot.lane.b32.xlu0 %v1605, 32
        %v1663 = vpop.permute.xlu0 %1662
        %1664 = vrot.lane.b32.xlu0 %v1606, 32
        %v1665 = vpop.permute.xlu0 %1664
        %1666 = vrot.lane.b32.xlu0 %v1607, 32
        %v1667 = vpop.permute.xlu0 %1666
        %vm1688 = vcmask 294144
        %1689 = vst.msk [vmem:[#allocation4] sm:$0xff] %vm1688, %v1629
        %1690 = vst.msk [vmem:[#allocation4 + $0x8] sm:$0xff] %vm1688, %v1631
        %1691 = vst.msk [vmem:[#allocation4 + $0x10] sm:$0xff] %vm1688, %v1633
        %1692 = vst.msk [vmem:[#allocation4 + $0x18] sm:$0xff] %vm1688, %v1635
        %1693 = vst.msk [vmem:[#allocation4 + $0x20] sm:$0xff] %vm1688, %v1637
        %1694 = vst.msk [vmem:[#allocation4 + $0x28] sm:$0xff] %vm1688, %v1639
        %1695 = vst.msk [vmem:[#allocation4 + $0x30] sm:$0xff] %vm1688, %v1641
        %1696 = vst.msk [vmem:[#allocation4 + $0x38] sm:$0xff] %vm1688, %v1643
        %1697 = vst.msk [vmem:[#allocation4 + $0x40] sm:$0xff] %vm1688, %v1645
        %1698 = vst.msk [vmem:[#allocation4 + $0x48] sm:$0xff] %vm1688, %v1647
        %1699 = vst.msk [vmem:[#allocation4 + $0x50] sm:$0xff] %vm1688, %v1649
        %1700 = vst.msk [vmem:[#allocation4 + $0x58] sm:$0xff] %vm1688, %v1651
        %1701 = vst.msk [vmem:[#allocation4 + $0x60] sm:$0xff] %vm1688, %v1653
        %1702 = vst.msk [vmem:[#allocation4 + $0x68] sm:$0xff] %vm1688, %v1655
        %1703 = vst.msk [vmem:[#allocation4 + $0x70] sm:$0xff] %vm1688, %v1657
        %1704 = vst.msk [vmem:[#allocation4 + $0x78] sm:$0xff] %vm1688, %v1659
        %1705 = vst.msk [vmem:[#allocation4 + $0x80] sm:$0xff] %vm1688, %v1661
        %1706 = vst.msk [vmem:[#allocation4 + $0x88] sm:$0xff] %vm1688, %v1663
        %1707 = vst.msk [vmem:[#allocation4 + $0x90] sm:$0xff] %vm1688, %v1665
        %1708 = vst.msk [vmem:[#allocation4 + $0x98] sm:$0xff] %vm1688, %v1667
        %v1709 = vld [vmem:[#allocation4] sm:$0xff]
        %v1710 = vld [vmem:[#allocation4 + $0x8] sm:$0xff]
        %v1711 = vld [vmem:[#allocation4 + $0x10] sm:$0xff]
        %v1712 = vld [vmem:[#allocation4 + $0x18] sm:$0xff]
        %v1713 = vld [vmem:[#allocation4 + $0x20] sm:$0xff]
        %v1714 = vld [vmem:[#allocation4 + $0x28] sm:$0xff]
        %v1715 = vld [vmem:[#allocation4 + $0x30] sm:$0xff]
        %v1716 = vld [vmem:[#allocation4 + $0x38] sm:$0xff]
        %v1717 = vld [vmem:[#allocation4 + $0x40] sm:$0xff]
        %v1718 = vld [vmem:[#allocation4 + $0x48] sm:$0xff]
        %v1719 = vld [vmem:[#allocation4 + $0x50] sm:$0xff]
        %v1720 = vld [vmem:[#allocation4 + $0x58] sm:$0xff]
        %v1721 = vld [vmem:[#allocation4 + $0x60] sm:$0xff]
        %v1722 = vld [vmem:[#allocation4 + $0x68] sm:$0xff]
        %v1723 = vld [vmem:[#allocation4 + $0x70] sm:$0xff]
        %v1724 = vld [vmem:[#allocation4 + $0x78] sm:$0xff]
        %v1725 = vld [vmem:[#allocation4 + $0x80] sm:$0xff]
        %v1726 = vld [vmem:[#allocation4 + $0x88] sm:$0xff]
        %v1727 = vld [vmem:[#allocation4 + $0x90] sm:$0xff]
        %v1728 = vld [vmem:[#allocation4 + $0x98] sm:$0xff]
        %v1729 = vld [vmem:[#allocation9] sm:$0xff]
        %v1730 = vld [vmem:[#allocation9 + $0x8] sm:$0xff]
        %v1731 = vld [vmem:[#allocation9 + $0x10] sm:$0xff]
        %v1732 = vld [vmem:[#allocation9 + $0x18] sm:$0xff]
        %v1733 = vld [vmem:[#allocation9 + $0x20] sm:$0xf]
        %vm1734 = vcmask 293888
        %v1736 = vsel %vm1734, %v1709, 0
        %v1739 = vsel %vm1734, %v1710, 0
        %v1742 = vsel %vm1734, %v1711, 0
        %v1745 = vsel %vm1734, %v1712, 0
        %v1748 = vsel %vm1734, %v1713, 0
        %v1751 = vsel %vm1734, %v1714, 0
        %v1754 = vsel %vm1734, %v1715, 0
        %v1757 = vsel %vm1734, %v1716, 0
        %v1760 = vsel %vm1734, %v1717, 0
        %v1763 = vsel %vm1734, %v1718, 0
        %v1766 = vsel %vm1734, %v1719, 0
        %v1769 = vsel %vm1734, %v1720, 0
        %v1772 = vsel %vm1734, %v1721, 0
        %v1775 = vsel %vm1734, %v1722, 0
        %v1778 = vsel %vm1734, %v1723, 0
        %v1781 = vsel %vm1734, %v1724, 0
        %v1784 = vsel %vm1734, %v1725, 0
        %v1787 = vsel %vm1734, %v1726, 0
        %v1790 = vsel %vm1734, %v1727, 0
        %v1793 = vsel %vm1734, %v1728, 0
        %vm1795 = vcmask 1043456
        %v1797 = vsel %vm1795, %v1733, 0
        %1799 = vmatprep.subr.mxu0 0.0
        %1800 = vmatpush1.msra.mxu0 %v1729
        %1801 = vmatprep.subr.mxu0 0.0
        %1802 = vmatpush1.msra.mxu0 %v1730
        %1803 = vmatprep.subr.mxu0 0.0
        %1804 = vmatpush1.msra.mxu0 %v1731
        %1805 = vmatprep.subr.mxu0 0.0
        %1806 = vmatpush1.msra.mxu0 %v1732
        %1807 = vmatprep.subr.mxu0 0.0
        %1808 = vmatpush1.msra.mxu0 %v1797
        %1809 = vmatprep.subr.mxu0 0.0
        %1810 = vmatpush1.msra.mxu0 0.0
        %1811 = vmatprep.subr.mxu0 0.0
        %1812 = vmatpush1.msra.mxu0 0.0
        %1813 = vmatprep.subr.mxu0 0.0
        %1814 = vmatpush1.msra.mxu0 0.0
        %1815 = vmatprep.subr.mxu0 0.0
        %1816 = vmatpush1.msra.mxu0 0.0
        %1817 = vmatprep.subr.mxu0 0.0
        %1818 = vmatpush1.msra.mxu0 0.0
        %1819 = vmatprep.subr.mxu0 0.0
        %1820 = vmatpush1.msra.mxu0 0.0
        %1821 = vmatprep.subr.mxu0 0.0
        %1822 = vmatpush1.msra.mxu0 0.0
        %1823 = vmatprep.subr.mxu0 0.0
        %1824 = vmatpush1.msra.mxu0 0.0
        %1825 = vmatprep.subr.mxu0 0.0
        %1826 = vmatpush1.msra.mxu0 0.0
        %1827 = vmatprep.subr.mxu0 0.0
        %1828 = vmatpush1.msra.mxu0 0.0
        %1829 = vmatprep.subr.mxu0 0.0
        %1830 = vmatpush1.msra.mxu0 0.0
        %1831 = vmatprep.subr.mxu0 0.0
        %1832 = vmatpush1.msra.mxu0 0.0
        %1833 = vmatprep.subr.mxu0 0.0
        %1834 = vmatpush1.msra.mxu0 0.0
        %1835 = vmatprep.subr.mxu0 0.0
        %1836 = vmatpush1.msra.mxu0 0.0
        %1837 = vmatprep.subr.mxu0 0.0
        %1838 = vmatpush1.msra.mxu0 0.0
        %1839 = vmatprep.subr.mxu0 0.0
        %1840 = vmatpush1.msra.mxu0 0.0
        %1841 = vmatprep.subr.mxu0 0.0
        %1842 = vmatpush1.msra.mxu0 0.0
        %1843 = vmatprep.subr.mxu0 0.0
        %1844 = vmatpush1.msra.mxu0 0.0
        %1845 = vmatprep.subr.mxu0 0.0
        %1846 = vmatpush1.msra.mxu0 0.0
        %1847 = vmatprep.subr.mxu0 0.0
        %1848 = vmatpush1.msra.mxu0 0.0
        %1849 = vmatprep.subr.mxu0 0.0
        %1850 = vmatpush1.msra.mxu0 0.0
        %1851 = vmatprep.subr.mxu0 0.0
        %1852 = vmatpush1.msra.mxu0 0.0
        %1853 = vmatprep.subr.mxu0 0.0
        %1854 = vmatpush1.msra.mxu0 0.0
        %1855 = vmatprep.subr.mxu0 0.0
        %1856 = vmatpush1.msra.mxu0 0.0
        %1857 = vmatprep.subr.mxu0 0.0
        %1858 = vmatpush1.msra.mxu0 0.0
        %1859 = vmatprep.subr.mxu0 0.0
        %1860 = vmatpush1.msra.mxu0 0.0
        %1861 = vmatprep.subr.mxu0 0.0
        %1862 = vmatpush1.msra.mxu0 0.0
        %1863 = vmatprep.mubr.f32.mxu0 0.0
        %1864 = vmatmul.mubr.f32.gmra.mrb[0].mxu0 %v1736
        %v1865 = vpop.f32.mrb[0].mxu0
        %v1866 = vadd.f32 0.0, %v1865
        %v1867 = vpop.f32.mrb[0].mxu0
        %1868 = vmatprep.mubr.f32.mxu0 0.0
        %1869 = vmatmul.mubr.f32.gmra.mrb[0].mxu0 %v1739
        %v1870 = vpop.f32.mrb[0].mxu0
        %v1871 = vadd.f32 0.0, %v1870
        %v1872 = vpop.f32.mrb[0].mxu0
        %1873 = vmatprep.mubr.f32.mxu0 0.0
        %1874 = vmatmul.mubr.f32.gmra.mrb[0].mxu0 %v1742
        %v1875 = vpop.f32.mrb[0].mxu0
        %v1876 = vadd.f32 0.0, %v1875
        %v1877 = vpop.f32.mrb[0].mxu0
        %1878 = vmatprep.mubr.f32.mxu0 0.0
        %1879 = vmatmul.mubr.f32.gmra.mrb[0].mxu0 %v1745
        %v1880 = vpop.f32.mrb[0].mxu0
        %v1881 = vadd.f32 0.0, %v1880
        %v1882 = vpop.f32.mrb[0].mxu0
        %1883 = vmatprep.mubr.f32.mxu0 0.0
        %1884 = vmatmul.mubr.f32.gmra.mrb[0].mxu0 %v1748
        %v1885 = vpop.f32.mrb[0].mxu0
        %v1886 = vadd.f32 0.0, %v1885
        %v1887 = vpop.f32.mrb[0].mxu0
        %1888 = vmatprep.mubr.f32.mxu0 0.0
        %1889 = vmatmul.mubr.f32.gmra.mrb[0].mxu0 %v1751
        %v1890 = vpop.f32.mrb[0].mxu0
        %v1891 = vadd.f32 0.0, %v1890
        %v1892 = vpop.f32.mrb[0].mxu0
        %1893 = vmatprep.mubr.f32.mxu0 0.0
        %1894 = vmatmul.mubr.f32.gmra.mrb[0].mxu0 %v1754
        %v1895 = vpop.f32.mrb[0].mxu0
        %v1896 = vadd.f32 0.0, %v1895
        %v1897 = vpop.f32.mrb[0].mxu0
        %1898 = vmatprep.mubr.f32.mxu0 0.0
        %1899 = vmatmul.mubr.f32.gmra.mrb[0].mxu0 %v1757
        %v1900 = vpop.f32.mrb[0].mxu0
        %v1901 = vadd.f32 0.0, %v1900
        %v1902 = vpop.f32.mrb[0].mxu0
        %1903 = vmatprep.mubr.f32.mxu0 0.0
        %1904 = vmatmul.mubr.f32.gmra.mrb[0].mxu0 %v1760
        %v1905 = vpop.f32.mrb[0].mxu0
        %v1906 = vadd.f32 0.0, %v1905
        %v1907 = vpop.f32.mrb[0].mxu0
        %1908 = vmatprep.mubr.f32.mxu0 0.0
        %1909 = vmatmul.mubr.f32.gmra.mrb[0].mxu0 %v1763
        %v1910 = vpop.f32.mrb[0].mxu0
        %v1911 = vadd.f32 0.0, %v1910
        %v1912 = vpop.f32.mrb[0].mxu0
        %1913 = vmatprep.mubr.f32.mxu0 0.0
        %1914 = vmatmul.mubr.f32.gmra.mrb[0].mxu0 %v1766
        %v1915 = vpop.f32.mrb[0].mxu0
        %v1916 = vadd.f32 0.0, %v1915
        %v1917 = vpop.f32.mrb[0].mxu0
        %1918 = vmatprep.mubr.f32.mxu0 0.0
        %1919 = vmatmul.mubr.f32.gmra.mrb[0].mxu0 %v1769
        %v1920 = vpop.f32.mrb[0].mxu0
        %v1921 = vadd.f32 0.0, %v1920
        %v1922 = vpop.f32.mrb[0].mxu0
        %1923 = vmatprep.mubr.f32.mxu0 0.0
        %1924 = vmatmul.mubr.f32.gmra.mrb[0].mxu0 %v1772
        %v1925 = vpop.f32.mrb[0].mxu0
        %v1926 = vadd.f32 0.0, %v1925
        %v1927 = vpop.f32.mrb[0].mxu0
        %1928 = vmatprep.mubr.f32.mxu0 0.0
        %1929 = vmatmul.mubr.f32.gmra.mrb[0].mxu0 %v1775
        %v1930 = vpop.f32.mrb[0].mxu0
        %v1931 = vadd.f32 0.0, %v1930
        %v1932 = vpop.f32.mrb[0].mxu0
        %1933 = vmatprep.mubr.f32.mxu0 0.0
        %1934 = vmatmul.mubr.f32.gmra.mrb[0].mxu0 %v1778
        %v1935 = vpop.f32.mrb[0].mxu0
        %v1936 = vadd.f32 0.0, %v1935
        %v1937 = vpop.f32.mrb[0].mxu0
        %1938 = vmatprep.mubr.f32.mxu0 0.0
        %1939 = vmatmul.mubr.f32.gmra.mrb[0].mxu0 %v1781
        %v1940 = vpop.f32.mrb[0].mxu0
        %v1941 = vadd.f32 0.0, %v1940
        %v1942 = vpop.f32.mrb[0].mxu0
        %1943 = vmatprep.mubr.f32.mxu0 0.0
        %1944 = vmatmul.mubr.f32.gmra.mrb[0].mxu0 %v1784
        %v1945 = vpop.f32.mrb[0].mxu0
        %v1946 = vadd.f32 0.0, %v1945
        %v1947 = vpop.f32.mrb[0].mxu0
        %1948 = vmatprep.mubr.f32.mxu0 0.0
        %1949 = vmatmul.mubr.f32.gmra.mrb[0].mxu0 %v1787
        %v1950 = vpop.f32.mrb[0].mxu0
        %v1951 = vadd.f32 0.0, %v1950
        %v1952 = vpop.f32.mrb[0].mxu0
        %1953 = vmatprep.mubr.f32.mxu0 0.0
        %1954 = vmatmul.mubr.f32.gmra.mrb[0].mxu0 %v1790
        %v1955 = vpop.f32.mrb[0].mxu0
        %v1956 = vadd.f32 0.0, %v1955
        %v1957 = vpop.f32.mrb[0].mxu0
        %1958 = vmatprep.mubr.f32.mxu0 0.0
        %1959 = vmatmul.mubr.f32.gmra.mrb[0].mxu0 %v1793
        %v1960 = vpop.f32.mrb[0].mxu0
        %v1961 = vadd.f32 0.0, %v1960
        %v1962 = vpop.f32.mrb[0].mxu0
        %1963 = vdwg.mxu0
        %v1964 = vld [vmem:[#allocation11] sm:$0x1]
        %v1966 = vlaneseq
        %v1967 = vshrl.u32 %v1966, 7
        %v1968 = vsub.s32 0, %v1967
        %v1969 = vrot.slane %v1964, %v1968
        %v1971 = vmul.f32 %v1866, %v1969
        %v1972 = vmul.f32 %v1871, %v1969
        %v1973 = vmul.f32 %v1876, %v1969
        %v1974 = vmul.f32 %v1881, %v1969
        %v1975 = vmul.f32 %v1886, %v1969
        %v1976 = vmul.f32 %v1891, %v1969
        %v1977 = vmul.f32 %v1896, %v1969
        %v1978 = vmul.f32 %v1901, %v1969
        %v1979 = vmul.f32 %v1906, %v1969
        %v1980 = vmul.f32 %v1911, %v1969
        %v1981 = vmul.f32 %v1916, %v1969
        %v1982 = vmul.f32 %v1921, %v1969
        %v1983 = vmul.f32 %v1926, %v1969
        %v1984 = vmul.f32 %v1931, %v1969
        %v1985 = vmul.f32 %v1936, %v1969
        %v1986 = vmul.f32 %v1941, %v1969
        %v1987 = vmul.f32 %v1946, %v1969
        %v1988 = vmul.f32 %v1951, %v1969
        %v1989 = vmul.f32 %v1956, %v1969
        %v1990 = vmul.f32 %v1961, %v1969
        %v1991 = vld [vmem:[#allocation12] sm:$0x1]
        %v1993 = vlaneseq
        %v1994 = vshrl.u32 %v1993, 7
        %v1995 = vsub.s32 0, %v1994
        %v1996 = vrot.slane %v1991, %v1995
        %v1998 = vadd.f32 %v1971, %v1996
        %v1999 = vadd.f32 %v1972, %v1996
        %v2000 = vadd.f32 %v1973, %v1996
        %v2001 = vadd.f32 %v1974, %v1996
        %v2002 = vadd.f32 %v1975, %v1996
        %v2003 = vadd.f32 %v1976, %v1996
        %v2004 = vadd.f32 %v1977, %v1996
        %v2005 = vadd.f32 %v1978, %v1996
        %v2006 = vadd.f32 %v1979, %v1996
        %v2007 = vadd.f32 %v1980, %v1996
        %v2008 = vadd.f32 %v1981, %v1996
        %v2009 = vadd.f32 %v1982, %v1996
        %v2010 = vadd.f32 %v1983, %v1996
        %v2011 = vadd.f32 %v1984, %v1996
        %v2012 = vadd.f32 %v1985, %v1996
        %v2013 = vadd.f32 %v1986, %v1996
        %v2014 = vadd.f32 %v1987, %v1996
        %v2015 = vadd.f32 %v1988, %v1996
        %v2016 = vadd.f32 %v1989, %v1996
        %v2017 = vadd.f32 %v1990, %v1996
        %v2018 = vmax.f32 %v1998, 0.0
        %v2019 = vmax.f32 %v1999, 0.0
        %v2020 = vmax.f32 %v2000, 0.0
        %v2021 = vmax.f32 %v2001, 0.0
        %v2022 = vmax.f32 %v2002, 0.0
        %v2023 = vmax.f32 %v2003, 0.0
        %v2024 = vmax.f32 %v2004, 0.0
        %v2025 = vmax.f32 %v2005, 0.0
        %v2026 = vmax.f32 %v2006, 0.0
        %v2027 = vmax.f32 %v2007, 0.0
        %v2028 = vmax.f32 %v2008, 0.0
        %v2029 = vmax.f32 %v2009, 0.0
        %v2030 = vmax.f32 %v2010, 0.0
        %v2031 = vmax.f32 %v2011, 0.0
        %v2032 = vmax.f32 %v2012, 0.0
        %v2033 = vmax.f32 %v2013, 0.0
        %v2034 = vmax.f32 %v2014, 0.0
        %v2035 = vmax.f32 %v2015, 0.0
        %v2036 = vmax.f32 %v2016, 0.0
        %v2037 = vmax.f32 %v2017, 0.0
        %s2038 = smul.u32 %s37, 8
        %s2039 = smul.u32 %s2038, 16
        %s2040 = scalar_lea.vmem %s436, %s2039 [#allocation6]
        %v2041 = vld [vmem:[%s2040] sm:$0xff]
        %v2042 = vld [vmem:[%s2040 + $0x8] sm:$0xff]
        %v2043 = vld [vmem:[%s2040 + $0x10] sm:$0xff]
        %v2044 = vld [vmem:[%s2040 + $0x18] sm:$0xff]
        %v2045 = vld [vmem:[%s2040 + $0x20] sm:$0xff]
        %v2046 = vld [vmem:[%s2040 + $0x28] sm:$0xff]
        %v2047 = vld [vmem:[%s2040 + $0x30] sm:$0xff]
        %v2048 = vld [vmem:[%s2040 + $0x38] sm:$0xff]
        %v2049 = vld [vmem:[%s2040 + $0x40] sm:$0xff]
        %v2050 = vld [vmem:[%s2040 + $0x48] sm:$0xff]
        %v2051 = vld [vmem:[%s2040 + $0x50] sm:$0xff]
        %v2052 = vld [vmem:[%s2040 + $0x58] sm:$0xff]
        %v2053 = vld [vmem:[%s2040 + $0x60] sm:$0xff]
        %v2054 = vld [vmem:[%s2040 + $0x68] sm:$0xff]
        %v2055 = vld [vmem:[%s2040 + $0x70] sm:$0xff]
        %v2056 = vld [vmem:[%s2040 + $0x78] sm:$0xff]
        %v2057 = vld [vmem:[#allocation18] sm:$0xf]
        %v2059 = vsel %vm510, %v2041, 0
        %v2062 = vsel %vm510, %v2042, 0
        %v2065 = vsel %vm510, %v2043, 0
        %v2068 = vsel %vm510, %v2044, 0
        %v2071 = vsel %vm510, %v2045, 0
        %v2074 = vsel %vm510, %v2046, 0
        %v2077 = vsel %vm510, %v2047, 0
        %v2080 = vsel %vm510, %v2048, 0
        %v2083 = vsel %vm510, %v2049, 0
        %v2086 = vsel %vm510, %v2050, 0
        %v2089 = vsel %vm510, %v2051, 0
        %v2092 = vsel %vm510, %v2052, 0
        %v2095 = vsel %vm510, %v2053, 0
        %v2098 = vsel %vm510, %v2054, 0
        %v2101 = vsel %vm510, %v2055, 0
        %v2104 = vsel %vm510, %v2056, 0
        %v2107 = vsel %vm1795, %v2057, 0
        %2109 = vmatprep.subr.mxu0 0.0
        %2110 = vmatpush1.msra.mxu0 %v2107
        %2111 = vmatprep.subr.mxu0 0.0
        %2112 = vmatpush1.msra.mxu0 0.0
        %2113 = vmatprep.subr.mxu0 0.0
        %2114 = vmatpush1.msra.mxu0 0.0
        %2115 = vmatprep.subr.mxu0 0.0
        %2116 = vmatpush1.msra.mxu0 0.0
        %2117 = vmatprep.subr.mxu0 0.0
        %2118 = vmatpush1.msra.mxu0 0.0
        %2119 = vmatprep.subr.mxu0 0.0
        %2120 = vmatpush1.msra.mxu0 0.0
        %2121 = vmatprep.subr.mxu0 0.0
        %2122 = vmatpush1.msra.mxu0 0.0
        %2123 = vmatprep.subr.mxu0 0.0
        %2124 = vmatpush1.msra.mxu0 0.0
        %2125 = vmatprep.subr.mxu0 0.0
        %2126 = vmatpush1.msra.mxu0 0.0
        %2127 = vmatprep.subr.mxu0 0.0
        %2128 = vmatpush1.msra.mxu0 0.0
        %2129 = vmatprep.subr.mxu0 0.0
        %2130 = vmatpush1.msra.mxu0 0.0
        %2131 = vmatprep.subr.mxu0 0.0
        %2132 = vmatpush1.msra.mxu0 0.0
        %2133 = vmatprep.subr.mxu0 0.0
        %2134 = vmatpush1.msra.mxu0 0.0
        %2135 = vmatprep.subr.mxu0 0.0
        %2136 = vmatpush1.msra.mxu0 0.0
        %2137 = vmatprep.subr.mxu0 0.0
        %2138 = vmatpush1.msra.mxu0 0.0
        %2139 = vmatprep.subr.mxu0 0.0
        %2140 = vmatpush1.msra.mxu0 0.0
        %2141 = vmatprep.subr.mxu0 0.0
        %2142 = vmatpush1.msra.mxu0 0.0
        %2143 = vmatprep.subr.mxu0 0.0
        %2144 = vmatpush1.msra.mxu0 0.0
        %2145 = vmatprep.subr.mxu0 0.0
        %2146 = vmatpush1.msra.mxu0 0.0
        %2147 = vmatprep.subr.mxu0 0.0
        %2148 = vmatpush1.msra.mxu0 0.0
        %2149 = vmatprep.subr.mxu0 0.0
        %2150 = vmatpush1.msra.mxu0 0.0
        %2151 = vmatprep.subr.mxu0 0.0
        %2152 = vmatpush1.msra.mxu0 0.0
        %2153 = vmatprep.subr.mxu0 0.0
        %2154 = vmatpush1.msra.mxu0 0.0
        %2155 = vmatprep.subr.mxu0 0.0
        %2156 = vmatpush1.msra.mxu0 0.0
        %2157 = vmatprep.subr.mxu0 0.0
        %2158 = vmatpush1.msra.mxu0 0.0
        %2159 = vmatprep.subr.mxu0 0.0
        %2160 = vmatpush1.msra.mxu0 0.0
        %2161 = vmatprep.subr.mxu0 0.0
        %2162 = vmatpush1.msra.mxu0 0.0
        %2163 = vmatprep.subr.mxu0 0.0
        %2164 = vmatpush1.msra.mxu0 0.0
        %2165 = vmatprep.subr.mxu0 0.0
        %2166 = vmatpush1.msra.mxu0 0.0
        %2167 = vmatprep.subr.mxu0 0.0
        %2168 = vmatpush1.msra.mxu0 0.0
        %2169 = vmatprep.subr.mxu0 0.0
        %2170 = vmatpush1.msra.mxu0 0.0
        %2171 = vmatprep.subr.mxu0 0.0
        %2172 = vmatpush1.msra.mxu0 0.0
        %2173 = vmatprep.mubr.f32.mxu0 0.0
        %2174 = vmatmul.mubr.f32.gmra.mrb[0].mxu0 %v2059
        %v2175 = vpop.f32.mrb[0].mxu0
        %v2176 = vadd.f32 0.0, %v2175
        %v2177 = vpop.f32.mrb[0].mxu0
        %2178 = vmatprep.mubr.f32.mxu0 0.0
        %2179 = vmatmul.mubr.f32.gmra.mrb[0].mxu0 %v2062
        %v2180 = vpop.f32.mrb[0].mxu0
        %v2181 = vadd.f32 0.0, %v2180
        %v2182 = vpop.f32.mrb[0].mxu0
        %2183 = vmatprep.mubr.f32.mxu0 0.0
        %2184 = vmatmul.mubr.f32.gmra.mrb[0].mxu0 %v2065
        %v2185 = vpop.f32.mrb[0].mxu0
        %v2186 = vadd.f32 0.0, %v2185
        %v2187 = vpop.f32.mrb[0].mxu0
        %2188 = vmatprep.mubr.f32.mxu0 0.0
        %2189 = vmatmul.mubr.f32.gmra.mrb[0].mxu0 %v2068
        %v2190 = vpop.f32.mrb[0].mxu0
        %v2191 = vadd.f32 0.0, %v2190
        %v2192 = vpop.f32.mrb[0].mxu0
        %2193 = vmatprep.mubr.f32.mxu0 0.0
        %2194 = vmatmul.mubr.f32.gmra.mrb[0].mxu0 %v2071
        %v2195 = vpop.f32.mrb[0].mxu0
        %v2196 = vadd.f32 0.0, %v2195
        %v2197 = vpop.f32.mrb[0].mxu0
        %2198 = vmatprep.mubr.f32.mxu0 0.0
        %2199 = vmatmul.mubr.f32.gmra.mrb[0].mxu0 %v2074
        %v2200 = vpop.f32.mrb[0].mxu0
        %v2201 = vadd.f32 0.0, %v2200
        %v2202 = vpop.f32.mrb[0].mxu0
        %2203 = vmatprep.mubr.f32.mxu0 0.0
        %2204 = vmatmul.mubr.f32.gmra.mrb[0].mxu0 %v2077
        %v2205 = vpop.f32.mrb[0].mxu0
        %v2206 = vadd.f32 0.0, %v2205
        %v2207 = vpop.f32.mrb[0].mxu0
        %2208 = vmatprep.mubr.f32.mxu0 0.0
        %2209 = vmatmul.mubr.f32.gmra.mrb[0].mxu0 %v2080
        %v2210 = vpop.f32.mrb[0].mxu0
        %v2211 = vadd.f32 0.0, %v2210
        %v2212 = vpop.f32.mrb[0].mxu0
        %2213 = vmatprep.mubr.f32.mxu0 0.0
        %2214 = vmatmul.mubr.f32.gmra.mrb[0].mxu0 %v2083
        %v2215 = vpop.f32.mrb[0].mxu0
        %v2216 = vadd.f32 0.0, %v2215
        %v2217 = vpop.f32.mrb[0].mxu0
        %2218 = vmatprep.mubr.f32.mxu0 0.0
        %2219 = vmatmul.mubr.f32.gmra.mrb[0].mxu0 %v2086
        %v2220 = vpop.f32.mrb[0].mxu0
        %v2221 = vadd.f32 0.0, %v2220
        %v2222 = vpop.f32.mrb[0].mxu0
        %2223 = vmatprep.mubr.f32.mxu0 0.0
        %2224 = vmatmul.mubr.f32.gmra.mrb[0].mxu0 %v2089
        %v2225 = vpop.f32.mrb[0].mxu0
        %v2226 = vadd.f32 0.0, %v2225
        %v2227 = vpop.f32.mrb[0].mxu0
        %2228 = vmatprep.mubr.f32.mxu0 0.0
        %2229 = vmatmul.mubr.f32.gmra.mrb[0].mxu0 %v2092
        %v2230 = vpop.f32.mrb[0].mxu0
        %v2231 = vadd.f32 0.0, %v2230
        %v2232 = vpop.f32.mrb[0].mxu0
        %2233 = vmatprep.mubr.f32.mxu0 0.0
        %2234 = vmatmul.mubr.f32.gmra.mrb[0].mxu0 %v2095
        %v2235 = vpop.f32.mrb[0].mxu0
        %v2236 = vadd.f32 0.0, %v2235
        %v2237 = vpop.f32.mrb[0].mxu0
        %2238 = vmatprep.mubr.f32.mxu0 0.0
        %2239 = vmatmul.mubr.f32.gmra.mrb[0].mxu0 %v2098
        %v2240 = vpop.f32.mrb[0].mxu0
        %v2241 = vadd.f32 0.0, %v2240
        %v2242 = vpop.f32.mrb[0].mxu0
        %2243 = vmatprep.mubr.f32.mxu0 0.0
        %2244 = vmatmul.mubr.f32.gmra.mrb[0].mxu0 %v2101
        %v2245 = vpop.f32.mrb[0].mxu0
        %v2246 = vadd.f32 0.0, %v2245
        %v2247 = vpop.f32.mrb[0].mxu0
        %2248 = vmatprep.mubr.f32.mxu0 0.0
        %2249 = vmatmul.mubr.f32.gmra.mrb[0].mxu0 %v2104
        %v2250 = vpop.f32.mrb[0].mxu0
        %v2251 = vadd.f32 0.0, %v2250
        %v2252 = vpop.f32.mrb[0].mxu0
        %2253 = vdwg.mxu0
        %v2254 = vld [vmem:[#allocation20] sm:$0x1]
        %v2256 = vlaneseq
        %v2257 = vshrl.u32 %v2256, 7
        %v2258 = vsub.s32 0, %v2257
        %v2259 = vrot.slane %v2254, %v2258
        %v2261 = vmul.f32 %v2176, %v2259
        %v2262 = vmul.f32 %v2181, %v2259
        %v2263 = vmul.f32 %v2186, %v2259
        %v2264 = vmul.f32 %v2191, %v2259
        %v2265 = vmul.f32 %v2196, %v2259
        %v2266 = vmul.f32 %v2201, %v2259
        %v2267 = vmul.f32 %v2206, %v2259
        %v2268 = vmul.f32 %v2211, %v2259
        %v2269 = vmul.f32 %v2216, %v2259
        %v2270 = vmul.f32 %v2221, %v2259
        %v2271 = vmul.f32 %v2226, %v2259
        %v2272 = vmul.f32 %v2231, %v2259
        %v2273 = vmul.f32 %v2236, %v2259
        %v2274 = vmul.f32 %v2241, %v2259
        %v2275 = vmul.f32 %v2246, %v2259
        %v2276 = vmul.f32 %v2251, %v2259
        %v2277 = vld [vmem:[#allocation21] sm:$0x1]
        %v2279 = vlaneseq
        %v2280 = vshrl.u32 %v2279, 7
        %v2281 = vsub.s32 0, %v2280
        %v2282 = vrot.slane %v2277, %v2281
        %v2284 = vadd.f32 %v2261, %v2282
        %v2285 = vadd.f32 %v2262, %v2282
        %v2286 = vadd.f32 %v2263, %v2282
        %v2287 = vadd.f32 %v2264, %v2282
        %v2288 = vadd.f32 %v2265, %v2282
        %v2289 = vadd.f32 %v2266, %v2282
        %v2290 = vadd.f32 %v2267, %v2282
        %v2291 = vadd.f32 %v2268, %v2282
        %v2292 = vadd.f32 %v2269, %v2282
        %v2293 = vadd.f32 %v2270, %v2282
        %v2294 = vadd.f32 %v2271, %v2282
        %v2295 = vadd.f32 %v2272, %v2282
        %v2296 = vadd.f32 %v2273, %v2282
        %v2297 = vadd.f32 %v2274, %v2282
        %v2298 = vadd.f32 %v2275, %v2282
        %v2299 = vadd.f32 %v2276, %v2282
        %vm2300 = vcmask 64512
        %2301 = vst.msk [vmem:[#allocation3] sm:$0xff] %vm2300, 0.0
        %2302 = vst.msk [vmem:[#allocation3 + $0x8] sm:$0xff] %vm2300, 0.0
        %vm2303 = vcmask 58368
        %2304 = vst.msk [vmem:[#allocation3 + $0x10] sm:$0x3] %vm2303, 0.0
        %2305 = vst.msk [vmem:[#allocation3 + $0x18] sm:$0xff] %vm2300, 0.0
        %2306 = vst.msk [vmem:[#allocation3 + $0x20] sm:$0xff] %vm2300, 0.0
        %2307 = vst.msk [vmem:[#allocation3 + $0x28] sm:$0x3] %vm2303, 0.0
        %2308 = vst.msk [vmem:[#allocation3 + $0x30] sm:$0xff] %vm2300, 0.0
        %2309 = vst.msk [vmem:[#allocation3 + $0x38] sm:$0xff] %vm2300, 0.0
        %2310 = vst.msk [vmem:[#allocation3 + $0x40] sm:$0x3] %vm2303, 0.0
        %2311 = vst.msk [vmem:[#allocation3 + $0x48] sm:$0xff] %vm2300, 0.0
        %2312 = vst.msk [vmem:[#allocation3 + $0x50] sm:$0xff] %vm2300, 0.0
        %2313 = vst.msk [vmem:[#allocation3 + $0x58] sm:$0x3] %vm2303, 0.0
        %2314 = vst.msk [vmem:[#allocation3 + $0x60] sm:$0xff] %vm2300, 0.0
        %2315 = vst.msk [vmem:[#allocation3 + $0x68] sm:$0xff] %vm2300, 0.0
        %2316 = vst.msk [vmem:[#allocation3 + $0x70] sm:$0x3] %vm2303, 0.0
        %2317 = vst.msk [vmem:[#allocation3 + $0x78] sm:$0xff] %vm2300, 0.0
        %2318 = vst.msk [vmem:[#allocation3 + $0x80] sm:$0xff] %vm2300, 0.0
        %2319 = vst.msk [vmem:[#allocation3 + $0x88] sm:$0x3] %vm2303, 0.0
        %2320 = vst.msk [vmem:[#allocation3 + $0x90] sm:$0xff] %vm2300, 0.0
        %2321 = vst.msk [vmem:[#allocation3 + $0x98] sm:$0xff] %vm2300, 0.0
        %2322 = vst.msk [vmem:[#allocation3 + $0xa0] sm:$0x3] %vm2303, 0.0
        %2323 = vst.msk [vmem:[#allocation3 + $0xa8] sm:$0xff] %vm2300, 0.0
        %2324 = vst.msk [vmem:[#allocation3 + $0xb0] sm:$0xff] %vm2300, 0.0
        %2325 = vst.msk [vmem:[#allocation3 + $0xb8] sm:$0x3] %vm2303, 0.0
        %2326 = vst.msk [vmem:[#allocation3 + $0xc0] sm:$0xff] %vm2300, 0.0
        %2327 = vst.msk [vmem:[#allocation3 + $0xc8] sm:$0xff] %vm2300, 0.0
        %2328 = vst.msk [vmem:[#allocation3 + $0xd0] sm:$0x3] %vm2303, 0.0
        %2329 = vst.msk [vmem:[#allocation3 + $0xd8] sm:$0xff] %vm2300, 0.0
        %2330 = vst.msk [vmem:[#allocation3 + $0xe0] sm:$0xff] %vm2300, 0.0
        %2331 = vst.msk [vmem:[#allocation3 + $0xe8] sm:$0x3] %vm2303, 0.0
        %2332 = vst.msk [vmem:[#allocation3 + $0x1] sm:$0xff] %vm2300, %v2018
        %2333 = vst.msk [vmem:[#allocation3 + $0x9] sm:$0xff] %vm2300, %v2019
        %2334 = vst.msk [vmem:[#allocation3 + $0x19] sm:$0xff] %vm2300, %v2020
        %2335 = vst.msk [vmem:[#allocation3 + $0x21] sm:$0xff] %vm2300, %v2021
        %2336 = vst.msk [vmem:[#allocation3 + $0x31] sm:$0xff] %vm2300, %v2022
        %2337 = vst.msk [vmem:[#allocation3 + $0x39] sm:$0xff] %vm2300, %v2023
        %2338 = vst.msk [vmem:[#allocation3 + $0x49] sm:$0xff] %vm2300, %v2024
        %2339 = vst.msk [vmem:[#allocation3 + $0x51] sm:$0xff] %vm2300, %v2025
        %2340 = vst.msk [vmem:[#allocation3 + $0x61] sm:$0xff] %vm2300, %v2026
        %2341 = vst.msk [vmem:[#allocation3 + $0x69] sm:$0xff] %vm2300, %v2027
        %2342 = vst.msk [vmem:[#allocation3 + $0x79] sm:$0xff] %vm2300, %v2028
        %2343 = vst.msk [vmem:[#allocation3 + $0x81] sm:$0xff] %vm2300, %v2029
        %2344 = vst.msk [vmem:[#allocation3 + $0x91] sm:$0xff] %vm2300, %v2030
        %2345 = vst.msk [vmem:[#allocation3 + $0x99] sm:$0xff] %vm2300, %v2031
        %2346 = vst.msk [vmem:[#allocation3 + $0xa9] sm:$0xff] %vm2300, %v2032
        %2347 = vst.msk [vmem:[#allocation3 + $0xb1] sm:$0xff] %vm2300, %v2033
        %2348 = vst.msk [vmem:[#allocation3 + $0xc1] sm:$0xff] %vm2300, %v2034
        %2349 = vst.msk [vmem:[#allocation3 + $0xc9] sm:$0xff] %vm2300, %v2035
        %2350 = vst.msk [vmem:[#allocation3 + $0xd9] sm:$0xff] %vm2300, %v2036
        %2351 = vst.msk [vmem:[#allocation3 + $0xe1] sm:$0xff] %vm2300, %v2037
        // Predicated region
        $region113: #{tpu_custom_call.1} parent=59 // pred_check
          %p2352 = pneg %p548
        $region114: #{tpu_custom_call.1} parent=59 // pred_check_branch
          %2354 = sbr.rel (%p2352) target = $region116
        $region115: #{tpu_custom_call.1} parent=59 // pred_region
          %2355 = vst.msk [vmem:[#allocation3] sm:$0xff] %vm2300, 0.0
          %2356 = vst.msk [vmem:[#allocation3 + $0x8] sm:$0xff] %vm2300, 0.0
          %2357 = vst.msk [vmem:[#allocation3 + $0x10] sm:$0x3] %vm2303, 0.0
        $region116: #{tpu_custom_call.1} parent=59 // pred_fallthru
          _
        // Predicated region
        $region117: #{tpu_custom_call.1} parent=59 // pred_check
          %p2358 = pneg %p651
        $region118: #{tpu_custom_call.1} parent=59 // pred_check_branch
          %2360 = sbr.rel (%p2358) target = $region120
        $region119: #{tpu_custom_call.1} parent=59 // pred_region
          %s2361 = scalar_lea.vmem [#allocation3], 216
          %2362 = vst.msk [vmem:[%s2361] sm:$0xff] %vm2300, 0.0
          %2363 = vst.msk [vmem:[%s2361 + $0x8] sm:$0xff] %vm2300, 0.0
          %2364 = vst.msk [vmem:[%s2361 + $0x10] sm:$0x3] %vm2303, 0.0
        $region120: #{tpu_custom_call.1} parent=59 // pred_fallthru
          _
        %v2365 = vld [vmem:[#allocation3] sm:$0xff]
        %v2366 = vld [vmem:[#allocation3 + $0x8] sm:$0xff]
        %v2367 = vld [vmem:[#allocation3 + $0x18] sm:$0xff]
        %v2368 = vld [vmem:[#allocation3 + $0x20] sm:$0xff]
        %v2369 = vld [vmem:[#allocation3 + $0x30] sm:$0xff]
        %v2370 = vld [vmem:[#allocation3 + $0x38] sm:$0xff]
        %v2371 = vld [vmem:[#allocation3 + $0x48] sm:$0xff]
        %v2372 = vld [vmem:[#allocation3 + $0x50] sm:$0xff]
        %v2373 = vld [vmem:[#allocation3 + $0x60] sm:$0xff]
        %v2374 = vld [vmem:[#allocation3 + $0x68] sm:$0xff]
        %v2375 = vld [vmem:[#allocation3 + $0x78] sm:$0xff]
        %v2376 = vld [vmem:[#allocation3 + $0x80] sm:$0xff]
        %v2377 = vld [vmem:[#allocation3 + $0x90] sm:$0xff]
        %v2378 = vld [vmem:[#allocation3 + $0x98] sm:$0xff]
        %v2379 = vld [vmem:[#allocation3 + $0xa8] sm:$0xff]
        %v2380 = vld [vmem:[#allocation3 + $0xb0] sm:$0xff]
        %2381 = vst.msk [vmem:[#allocation5] sm:$0xff] %vm2300, %v2365
        %2382 = vst.msk [vmem:[#allocation5 + $0x8] sm:$0xff] %vm2300, %v2366
        %2383 = vst.msk [vmem:[#allocation5 + $0x10] sm:$0xff] %vm2300, %v2367
        %2384 = vst.msk [vmem:[#allocation5 + $0x18] sm:$0xff] %vm2300, %v2368
        %2385 = vst.msk [vmem:[#allocation5 + $0x20] sm:$0xff] %vm2300, %v2369
        %2386 = vst.msk [vmem:[#allocation5 + $0x28] sm:$0xff] %vm2300, %v2370
        %2387 = vst.msk [vmem:[#allocation5 + $0x30] sm:$0xff] %vm2300, %v2371
        %2388 = vst.msk [vmem:[#allocation5 + $0x38] sm:$0xff] %vm2300, %v2372
        %2389 = vst.msk [vmem:[#allocation5 + $0x40] sm:$0xff] %vm2300, %v2373
        %2390 = vst.msk [vmem:[#allocation5 + $0x48] sm:$0xff] %vm2300, %v2374
        %2391 = vst.msk [vmem:[#allocation5 + $0x50] sm:$0xff] %vm2300, %v2375
        %2392 = vst.msk [vmem:[#allocation5 + $0x58] sm:$0xff] %vm2300, %v2376
        %2393 = vst.msk [vmem:[#allocation5 + $0x60] sm:$0xff] %vm2300, %v2377
        %2394 = vst.msk [vmem:[#allocation5 + $0x68] sm:$0xff] %vm2300, %v2378
        %2395 = vst.msk [vmem:[#allocation5 + $0x70] sm:$0xff] %vm2300, %v2379
        %2396 = vst.msk [vmem:[#allocation5 + $0x78] sm:$0xff] %vm2300, %v2380
        %v2397 = vld [vmem:[#allocation3 + $0x1] sm:$0xff]
        %v2398 = vld [vmem:[#allocation3 + $0x9] sm:$0xff]
        %v2399 = vld [vmem:[#allocation3 + $0x19] sm:$0xff]
        %v2400 = vld [vmem:[#allocation3 + $0x21] sm:$0xff]
        %v2401 = vld [vmem:[#allocation3 + $0x31] sm:$0xff]
        %v2402 = vld [vmem:[#allocation3 + $0x39] sm:$0xff]
        %v2403 = vld [vmem:[#allocation3 + $0x49] sm:$0xff]
        %v2404 = vld [vmem:[#allocation3 + $0x51] sm:$0xff]
        %v2405 = vld [vmem:[#allocation3 + $0x61] sm:$0xff]
        %v2406 = vld [vmem:[#allocation3 + $0x69] sm:$0xff]
        %v2407 = vld [vmem:[#allocation3 + $0x79] sm:$0xff]
        %v2408 = vld [vmem:[#allocation3 + $0x81] sm:$0xff]
        %v2409 = vld [vmem:[#allocation3 + $0x91] sm:$0xff]
        %v2410 = vld [vmem:[#allocation3 + $0x99] sm:$0xff]
        %v2411 = vld [vmem:[#allocation3 + $0xa9] sm:$0xff]
        %v2412 = vld [vmem:[#allocation3 + $0xb1] sm:$0xff]
        %2429 = vrot.lane.b32.xlu0 %v2397, 8
        %v2430 = vpop.permute.xlu0 %2429
        %2431 = vrot.lane.b32.xlu0 %v2398, 8
        %v2432 = vpop.permute.xlu0 %2431
        %2433 = vrot.lane.b32.xlu0 %v2399, 8
        %v2434 = vpop.permute.xlu0 %2433
        %2435 = vrot.lane.b32.xlu0 %v2400, 8
        %v2436 = vpop.permute.xlu0 %2435
        %2437 = vrot.lane.b32.xlu0 %v2401, 8
        %v2438 = vpop.permute.xlu0 %2437
        %2439 = vrot.lane.b32.xlu0 %v2402, 8
        %v2440 = vpop.permute.xlu0 %2439
        %2441 = vrot.lane.b32.xlu0 %v2403, 8
        %v2442 = vpop.permute.xlu0 %2441
        %2443 = vrot.lane.b32.xlu0 %v2404, 8
        %v2444 = vpop.permute.xlu0 %2443
        %2445 = vrot.lane.b32.xlu0 %v2405, 8
        %v2446 = vpop.permute.xlu0 %2445
        %2447 = vrot.lane.b32.xlu0 %v2406, 8
        %v2448 = vpop.permute.xlu0 %2447
        %2449 = vrot.lane.b32.xlu0 %v2407, 8
        %v2450 = vpop.permute.xlu0 %2449
        %2451 = vrot.lane.b32.xlu0 %v2408, 8
        %v2452 = vpop.permute.xlu0 %2451
        %2453 = vrot.lane.b32.xlu0 %v2409, 8
        %v2454 = vpop.permute.xlu0 %2453
        %2455 = vrot.lane.b32.xlu0 %v2410, 8
        %v2456 = vpop.permute.xlu0 %2455
        %2457 = vrot.lane.b32.xlu0 %v2411, 8
        %v2458 = vpop.permute.xlu0 %2457
        %2459 = vrot.lane.b32.xlu0 %v2412, 8
        %v2460 = vpop.permute.xlu0 %2459
        %vm2477 = vcmask 130112
        %2478 = vst.msk [vmem:[#allocation5] sm:$0xff] %vm2477, %v2430
        %2479 = vst.msk [vmem:[#allocation5 + $0x8] sm:$0xff] %vm2477, %v2432
        %2480 = vst.msk [vmem:[#allocation5 + $0x10] sm:$0xff] %vm2477, %v2434
        %2481 = vst.msk [vmem:[#allocation5 + $0x18] sm:$0xff] %vm2477, %v2436
        %2482 = vst.msk [vmem:[#allocation5 + $0x20] sm:$0xff] %vm2477, %v2438
        %2483 = vst.msk [vmem:[#allocation5 + $0x28] sm:$0xff] %vm2477, %v2440
        %2484 = vst.msk [vmem:[#allocation5 + $0x30] sm:$0xff] %vm2477, %v2442
        %2485 = vst.msk [vmem:[#allocation5 + $0x38] sm:$0xff] %vm2477, %v2444
        %2486 = vst.msk [vmem:[#allocation5 + $0x40] sm:$0xff] %vm2477, %v2446
        %2487 = vst.msk [vmem:[#allocation5 + $0x48] sm:$0xff] %vm2477, %v2448
        %2488 = vst.msk [vmem:[#allocation5 + $0x50] sm:$0xff] %vm2477, %v2450
        %2489 = vst.msk [vmem:[#allocation5 + $0x58] sm:$0xff] %vm2477, %v2452
        %2490 = vst.msk [vmem:[#allocation5 + $0x60] sm:$0xff] %vm2477, %v2454
        %2491 = vst.msk [vmem:[#allocation5 + $0x68] sm:$0xff] %vm2477, %v2456
        %2492 = vst.msk [vmem:[#allocation5 + $0x70] sm:$0xff] %vm2477, %v2458
        %2493 = vst.msk [vmem:[#allocation5 + $0x78] sm:$0xff] %vm2477, %v2460
        %v2494 = vld [vmem:[#allocation3 + $0x2] sm:$0xff]
        %v2495 = vld [vmem:[#allocation3 + $0xa] sm:$0xff]
        %v2496 = vld [vmem:[#allocation3 + $0x1a] sm:$0xff]
        %v2497 = vld [vmem:[#allocation3 + $0x22] sm:$0xff]
        %v2498 = vld [vmem:[#allocation3 + $0x32] sm:$0xff]
        %v2499 = vld [vmem:[#allocation3 + $0x3a] sm:$0xff]
        %v2500 = vld [vmem:[#allocation3 + $0x4a] sm:$0xff]
        %v2501 = vld [vmem:[#allocation3 + $0x52] sm:$0xff]
        %v2502 = vld [vmem:[#allocation3 + $0x62] sm:$0xff]
        %v2503 = vld [vmem:[#allocation3 + $0x6a] sm:$0xff]
        %v2504 = vld [vmem:[#allocation3 + $0x7a] sm:$0xff]
        %v2505 = vld [vmem:[#allocation3 + $0x82] sm:$0xff]
        %v2506 = vld [vmem:[#allocation3 + $0x92] sm:$0xff]
        %v2507 = vld [vmem:[#allocation3 + $0x9a] sm:$0xff]
        %v2508 = vld [vmem:[#allocation3 + $0xaa] sm:$0xff]
        %v2509 = vld [vmem:[#allocation3 + $0xb2] sm:$0xff]
        %2526 = vrot.lane.b32.xlu0 %v2494, 16
        %v2527 = vpop.permute.xlu0 %2526
        %2528 = vrot.lane.b32.xlu0 %v2495, 16
        %v2529 = vpop.permute.xlu0 %2528
        %2530 = vrot.lane.b32.xlu0 %v2496, 16
        %v2531 = vpop.permute.xlu0 %2530
        %2532 = vrot.lane.b32.xlu0 %v2497, 16
        %v2533 = vpop.permute.xlu0 %2532
        %2534 = vrot.lane.b32.xlu0 %v2498, 16
        %v2535 = vpop.permute.xlu0 %2534
        %2536 = vrot.lane.b32.xlu0 %v2499, 16
        %v2537 = vpop.permute.xlu0 %2536
        %2538 = vrot.lane.b32.xlu0 %v2500, 16
        %v2539 = vpop.permute.xlu0 %2538
        %2540 = vrot.lane.b32.xlu0 %v2501, 16
        %v2541 = vpop.permute.xlu0 %2540
        %2542 = vrot.lane.b32.xlu0 %v2502, 16
        %v2543 = vpop.permute.xlu0 %2542
        %2544 = vrot.lane.b32.xlu0 %v2503, 16
        %v2545 = vpop.permute.xlu0 %2544
        %2546 = vrot.lane.b32.xlu0 %v2504, 16
        %v2547 = vpop.permute.xlu0 %2546
        %2548 = vrot.lane.b32.xlu0 %v2505, 16
        %v2549 = vpop.permute.xlu0 %2548
        %2550 = vrot.lane.b32.xlu0 %v2506, 16
        %v2551 = vpop.permute.xlu0 %2550
        %2552 = vrot.lane.b32.xlu0 %v2507, 16
        %v2553 = vpop.permute.xlu0 %2552
        %2554 = vrot.lane.b32.xlu0 %v2508, 16
        %v2555 = vpop.permute.xlu0 %2554
        %2556 = vrot.lane.b32.xlu0 %v2509, 16
        %v2557 = vpop.permute.xlu0 %2556
        %vm2574 = vcmask 195712
        %2575 = vst.msk [vmem:[#allocation5] sm:$0xff] %vm2574, %v2527
        %2576 = vst.msk [vmem:[#allocation5 + $0x8] sm:$0xff] %vm2574, %v2529
        %2577 = vst.msk [vmem:[#allocation5 + $0x10] sm:$0xff] %vm2574, %v2531
        %2578 = vst.msk [vmem:[#allocation5 + $0x18] sm:$0xff] %vm2574, %v2533
        %2579 = vst.msk [vmem:[#allocation5 + $0x20] sm:$0xff] %vm2574, %v2535
        %2580 = vst.msk [vmem:[#allocation5 + $0x28] sm:$0xff] %vm2574, %v2537
        %2581 = vst.msk [vmem:[#allocation5 + $0x30] sm:$0xff] %vm2574, %v2539
        %2582 = vst.msk [vmem:[#allocation5 + $0x38] sm:$0xff] %vm2574, %v2541
        %2583 = vst.msk [vmem:[#allocation5 + $0x40] sm:$0xff] %vm2574, %v2543
        %2584 = vst.msk [vmem:[#allocation5 + $0x48] sm:$0xff] %vm2574, %v2545
        %2585 = vst.msk [vmem:[#allocation5 + $0x50] sm:$0xff] %vm2574, %v2547
        %2586 = vst.msk [vmem:[#allocation5 + $0x58] sm:$0xff] %vm2574, %v2549
        %2587 = vst.msk [vmem:[#allocation5 + $0x60] sm:$0xff] %vm2574, %v2551
        %2588 = vst.msk [vmem:[#allocation5 + $0x68] sm:$0xff] %vm2574, %v2553
        %2589 = vst.msk [vmem:[#allocation5 + $0x70] sm:$0xff] %vm2574, %v2555
        %2590 = vst.msk [vmem:[#allocation5 + $0x78] sm:$0xff] %vm2574, %v2557
        %s2591 = scalar_lea.vmem [#allocation3], 24
        %v2592 = vld [vmem:[%s2591] sm:$0xff]
        %v2593 = vld [vmem:[%s2591 + $0x8] sm:$0xff]
        %v2594 = vld [vmem:[%s2591 + $0x18] sm:$0xff]
        %v2595 = vld [vmem:[%s2591 + $0x20] sm:$0xff]
        %v2596 = vld [vmem:[%s2591 + $0x30] sm:$0xff]
        %v2597 = vld [vmem:[%s2591 + $0x38] sm:$0xff]
        %v2598 = vld [vmem:[%s2591 + $0x48] sm:$0xff]
        %v2599 = vld [vmem:[%s2591 + $0x50] sm:$0xff]
        %v2600 = vld [vmem:[%s2591 + $0x60] sm:$0xff]
        %v2601 = vld [vmem:[%s2591 + $0x68] sm:$0xff]
        %v2602 = vld [vmem:[%s2591 + $0x78] sm:$0xff]
        %v2603 = vld [vmem:[%s2591 + $0x80] sm:$0xff]
        %v2604 = vld [vmem:[%s2591 + $0x90] sm:$0xff]
        %v2605 = vld [vmem:[%s2591 + $0x98] sm:$0xff]
        %v2606 = vld [vmem:[%s2591 + $0xa8] sm:$0xff]
        %v2607 = vld [vmem:[%s2591 + $0xb0] sm:$0xff]
        %2624 = vrot.lane.b32.xlu0 %v2592, 24
        %v2625 = vpop.permute.xlu0 %2624
        %2626 = vrot.lane.b32.xlu0 %v2593, 24
        %v2627 = vpop.permute.xlu0 %2626
        %2628 = vrot.lane.b32.xlu0 %v2594, 24
        %v2629 = vpop.permute.xlu0 %2628
        %2630 = vrot.lane.b32.xlu0 %v2595, 24
        %v2631 = vpop.permute.xlu0 %2630
        %2632 = vrot.lane.b32.xlu0 %v2596, 24
        %v2633 = vpop.permute.xlu0 %2632
        %2634 = vrot.lane.b32.xlu0 %v2597, 24
        %v2635 = vpop.permute.xlu0 %2634
        %2636 = vrot.lane.b32.xlu0 %v2598, 24
        %v2637 = vpop.permute.xlu0 %2636
        %2638 = vrot.lane.b32.xlu0 %v2599, 24
        %v2639 = vpop.permute.xlu0 %2638
        %2640 = vrot.lane.b32.xlu0 %v2600, 24
        %v2641 = vpop.permute.xlu0 %2640
        %2642 = vrot.lane.b32.xlu0 %v2601, 24
        %v2643 = vpop.permute.xlu0 %2642
        %2644 = vrot.lane.b32.xlu0 %v2602, 24
        %v2645 = vpop.permute.xlu0 %2644
        %2646 = vrot.lane.b32.xlu0 %v2603, 24
        %v2647 = vpop.permute.xlu0 %2646
        %2648 = vrot.lane.b32.xlu0 %v2604, 24
        %v2649 = vpop.permute.xlu0 %2648
        %2650 = vrot.lane.b32.xlu0 %v2605, 24
        %v2651 = vpop.permute.xlu0 %2650
        %2652 = vrot.lane.b32.xlu0 %v2606, 24
        %v2653 = vpop.permute.xlu0 %2652
        %2654 = vrot.lane.b32.xlu0 %v2607, 24
        %v2655 = vpop.permute.xlu0 %2654
        %vm2672 = vcmask 261312
        %2673 = vst.msk [vmem:[#allocation5] sm:$0xff] %vm2672, %v2625
        %2674 = vst.msk [vmem:[#allocation5 + $0x8] sm:$0xff] %vm2672, %v2627
        %2675 = vst.msk [vmem:[#allocation5 + $0x10] sm:$0xff] %vm2672, %v2629
        %2676 = vst.msk [vmem:[#allocation5 + $0x18] sm:$0xff] %vm2672, %v2631
        %2677 = vst.msk [vmem:[#allocation5 + $0x20] sm:$0xff] %vm2672, %v2633
        %2678 = vst.msk [vmem:[#allocation5 + $0x28] sm:$0xff] %vm2672, %v2635
        %2679 = vst.msk [vmem:[#allocation5 + $0x30] sm:$0xff] %vm2672, %v2637
        %2680 = vst.msk [vmem:[#allocation5 + $0x38] sm:$0xff] %vm2672, %v2639
        %2681 = vst.msk [vmem:[#allocation5 + $0x40] sm:$0xff] %vm2672, %v2641
        %2682 = vst.msk [vmem:[#allocation5 + $0x48] sm:$0xff] %vm2672, %v2643
        %2683 = vst.msk [vmem:[#allocation5 + $0x50] sm:$0xff] %vm2672, %v2645
        %2684 = vst.msk [vmem:[#allocation5 + $0x58] sm:$0xff] %vm2672, %v2647
        %2685 = vst.msk [vmem:[#allocation5 + $0x60] sm:$0xff] %vm2672, %v2649
        %2686 = vst.msk [vmem:[#allocation5 + $0x68] sm:$0xff] %vm2672, %v2651
        %2687 = vst.msk [vmem:[#allocation5 + $0x70] sm:$0xff] %vm2672, %v2653
        %2688 = vst.msk [vmem:[#allocation5 + $0x78] sm:$0xff] %vm2672, %v2655
        %v2689 = vld [vmem:[%s2591 + $0x1] sm:$0xff]
        %v2690 = vld [vmem:[%s2591 + $0x9] sm:$0xff]
        %v2691 = vld [vmem:[%s2591 + $0x19] sm:$0xff]
        %v2692 = vld [vmem:[%s2591 + $0x21] sm:$0xff]
        %v2693 = vld [vmem:[%s2591 + $0x31] sm:$0xff]
        %v2694 = vld [vmem:[%s2591 + $0x39] sm:$0xff]
        %v2695 = vld [vmem:[%s2591 + $0x49] sm:$0xff]
        %v2696 = vld [vmem:[%s2591 + $0x51] sm:$0xff]
        %v2697 = vld [vmem:[%s2591 + $0x61] sm:$0xff]
        %v2698 = vld [vmem:[%s2591 + $0x69] sm:$0xff]
        %v2699 = vld [vmem:[%s2591 + $0x79] sm:$0xff]
        %v2700 = vld [vmem:[%s2591 + $0x81] sm:$0xff]
        %v2701 = vld [vmem:[%s2591 + $0x91] sm:$0xff]
        %v2702 = vld [vmem:[%s2591 + $0x99] sm:$0xff]
        %v2703 = vld [vmem:[%s2591 + $0xa9] sm:$0xff]
        %v2704 = vld [vmem:[%s2591 + $0xb1] sm:$0xff]
        %2721 = vrot.lane.b32.xlu0 %v2689, 32
        %v2722 = vpop.permute.xlu0 %2721
        %2723 = vrot.lane.b32.xlu0 %v2690, 32
        %v2724 = vpop.permute.xlu0 %2723
        %2725 = vrot.lane.b32.xlu0 %v2691, 32
        %v2726 = vpop.permute.xlu0 %2725
        %2727 = vrot.lane.b32.xlu0 %v2692, 32
        %v2728 = vpop.permute.xlu0 %2727
        %2729 = vrot.lane.b32.xlu0 %v2693, 32
        %v2730 = vpop.permute.xlu0 %2729
        %2731 = vrot.lane.b32.xlu0 %v2694, 32
        %v2732 = vpop.permute.xlu0 %2731
        %2733 = vrot.lane.b32.xlu0 %v2695, 32
        %v2734 = vpop.permute.xlu0 %2733
        %2735 = vrot.lane.b32.xlu0 %v2696, 32
        %v2736 = vpop.permute.xlu0 %2735
        %2737 = vrot.lane.b32.xlu0 %v2697, 32
        %v2738 = vpop.permute.xlu0 %2737
        %2739 = vrot.lane.b32.xlu0 %v2698, 32
        %v2740 = vpop.permute.xlu0 %2739
        %2741 = vrot.lane.b32.xlu0 %v2699, 32
        %v2742 = vpop.permute.xlu0 %2741
        %2743 = vrot.lane.b32.xlu0 %v2700, 32
        %v2744 = vpop.permute.xlu0 %2743
        %2745 = vrot.lane.b32.xlu0 %v2701, 32
        %v2746 = vpop.permute.xlu0 %2745
        %2747 = vrot.lane.b32.xlu0 %v2702, 32
        %v2748 = vpop.permute.xlu0 %2747
        %2749 = vrot.lane.b32.xlu0 %v2703, 32
        %v2750 = vpop.permute.xlu0 %2749
        %2751 = vrot.lane.b32.xlu0 %v2704, 32
        %v2752 = vpop.permute.xlu0 %2751
        %vm2769 = vcmask 326912
        %2770 = vst.msk [vmem:[#allocation5] sm:$0xff] %vm2769, %v2722
        %2771 = vst.msk [vmem:[#allocation5 + $0x8] sm:$0xff] %vm2769, %v2724
        %2772 = vst.msk [vmem:[#allocation5 + $0x10] sm:$0xff] %vm2769, %v2726
        %2773 = vst.msk [vmem:[#allocation5 + $0x18] sm:$0xff] %vm2769, %v2728
        %2774 = vst.msk [vmem:[#allocation5 + $0x20] sm:$0xff] %vm2769, %v2730
        %2775 = vst.msk [vmem:[#allocation5 + $0x28] sm:$0xff] %vm2769, %v2732
        %2776 = vst.msk [vmem:[#allocation5 + $0x30] sm:$0xff] %vm2769, %v2734
        %2777 = vst.msk [vmem:[#allocation5 + $0x38] sm:$0xff] %vm2769, %v2736
        %2778 = vst.msk [vmem:[#allocation5 + $0x40] sm:$0xff] %vm2769, %v2738
        %2779 = vst.msk [vmem:[#allocation5 + $0x48] sm:$0xff] %vm2769, %v2740
        %2780 = vst.msk [vmem:[#allocation5 + $0x50] sm:$0xff] %vm2769, %v2742
        %2781 = vst.msk [vmem:[#allocation5 + $0x58] sm:$0xff] %vm2769, %v2744
        %2782 = vst.msk [vmem:[#allocation5 + $0x60] sm:$0xff] %vm2769, %v2746
        %2783 = vst.msk [vmem:[#allocation5 + $0x68] sm:$0xff] %vm2769, %v2748
        %2784 = vst.msk [vmem:[#allocation5 + $0x70] sm:$0xff] %vm2769, %v2750
        %2785 = vst.msk [vmem:[#allocation5 + $0x78] sm:$0xff] %vm2769, %v2752
        %v2786 = vld [vmem:[%s2591 + $0x2] sm:$0xff]
        %v2787 = vld [vmem:[%s2591 + $0xa] sm:$0xff]
        %v2788 = vld [vmem:[%s2591 + $0x1a] sm:$0xff]
        %v2789 = vld [vmem:[%s2591 + $0x22] sm:$0xff]
        %v2790 = vld [vmem:[%s2591 + $0x32] sm:$0xff]
        %v2791 = vld [vmem:[%s2591 + $0x3a] sm:$0xff]
        %v2792 = vld [vmem:[%s2591 + $0x4a] sm:$0xff]
        %v2793 = vld [vmem:[%s2591 + $0x52] sm:$0xff]
        %v2794 = vld [vmem:[%s2591 + $0x62] sm:$0xff]
        %v2795 = vld [vmem:[%s2591 + $0x6a] sm:$0xff]
        %v2796 = vld [vmem:[%s2591 + $0x7a] sm:$0xff]
        %v2797 = vld [vmem:[%s2591 + $0x82] sm:$0xff]
        %v2798 = vld [vmem:[%s2591 + $0x92] sm:$0xff]
        %v2799 = vld [vmem:[%s2591 + $0x9a] sm:$0xff]
        %v2800 = vld [vmem:[%s2591 + $0xaa] sm:$0xff]
        %v2801 = vld [vmem:[%s2591 + $0xb2] sm:$0xff]
        %2818 = vrot.lane.b32.xlu0 %v2786, 40
        %v2819 = vpop.permute.xlu0 %2818
        %2820 = vrot.lane.b32.xlu0 %v2787, 40
        %v2821 = vpop.permute.xlu0 %2820
        %2822 = vrot.lane.b32.xlu0 %v2788, 40
        %v2823 = vpop.permute.xlu0 %2822
        %2824 = vrot.lane.b32.xlu0 %v2789, 40
        %v2825 = vpop.permute.xlu0 %2824
        %2826 = vrot.lane.b32.xlu0 %v2790, 40
        %v2827 = vpop.permute.xlu0 %2826
        %2828 = vrot.lane.b32.xlu0 %v2791, 40
        %v2829 = vpop.permute.xlu0 %2828
        %2830 = vrot.lane.b32.xlu0 %v2792, 40
        %v2831 = vpop.permute.xlu0 %2830
        %2832 = vrot.lane.b32.xlu0 %v2793, 40
        %v2833 = vpop.permute.xlu0 %2832
        %2834 = vrot.lane.b32.xlu0 %v2794, 40
        %v2835 = vpop.permute.xlu0 %2834
        %2836 = vrot.lane.b32.xlu0 %v2795, 40
        %v2837 = vpop.permute.xlu0 %2836
        %2838 = vrot.lane.b32.xlu0 %v2796, 40
        %v2839 = vpop.permute.xlu0 %2838
        %2840 = vrot.lane.b32.xlu0 %v2797, 40
        %v2841 = vpop.permute.xlu0 %2840
        %2842 = vrot.lane.b32.xlu0 %v2798, 40
        %v2843 = vpop.permute.xlu0 %2842
        %2844 = vrot.lane.b32.xlu0 %v2799, 40
        %v2845 = vpop.permute.xlu0 %2844
        %2846 = vrot.lane.b32.xlu0 %v2800, 40
        %v2847 = vpop.permute.xlu0 %2846
        %2848 = vrot.lane.b32.xlu0 %v2801, 40
        %v2849 = vpop.permute.xlu0 %2848
        %vm2866 = vcmask 392512
        %2867 = vst.msk [vmem:[#allocation5] sm:$0xff] %vm2866, %v2819
        %2868 = vst.msk [vmem:[#allocation5 + $0x8] sm:$0xff] %vm2866, %v2821
        %2869 = vst.msk [vmem:[#allocation5 + $0x10] sm:$0xff] %vm2866, %v2823
        %2870 = vst.msk [vmem:[#allocation5 + $0x18] sm:$0xff] %vm2866, %v2825
        %2871 = vst.msk [vmem:[#allocation5 + $0x20] sm:$0xff] %vm2866, %v2827
        %2872 = vst.msk [vmem:[#allocation5 + $0x28] sm:$0xff] %vm2866, %v2829
        %2873 = vst.msk [vmem:[#allocation5 + $0x30] sm:$0xff] %vm2866, %v2831
        %2874 = vst.msk [vmem:[#allocation5 + $0x38] sm:$0xff] %vm2866, %v2833
        %2875 = vst.msk [vmem:[#allocation5 + $0x40] sm:$0xff] %vm2866, %v2835
        %2876 = vst.msk [vmem:[#allocation5 + $0x48] sm:$0xff] %vm2866, %v2837
        %2877 = vst.msk [vmem:[#allocation5 + $0x50] sm:$0xff] %vm2866, %v2839
        %2878 = vst.msk [vmem:[#allocation5 + $0x58] sm:$0xff] %vm2866, %v2841
        %2879 = vst.msk [vmem:[#allocation5 + $0x60] sm:$0xff] %vm2866, %v2843
        %2880 = vst.msk [vmem:[#allocation5 + $0x68] sm:$0xff] %vm2866, %v2845
        %2881 = vst.msk [vmem:[#allocation5 + $0x70] sm:$0xff] %vm2866, %v2847
        %2882 = vst.msk [vmem:[#allocation5 + $0x78] sm:$0xff] %vm2866, %v2849
        %s2883 = scalar_lea.vmem [#allocation3], 48
        %v2884 = vld [vmem:[%s2883] sm:$0xff]
        %v2885 = vld [vmem:[%s2883 + $0x8] sm:$0xff]
        %v2886 = vld [vmem:[%s2883 + $0x18] sm:$0xff]
        %v2887 = vld [vmem:[%s2883 + $0x20] sm:$0xff]
        %v2888 = vld [vmem:[%s2883 + $0x30] sm:$0xff]
        %v2889 = vld [vmem:[%s2883 + $0x38] sm:$0xff]
        %v2890 = vld [vmem:[%s2883 + $0x48] sm:$0xff]
        %v2891 = vld [vmem:[%s2883 + $0x50] sm:$0xff]
        %v2892 = vld [vmem:[%s2883 + $0x60] sm:$0xff]
        %v2893 = vld [vmem:[%s2883 + $0x68] sm:$0xff]
        %v2894 = vld [vmem:[%s2883 + $0x78] sm:$0xff]
        %v2895 = vld [vmem:[%s2883 + $0x80] sm:$0xff]
        %v2896 = vld [vmem:[%s2883 + $0x90] sm:$0xff]
        %v2897 = vld [vmem:[%s2883 + $0x98] sm:$0xff]
        %v2898 = vld [vmem:[%s2883 + $0xa8] sm:$0xff]
        %v2899 = vld [vmem:[%s2883 + $0xb0] sm:$0xff]
        %2916 = vrot.lane.b32.xlu0 %v2884, 48
        %v2917 = vpop.permute.xlu0 %2916
        %2918 = vrot.lane.b32.xlu0 %v2885, 48
        %v2919 = vpop.permute.xlu0 %2918
        %2920 = vrot.lane.b32.xlu0 %v2886, 48
        %v2921 = vpop.permute.xlu0 %2920
        %2922 = vrot.lane.b32.xlu0 %v2887, 48
        %v2923 = vpop.permute.xlu0 %2922
        %2924 = vrot.lane.b32.xlu0 %v2888, 48
        %v2925 = vpop.permute.xlu0 %2924
        %2926 = vrot.lane.b32.xlu0 %v2889, 48
        %v2927 = vpop.permute.xlu0 %2926
        %2928 = vrot.lane.b32.xlu0 %v2890, 48
        %v2929 = vpop.permute.xlu0 %2928
        %2930 = vrot.lane.b32.xlu0 %v2891, 48
        %v2931 = vpop.permute.xlu0 %2930
        %2932 = vrot.lane.b32.xlu0 %v2892, 48
        %v2933 = vpop.permute.xlu0 %2932
        %2934 = vrot.lane.b32.xlu0 %v2893, 48
        %v2935 = vpop.permute.xlu0 %2934
        %2936 = vrot.lane.b32.xlu0 %v2894, 48
        %v2937 = vpop.permute.xlu0 %2936
        %2938 = vrot.lane.b32.xlu0 %v2895, 48
        %v2939 = vpop.permute.xlu0 %2938
        %2940 = vrot.lane.b32.xlu0 %v2896, 48
        %v2941 = vpop.permute.xlu0 %2940
        %2942 = vrot.lane.b32.xlu0 %v2897, 48
        %v2943 = vpop.permute.xlu0 %2942
        %2944 = vrot.lane.b32.xlu0 %v2898, 48
        %v2945 = vpop.permute.xlu0 %2944
        %2946 = vrot.lane.b32.xlu0 %v2899, 48
        %v2947 = vpop.permute.xlu0 %2946
        %vm2964 = vcmask 458112
        %2965 = vst.msk [vmem:[#allocation5] sm:$0xff] %vm2964, %v2917
        %2966 = vst.msk [vmem:[#allocation5 + $0x8] sm:$0xff] %vm2964, %v2919
        %2967 = vst.msk [vmem:[#allocation5 + $0x10] sm:$0xff] %vm2964, %v2921
        %2968 = vst.msk [vmem:[#allocation5 + $0x18] sm:$0xff] %vm2964, %v2923
        %2969 = vst.msk [vmem:[#allocation5 + $0x20] sm:$0xff] %vm2964, %v2925
        %2970 = vst.msk [vmem:[#allocation5 + $0x28] sm:$0xff] %vm2964, %v2927
        %2971 = vst.msk [vmem:[#allocation5 + $0x30] sm:$0xff] %vm2964, %v2929
        %2972 = vst.msk [vmem:[#allocation5 + $0x38] sm:$0xff] %vm2964, %v2931
        %2973 = vst.msk [vmem:[#allocation5 + $0x40] sm:$0xff] %vm2964, %v2933
        %2974 = vst.msk [vmem:[#allocation5 + $0x48] sm:$0xff] %vm2964, %v2935
        %2975 = vst.msk [vmem:[#allocation5 + $0x50] sm:$0xff] %vm2964, %v2937
        %2976 = vst.msk [vmem:[#allocation5 + $0x58] sm:$0xff] %vm2964, %v2939
        %2977 = vst.msk [vmem:[#allocation5 + $0x60] sm:$0xff] %vm2964, %v2941
        %2978 = vst.msk [vmem:[#allocation5 + $0x68] sm:$0xff] %vm2964, %v2943
        %2979 = vst.msk [vmem:[#allocation5 + $0x70] sm:$0xff] %vm2964, %v2945
        %2980 = vst.msk [vmem:[#allocation5 + $0x78] sm:$0xff] %vm2964, %v2947
        %v2981 = vld [vmem:[%s2883 + $0x1] sm:$0xff]
        %v2982 = vld [vmem:[%s2883 + $0x9] sm:$0xff]
        %v2983 = vld [vmem:[%s2883 + $0x19] sm:$0xff]
        %v2984 = vld [vmem:[%s2883 + $0x21] sm:$0xff]
        %v2985 = vld [vmem:[%s2883 + $0x31] sm:$0xff]
        %v2986 = vld [vmem:[%s2883 + $0x39] sm:$0xff]
        %v2987 = vld [vmem:[%s2883 + $0x49] sm:$0xff]
        %v2988 = vld [vmem:[%s2883 + $0x51] sm:$0xff]
        %v2989 = vld [vmem:[%s2883 + $0x61] sm:$0xff]
        %v2990 = vld [vmem:[%s2883 + $0x69] sm:$0xff]
        %v2991 = vld [vmem:[%s2883 + $0x79] sm:$0xff]
        %v2992 = vld [vmem:[%s2883 + $0x81] sm:$0xff]
        %v2993 = vld [vmem:[%s2883 + $0x91] sm:$0xff]
        %v2994 = vld [vmem:[%s2883 + $0x99] sm:$0xff]
        %v2995 = vld [vmem:[%s2883 + $0xa9] sm:$0xff]
        %v2996 = vld [vmem:[%s2883 + $0xb1] sm:$0xff]
        %3013 = vrot.lane.b32.xlu0 %v2981, 56
        %v3014 = vpop.permute.xlu0 %3013
        %3015 = vrot.lane.b32.xlu0 %v2982, 56
        %v3016 = vpop.permute.xlu0 %3015
        %3017 = vrot.lane.b32.xlu0 %v2983, 56
        %v3018 = vpop.permute.xlu0 %3017
        %3019 = vrot.lane.b32.xlu0 %v2984, 56
        %v3020 = vpop.permute.xlu0 %3019
        %3021 = vrot.lane.b32.xlu0 %v2985, 56
        %v3022 = vpop.permute.xlu0 %3021
        %3023 = vrot.lane.b32.xlu0 %v2986, 56
        %v3024 = vpop.permute.xlu0 %3023
        %3025 = vrot.lane.b32.xlu0 %v2987, 56
        %v3026 = vpop.permute.xlu0 %3025
        %3027 = vrot.lane.b32.xlu0 %v2988, 56
        %v3028 = vpop.permute.xlu0 %3027
        %3029 = vrot.lane.b32.xlu0 %v2989, 56
        %v3030 = vpop.permute.xlu0 %3029
        %3031 = vrot.lane.b32.xlu0 %v2990, 56
        %v3032 = vpop.permute.xlu0 %3031
        %3033 = vrot.lane.b32.xlu0 %v2991, 56
        %v3034 = vpop.permute.xlu0 %3033
        %3035 = vrot.lane.b32.xlu0 %v2992, 56
        %v3036 = vpop.permute.xlu0 %3035
        %3037 = vrot.lane.b32.xlu0 %v2993, 56
        %v3038 = vpop.permute.xlu0 %3037
        %3039 = vrot.lane.b32.xlu0 %v2994, 56
        %v3040 = vpop.permute.xlu0 %3039
        %3041 = vrot.lane.b32.xlu0 %v2995, 56
        %v3042 = vpop.permute.xlu0 %3041
        %3043 = vrot.lane.b32.xlu0 %v2996, 56
        %v3044 = vpop.permute.xlu0 %3043
        %vm3061 = vcmask 523712
        %3062 = vst.msk [vmem:[#allocation5] sm:$0xff] %vm3061, %v3014
        %3063 = vst.msk [vmem:[#allocation5 + $0x8] sm:$0xff] %vm3061, %v3016
        %3064 = vst.msk [vmem:[#allocation5 + $0x10] sm:$0xff] %vm3061, %v3018
        %3065 = vst.msk [vmem:[#allocation5 + $0x18] sm:$0xff] %vm3061, %v3020
        %3066 = vst.msk [vmem:[#allocation5 + $0x20] sm:$0xff] %vm3061, %v3022
        %3067 = vst.msk [vmem:[#allocation5 + $0x28] sm:$0xff] %vm3061, %v3024
        %3068 = vst.msk [vmem:[#allocation5 + $0x30] sm:$0xff] %vm3061, %v3026
        %3069 = vst.msk [vmem:[#allocation5 + $0x38] sm:$0xff] %vm3061, %v3028
        %3070 = vst.msk [vmem:[#allocation5 + $0x40] sm:$0xff] %vm3061, %v3030
        %3071 = vst.msk [vmem:[#allocation5 + $0x48] sm:$0xff] %vm3061, %v3032
        %3072 = vst.msk [vmem:[#allocation5 + $0x50] sm:$0xff] %vm3061, %v3034
        %3073 = vst.msk [vmem:[#allocation5 + $0x58] sm:$0xff] %vm3061, %v3036
        %3074 = vst.msk [vmem:[#allocation5 + $0x60] sm:$0xff] %vm3061, %v3038
        %3075 = vst.msk [vmem:[#allocation5 + $0x68] sm:$0xff] %vm3061, %v3040
        %3076 = vst.msk [vmem:[#allocation5 + $0x70] sm:$0xff] %vm3061, %v3042
        %3077 = vst.msk [vmem:[#allocation5 + $0x78] sm:$0xff] %vm3061, %v3044
        %v3078 = vld [vmem:[%s2883 + $0x2] sm:$0xff]
        %v3079 = vld [vmem:[%s2883 + $0xa] sm:$0xff]
        %v3080 = vld [vmem:[%s2883 + $0x1a] sm:$0xff]
        %v3081 = vld [vmem:[%s2883 + $0x22] sm:$0xff]
        %v3082 = vld [vmem:[%s2883 + $0x32] sm:$0xff]
        %v3083 = vld [vmem:[%s2883 + $0x3a] sm:$0xff]
        %v3084 = vld [vmem:[%s2883 + $0x4a] sm:$0xff]
        %v3085 = vld [vmem:[%s2883 + $0x52] sm:$0xff]
        %v3086 = vld [vmem:[%s2883 + $0x62] sm:$0xff]
        %v3087 = vld [vmem:[%s2883 + $0x6a] sm:$0xff]
        %v3088 = vld [vmem:[%s2883 + $0x7a] sm:$0xff]
        %v3089 = vld [vmem:[%s2883 + $0x82] sm:$0xff]
        %v3090 = vld [vmem:[%s2883 + $0x92] sm:$0xff]
        %v3091 = vld [vmem:[%s2883 + $0x9a] sm:$0xff]
        %v3092 = vld [vmem:[%s2883 + $0xaa] sm:$0xff]
        %v3093 = vld [vmem:[%s2883 + $0xb2] sm:$0xff]
        %3110 = vrot.lane.b32.xlu0 %v3078, 64
        %v3111 = vpop.permute.xlu0 %3110
        %3112 = vrot.lane.b32.xlu0 %v3079, 64
        %v3113 = vpop.permute.xlu0 %3112
        %3114 = vrot.lane.b32.xlu0 %v3080, 64
        %v3115 = vpop.permute.xlu0 %3114
        %3116 = vrot.lane.b32.xlu0 %v3081, 64
        %v3117 = vpop.permute.xlu0 %3116
        %3118 = vrot.lane.b32.xlu0 %v3082, 64
        %v3119 = vpop.permute.xlu0 %3118
        %3120 = vrot.lane.b32.xlu0 %v3083, 64
        %v3121 = vpop.permute.xlu0 %3120
        %3122 = vrot.lane.b32.xlu0 %v3084, 64
        %v3123 = vpop.permute.xlu0 %3122
        %3124 = vrot.lane.b32.xlu0 %v3085, 64
        %v3125 = vpop.permute.xlu0 %3124
        %3126 = vrot.lane.b32.xlu0 %v3086, 64
        %v3127 = vpop.permute.xlu0 %3126
        %3128 = vrot.lane.b32.xlu0 %v3087, 64
        %v3129 = vpop.permute.xlu0 %3128
        %3130 = vrot.lane.b32.xlu0 %v3088, 64
        %v3131 = vpop.permute.xlu0 %3130
        %3132 = vrot.lane.b32.xlu0 %v3089, 64
        %v3133 = vpop.permute.xlu0 %3132
        %3134 = vrot.lane.b32.xlu0 %v3090, 64
        %v3135 = vpop.permute.xlu0 %3134
        %3136 = vrot.lane.b32.xlu0 %v3091, 64
        %v3137 = vpop.permute.xlu0 %3136
        %3138 = vrot.lane.b32.xlu0 %v3092, 64
        %v3139 = vpop.permute.xlu0 %3138
        %3140 = vrot.lane.b32.xlu0 %v3093, 64
        %v3141 = vpop.permute.xlu0 %3140
        %vm3158 = vcmask 589312
        %3159 = vst.msk [vmem:[#allocation5] sm:$0xff] %vm3158, %v3111
        %3160 = vst.msk [vmem:[#allocation5 + $0x8] sm:$0xff] %vm3158, %v3113
        %3161 = vst.msk [vmem:[#allocation5 + $0x10] sm:$0xff] %vm3158, %v3115
        %3162 = vst.msk [vmem:[#allocation5 + $0x18] sm:$0xff] %vm3158, %v3117
        %3163 = vst.msk [vmem:[#allocation5 + $0x20] sm:$0xff] %vm3158, %v3119
        %3164 = vst.msk [vmem:[#allocation5 + $0x28] sm:$0xff] %vm3158, %v3121
        %3165 = vst.msk [vmem:[#allocation5 + $0x30] sm:$0xff] %vm3158, %v3123
        %3166 = vst.msk [vmem:[#allocation5 + $0x38] sm:$0xff] %vm3158, %v3125
        %3167 = vst.msk [vmem:[#allocation5 + $0x40] sm:$0xff] %vm3158, %v3127
        %3168 = vst.msk [vmem:[#allocation5 + $0x48] sm:$0xff] %vm3158, %v3129
        %3169 = vst.msk [vmem:[#allocation5 + $0x50] sm:$0xff] %vm3158, %v3131
        %3170 = vst.msk [vmem:[#allocation5 + $0x58] sm:$0xff] %vm3158, %v3133
        %3171 = vst.msk [vmem:[#allocation5 + $0x60] sm:$0xff] %vm3158, %v3135
        %3172 = vst.msk [vmem:[#allocation5 + $0x68] sm:$0xff] %vm3158, %v3137
        %3173 = vst.msk [vmem:[#allocation5 + $0x70] sm:$0xff] %vm3158, %v3139
        %3174 = vst.msk [vmem:[#allocation5 + $0x78] sm:$0xff] %vm3158, %v3141
        %v3175 = vld [vmem:[#allocation5] sm:$0xff]
        %v3176 = vld [vmem:[#allocation5 + $0x8] sm:$0xff]
        %v3177 = vld [vmem:[#allocation5 + $0x10] sm:$0xff]
        %v3178 = vld [vmem:[#allocation5 + $0x18] sm:$0xff]
        %v3179 = vld [vmem:[#allocation5 + $0x20] sm:$0xff]
        %v3180 = vld [vmem:[#allocation5 + $0x28] sm:$0xff]
        %v3181 = vld [vmem:[#allocation5 + $0x30] sm:$0xff]
        %v3182 = vld [vmem:[#allocation5 + $0x38] sm:$0xff]
        %v3183 = vld [vmem:[#allocation5 + $0x40] sm:$0xff]
        %v3184 = vld [vmem:[#allocation5 + $0x48] sm:$0xff]
        %v3185 = vld [vmem:[#allocation5 + $0x50] sm:$0xff]
        %v3186 = vld [vmem:[#allocation5 + $0x58] sm:$0xff]
        %v3187 = vld [vmem:[#allocation5 + $0x60] sm:$0xff]
        %v3188 = vld [vmem:[#allocation5 + $0x68] sm:$0xff]
        %v3189 = vld [vmem:[#allocation5 + $0x70] sm:$0xff]
        %v3190 = vld [vmem:[#allocation5 + $0x78] sm:$0xff]
        %v3191 = vld [vmem:[#allocation14] sm:$0xff]
        %v3192 = vld [vmem:[#allocation14 + $0x8] sm:$0xff]
        %v3193 = vld [vmem:[#allocation14 + $0x10] sm:$0xff]
        %v3194 = vld [vmem:[#allocation14 + $0x18] sm:$0xff]
        %v3195 = vld [vmem:[#allocation14 + $0x20] sm:$0xff]
        %v3196 = vld [vmem:[#allocation14 + $0x28] sm:$0xff]
        %v3197 = vld [vmem:[#allocation14 + $0x30] sm:$0xff]
        %v3198 = vld [vmem:[#allocation14 + $0x38] sm:$0xff]
        %v3199 = vld [vmem:[#allocation14 + $0x40] sm:$0xff]
        %vm3200 = vcmask 588800
        %v3202 = vsel %vm3200, %v3175, 0
        %v3205 = vsel %vm3200, %v3176, 0
        %v3208 = vsel %vm3200, %v3177, 0
        %v3211 = vsel %vm3200, %v3178, 0
        %v3214 = vsel %vm3200, %v3179, 0
        %v3217 = vsel %vm3200, %v3180, 0
        %v3220 = vsel %vm3200, %v3181, 0
        %v3223 = vsel %vm3200, %v3182, 0
        %v3226 = vsel %vm3200, %v3183, 0
        %v3229 = vsel %vm3200, %v3184, 0
        %v3232 = vsel %vm3200, %v3185, 0
        %v3235 = vsel %vm3200, %v3186, 0
        %v3238 = vsel %vm3200, %v3187, 0
        %v3241 = vsel %vm3200, %v3188, 0
        %v3244 = vsel %vm3200, %v3189, 0
        %v3247 = vsel %vm3200, %v3190, 0
        %3249 = vmatprep.subr.mxu0 0.0
        %3250 = vmatpush1.msra.mxu0 %v3191
        %3251 = vmatprep.subr.mxu0 0.0
        %3252 = vmatpush1.msra.mxu0 %v3192
        %3253 = vmatprep.subr.mxu0 0.0
        %3254 = vmatpush1.msra.mxu0 %v3193
        %3255 = vmatprep.subr.mxu0 0.0
        %3256 = vmatpush1.msra.mxu0 %v3194
        %3257 = vmatprep.subr.mxu0 0.0
        %3258 = vmatpush1.msra.mxu0 %v3195
        %3259 = vmatprep.subr.mxu0 0.0
        %3260 = vmatpush1.msra.mxu0 %v3196
        %3261 = vmatprep.subr.mxu0 0.0
        %3262 = vmatpush1.msra.mxu0 %v3197
        %3263 = vmatprep.subr.mxu0 0.0
        %3264 = vmatpush1.msra.mxu0 %v3198
        %3265 = vmatprep.subr.mxu0 0.0
        %3266 = vmatpush1.msra.mxu0 %v3199
        %3267 = vmatprep.subr.mxu0 0.0
        %3268 = vmatpush1.msra.mxu0 0.0
        %3269 = vmatprep.subr.mxu0 0.0
        %3270 = vmatpush1.msra.mxu0 0.0
        %3271 = vmatprep.subr.mxu0 0.0
        %3272 = vmatpush1.msra.mxu0 0.0
        %3273 = vmatprep.subr.mxu0 0.0
        %3274 = vmatpush1.msra.mxu0 0.0
        %3275 = vmatprep.subr.mxu0 0.0
        %3276 = vmatpush1.msra.mxu0 0.0
        %3277 = vmatprep.subr.mxu0 0.0
        %3278 = vmatpush1.msra.mxu0 0.0
        %3279 = vmatprep.subr.mxu0 0.0
        %3280 = vmatpush1.msra.mxu0 0.0
        %3281 = vmatprep.subr.mxu0 0.0
        %3282 = vmatpush1.msra.mxu0 0.0
        %3283 = vmatprep.subr.mxu0 0.0
        %3284 = vmatpush1.msra.mxu0 0.0
        %3285 = vmatprep.subr.mxu0 0.0
        %3286 = vmatpush1.msra.mxu0 0.0
        %3287 = vmatprep.subr.mxu0 0.0
        %3288 = vmatpush1.msra.mxu0 0.0
        %3289 = vmatprep.subr.mxu0 0.0
        %3290 = vmatpush1.msra.mxu0 0.0
        %3291 = vmatprep.subr.mxu0 0.0
        %3292 = vmatpush1.msra.mxu0 0.0
        %3293 = vmatprep.subr.mxu0 0.0
        %3294 = vmatpush1.msra.mxu0 0.0
        %3295 = vmatprep.subr.mxu0 0.0
        %3296 = vmatpush1.msra.mxu0 0.0
        %3297 = vmatprep.subr.mxu0 0.0
        %3298 = vmatpush1.msra.mxu0 0.0
        %3299 = vmatprep.subr.mxu0 0.0
        %3300 = vmatpush1.msra.mxu0 0.0
        %3301 = vmatprep.subr.mxu0 0.0
        %3302 = vmatpush1.msra.mxu0 0.0
        %3303 = vmatprep.subr.mxu0 0.0
        %3304 = vmatpush1.msra.mxu0 0.0
        %3305 = vmatprep.subr.mxu0 0.0
        %3306 = vmatpush1.msra.mxu0 0.0
        %3307 = vmatprep.subr.mxu0 0.0
        %3308 = vmatpush1.msra.mxu0 0.0
        %3309 = vmatprep.subr.mxu0 0.0
        %3310 = vmatpush1.msra.mxu0 0.0
        %3311 = vmatprep.subr.mxu0 0.0
        %3312 = vmatpush1.msra.mxu0 0.0
        %3313 = vmatprep.mubr.f32.mxu0 0.0
        %3314 = vmatmul.mubr.f32.gmra.mrb[0].mxu0 %v3202
        %v3315 = vpop.f32.mrb[0].mxu0
        %v3316 = vadd.f32 0.0, %v3315
        %v3317 = vpop.f32.mrb[0].mxu0
        %3318 = vmatprep.mubr.f32.mxu0 0.0
        %3319 = vmatmul.mubr.f32.gmra.mrb[0].mxu0 %v3205
        %v3320 = vpop.f32.mrb[0].mxu0
        %v3321 = vadd.f32 0.0, %v3320
        %v3322 = vpop.f32.mrb[0].mxu0
        %3323 = vmatprep.mubr.f32.mxu0 0.0
        %3324 = vmatmul.mubr.f32.gmra.mrb[0].mxu0 %v3208
        %v3325 = vpop.f32.mrb[0].mxu0
        %v3326 = vadd.f32 0.0, %v3325
        %v3327 = vpop.f32.mrb[0].mxu0
        %3328 = vmatprep.mubr.f32.mxu0 0.0
        %3329 = vmatmul.mubr.f32.gmra.mrb[0].mxu0 %v3211
        %v3330 = vpop.f32.mrb[0].mxu0
        %v3331 = vadd.f32 0.0, %v3330
        %v3332 = vpop.f32.mrb[0].mxu0
        %3333 = vmatprep.mubr.f32.mxu0 0.0
        %3334 = vmatmul.mubr.f32.gmra.mrb[0].mxu0 %v3214
        %v3335 = vpop.f32.mrb[0].mxu0
        %v3336 = vadd.f32 0.0, %v3335
        %v3337 = vpop.f32.mrb[0].mxu0
        %3338 = vmatprep.mubr.f32.mxu0 0.0
        %3339 = vmatmul.mubr.f32.gmra.mrb[0].mxu0 %v3217
        %v3340 = vpop.f32.mrb[0].mxu0
        %v3341 = vadd.f32 0.0, %v3340
        %v3342 = vpop.f32.mrb[0].mxu0
        %3343 = vmatprep.mubr.f32.mxu0 0.0
        %3344 = vmatmul.mubr.f32.gmra.mrb[0].mxu0 %v3220
        %v3345 = vpop.f32.mrb[0].mxu0
        %v3346 = vadd.f32 0.0, %v3345
        %v3347 = vpop.f32.mrb[0].mxu0
        %3348 = vmatprep.mubr.f32.mxu0 0.0
        %3349 = vmatmul.mubr.f32.gmra.mrb[0].mxu0 %v3223
        %v3350 = vpop.f32.mrb[0].mxu0
        %v3351 = vadd.f32 0.0, %v3350
        %v3352 = vpop.f32.mrb[0].mxu0
        %3353 = vmatprep.mubr.f32.mxu0 0.0
        %3354 = vmatmul.mubr.f32.gmra.mrb[0].mxu0 %v3226
        %v3355 = vpop.f32.mrb[0].mxu0
        %v3356 = vadd.f32 0.0, %v3355
        %v3357 = vpop.f32.mrb[0].mxu0
        %3358 = vmatprep.mubr.f32.mxu0 0.0
        %3359 = vmatmul.mubr.f32.gmra.mrb[0].mxu0 %v3229
        %v3360 = vpop.f32.mrb[0].mxu0
        %v3361 = vadd.f32 0.0, %v3360
        %v3362 = vpop.f32.mrb[0].mxu0
        %3363 = vmatprep.mubr.f32.mxu0 0.0
        %3364 = vmatmul.mubr.f32.gmra.mrb[0].mxu0 %v3232
        %v3365 = vpop.f32.mrb[0].mxu0
        %v3366 = vadd.f32 0.0, %v3365
        %v3367 = vpop.f32.mrb[0].mxu0
        %3368 = vmatprep.mubr.f32.mxu0 0.0
        %3369 = vmatmul.mubr.f32.gmra.mrb[0].mxu0 %v3235
        %v3370 = vpop.f32.mrb[0].mxu0
        %v3371 = vadd.f32 0.0, %v3370
        %v3372 = vpop.f32.mrb[0].mxu0
        %3373 = vmatprep.mubr.f32.mxu0 0.0
        %3374 = vmatmul.mubr.f32.gmra.mrb[0].mxu0 %v3238
        %v3375 = vpop.f32.mrb[0].mxu0
        %v3376 = vadd.f32 0.0, %v3375
        %v3377 = vpop.f32.mrb[0].mxu0
        %3378 = vmatprep.mubr.f32.mxu0 0.0
        %3379 = vmatmul.mubr.f32.gmra.mrb[0].mxu0 %v3241
        %v3380 = vpop.f32.mrb[0].mxu0
        %v3381 = vadd.f32 0.0, %v3380
        %v3382 = vpop.f32.mrb[0].mxu0
        %3383 = vmatprep.mubr.f32.mxu0 0.0
        %3384 = vmatmul.mubr.f32.gmra.mrb[0].mxu0 %v3244
        %v3385 = vpop.f32.mrb[0].mxu0
        %v3386 = vadd.f32 0.0, %v3385
        %v3387 = vpop.f32.mrb[0].mxu0
        %3388 = vmatprep.mubr.f32.mxu0 0.0
        %3389 = vmatmul.mubr.f32.gmra.mrb[0].mxu0 %v3247
        %v3390 = vpop.f32.mrb[0].mxu0
        %v3391 = vadd.f32 0.0, %v3390
        %v3392 = vpop.f32.mrb[0].mxu0
        %3393 = vdwg.mxu0
        %v3394 = vld [vmem:[#allocation15] sm:$0x1]
        %v3396 = vlaneseq
        %v3397 = vshrl.u32 %v3396, 7
        %v3398 = vsub.s32 0, %v3397
        %v3399 = vrot.slane %v3394, %v3398
        %v3401 = vmul.f32 %v3316, %v3399
        %v3402 = vmul.f32 %v3321, %v3399
        %v3403 = vmul.f32 %v3326, %v3399
        %v3404 = vmul.f32 %v3331, %v3399
        %v3405 = vmul.f32 %v3336, %v3399
        %v3406 = vmul.f32 %v3341, %v3399
        %v3407 = vmul.f32 %v3346, %v3399
        %v3408 = vmul.f32 %v3351, %v3399
        %v3409 = vmul.f32 %v3356, %v3399
        %v3410 = vmul.f32 %v3361, %v3399
        %v3411 = vmul.f32 %v3366, %v3399
        %v3412 = vmul.f32 %v3371, %v3399
        %v3413 = vmul.f32 %v3376, %v3399
        %v3414 = vmul.f32 %v3381, %v3399
        %v3415 = vmul.f32 %v3386, %v3399
        %v3416 = vmul.f32 %v3391, %v3399
        %v3417 = vld [vmem:[#allocation17] sm:$0x1]
        %v3419 = vlaneseq
        %v3420 = vshrl.u32 %v3419, 7
        %v3421 = vsub.s32 0, %v3420
        %v3422 = vrot.slane %v3417, %v3421
        %v3424 = vadd.f32 %v3401, %v3422
        %v3425 = vadd.f32 %v3402, %v3422
        %v3426 = vadd.f32 %v3403, %v3422
        %v3427 = vadd.f32 %v3404, %v3422
        %v3428 = vadd.f32 %v3405, %v3422
        %v3429 = vadd.f32 %v3406, %v3422
        %v3430 = vadd.f32 %v3407, %v3422
        %v3431 = vadd.f32 %v3408, %v3422
        %v3432 = vadd.f32 %v3409, %v3422
        %v3433 = vadd.f32 %v3410, %v3422
        %v3434 = vadd.f32 %v3411, %v3422
        %v3435 = vadd.f32 %v3412, %v3422
        %v3436 = vadd.f32 %v3413, %v3422
        %v3437 = vadd.f32 %v3414, %v3422
        %v3438 = vadd.f32 %v3415, %v3422
        %v3439 = vadd.f32 %v3416, %v3422
        %v3440 = vadd.f32 %v3424, %v2284
        %v3441 = vadd.f32 %v3425, %v2285
        %v3442 = vadd.f32 %v3426, %v2286
        %v3443 = vadd.f32 %v3427, %v2287
        %v3444 = vadd.f32 %v3428, %v2288
        %v3445 = vadd.f32 %v3429, %v2289
        %v3446 = vadd.f32 %v3430, %v2290
        %v3447 = vadd.f32 %v3431, %v2291
        %v3448 = vadd.f32 %v3432, %v2292
        %v3449 = vadd.f32 %v3433, %v2293
        %v3450 = vadd.f32 %v3434, %v2294
        %v3451 = vadd.f32 %v3435, %v2295
        %v3452 = vadd.f32 %v3436, %v2296
        %v3453 = vadd.f32 %v3437, %v2297
        %v3454 = vadd.f32 %v3438, %v2298
        %v3455 = vadd.f32 %v3439, %v2299
        %v3456 = vmax.f32 %v3440, 0.0
        %v3457 = vmax.f32 %v3441, 0.0
        %v3458 = vmax.f32 %v3442, 0.0
        %v3459 = vmax.f32 %v3443, 0.0
        %v3460 = vmax.f32 %v3444, 0.0
        %v3461 = vmax.f32 %v3445, 0.0
        %v3462 = vmax.f32 %v3446, 0.0
        %v3463 = vmax.f32 %v3447, 0.0
        %v3464 = vmax.f32 %v3448, 0.0
        %v3465 = vmax.f32 %v3449, 0.0
        %v3466 = vmax.f32 %v3450, 0.0
        %v3467 = vmax.f32 %v3451, 0.0
        %v3468 = vmax.f32 %v3452, 0.0
        %v3469 = vmax.f32 %v3453, 0.0
        %v3470 = vmax.f32 %v3454, 0.0
        %v3471 = vmax.f32 %v3455, 0.0
        %3472 = vst.msk [vmem:[%s508] sm:$0xff] %vm2300, %v3456
        %3473 = vst.msk [vmem:[%s508 + $0x8] sm:$0xff] %vm2300, %v3457
        %3474 = vst.msk [vmem:[%s508 + $0x10] sm:$0xff] %vm2300, %v3458
        %3475 = vst.msk [vmem:[%s508 + $0x18] sm:$0xff] %vm2300, %v3459
        %3476 = vst.msk [vmem:[%s508 + $0x20] sm:$0xff] %vm2300, %v3460
        %3477 = vst.msk [vmem:[%s508 + $0x28] sm:$0xff] %vm2300, %v3461
        %3478 = vst.msk [vmem:[%s508 + $0x30] sm:$0xff] %vm2300, %v3462
        %3479 = vst.msk [vmem:[%s508 + $0x38] sm:$0xff] %vm2300, %v3463
        %3480 = vst.msk [vmem:[%s508 + $0x40] sm:$0xff] %vm2300, %v3464
        %3481 = vst.msk [vmem:[%s508 + $0x48] sm:$0xff] %vm2300, %v3465
        %3482 = vst.msk [vmem:[%s508 + $0x50] sm:$0xff] %vm2300, %v3466
        %3483 = vst.msk [vmem:[%s508 + $0x58] sm:$0xff] %vm2300, %v3467
        %3484 = vst.msk [vmem:[%s508 + $0x60] sm:$0xff] %vm2300, %v3468
        %3485 = vst.msk [vmem:[%s508 + $0x68] sm:$0xff] %vm2300, %v3469
        %3486 = vst.msk [vmem:[%s508 + $0x70] sm:$0xff] %vm2300, %v3470
        %3487 = vst.msk [vmem:[%s508 + $0x78] sm:$0xff] %vm2300, %v3471
        %s3488 = sand.u32 %s269, 1
        %s3489 = scalar_lea.sflag [#allocation8], %s3488
        %s3490 = sand.u32 %s269, 1
        %s3491 = smul.addr %s3490, 128
        %s3492 = scalar_lea.vmem [#allocation23], %s3491
        // Predicated region
        $region121: #{tpu_custom_call.1} parent=59 // pred_check
          %p3493 = pneg %p279
        $region122: #{tpu_custom_call.1} parent=59 // pred_check_branch
          %3495 = sbr.rel (%p3493) target = $region124
        $region123: #{tpu_custom_call.1} parent=59 // pred_region
          %s3496 = smul.u32 16, %s37
          %s3498 = ssub.s32 2048, 2048
          %3499 = vsyncadd %s3489, %s3498
          %s3500 = smul.addr %s36, 32
          %s3501 = sadd.s32 %s3496, %s3500
          %s3502 = smul.addr %s3501, 128
          %s3503 = scalar_lea.hbm %s10, %s3502
          %s3504 = sshll.u32 %s3492, 4
          %s3505 = int_to_ptr.vmem [resolvable:$true] %s3504
          %3510 = dma.vmem_to_hbm [thread:$0]  %s3505, 2048, %s3503, %s3489, 128, 128, 8
        $region124: #{tpu_custom_call.1} parent=59 // pred_fallthru
          _
      $region60: #{tpu_custom_call.1} parent=5 // pred_fallthru
        _
      %p3511 = scmp.le.s32.totalorder 2, %s27
      // Predicated region
      $region125: #{tpu_custom_call.1} parent=5 // pred_check
        %p3512 = pneg %p3511
      $region126: #{tpu_custom_call.1} parent=5 // pred_check_branch
        %3514 = sbr.rel (%p3512) target = $region128
      $region127: #{tpu_custom_call.1} parent=5 // pred_region
        %s3515 = ssub.s32 %s27, 2
        // Predicated region
        $region129: #{tpu_custom_call.1} parent=127 // pred_check
          %p3516 = pneg %p285
        $region130: #{tpu_custom_call.1} parent=127 // pred_check_branch
          %3518 = sbr.rel (%p3516) target = $region132
        $region131: #{tpu_custom_call.1} parent=127 // pred_region
          %s3519 = sand.u32 %s270, 1
          %s3520 = scalar_lea.sflag [#allocation8], %s3519
          %s3521 = sand.u32 %s270, 1
          %s3522 = smul.addr %s3521, 128
          %s3523 = scalar_lea.vmem [#allocation23], %s3522
          %3524 = dma.done %s3520, 2048
        $region132: #{tpu_custom_call.1} parent=127 // pred_fallthru
          _
      $region128: #{tpu_custom_call.1} parent=5 // pred_fallthru
        _
    $region6: #{tpu_custom_call.1} parent=1 // loop_footer
      %s31 = sadd.s32 1, %s27
    $region7: #{tpu_custom_call.1} parent=1 // loop_footer_branch
      %26 = sbr.rel target = $region3
    $region8: #{tpu_custom_call.1} parent=1 // loop_exit
      _
    %3525 = vsyncpa [#allocation7], 1
    %s3526 = scalar_lea.sflag [#allocation7], 1
    %3527 = vsyncpa %s3526, 1
    %3528 = vsyncpa [#allocation10], 1
    %3529 = vsyncpa [#allocation13], 1
    %3530 = vsyncpa [#allocation16], 1
    %3531 = vsyncpa [#allocation19], 1
    %3532 = vsyncpa [#allocation22], 1
    %3533 = vsyncpa [#allocation8], 1
    %s3534 = scalar_lea.sflag [#allocation8], 1
    %3535 = vsyncpa %s3534, 1

</llo_original>
